<compile_context>
chip_gen: v7x
topology: tpu7x:2x2x1
jax: 0.10.0
libtpu: 0.0.40
codegen_flags: <defaults>
</compile_context>

<pallas_src>
import jax
import jax.numpy as jnp
import numpy as np
from jax.experimental import pallas as pl
from jax.experimental.pallas import tpu as pltpu

D_MODEL = 36          # feature_size
N_HEAD = 4
HEAD_DIM = D_MODEL // N_HEAD
HEAD_PAD = 128        # each head's q/k/v padded to a full 128-lane band
QO = 0
KO = N_HEAD * HEAD_PAD
VO = 2 * N_HEAD * HEAD_PAD
FFN = 2048            # nn.TransformerEncoderLayer default dim_feedforward
N_LAYERS = 3
LN_EPS = 1e-5


# ----------------------------- Pallas kernel ---------------------------------

def transam_kernel(x_ref, pe_ref, mask_ref, emb_wT_ref, emb_b_ref,
                   in_wT_ref, in_b_ref, out_wT_ref, out_b_ref,
                   ln1_w_ref, ln1_b_ref, lin1_wT_ref, lin1_b_ref,
                   lin2_wT_ref, lin2_b_ref, ln2_w_ref, ln2_b_ref,
                   dec_wT_ref, dec_b_ref, o_ref):
    # x_ref: (M, C) = (batches_per_group * S, C); mask_ref: (M, M) block-diag causal.
    mask = mask_ref[...]

    def layer_norm(v, w, b):
        mu = jnp.mean(v, axis=-1, keepdims=True)
        var = jnp.mean(jnp.square(v - mu), axis=-1, keepdims=True)
        return (v - mu) * jax.lax.rsqrt(var + LN_EPS) * w + b

    def softmax(s):
        m = jnp.max(s, axis=-1, keepdims=True)
        e = jnp.exp(s - m)
        return e * pl.reciprocal(jnp.sum(e, axis=-1, keepdims=True), approx=True)

    # ---- input embedding (one fused dot) + positional encoding ----
    x = jnp.dot(x_ref[...], emb_wT_ref[...],
                preferred_element_type=jnp.float32) + emb_b_ref[...]
    x = x + pe_ref[...]                                               # (M, D)

    for l in range(N_LAYERS):
        # ---- multi-head self-attention, one fused QKV matmul into lane-aligned bands ----
        # qkv layout: [Q0|Q1|Q2|Q3|K0..K3|V0..V3], 128 lanes per band, dh=9 data + zeros.
        # 1/sqrt(dh) is already folded into the Q weights/bias.
        qkv = jnp.dot(x, in_wT_ref[l],
                      preferred_element_type=jnp.float32) + in_b_ref[l]   # (M, 12*128)
        ctx_heads = []
        for h in range(N_HEAD):
            q = qkv[:, QO + h * HEAD_PAD:QO + (h + 1) * HEAD_PAD]          # (M, 128)
            k = qkv[:, KO + h * HEAD_PAD:KO + (h + 1) * HEAD_PAD]
            v = qkv[:, VO + h * HEAD_PAD:VO + (h + 1) * HEAD_PAD]
            s = jax.lax.dot_general(q, k, (((1,), (1,)), ((), ())),
                                    preferred_element_type=jnp.float32)   # (M, M)
            p = softmax(s + mask)
            ctx_heads.append(jnp.dot(p, v, preferred_element_type=jnp.float32))
        ctx = jnp.concatenate(ctx_heads, axis=-1)                          # (M, 4*128)
        attn = jnp.dot(ctx, out_wT_ref[l],
                       preferred_element_type=jnp.float32) + out_b_ref[l]  # (M, D)
        # dropout1 is identity in eval mode
        x = layer_norm(x + attn, ln1_w_ref[l], ln1_b_ref[l])

        # ---- feed-forward (ReLU), bf16 weights, f32 accumulation ----
        hdn = jnp.maximum(
            jnp.dot(x.astype(jnp.bfloat16), lin1_wT_ref[l],
                    preferred_element_type=jnp.float32) + lin1_b_ref[l], 0.0)   # (M, FFN)
        ff = jnp.dot(hdn.astype(jnp.bfloat16), lin2_wT_ref[l],
                     preferred_element_type=jnp.float32) + lin2_b_ref[l]        # (M, D)
        # dropout / dropout2 are identity in eval mode
        x = layer_norm(x + ff, ln2_w_ref[l], ln2_b_ref[l])

    # ---- decoder Linear(D -> C): one dot, dense per-group store ----
    o_ref[...] = jnp.dot(x, dec_wT_ref[...],
                         preferred_element_type=jnp.float32) + dec_b_ref[...]


# ----------------------------- Wrapper ---------------------------------------

def positional_encoding(S, d_model):
    """Exactly the PositionalEncoding buffer from the spec module (its own div_term
    construction: div_term over all d indices, then sliced [0::2]/[1::2])."""
    position = np.arange(S, dtype=np.float64)[:, None]                    # (S, 1)
    div_term = 1.0 / (10000.0 ** (2.0 * np.arange(d_model) / d_model))    # (d,)
    pe = np.zeros((S, d_model), dtype=np.float32)
    pe[:, 0::2] = np.sin(position * div_term[0::2])
    pe[:, 1::2] = np.cos(position * div_term[1::2])
    return jnp.asarray(pe, dtype=jnp.float32)


def _default_num_groups(B):
    """One grid step per TensorCore; remaining batch is folded into rows.
    Falls back to a single fused step on 1-TC chips (v5e/v6e)."""
    n_tc = 1
    try:
        n_tc = int(getattr(jax.devices()[0], "num_cores", 1) or 1)
    except Exception:
        n_tc = 1
    g = max(1, min(n_tc, B))
    while B % g:
        g -= 1
    return g


def transam_forward(x, params, num_groups=None):
    """x: (S, B, C) float32, same convention as the PyTorch module."""
    S, B, C = x.shape
    D, L, F, PH = D_MODEL, N_LAYERS, FFN, HEAD_PAD
    if num_groups is None:
        num_groups = _default_num_groups(B)
    G = int(num_groups)
    assert B % G == 0, "num_groups must divide the batch"
    Bg = B // G
    M = Bg * S                                                       # rows per grid step

    # ---- fold batch into the row dimension (plain JAX glue) ----
    xg = jnp.transpose(x, (1, 0, 2)).reshape(G, M, C)                # (G, Bg*S, C)
    pe_t = jnp.tile(positional_encoding(S, D), (Bg, 1))              # (M, D)

    # block-diagonal causal mask over the folded rows (hoisted out of the kernel)
    pos = jnp.arange(M)
    seq_id, t_id = pos // S, pos % S
    allowed = (seq_id[:, None] == seq_id[None, :]) & (t_id[None, :] <= t_id[:, None])
    mask = jnp.where(allowed, 0.0, -jnp.inf).astype(jnp.float32)     # (M, M)

    scale = float(1.0 / np.sqrt(HEAD_DIM))

    # ---- parameter re-packing ----
    emb_wT = params['emb_w'].T                                       # (C, D)
    emb_b = params['emb_b'].reshape(1, D)

    # in_proj: pad each head's q/k/v to its own 128-lane band; fold 1/sqrt(dh) into Q.
    in_wT = jnp.transpose(params['in_proj_w'], (0, 2, 1))            # (L, D, 3D)
    in_b = params['in_proj_b']                                       # (L, 3D)
    w_parts, b_parts = [], []
    for blk, sc in ((0, scale), (1, 1.0), (2, 1.0)):                 # Q (scaled), K, V
        for h in range(N_HEAD):
            lo = blk * D + h * HEAD_DIM
            w_seg = in_wT[:, :, lo:lo + HEAD_DIM] * sc
            b_seg = in_b[:, lo:lo + HEAD_DIM] * sc
            w_parts.append(jnp.pad(w_seg, ((0, 0), (0, 0), (0, PH - HEAD_DIM))))
            b_parts.append(jnp.pad(b_seg, ((0, 0), (0, PH - HEAD_DIM))))
    in_wT_p = jnp.concatenate(w_parts, axis=-1)                      # (L, D, 3*H*128)
    in_b_p = jnp.concatenate(b_parts, axis=-1)[:, None, :]           # (L, 1, 3*H*128)

    # out_proj: zero rows at the padded head positions so ctx (M, 4*128) @ out_wT works.
    out_wT = jnp.transpose(params['out_proj_w'], (0, 2, 1))          # (L, D, D)
    o_parts = []
    for h in range(N_HEAD):
        seg = out_wT[:, h * HEAD_DIM:(h + 1) * HEAD_DIM, :]          # (L, 9, D)
        o_parts.append(jnp.pad(seg, ((0, 0), (0, PH - HEAD_DIM), (0, 0))))
    out_wT_p = jnp.concatenate(o_parts, axis=1)                      # (L, H*128, D)
    out_b = params['out_proj_b'].reshape(L, 1, D)

    ln1_w = params['ln1_w'].reshape(L, 1, D)
    ln1_b = params['ln1_b'].reshape(L, 1, D)
    # FFN weights in bf16 (dominant HBM->VMEM bytes), f32 accumulation in the kernel.
    lin1_wT = jnp.transpose(params['lin1_w'], (0, 2, 1)).astype(jnp.bfloat16)  # (L, D, FFN)
    lin1_b = params['lin1_b'].reshape(L, 1, F)
    lin2_wT = jnp.transpose(params['lin2_w'], (0, 2, 1)).astype(jnp.bfloat16)  # (L, FFN, D)
    lin2_b = params['lin2_b'].reshape(L, 1, D)
    ln2_w = params['ln2_w'].reshape(L, 1, D)
    ln2_b = params['ln2_b'].reshape(L, 1, D)
    dec_wT = params['dec_w'].T                                       # (D, C)
    dec_b = params['dec_b'].reshape(1, C)

    args = (xg, pe_t, mask, emb_wT, emb_b, in_wT_p, in_b_p, out_wT_p, out_b,
            ln1_w, ln1_b, lin1_wT, lin1_b, lin2_wT, lin2_b, ln2_w, ln2_b,
            dec_wT, dec_b)

    def full_spec(a):
        # whole array resident in VMEM; constant block index across the grid
        if a.ndim == 2:
            return pl.BlockSpec(a.shape, lambda g: (0, 0))
        return pl.BlockSpec(a.shape, lambda g: (0, 0, 0))

    in_specs = [pl.BlockSpec((None, M, C), lambda g: (g, 0, 0))]     # per-group slab
    in_specs += [full_spec(a) for a in args[1:]]
    out_spec = pl.BlockSpec((None, M, C), lambda g: (g, 0, 0))       # dense per-group store

    out = pl.pallas_call(
        transam_kernel,
        out_shape=jax.ShapeDtypeStruct((G, M, C), jnp.float32),
        grid_spec=pltpu.PrefetchScalarGridSpec(
            num_scalar_prefetch=0,
            grid=(G,),
            in_specs=in_specs,
            out_specs=out_spec,
        ),
        compiler_params=pltpu.CompilerParams(
            dimension_semantics=("parallel",),          # v7x: one group per TensorCore
            vmem_limit_bytes=32 * 1024 * 1024,
        ),
    )(*args)

    # (G, Bg*S, C) -> (B, S, C) -> (S, B, C)
    return jnp.transpose(out.reshape(B, S, C), (1, 0, 2))


# ----------------------------- Pure-JAX reference ----------------------------

def _layer_norm_ref(v, w, b):
    mu = jnp.mean(v, axis=-1, keepdims=True)
    var = jnp.mean(jnp.square(v - mu), axis=-1, keepdims=True)
    return (v - mu) * jax.lax.rsqrt(var + LN_EPS) * w + b


def reference_forward(x, params):
    """Pure-JAX (float32) reproduction of TransAm.forward (eval mode)."""
    S, B, C = x.shape
    D = D_MODEL
    mask = jnp.where(jnp.tril(jnp.ones((S, S), dtype=bool)), 0.0, -jnp.inf)

    h = x @ params['emb_w'].T + params['emb_b']                      # (S, B, D)
    h = h + positional_encoding(S, D)[:, None, :]

    for l in range(N_LAYERS):
        qkv = h @ params['in_proj_w'][l].T + params['in_proj_b'][l]  # (S, B, 3D)
        q, k, v = qkv[..., :D], qkv[..., D:2 * D], qkv[..., 2 * D:]

        def split(t):
            return jnp.transpose(t.reshape(S, B, N_HEAD, HEAD_DIM), (1, 2, 0, 3))

        qh, kh, vh = split(q), split(k), split(v)
        s = jnp.einsum('bhqd,bhkd->bhqk', qh, kh) * float(1.0 / np.sqrt(HEAD_DIM)) + mask
        p = jax.nn.softmax(s, axis=-1)
        ctx = jnp.einsum('bhqk,bhkd->bhqd', p, vh)                   # (B, H, S, dh)
        ctx = jnp.transpose(ctx, (2, 0, 1, 3)).reshape(S, B, D)
        attn = ctx @ params['out_proj_w'][l].T + params['out_proj_b'][l]
        h = _layer_norm_ref(h + attn, params['ln1_w'][l], params['ln1_b'][l])

        ff = jax.nn.relu(h @ params['lin1_w'][l].T + params['lin1_b'][l])
        ff = ff @ params['lin2_w'][l].T + params['lin2_b'][l]
        h = _layer_norm_ref(h + ff, params['ln2_w'][l], params['ln2_b'][l])

    return h @ params['dec_w'].T + params['dec_b']                   # (S, B, C)


# ----------------------------- Params & main ---------------------------------

def init_params(key, num_country):
    C = num_country + 1
    D, L, F = D_MODEL, N_LAYERS, FFN
    ks = jax.random.split(key, 16)

    def u(k, shape, bound):
        return jax.random.uniform(k, shape, jnp.float32, -bound, bound)

    return {
        'emb_w': u(ks[0], (D, C), 1.0 / np.sqrt(C)),
        'emb_b': u(ks[1], (D,), 1.0 / np.sqrt(C)),
        'in_proj_w': u(ks[2], (L, 3 * D, D), float(np.sqrt(6.0 / (4 * D)))),
        'in_proj_b': u(ks[3], (L, 3 * D), 0.05),
        'out_proj_w': u(ks[4], (L, D, D), 1.0 / np.sqrt(D)),
        'out_proj_b': u(ks[5], (L, D), 0.05),
        'ln1_w': 1.0 + u(ks[6], (L, D), 0.1),
        'ln1_b': u(ks[7], (L, D), 0.1),
        'lin1_w': u(ks[8], (L, F, D), 1.0 / np.sqrt(D)),
        'lin1_b': u(ks[9], (L, F), 1.0 / np.sqrt(D)),
        'lin2_w': u(ks[10], (L, D, F), 1.0 / np.sqrt(F)),
        'lin2_b': u(ks[11], (L, D), 1.0 / np.sqrt(F)),
        'ln2_w': 1.0 + u(ks[12], (L, D), 0.1),
        'ln2_b': u(ks[13], (L, D), 0.1),
        'dec_w': u(ks[14], (C, D), 0.1),                 # init_weights(): uniform(-0.1, 0.1)
        'dec_b': jnp.zeros((C,), jnp.float32),           # init_weights(): bias zeroed
    }


if __name__ == "__main__":
    num_country = 3
    C = num_country + 1
    S, B = 8, 2                                          # seq len, batch

    key = jax.random.PRNGKey(0)
    kx, kp = jax.random.split(key)
    x = jax.random.normal(kx, (S, B, C), jnp.float32)    # (seq, batch, num_country+1)
    params = init_params(kp, num_country)

    out = jax.jit(transam_forward)(x, params)
    out = jax.block_until_ready(out)

    ref = reference_forward(x, params)
    assert out.shape == (S, B, C), out.shape
    np.testing.assert_allclose(np.asarray(out), np.asarray(ref), rtol=2e-2, atol=2e-2)
    print("KERNEL_OK")
</pallas_src>

<mosaic_0001>
module attributes {stable_mosaic.version = 11 : i64} {
  func.func @transam_kernel(%arg0: i32, %arg1: memref<1x16x4xf32, #tpu.memory_space<vmem>>, %arg2: memref<16x36xf32, #tpu.memory_space<vmem>>, %arg3: memref<16x16xf32, #tpu.memory_space<vmem>>, %arg4: memref<4x36xf32, #tpu.memory_space<vmem>>, %arg5: memref<1x36xf32, #tpu.memory_space<vmem>>, %arg6: memref<3x36x1536xf32, #tpu.memory_space<vmem>>, %arg7: memref<3x1x1536xf32, #tpu.memory_space<vmem>>, %arg8: memref<3x512x36xf32, #tpu.memory_space<vmem>>, %arg9: memref<3x1x36xf32, #tpu.memory_space<vmem>>, %arg10: memref<3x1x36xf32, #tpu.memory_space<vmem>>, %arg11: memref<3x1x36xf32, #tpu.memory_space<vmem>>, %arg12: memref<3x36x2048xbf16, #tpu.memory_space<vmem>>, %arg13: memref<3x1x2048xf32, #tpu.memory_space<vmem>>, %arg14: memref<3x2048x36xbf16, #tpu.memory_space<vmem>>, %arg15: memref<3x1x36xf32, #tpu.memory_space<vmem>>, %arg16: memref<3x1x36xf32, #tpu.memory_space<vmem>>, %arg17: memref<3x1x36xf32, #tpu.memory_space<vmem>>, %arg18: memref<36x4xf32, #tpu.memory_space<vmem>>, %arg19: memref<1x4xf32, #tpu.memory_space<vmem>>, %arg20: memref<1x16x4xf32, #tpu.memory_space<vmem>>) attributes {dimension_semantics = [#tpu.dimension_semantics<parallel>], iteration_bounds = array<i64: 1>, scalar_prefetch = 0 : i64, scratch_operands = 0 : i64, tpu.core_type = #tpu.core_type<tc>, window_params = [{transform_indices = @transform_0, window_bounds = array<i64: 1, 16, 4>}, {pipeline_mode = #tpu.pipeline_mode<synchronous>, transform_indices = @transform_1, window_bounds = array<i64: 16, 36>}, {pipeline_mode = #tpu.pipeline_mode<synchronous>, transform_indices = @transform_2, window_bounds = array<i64: 16, 16>}, {pipeline_mode = #tpu.pipeline_mode<synchronous>, transform_indices = @transform_3, window_bounds = array<i64: 4, 36>}, {pipeline_mode = #tpu.pipeline_mode<synchronous>, transform_indices = @transform_4, window_bounds = array<i64: 1, 36>}, {pipeline_mode = #tpu.pipeline_mode<synchronous>, transform_indices = @transform_5, window_bounds = array<i64: 3, 36, 1536>}, {pipeline_mode = #tpu.pipeline_mode<synchronous>, transform_indices = @transform_6, window_bounds = array<i64: 3, 1, 1536>}, {pipeline_mode = #tpu.pipeline_mode<synchronous>, transform_indices = @transform_7, window_bounds = array<i64: 3, 512, 36>}, {pipeline_mode = #tpu.pipeline_mode<synchronous>, transform_indices = @transform_8, window_bounds = array<i64: 3, 1, 36>}, {pipeline_mode = #tpu.pipeline_mode<synchronous>, transform_indices = @transform_9, window_bounds = array<i64: 3, 1, 36>}, {pipeline_mode = #tpu.pipeline_mode<synchronous>, transform_indices = @transform_10, window_bounds = array<i64: 3, 1, 36>}, {pipeline_mode = #tpu.pipeline_mode<synchronous>, transform_indices = @transform_11, window_bounds = array<i64: 3, 36, 2048>}, {pipeline_mode = #tpu.pipeline_mode<synchronous>, transform_indices = @transform_12, window_bounds = array<i64: 3, 1, 2048>}, {pipeline_mode = #tpu.pipeline_mode<synchronous>, transform_indices = @transform_13, window_bounds = array<i64: 3, 2048, 36>}, {pipeline_mode = #tpu.pipeline_mode<synchronous>, transform_indices = @transform_14, window_bounds = array<i64: 3, 1, 36>}, {pipeline_mode = #tpu.pipeline_mode<synchronous>, transform_indices = @transform_15, window_bounds = array<i64: 3, 1, 36>}, {pipeline_mode = #tpu.pipeline_mode<synchronous>, transform_indices = @transform_16, window_bounds = array<i64: 3, 1, 36>}, {pipeline_mode = #tpu.pipeline_mode<synchronous>, transform_indices = @transform_17, window_bounds = array<i64: 36, 4>}, {pipeline_mode = #tpu.pipeline_mode<synchronous>, transform_indices = @transform_18, window_bounds = array<i64: 1, 4>}, {transform_indices = @transform_19, window_bounds = array<i64: 1, 16, 4>}]} {
    %c0 = arith.constant 0 : index
    %c0_0 = arith.constant 0 : index
    %0 = vector.load %arg3[%c0, %c0_0] : memref<16x16xf32, #tpu.memory_space<vmem>>, vector<16x16xf32>
    %c0_1 = arith.constant 0 : index
    %c0_2 = arith.constant 0 : index
    %c0_3 = arith.constant 0 : index
    %1 = vector.load %arg1[%c0_1, %c0_2, %c0_3] : memref<1x16x4xf32, #tpu.memory_space<vmem>>, vector<1x16x4xf32>
    %2 = vector.shape_cast %1 : vector<1x16x4xf32> to vector<16x4xf32>
    %c0_4 = arith.constant 0 : index
    %c0_5 = arith.constant 0 : index
    %3 = vector.load %arg4[%c0_4, %c0_5] : memref<4x36xf32, #tpu.memory_space<vmem>>, vector<4x36xf32>
    %cst = arith.constant dense<0.000000e+00> : vector<16x36xf32>
    %4 = tpu.matmul %2, %3, %cst {dimension_numbers = #tpu.dot_dimension_numbers<[1], [0], [0], [1], [0, 0, 1, 1], [], []>} : vector<16x4xf32>, vector<4x36xf32>, vector<16x36xf32> -> vector<16x36xf32>
    %c0_6 = arith.constant 0 : index
    %c0_7 = arith.constant 0 : index
    %5 = vector.load %arg5[%c0_6, %c0_7] : memref<1x36xf32, #tpu.memory_space<vmem>>, vector<1x36xf32>
    %6 = vector.broadcast %5 : vector<1x36xf32> to vector<16x36xf32>
    %7 = arith.addf %4, %6 : vector<16x36xf32>
    %c0_8 = arith.constant 0 : index
    %c0_9 = arith.constant 0 : index
    %8 = vector.load %arg2[%c0_8, %c0_9] : memref<16x36xf32, #tpu.memory_space<vmem>>, vector<16x36xf32>
    %9 = arith.addf %7, %8 : vector<16x36xf32>
    %c0_10 = arith.constant 0 : index
    %c0_11 = arith.constant 0 : index
    %c0_12 = arith.constant 0 : index
    %10 = vector.load %arg6[%c0_10, %c0_11, %c0_12] : memref<3x36x1536xf32, #tpu.memory_space<vmem>>, vector<1x36x1536xf32>
    %11 = vector.shape_cast %10 : vector<1x36x1536xf32> to vector<36x1536xf32>
    %cst_13 = arith.constant dense<0.000000e+00> : vector<16x1536xf32>
    %12 = tpu.matmul %9, %11, %cst_13 {dimension_numbers = #tpu.dot_dimension_numbers<[1], [0], [0], [1], [0, 0, 1, 1], [], []>} : vector<16x36xf32>, vector<36x1536xf32>, vector<16x1536xf32> -> vector<16x1536xf32>
    %c0_14 = arith.constant 0 : index
    %c0_15 = arith.constant 0 : index
    %c0_16 = arith.constant 0 : index
    %13 = vector.load %arg7[%c0_14, %c0_15, %c0_16] : memref<3x1x1536xf32, #tpu.memory_space<vmem>>, vector<1x1x1536xf32>
    %14 = vector.shape_cast %13 : vector<1x1x1536xf32> to vector<1x1536xf32>
    %15 = vector.broadcast %14 : vector<1x1536xf32> to vector<16x1536xf32>
    %16 = arith.addf %12, %15 : vector<16x1536xf32>
    %17 = vector.extract_strided_slice %16 {offsets = [0, 0], sizes = [16, 128], strides = [1, 1]} : vector<16x1536xf32> to vector<16x128xf32>
    %18 = vector.extract_strided_slice %16 {offsets = [0, 512], sizes = [16, 128], strides = [1, 1]} : vector<16x1536xf32> to vector<16x128xf32>
    %19 = vector.extract_strided_slice %16 {offsets = [0, 1024], sizes = [16, 128], strides = [1, 1]} : vector<16x1536xf32> to vector<16x128xf32>
    %cst_17 = arith.constant dense<0.000000e+00> : vector<16x16xf32>
    %20 = tpu.matmul %17, %18, %cst_17 {dimension_numbers = #tpu.dot_dimension_numbers<[1], [1], [0], [0], [0, 0, 1, 0], [], []>} : vector<16x128xf32>, vector<16x128xf32>, vector<16x16xf32> -> vector<16x16xf32>
    %21 = arith.addf %20, %0 : vector<16x16xf32>
    %cst_18 = arith.constant dense<0xFF800000> : vector<16xf32>
    %22 = vector.multi_reduction <maximumf>, %21, %cst_18 [1] : vector<16x16xf32> to vector<16xf32>
    %23 = vector.shape_cast %22 : vector<16xf32> to vector<16x1xf32>
    %24 = vector.broadcast %23 : vector<16x1xf32> to vector<16x16xf32>
    %25 = arith.subf %21, %24 : vector<16x16xf32>
    %26 = math.exp %25 : vector<16x16xf32>
    %cst_19 = arith.constant dense<0.000000e+00> : vector<16xf32>
    %27 = vector.multi_reduction <add>, %26, %cst_19 [1] : vector<16x16xf32> to vector<16xf32>
    %28 = vector.shape_cast %27 : vector<16xf32> to vector<16x1xf32>
    %29 = tpu.reciprocal %28 {approx = true} : vector<16x1xf32> -> vector<16x1xf32>
    %30 = vector.broadcast %29 : vector<16x1xf32> to vector<16x16xf32>
    %31 = arith.mulf %26, %30 : vector<16x16xf32>
    %cst_20 = arith.constant dense<0.000000e+00> : vector<16x128xf32>
    %32 = tpu.matmul %31, %19, %cst_20 {dimension_numbers = #tpu.dot_dimension_numbers<[1], [0], [0], [1], [0, 0, 1, 1], [], []>} : vector<16x16xf32>, vector<16x128xf32>, vector<16x128xf32> -> vector<16x128xf32>
    %33 = vector.extract_strided_slice %16 {offsets = [0, 128], sizes = [16, 128], strides = [1, 1]} : vector<16x1536xf32> to vector<16x128xf32>
    %34 = vector.extract_strided_slice %16 {offsets = [0, 640], sizes = [16, 128], strides = [1, 1]} : vector<16x1536xf32> to vector<16x128xf32>
    %35 = vector.extract_strided_slice %16 {offsets = [0, 1152], sizes = [16, 128], strides = [1, 1]} : vector<16x1536xf32> to vector<16x128xf32>
    %cst_21 = arith.constant dense<0.000000e+00> : vector<16x16xf32>
    %36 = tpu.matmul %33, %34, %cst_21 {dimension_numbers = #tpu.dot_dimension_numbers<[1], [1], [0], [0], [0, 0, 1, 0], [], []>} : vector<16x128xf32>, vector<16x128xf32>, vector<16x16xf32> -> vector<16x16xf32>
    %37 = arith.addf %36, %0 : vector<16x16xf32>
    %cst_22 = arith.constant dense<0xFF800000> : vector<16xf32>
    %38 = vector.multi_reduction <maximumf>, %37, %cst_22 [1] : vector<16x16xf32> to vector<16xf32>
    %39 = vector.shape_cast %38 : vector<16xf32> to vector<16x1xf32>
    %40 = vector.broadcast %39 : vector<16x1xf32> to vector<16x16xf32>
    %41 = arith.subf %37, %40 : vector<16x16xf32>
    %42 = math.exp %41 : vector<16x16xf32>
    %cst_23 = arith.constant dense<0.000000e+00> : vector<16xf32>
    %43 = vector.multi_reduction <add>, %42, %cst_23 [1] : vector<16x16xf32> to vector<16xf32>
    %44 = vector.shape_cast %43 : vector<16xf32> to vector<16x1xf32>
    %45 = tpu.reciprocal %44 {approx = true} : vector<16x1xf32> -> vector<16x1xf32>
    %46 = vector.broadcast %45 : vector<16x1xf32> to vector<16x16xf32>
    %47 = arith.mulf %42, %46 : vector<16x16xf32>
    %cst_24 = arith.constant dense<0.000000e+00> : vector<16x128xf32>
    %48 = tpu.matmul %47, %35, %cst_24 {dimension_numbers = #tpu.dot_dimension_numbers<[1], [0], [0], [1], [0, 0, 1, 1], [], []>} : vector<16x16xf32>, vector<16x128xf32>, vector<16x128xf32> -> vector<16x128xf32>
    %49 = vector.extract_strided_slice %16 {offsets = [0, 256], sizes = [16, 128], strides = [1, 1]} : vector<16x1536xf32> to vector<16x128xf32>
    %50 = vector.extract_strided_slice %16 {offsets = [0, 768], sizes = [16, 128], strides = [1, 1]} : vector<16x1536xf32> to vector<16x128xf32>
    %51 = vector.extract_strided_slice %16 {offsets = [0, 1280], sizes = [16, 128], strides = [1, 1]} : vector<16x1536xf32> to vector<16x128xf32>
    %cst_25 = arith.constant dense<0.000000e+00> : vector<16x16xf32>
    %52 = tpu.matmul %49, %50, %cst_25 {dimension_numbers = #tpu.dot_dimension_numbers<[1], [1], [0], [0], [0, 0, 1, 0], [], []>} : vector<16x128xf32>, vector<16x128xf32>, vector<16x16xf32> -> vector<16x16xf32>
    %53 = arith.addf %52, %0 : vector<16x16xf32>
    %cst_26 = arith.constant dense<0xFF800000> : vector<16xf32>
    %54 = vector.multi_reduction <maximumf>, %53, %cst_26 [1] : vector<16x16xf32> to vector<16xf32>
    %55 = vector.shape_cast %54 : vector<16xf32> to vector<16x1xf32>
    %56 = vector.broadcast %55 : vector<16x1xf32> to vector<16x16xf32>
    %57 = arith.subf %53, %56 : vector<16x16xf32>
    %58 = math.exp %57 : vector<16x16xf32>
    %cst_27 = arith.constant dense<0.000000e+00> : vector<16xf32>
    %59 = vector.multi_reduction <add>, %58, %cst_27 [1] : vector<16x16xf32> to vector<16xf32>
    %60 = vector.shape_cast %59 : vector<16xf32> to vector<16x1xf32>
    %61 = tpu.reciprocal %60 {approx = true} : vector<16x1xf32> -> vector<16x1xf32>
    %62 = vector.broadcast %61 : vector<16x1xf32> to vector<16x16xf32>
    %63 = arith.mulf %58, %62 : vector<16x16xf32>
    %cst_28 = arith.constant dense<0.000000e+00> : vector<16x128xf32>
    %64 = tpu.matmul %63, %51, %cst_28 {dimension_numbers = #tpu.dot_dimension_numbers<[1], [0], [0], [1], [0, 0, 1, 1], [], []>} : vector<16x16xf32>, vector<16x128xf32>, vector<16x128xf32> -> vector<16x128xf32>
    %65 = vector.extract_strided_slice %16 {offsets = [0, 384], sizes = [16, 128], strides = [1, 1]} : vector<16x1536xf32> to vector<16x128xf32>
    %66 = vector.extract_strided_slice %16 {offsets = [0, 896], sizes = [16, 128], strides = [1, 1]} : vector<16x1536xf32> to vector<16x128xf32>
    %67 = vector.extract_strided_slice %16 {offsets = [0, 1408], sizes = [16, 128], strides = [1, 1]} : vector<16x1536xf32> to vector<16x128xf32>
    %cst_29 = arith.constant dense<0.000000e+00> : vector<16x16xf32>
    %68 = tpu.matmul %65, %66, %cst_29 {dimension_numbers = #tpu.dot_dimension_numbers<[1], [1], [0], [0], [0, 0, 1, 0], [], []>} : vector<16x128xf32>, vector<16x128xf32>, vector<16x16xf32> -> vector<16x16xf32>
    %69 = arith.addf %68, %0 : vector<16x16xf32>
    %cst_30 = arith.constant dense<0xFF800000> : vector<16xf32>
    %70 = vector.multi_reduction <maximumf>, %69, %cst_30 [1] : vector<16x16xf32> to vector<16xf32>
    %71 = vector.shape_cast %70 : vector<16xf32> to vector<16x1xf32>
    %72 = vector.broadcast %71 : vector<16x1xf32> to vector<16x16xf32>
    %73 = arith.subf %69, %72 : vector<16x16xf32>
    %74 = math.exp %73 : vector<16x16xf32>
    %cst_31 = arith.constant dense<0.000000e+00> : vector<16xf32>
    %75 = vector.multi_reduction <add>, %74, %cst_31 [1] : vector<16x16xf32> to vector<16xf32>
    %76 = vector.shape_cast %75 : vector<16xf32> to vector<16x1xf32>
    %77 = tpu.reciprocal %76 {approx = true} : vector<16x1xf32> -> vector<16x1xf32>
    %78 = vector.broadcast %77 : vector<16x1xf32> to vector<16x16xf32>
    %79 = arith.mulf %74, %78 : vector<16x16xf32>
    %cst_32 = arith.constant dense<0.000000e+00> : vector<16x128xf32>
    %80 = tpu.matmul %79, %67, %cst_32 {dimension_numbers = #tpu.dot_dimension_numbers<[1], [0], [0], [1], [0, 0, 1, 1], [], []>} : vector<16x16xf32>, vector<16x128xf32>, vector<16x128xf32> -> vector<16x128xf32>
    %81 = tpu.concatenate %32, %48, %64, %80 in 1 : vector<16x128xf32>, vector<16x128xf32>, vector<16x128xf32>, vector<16x128xf32> -> vector<16x512xf32>
    %c0_33 = arith.constant 0 : index
    %c0_34 = arith.constant 0 : index
    %c0_35 = arith.constant 0 : index
    %82 = vector.load %arg8[%c0_33, %c0_34, %c0_35] : memref<3x512x36xf32, #tpu.memory_space<vmem>>, vector<1x512x36xf32>
    %83 = vector.shape_cast %82 : vector<1x512x36xf32> to vector<512x36xf32>
    %cst_36 = arith.constant dense<0.000000e+00> : vector<16x36xf32>
    %84 = tpu.matmul %81, %83, %cst_36 {dimension_numbers = #tpu.dot_dimension_numbers<[1], [0], [0], [1], [0, 0, 1, 1], [], []>} : vector<16x512xf32>, vector<512x36xf32>, vector<16x36xf32> -> vector<16x36xf32>
    %c0_37 = arith.constant 0 : index
    %c0_38 = arith.constant 0 : index
    %c0_39 = arith.constant 0 : index
    %85 = vector.load %arg9[%c0_37, %c0_38, %c0_39] : memref<3x1x36xf32, #tpu.memory_space<vmem>>, vector<1x1x36xf32>
    %86 = vector.shape_cast %85 : vector<1x1x36xf32> to vector<1x36xf32>
    %87 = vector.broadcast %86 : vector<1x36xf32> to vector<16x36xf32>
    %88 = arith.addf %84, %87 : vector<16x36xf32>
    %89 = arith.addf %9, %88 : vector<16x36xf32>
    %c0_40 = arith.constant 0 : index
    %c0_41 = arith.constant 0 : index
    %c0_42 = arith.constant 0 : index
    %90 = vector.load %arg10[%c0_40, %c0_41, %c0_42] : memref<3x1x36xf32, #tpu.memory_space<vmem>>, vector<1x1x36xf32>
    %91 = vector.shape_cast %90 : vector<1x1x36xf32> to vector<1x36xf32>
    %c0_43 = arith.constant 0 : index
    %c0_44 = arith.constant 0 : index
    %c0_45 = arith.constant 0 : index
    %92 = vector.load %arg11[%c0_43, %c0_44, %c0_45] : memref<3x1x36xf32, #tpu.memory_space<vmem>>, vector<1x1x36xf32>
    %93 = vector.shape_cast %92 : vector<1x1x36xf32> to vector<1x36xf32>
    %cst_46 = arith.constant dense<0.000000e+00> : vector<16xf32>
    %94 = vector.multi_reduction <add>, %89, %cst_46 [1] : vector<16x36xf32> to vector<16xf32>
    %95 = vector.shape_cast %94 : vector<16xf32> to vector<16x1xf32>
    %cst_47 = arith.constant 3.600000e+01 : f32
    %96 = vector.broadcast %cst_47 : f32 to vector<16x1xf32>
    %97 = arith.divf %95, %96 : vector<16x1xf32>
    %98 = vector.broadcast %97 : vector<16x1xf32> to vector<16x36xf32>
    %99 = arith.subf %89, %98 : vector<16x36xf32>
    %100 = arith.mulf %99, %99 : vector<16x36xf32>
    %cst_48 = arith.constant dense<0.000000e+00> : vector<16xf32>
    %101 = vector.multi_reduction <add>, %100, %cst_48 [1] : vector<16x36xf32> to vector<16xf32>
    %102 = vector.shape_cast %101 : vector<16xf32> to vector<16x1xf32>
    %cst_49 = arith.constant 3.600000e+01 : f32
    %103 = vector.broadcast %cst_49 : f32 to vector<16x1xf32>
    %104 = arith.divf %102, %103 : vector<16x1xf32>
    %105 = vector.broadcast %97 : vector<16x1xf32> to vector<16x36xf32>
    %106 = arith.subf %89, %105 : vector<16x36xf32>
    %cst_50 = arith.constant 9.99999974E-6 : f32
    %107 = vector.broadcast %cst_50 : f32 to vector<16x1xf32>
    %108 = arith.addf %104, %107 : vector<16x1xf32>
    %109 = math.rsqrt %108 : vector<16x1xf32>
    %110 = vector.broadcast %109 : vector<16x1xf32> to vector<16x36xf32>
    %111 = arith.mulf %106, %110 : vector<16x36xf32>
    %112 = vector.broadcast %91 : vector<1x36xf32> to vector<16x36xf32>
    %113 = arith.mulf %111, %112 : vector<16x36xf32>
    %114 = vector.broadcast %93 : vector<1x36xf32> to vector<16x36xf32>
    %115 = arith.addf %113, %114 : vector<16x36xf32>
    %116 = arith.truncf %115 : vector<16x36xf32> to vector<16x36xbf16>
    %c0_51 = arith.constant 0 : index
    %c0_52 = arith.constant 0 : index
    %c0_53 = arith.constant 0 : index
    %117 = vector.load %arg12[%c0_51, %c0_52, %c0_53] : memref<3x36x2048xbf16, #tpu.memory_space<vmem>>, vector<1x36x2048xbf16>
    %118 = vector.shape_cast %117 : vector<1x36x2048xbf16> to vector<36x2048xbf16>
    %cst_54 = arith.constant dense<0.000000e+00> : vector<16x2048xf32>
    %119 = tpu.matmul %116, %118, %cst_54 {dimension_numbers = #tpu.dot_dimension_numbers<[1], [0], [0], [1], [0, 0, 1, 1], [], []>} : vector<16x36xbf16>, vector<36x2048xbf16>, vector<16x2048xf32> -> vector<16x2048xf32>
    %c0_55 = arith.constant 0 : index
    %c0_56 = arith.constant 0 : index
    %c0_57 = arith.constant 0 : index
    %120 = vector.load %arg13[%c0_55, %c0_56, %c0_57] : memref<3x1x2048xf32, #tpu.memory_space<vmem>>, vector<1x1x2048xf32>
    %121 = vector.shape_cast %120 : vector<1x1x2048xf32> to vector<1x2048xf32>
    %122 = vector.broadcast %121 : vector<1x2048xf32> to vector<16x2048xf32>
    %123 = arith.addf %119, %122 : vector<16x2048xf32>
    %cst_58 = arith.constant 0.000000e+00 : f32
    %124 = vector.broadcast %cst_58 : f32 to vector<16x2048xf32>
    %125 = arith.maximumf %123, %124 : vector<16x2048xf32>
    %126 = arith.truncf %125 : vector<16x2048xf32> to vector<16x2048xbf16>
    %c0_59 = arith.constant 0 : index
    %c0_60 = arith.constant 0 : index
    %c0_61 = arith.constant 0 : index
    %127 = vector.load %arg14[%c0_59, %c0_60, %c0_61] : memref<3x2048x36xbf16, #tpu.memory_space<vmem>>, vector<1x2048x36xbf16>
    %128 = vector.shape_cast %127 : vector<1x2048x36xbf16> to vector<2048x36xbf16>
    %cst_62 = arith.constant dense<0.000000e+00> : vector<16x36xf32>
    %129 = tpu.matmul %126, %128, %cst_62 {dimension_numbers = #tpu.dot_dimension_numbers<[1], [0], [0], [1], [0, 0, 1, 1], [], []>} : vector<16x2048xbf16>, vector<2048x36xbf16>, vector<16x36xf32> -> vector<16x36xf32>
    %c0_63 = arith.constant 0 : index
    %c0_64 = arith.constant 0 : index
    %c0_65 = arith.constant 0 : index
    %130 = vector.load %arg15[%c0_63, %c0_64, %c0_65] : memref<3x1x36xf32, #tpu.memory_space<vmem>>, vector<1x1x36xf32>
    %131 = vector.shape_cast %130 : vector<1x1x36xf32> to vector<1x36xf32>
    %132 = vector.broadcast %131 : vector<1x36xf32> to vector<16x36xf32>
    %133 = arith.addf %129, %132 : vector<16x36xf32>
    %134 = arith.addf %115, %133 : vector<16x36xf32>
    %c0_66 = arith.constant 0 : index
    %c0_67 = arith.constant 0 : index
    %c0_68 = arith.constant 0 : index
    %135 = vector.load %arg16[%c0_66, %c0_67, %c0_68] : memref<3x1x36xf32, #tpu.memory_space<vmem>>, vector<1x1x36xf32>
    %136 = vector.shape_cast %135 : vector<1x1x36xf32> to vector<1x36xf32>
    %c0_69 = arith.constant 0 : index
    %c0_70 = arith.constant 0 : index
    %c0_71 = arith.constant 0 : index
    %137 = vector.load %arg17[%c0_69, %c0_70, %c0_71] : memref<3x1x36xf32, #tpu.memory_space<vmem>>, vector<1x1x36xf32>
    %138 = vector.shape_cast %137 : vector<1x1x36xf32> to vector<1x36xf32>
    %cst_72 = arith.constant dense<0.000000e+00> : vector<16xf32>
    %139 = vector.multi_reduction <add>, %134, %cst_72 [1] : vector<16x36xf32> to vector<16xf32>
    %140 = vector.shape_cast %139 : vector<16xf32> to vector<16x1xf32>
    %cst_73 = arith.constant 3.600000e+01 : f32
    %141 = vector.broadcast %cst_73 : f32 to vector<16x1xf32>
    %142 = arith.divf %140, %141 : vector<16x1xf32>
    %143 = vector.broadcast %142 : vector<16x1xf32> to vector<16x36xf32>
    %144 = arith.subf %134, %143 : vector<16x36xf32>
    %145 = arith.mulf %144, %144 : vector<16x36xf32>
    %cst_74 = arith.constant dense<0.000000e+00> : vector<16xf32>
    %146 = vector.multi_reduction <add>, %145, %cst_74 [1] : vector<16x36xf32> to vector<16xf32>
    %147 = vector.shape_cast %146 : vector<16xf32> to vector<16x1xf32>
    %cst_75 = arith.constant 3.600000e+01 : f32
    %148 = vector.broadcast %cst_75 : f32 to vector<16x1xf32>
    %149 = arith.divf %147, %148 : vector<16x1xf32>
    %150 = vector.broadcast %142 : vector<16x1xf32> to vector<16x36xf32>
    %151 = arith.subf %134, %150 : vector<16x36xf32>
    %cst_76 = arith.constant 9.99999974E-6 : f32
    %152 = vector.broadcast %cst_76 : f32 to vector<16x1xf32>
    %153 = arith.addf %149, %152 : vector<16x1xf32>
    %154 = math.rsqrt %153 : vector<16x1xf32>
    %155 = vector.broadcast %154 : vector<16x1xf32> to vector<16x36xf32>
    %156 = arith.mulf %151, %155 : vector<16x36xf32>
    %157 = vector.broadcast %136 : vector<1x36xf32> to vector<16x36xf32>
    %158 = arith.mulf %156, %157 : vector<16x36xf32>
    %159 = vector.broadcast %138 : vector<1x36xf32> to vector<16x36xf32>
    %160 = arith.addf %158, %159 : vector<16x36xf32>
    %c1 = arith.constant 1 : index
    %c0_77 = arith.constant 0 : index
    %c0_78 = arith.constant 0 : index
    %161 = vector.load %arg6[%c1, %c0_77, %c0_78] : memref<3x36x1536xf32, #tpu.memory_space<vmem>>, vector<1x36x1536xf32>
    %162 = vector.shape_cast %161 : vector<1x36x1536xf32> to vector<36x1536xf32>
    %cst_79 = arith.constant dense<0.000000e+00> : vector<16x1536xf32>
    %163 = tpu.matmul %160, %162, %cst_79 {dimension_numbers = #tpu.dot_dimension_numbers<[1], [0], [0], [1], [0, 0, 1, 1], [], []>} : vector<16x36xf32>, vector<36x1536xf32>, vector<16x1536xf32> -> vector<16x1536xf32>
    %c1_80 = arith.constant 1 : index
    %c0_81 = arith.constant 0 : index
    %c0_82 = arith.constant 0 : index
    %164 = vector.load %arg7[%c1_80, %c0_81, %c0_82] : memref<3x1x1536xf32, #tpu.memory_space<vmem>>, vector<1x1x1536xf32>
    %165 = vector.shape_cast %164 : vector<1x1x1536xf32> to vector<1x1536xf32>
    %166 = vector.broadcast %165 : vector<1x1536xf32> to vector<16x1536xf32>
    %167 = arith.addf %163, %166 : vector<16x1536xf32>
    %168 = vector.extract_strided_slice %167 {offsets = [0, 0], sizes = [16, 128], strides = [1, 1]} : vector<16x1536xf32> to vector<16x128xf32>
    %169 = vector.extract_strided_slice %167 {offsets = [0, 512], sizes = [16, 128], strides = [1, 1]} : vector<16x1536xf32> to vector<16x128xf32>
    %170 = vector.extract_strided_slice %167 {offsets = [0, 1024], sizes = [16, 128], strides = [1, 1]} : vector<16x1536xf32> to vector<16x128xf32>
    %cst_83 = arith.constant dense<0.000000e+00> : vector<16x16xf32>
    %171 = tpu.matmul %168, %169, %cst_83 {dimension_numbers = #tpu.dot_dimension_numbers<[1], [1], [0], [0], [0, 0, 1, 0], [], []>} : vector<16x128xf32>, vector<16x128xf32>, vector<16x16xf32> -> vector<16x16xf32>
    %172 = arith.addf %171, %0 : vector<16x16xf32>
    %cst_84 = arith.constant dense<0xFF800000> : vector<16xf32>
    %173 = vector.multi_reduction <maximumf>, %172, %cst_84 [1] : vector<16x16xf32> to vector<16xf32>
    %174 = vector.shape_cast %173 : vector<16xf32> to vector<16x1xf32>
    %175 = vector.broadcast %174 : vector<16x1xf32> to vector<16x16xf32>
    %176 = arith.subf %172, %175 : vector<16x16xf32>
    %177 = math.exp %176 : vector<16x16xf32>
    %cst_85 = arith.constant dense<0.000000e+00> : vector<16xf32>
    %178 = vector.multi_reduction <add>, %177, %cst_85 [1] : vector<16x16xf32> to vector<16xf32>
    %179 = vector.shape_cast %178 : vector<16xf32> to vector<16x1xf32>
    %180 = tpu.reciprocal %179 {approx = true} : vector<16x1xf32> -> vector<16x1xf32>
    %181 = vector.broadcast %180 : vector<16x1xf32> to vector<16x16xf32>
    %182 = arith.mulf %177, %181 : vector<16x16xf32>
    %cst_86 = arith.constant dense<0.000000e+00> : vector<16x128xf32>
    %183 = tpu.matmul %182, %170, %cst_86 {dimension_numbers = #tpu.dot_dimension_numbers<[1], [0], [0], [1], [0, 0, 1, 1], [], []>} : vector<16x16xf32>, vector<16x128xf32>, vector<16x128xf32> -> vector<16x128xf32>
    %184 = vector.extract_strided_slice %167 {offsets = [0, 128], sizes = [16, 128], strides = [1, 1]} : vector<16x1536xf32> to vector<16x128xf32>
    %185 = vector.extract_strided_slice %167 {offsets = [0, 640], sizes = [16, 128], strides = [1, 1]} : vector<16x1536xf32> to vector<16x128xf32>
    %186 = vector.extract_strided_slice %167 {offsets = [0, 1152], sizes = [16, 128], strides = [1, 1]} : vector<16x1536xf32> to vector<16x128xf32>
    %cst_87 = arith.constant dense<0.000000e+00> : vector<16x16xf32>
    %187 = tpu.matmul %184, %185, %cst_87 {dimension_numbers = #tpu.dot_dimension_numbers<[1], [1], [0], [0], [0, 0, 1, 0], [], []>} : vector<16x128xf32>, vector<16x128xf32>, vector<16x16xf32> -> vector<16x16xf32>
    %188 = arith.addf %187, %0 : vector<16x16xf32>
    %cst_88 = arith.constant dense<0xFF800000> : vector<16xf32>
    %189 = vector.multi_reduction <maximumf>, %188, %cst_88 [1] : vector<16x16xf32> to vector<16xf32>
    %190 = vector.shape_cast %189 : vector<16xf32> to vector<16x1xf32>
    %191 = vector.broadcast %190 : vector<16x1xf32> to vector<16x16xf32>
    %192 = arith.subf %188, %191 : vector<16x16xf32>
    %193 = math.exp %192 : vector<16x16xf32>
    %cst_89 = arith.constant dense<0.000000e+00> : vector<16xf32>
    %194 = vector.multi_reduction <add>, %193, %cst_89 [1] : vector<16x16xf32> to vector<16xf32>
    %195 = vector.shape_cast %194 : vector<16xf32> to vector<16x1xf32>
    %196 = tpu.reciprocal %195 {approx = true} : vector<16x1xf32> -> vector<16x1xf32>
    %197 = vector.broadcast %196 : vector<16x1xf32> to vector<16x16xf32>
    %198 = arith.mulf %193, %197 : vector<16x16xf32>
    %cst_90 = arith.constant dense<0.000000e+00> : vector<16x128xf32>
    %199 = tpu.matmul %198, %186, %cst_90 {dimension_numbers = #tpu.dot_dimension_numbers<[1], [0], [0], [1], [0, 0, 1, 1], [], []>} : vector<16x16xf32>, vector<16x128xf32>, vector<16x128xf32> -> vector<16x128xf32>
    %200 = vector.extract_strided_slice %167 {offsets = [0, 256], sizes = [16, 128], strides = [1, 1]} : vector<16x1536xf32> to vector<16x128xf32>
    %201 = vector.extract_strided_slice %167 {offsets = [0, 768], sizes = [16, 128], strides = [1, 1]} : vector<16x1536xf32> to vector<16x128xf32>
    %202 = vector.extract_strided_slice %167 {offsets = [0, 1280], sizes = [16, 128], strides = [1, 1]} : vector<16x1536xf32> to vector<16x128xf32>
    %cst_91 = arith.constant dense<0.000000e+00> : vector<16x16xf32>
    %203 = tpu.matmul %200, %201, %cst_91 {dimension_numbers = #tpu.dot_dimension_numbers<[1], [1], [0], [0], [0, 0, 1, 0], [], []>} : vector<16x128xf32>, vector<16x128xf32>, vector<16x16xf32> -> vector<16x16xf32>
    %204 = arith.addf %203, %0 : vector<16x16xf32>
    %cst_92 = arith.constant dense<0xFF800000> : vector<16xf32>
    %205 = vector.multi_reduction <maximumf>, %204, %cst_92 [1] : vector<16x16xf32> to vector<16xf32>
    %206 = vector.shape_cast %205 : vector<16xf32> to vector<16x1xf32>
    %207 = vector.broadcast %206 : vector<16x1xf32> to vector<16x16xf32>
    %208 = arith.subf %204, %207 : vector<16x16xf32>
    %209 = math.exp %208 : vector<16x16xf32>
    %cst_93 = arith.constant dense<0.000000e+00> : vector<16xf32>
    %210 = vector.multi_reduction <add>, %209, %cst_93 [1] : vector<16x16xf32> to vector<16xf32>
    %211 = vector.shape_cast %210 : vector<16xf32> to vector<16x1xf32>
    %212 = tpu.reciprocal %211 {approx = true} : vector<16x1xf32> -> vector<16x1xf32>
    %213 = vector.broadcast %212 : vector<16x1xf32> to vector<16x16xf32>
    %214 = arith.mulf %209, %213 : vector<16x16xf32>
    %cst_94 = arith.constant dense<0.000000e+00> : vector<16x128xf32>
    %215 = tpu.matmul %214, %202, %cst_94 {dimension_numbers = #tpu.dot_dimension_numbers<[1], [0], [0], [1], [0, 0, 1, 1], [], []>} : vector<16x16xf32>, vector<16x128xf32>, vector<16x128xf32> -> vector<16x128xf32>
    %216 = vector.extract_strided_slice %167 {offsets = [0, 384], sizes = [16, 128], strides = [1, 1]} : vector<16x1536xf32> to vector<16x128xf32>
    %217 = vector.extract_strided_slice %167 {offsets = [0, 896], sizes = [16, 128], strides = [1, 1]} : vector<16x1536xf32> to vector<16x128xf32>
    %218 = vector.extract_strided_slice %167 {offsets = [0, 1408], sizes = [16, 128], strides = [1, 1]} : vector<16x1536xf32> to vector<16x128xf32>
    %cst_95 = arith.constant dense<0.000000e+00> : vector<16x16xf32>
    %219 = tpu.matmul %216, %217, %cst_95 {dimension_numbers = #tpu.dot_dimension_numbers<[1], [1], [0], [0], [0, 0, 1, 0], [], []>} : vector<16x128xf32>, vector<16x128xf32>, vector<16x16xf32> -> vector<16x16xf32>
    %220 = arith.addf %219, %0 : vector<16x16xf32>
    %cst_96 = arith.constant dense<0xFF800000> : vector<16xf32>
    %221 = vector.multi_reduction <maximumf>, %220, %cst_96 [1] : vector<16x16xf32> to vector<16xf32>
    %222 = vector.shape_cast %221 : vector<16xf32> to vector<16x1xf32>
    %223 = vector.broadcast %222 : vector<16x1xf32> to vector<16x16xf32>
    %224 = arith.subf %220, %223 : vector<16x16xf32>
    %225 = math.exp %224 : vector<16x16xf32>
    %cst_97 = arith.constant dense<0.000000e+00> : vector<16xf32>
    %226 = vector.multi_reduction <add>, %225, %cst_97 [1] : vector<16x16xf32> to vector<16xf32>
    %227 = vector.shape_cast %226 : vector<16xf32> to vector<16x1xf32>
    %228 = tpu.reciprocal %227 {approx = true} : vector<16x1xf32> -> vector<16x1xf32>
    %229 = vector.broadcast %228 : vector<16x1xf32> to vector<16x16xf32>
    %230 = arith.mulf %225, %229 : vector<16x16xf32>
    %cst_98 = arith.constant dense<0.000000e+00> : vector<16x128xf32>
    %231 = tpu.matmul %230, %218, %cst_98 {dimension_numbers = #tpu.dot_dimension_numbers<[1], [0], [0], [1], [0, 0, 1, 1], [], []>} : vector<16x16xf32>, vector<16x128xf32>, vector<16x128xf32> -> vector<16x128xf32>
    %232 = tpu.concatenate %183, %199, %215, %231 in 1 : vector<16x128xf32>, vector<16x128xf32>, vector<16x128xf32>, vector<16x128xf32> -> vector<16x512xf32>
    %c1_99 = arith.constant 1 : index
    %c0_100 = arith.constant 0 : index
    %c0_101 = arith.constant 0 : index
    %233 = vector.load %arg8[%c1_99, %c0_100, %c0_101] : memref<3x512x36xf32, #tpu.memory_space<vmem>>, vector<1x512x36xf32>
    %234 = vector.shape_cast %233 : vector<1x512x36xf32> to vector<512x36xf32>
    %cst_102 = arith.constant dense<0.000000e+00> : vector<16x36xf32>
    %235 = tpu.matmul %232, %234, %cst_102 {dimension_numbers = #tpu.dot_dimension_numbers<[1], [0], [0], [1], [0, 0, 1, 1], [], []>} : vector<16x512xf32>, vector<512x36xf32>, vector<16x36xf32> -> vector<16x36xf32>
    %c1_103 = arith.constant 1 : index
    %c0_104 = arith.constant 0 : index
    %c0_105 = arith.constant 0 : index
    %236 = vector.load %arg9[%c1_103, %c0_104, %c0_105] : memref<3x1x36xf32, #tpu.memory_space<vmem>>, vector<1x1x36xf32>
    %237 = vector.shape_cast %236 : vector<1x1x36xf32> to vector<1x36xf32>
    %238 = vector.broadcast %237 : vector<1x36xf32> to vector<16x36xf32>
    %239 = arith.addf %235, %238 : vector<16x36xf32>
    %240 = arith.addf %160, %239 : vector<16x36xf32>
    %c1_106 = arith.constant 1 : index
    %c0_107 = arith.constant 0 : index
    %c0_108 = arith.constant 0 : index
    %241 = vector.load %arg10[%c1_106, %c0_107, %c0_108] : memref<3x1x36xf32, #tpu.memory_space<vmem>>, vector<1x1x36xf32>
    %242 = vector.shape_cast %241 : vector<1x1x36xf32> to vector<1x36xf32>
    %c1_109 = arith.constant 1 : index
    %c0_110 = arith.constant 0 : index
    %c0_111 = arith.constant 0 : index
    %243 = vector.load %arg11[%c1_109, %c0_110, %c0_111] : memref<3x1x36xf32, #tpu.memory_space<vmem>>, vector<1x1x36xf32>
    %244 = vector.shape_cast %243 : vector<1x1x36xf32> to vector<1x36xf32>
    %cst_112 = arith.constant dense<0.000000e+00> : vector<16xf32>
    %245 = vector.multi_reduction <add>, %240, %cst_112 [1] : vector<16x36xf32> to vector<16xf32>
    %246 = vector.shape_cast %245 : vector<16xf32> to vector<16x1xf32>
    %cst_113 = arith.constant 3.600000e+01 : f32
    %247 = vector.broadcast %cst_113 : f32 to vector<16x1xf32>
    %248 = arith.divf %246, %247 : vector<16x1xf32>
    %249 = vector.broadcast %248 : vector<16x1xf32> to vector<16x36xf32>
    %250 = arith.subf %240, %249 : vector<16x36xf32>
    %251 = arith.mulf %250, %250 : vector<16x36xf32>
    %cst_114 = arith.constant dense<0.000000e+00> : vector<16xf32>
    %252 = vector.multi_reduction <add>, %251, %cst_114 [1] : vector<16x36xf32> to vector<16xf32>
    %253 = vector.shape_cast %252 : vector<16xf32> to vector<16x1xf32>
    %cst_115 = arith.constant 3.600000e+01 : f32
    %254 = vector.broadcast %cst_115 : f32 to vector<16x1xf32>
    %255 = arith.divf %253, %254 : vector<16x1xf32>
    %256 = vector.broadcast %248 : vector<16x1xf32> to vector<16x36xf32>
    %257 = arith.subf %240, %256 : vector<16x36xf32>
    %cst_116 = arith.constant 9.99999974E-6 : f32
    %258 = vector.broadcast %cst_116 : f32 to vector<16x1xf32>
    %259 = arith.addf %255, %258 : vector<16x1xf32>
    %260 = math.rsqrt %259 : vector<16x1xf32>
    %261 = vector.broadcast %260 : vector<16x1xf32> to vector<16x36xf32>
    %262 = arith.mulf %257, %261 : vector<16x36xf32>
    %263 = vector.broadcast %242 : vector<1x36xf32> to vector<16x36xf32>
    %264 = arith.mulf %262, %263 : vector<16x36xf32>
    %265 = vector.broadcast %244 : vector<1x36xf32> to vector<16x36xf32>
    %266 = arith.addf %264, %265 : vector<16x36xf32>
    %267 = arith.truncf %266 : vector<16x36xf32> to vector<16x36xbf16>
    %c1_117 = arith.constant 1 : index
    %c0_118 = arith.constant 0 : index
    %c0_119 = arith.constant 0 : index
    %268 = vector.load %arg12[%c1_117, %c0_118, %c0_119] : memref<3x36x2048xbf16, #tpu.memory_space<vmem>>, vector<1x36x2048xbf16>
    %269 = vector.shape_cast %268 : vector<1x36x2048xbf16> to vector<36x2048xbf16>
    %cst_120 = arith.constant dense<0.000000e+00> : vector<16x2048xf32>
    %270 = tpu.matmul %267, %269, %cst_120 {dimension_numbers = #tpu.dot_dimension_numbers<[1], [0], [0], [1], [0, 0, 1, 1], [], []>} : vector<16x36xbf16>, vector<36x2048xbf16>, vector<16x2048xf32> -> vector<16x2048xf32>
    %c1_121 = arith.constant 1 : index
    %c0_122 = arith.constant 0 : index
    %c0_123 = arith.constant 0 : index
    %271 = vector.load %arg13[%c1_121, %c0_122, %c0_123] : memref<3x1x2048xf32, #tpu.memory_space<vmem>>, vector<1x1x2048xf32>
    %272 = vector.shape_cast %271 : vector<1x1x2048xf32> to vector<1x2048xf32>
    %273 = vector.broadcast %272 : vector<1x2048xf32> to vector<16x2048xf32>
    %274 = arith.addf %270, %273 : vector<16x2048xf32>
    %cst_124 = arith.constant 0.000000e+00 : f32
    %275 = vector.broadcast %cst_124 : f32 to vector<16x2048xf32>
    %276 = arith.maximumf %274, %275 : vector<16x2048xf32>
    %277 = arith.truncf %276 : vector<16x2048xf32> to vector<16x2048xbf16>
    %c1_125 = arith.constant 1 : index
    %c0_126 = arith.constant 0 : index
    %c0_127 = arith.constant 0 : index
    %278 = vector.load %arg14[%c1_125, %c0_126, %c0_127] : memref<3x2048x36xbf16, #tpu.memory_space<vmem>>, vector<1x2048x36xbf16>
    %279 = vector.shape_cast %278 : vector<1x2048x36xbf16> to vector<2048x36xbf16>
    %cst_128 = arith.constant dense<0.000000e+00> : vector<16x36xf32>
    %280 = tpu.matmul %277, %279, %cst_128 {dimension_numbers = #tpu.dot_dimension_numbers<[1], [0], [0], [1], [0, 0, 1, 1], [], []>} : vector<16x2048xbf16>, vector<2048x36xbf16>, vector<16x36xf32> -> vector<16x36xf32>
    %c1_129 = arith.constant 1 : index
    %c0_130 = arith.constant 0 : index
    %c0_131 = arith.constant 0 : index
    %281 = vector.load %arg15[%c1_129, %c0_130, %c0_131] : memref<3x1x36xf32, #tpu.memory_space<vmem>>, vector<1x1x36xf32>
    %282 = vector.shape_cast %281 : vector<1x1x36xf32> to vector<1x36xf32>
    %283 = vector.broadcast %282 : vector<1x36xf32> to vector<16x36xf32>
    %284 = arith.addf %280, %283 : vector<16x36xf32>
    %285 = arith.addf %266, %284 : vector<16x36xf32>
    %c1_132 = arith.constant 1 : index
    %c0_133 = arith.constant 0 : index
    %c0_134 = arith.constant 0 : index
    %286 = vector.load %arg16[%c1_132, %c0_133, %c0_134] : memref<3x1x36xf32, #tpu.memory_space<vmem>>, vector<1x1x36xf32>
    %287 = vector.shape_cast %286 : vector<1x1x36xf32> to vector<1x36xf32>
    %c1_135 = arith.constant 1 : index
    %c0_136 = arith.constant 0 : index
    %c0_137 = arith.constant 0 : index
    %288 = vector.load %arg17[%c1_135, %c0_136, %c0_137] : memref<3x1x36xf32, #tpu.memory_space<vmem>>, vector<1x1x36xf32>
    %289 = vector.shape_cast %288 : vector<1x1x36xf32> to vector<1x36xf32>
    %cst_138 = arith.constant dense<0.000000e+00> : vector<16xf32>
    %290 = vector.multi_reduction <add>, %285, %cst_138 [1] : vector<16x36xf32> to vector<16xf32>
    %291 = vector.shape_cast %290 : vector<16xf32> to vector<16x1xf32>
    %cst_139 = arith.constant 3.600000e+01 : f32
    %292 = vector.broadcast %cst_139 : f32 to vector<16x1xf32>
    %293 = arith.divf %291, %292 : vector<16x1xf32>
    %294 = vector.broadcast %293 : vector<16x1xf32> to vector<16x36xf32>
    %295 = arith.subf %285, %294 : vector<16x36xf32>
    %296 = arith.mulf %295, %295 : vector<16x36xf32>
    %cst_140 = arith.constant dense<0.000000e+00> : vector<16xf32>
    %297 = vector.multi_reduction <add>, %296, %cst_140 [1] : vector<16x36xf32> to vector<16xf32>
    %298 = vector.shape_cast %297 : vector<16xf32> to vector<16x1xf32>
    %cst_141 = arith.constant 3.600000e+01 : f32
    %299 = vector.broadcast %cst_141 : f32 to vector<16x1xf32>
    %300 = arith.divf %298, %299 : vector<16x1xf32>
    %301 = vector.broadcast %293 : vector<16x1xf32> to vector<16x36xf32>
    %302 = arith.subf %285, %301 : vector<16x36xf32>
    %cst_142 = arith.constant 9.99999974E-6 : f32
    %303 = vector.broadcast %cst_142 : f32 to vector<16x1xf32>
    %304 = arith.addf %300, %303 : vector<16x1xf32>
    %305 = math.rsqrt %304 : vector<16x1xf32>
    %306 = vector.broadcast %305 : vector<16x1xf32> to vector<16x36xf32>
    %307 = arith.mulf %302, %306 : vector<16x36xf32>
    %308 = vector.broadcast %287 : vector<1x36xf32> to vector<16x36xf32>
    %309 = arith.mulf %307, %308 : vector<16x36xf32>
    %310 = vector.broadcast %289 : vector<1x36xf32> to vector<16x36xf32>
    %311 = arith.addf %309, %310 : vector<16x36xf32>
    %c2 = arith.constant 2 : index
    %c0_143 = arith.constant 0 : index
    %c0_144 = arith.constant 0 : index
    %312 = vector.load %arg6[%c2, %c0_143, %c0_144] : memref<3x36x1536xf32, #tpu.memory_space<vmem>>, vector<1x36x1536xf32>
    %313 = vector.shape_cast %312 : vector<1x36x1536xf32> to vector<36x1536xf32>
    %cst_145 = arith.constant dense<0.000000e+00> : vector<16x1536xf32>
    %314 = tpu.matmul %311, %313, %cst_145 {dimension_numbers = #tpu.dot_dimension_numbers<[1], [0], [0], [1], [0, 0, 1, 1], [], []>} : vector<16x36xf32>, vector<36x1536xf32>, vector<16x1536xf32> -> vector<16x1536xf32>
    %c2_146 = arith.constant 2 : index
    %c0_147 = arith.constant 0 : index
    %c0_148 = arith.constant 0 : index
    %315 = vector.load %arg7[%c2_146, %c0_147, %c0_148] : memref<3x1x1536xf32, #tpu.memory_space<vmem>>, vector<1x1x1536xf32>
    %316 = vector.shape_cast %315 : vector<1x1x1536xf32> to vector<1x1536xf32>
    %317 = vector.broadcast %316 : vector<1x1536xf32> to vector<16x1536xf32>
    %318 = arith.addf %314, %317 : vector<16x1536xf32>
    %319 = vector.extract_strided_slice %318 {offsets = [0, 0], sizes = [16, 128], strides = [1, 1]} : vector<16x1536xf32> to vector<16x128xf32>
    %320 = vector.extract_strided_slice %318 {offsets = [0, 512], sizes = [16, 128], strides = [1, 1]} : vector<16x1536xf32> to vector<16x128xf32>
    %321 = vector.extract_strided_slice %318 {offsets = [0, 1024], sizes = [16, 128], strides = [1, 1]} : vector<16x1536xf32> to vector<16x128xf32>
    %cst_149 = arith.constant dense<0.000000e+00> : vector<16x16xf32>
    %322 = tpu.matmul %319, %320, %cst_149 {dimension_numbers = #tpu.dot_dimension_numbers<[1], [1], [0], [0], [0, 0, 1, 0], [], []>} : vector<16x128xf32>, vector<16x128xf32>, vector<16x16xf32> -> vector<16x16xf32>
    %323 = arith.addf %322, %0 : vector<16x16xf32>
    %cst_150 = arith.constant dense<0xFF800000> : vector<16xf32>
    %324 = vector.multi_reduction <maximumf>, %323, %cst_150 [1] : vector<16x16xf32> to vector<16xf32>
    %325 = vector.shape_cast %324 : vector<16xf32> to vector<16x1xf32>
    %326 = vector.broadcast %325 : vector<16x1xf32> to vector<16x16xf32>
    %327 = arith.subf %323, %326 : vector<16x16xf32>
    %328 = math.exp %327 : vector<16x16xf32>
    %cst_151 = arith.constant dense<0.000000e+00> : vector<16xf32>
    %329 = vector.multi_reduction <add>, %328, %cst_151 [1] : vector<16x16xf32> to vector<16xf32>
    %330 = vector.shape_cast %329 : vector<16xf32> to vector<16x1xf32>
    %331 = tpu.reciprocal %330 {approx = true} : vector<16x1xf32> -> vector<16x1xf32>
    %332 = vector.broadcast %331 : vector<16x1xf32> to vector<16x16xf32>
    %333 = arith.mulf %328, %332 : vector<16x16xf32>
    %cst_152 = arith.constant dense<0.000000e+00> : vector<16x128xf32>
    %334 = tpu.matmul %333, %321, %cst_152 {dimension_numbers = #tpu.dot_dimension_numbers<[1], [0], [0], [1], [0, 0, 1, 1], [], []>} : vector<16x16xf32>, vector<16x128xf32>, vector<16x128xf32> -> vector<16x128xf32>
    %335 = vector.extract_strided_slice %318 {offsets = [0, 128], sizes = [16, 128], strides = [1, 1]} : vector<16x1536xf32> to vector<16x128xf32>
    %336 = vector.extract_strided_slice %318 {offsets = [0, 640], sizes = [16, 128], strides = [1, 1]} : vector<16x1536xf32> to vector<16x128xf32>
    %337 = vector.extract_strided_slice %318 {offsets = [0, 1152], sizes = [16, 128], strides = [1, 1]} : vector<16x1536xf32> to vector<16x128xf32>
    %cst_153 = arith.constant dense<0.000000e+00> : vector<16x16xf32>
    %338 = tpu.matmul %335, %336, %cst_153 {dimension_numbers = #tpu.dot_dimension_numbers<[1], [1], [0], [0], [0, 0, 1, 0], [], []>} : vector<16x128xf32>, vector<16x128xf32>, vector<16x16xf32> -> vector<16x16xf32>
    %339 = arith.addf %338, %0 : vector<16x16xf32>
    %cst_154 = arith.constant dense<0xFF800000> : vector<16xf32>
    %340 = vector.multi_reduction <maximumf>, %339, %cst_154 [1] : vector<16x16xf32> to vector<16xf32>
    %341 = vector.shape_cast %340 : vector<16xf32> to vector<16x1xf32>
    %342 = vector.broadcast %341 : vector<16x1xf32> to vector<16x16xf32>
    %343 = arith.subf %339, %342 : vector<16x16xf32>
    %344 = math.exp %343 : vector<16x16xf32>
    %cst_155 = arith.constant dense<0.000000e+00> : vector<16xf32>
    %345 = vector.multi_reduction <add>, %344, %cst_155 [1] : vector<16x16xf32> to vector<16xf32>
    %346 = vector.shape_cast %345 : vector<16xf32> to vector<16x1xf32>
    %347 = tpu.reciprocal %346 {approx = true} : vector<16x1xf32> -> vector<16x1xf32>
    %348 = vector.broadcast %347 : vector<16x1xf32> to vector<16x16xf32>
    %349 = arith.mulf %344, %348 : vector<16x16xf32>
    %cst_156 = arith.constant dense<0.000000e+00> : vector<16x128xf32>
    %350 = tpu.matmul %349, %337, %cst_156 {dimension_numbers = #tpu.dot_dimension_numbers<[1], [0], [0], [1], [0, 0, 1, 1], [], []>} : vector<16x16xf32>, vector<16x128xf32>, vector<16x128xf32> -> vector<16x128xf32>
    %351 = vector.extract_strided_slice %318 {offsets = [0, 256], sizes = [16, 128], strides = [1, 1]} : vector<16x1536xf32> to vector<16x128xf32>
    %352 = vector.extract_strided_slice %318 {offsets = [0, 768], sizes = [16, 128], strides = [1, 1]} : vector<16x1536xf32> to vector<16x128xf32>
    %353 = vector.extract_strided_slice %318 {offsets = [0, 1280], sizes = [16, 128], strides = [1, 1]} : vector<16x1536xf32> to vector<16x128xf32>
    %cst_157 = arith.constant dense<0.000000e+00> : vector<16x16xf32>
    %354 = tpu.matmul %351, %352, %cst_157 {dimension_numbers = #tpu.dot_dimension_numbers<[1], [1], [0], [0], [0, 0, 1, 0], [], []>} : vector<16x128xf32>, vector<16x128xf32>, vector<16x16xf32> -> vector<16x16xf32>
    %355 = arith.addf %354, %0 : vector<16x16xf32>
    %cst_158 = arith.constant dense<0xFF800000> : vector<16xf32>
    %356 = vector.multi_reduction <maximumf>, %355, %cst_158 [1] : vector<16x16xf32> to vector<16xf32>
    %357 = vector.shape_cast %356 : vector<16xf32> to vector<16x1xf32>
    %358 = vector.broadcast %357 : vector<16x1xf32> to vector<16x16xf32>
    %359 = arith.subf %355, %358 : vector<16x16xf32>
    %360 = math.exp %359 : vector<16x16xf32>
    %cst_159 = arith.constant dense<0.000000e+00> : vector<16xf32>
    %361 = vector.multi_reduction <add>, %360, %cst_159 [1] : vector<16x16xf32> to vector<16xf32>
    %362 = vector.shape_cast %361 : vector<16xf32> to vector<16x1xf32>
    %363 = tpu.reciprocal %362 {approx = true} : vector<16x1xf32> -> vector<16x1xf32>
    %364 = vector.broadcast %363 : vector<16x1xf32> to vector<16x16xf32>
    %365 = arith.mulf %360, %364 : vector<16x16xf32>
    %cst_160 = arith.constant dense<0.000000e+00> : vector<16x128xf32>
    %366 = tpu.matmul %365, %353, %cst_160 {dimension_numbers = #tpu.dot_dimension_numbers<[1], [0], [0], [1], [0, 0, 1, 1], [], []>} : vector<16x16xf32>, vector<16x128xf32>, vector<16x128xf32> -> vector<16x128xf32>
    %367 = vector.extract_strided_slice %318 {offsets = [0, 384], sizes = [16, 128], strides = [1, 1]} : vector<16x1536xf32> to vector<16x128xf32>
    %368 = vector.extract_strided_slice %318 {offsets = [0, 896], sizes = [16, 128], strides = [1, 1]} : vector<16x1536xf32> to vector<16x128xf32>
    %369 = vector.extract_strided_slice %318 {offsets = [0, 1408], sizes = [16, 128], strides = [1, 1]} : vector<16x1536xf32> to vector<16x128xf32>
    %cst_161 = arith.constant dense<0.000000e+00> : vector<16x16xf32>
    %370 = tpu.matmul %367, %368, %cst_161 {dimension_numbers = #tpu.dot_dimension_numbers<[1], [1], [0], [0], [0, 0, 1, 0], [], []>} : vector<16x128xf32>, vector<16x128xf32>, vector<16x16xf32> -> vector<16x16xf32>
    %371 = arith.addf %370, %0 : vector<16x16xf32>
    %cst_162 = arith.constant dense<0xFF800000> : vector<16xf32>
    %372 = vector.multi_reduction <maximumf>, %371, %cst_162 [1] : vector<16x16xf32> to vector<16xf32>
    %373 = vector.shape_cast %372 : vector<16xf32> to vector<16x1xf32>
    %374 = vector.broadcast %373 : vector<16x1xf32> to vector<16x16xf32>
    %375 = arith.subf %371, %374 : vector<16x16xf32>
    %376 = math.exp %375 : vector<16x16xf32>
    %cst_163 = arith.constant dense<0.000000e+00> : vector<16xf32>
    %377 = vector.multi_reduction <add>, %376, %cst_163 [1] : vector<16x16xf32> to vector<16xf32>
    %378 = vector.shape_cast %377 : vector<16xf32> to vector<16x1xf32>
    %379 = tpu.reciprocal %378 {approx = true} : vector<16x1xf32> -> vector<16x1xf32>
    %380 = vector.broadcast %379 : vector<16x1xf32> to vector<16x16xf32>
    %381 = arith.mulf %376, %380 : vector<16x16xf32>
    %cst_164 = arith.constant dense<0.000000e+00> : vector<16x128xf32>
    %382 = tpu.matmul %381, %369, %cst_164 {dimension_numbers = #tpu.dot_dimension_numbers<[1], [0], [0], [1], [0, 0, 1, 1], [], []>} : vector<16x16xf32>, vector<16x128xf32>, vector<16x128xf32> -> vector<16x128xf32>
    %383 = tpu.concatenate %334, %350, %366, %382 in 1 : vector<16x128xf32>, vector<16x128xf32>, vector<16x128xf32>, vector<16x128xf32> -> vector<16x512xf32>
    %c2_165 = arith.constant 2 : index
    %c0_166 = arith.constant 0 : index
    %c0_167 = arith.constant 0 : index
    %384 = vector.load %arg8[%c2_165, %c0_166, %c0_167] : memref<3x512x36xf32, #tpu.memory_space<vmem>>, vector<1x512x36xf32>
    %385 = vector.shape_cast %384 : vector<1x512x36xf32> to vector<512x36xf32>
    %cst_168 = arith.constant dense<0.000000e+00> : vector<16x36xf32>
    %386 = tpu.matmul %383, %385, %cst_168 {dimension_numbers = #tpu.dot_dimension_numbers<[1], [0], [0], [1], [0, 0, 1, 1], [], []>} : vector<16x512xf32>, vector<512x36xf32>, vector<16x36xf32> -> vector<16x36xf32>
    %c2_169 = arith.constant 2 : index
    %c0_170 = arith.constant 0 : index
    %c0_171 = arith.constant 0 : index
    %387 = vector.load %arg9[%c2_169, %c0_170, %c0_171] : memref<3x1x36xf32, #tpu.memory_space<vmem>>, vector<1x1x36xf32>
    %388 = vector.shape_cast %387 : vector<1x1x36xf32> to vector<1x36xf32>
    %389 = vector.broadcast %388 : vector<1x36xf32> to vector<16x36xf32>
    %390 = arith.addf %386, %389 : vector<16x36xf32>
    %391 = arith.addf %311, %390 : vector<16x36xf32>
    %c2_172 = arith.constant 2 : index
    %c0_173 = arith.constant 0 : index
    %c0_174 = arith.constant 0 : index
    %392 = vector.load %arg10[%c2_172, %c0_173, %c0_174] : memref<3x1x36xf32, #tpu.memory_space<vmem>>, vector<1x1x36xf32>
    %393 = vector.shape_cast %392 : vector<1x1x36xf32> to vector<1x36xf32>
    %c2_175 = arith.constant 2 : index
    %c0_176 = arith.constant 0 : index
    %c0_177 = arith.constant 0 : index
    %394 = vector.load %arg11[%c2_175, %c0_176, %c0_177] : memref<3x1x36xf32, #tpu.memory_space<vmem>>, vector<1x1x36xf32>
    %395 = vector.shape_cast %394 : vector<1x1x36xf32> to vector<1x36xf32>
    %cst_178 = arith.constant dense<0.000000e+00> : vector<16xf32>
    %396 = vector.multi_reduction <add>, %391, %cst_178 [1] : vector<16x36xf32> to vector<16xf32>
    %397 = vector.shape_cast %396 : vector<16xf32> to vector<16x1xf32>
    %cst_179 = arith.constant 3.600000e+01 : f32
    %398 = vector.broadcast %cst_179 : f32 to vector<16x1xf32>
    %399 = arith.divf %397, %398 : vector<16x1xf32>
    %400 = vector.broadcast %399 : vector<16x1xf32> to vector<16x36xf32>
    %401 = arith.subf %391, %400 : vector<16x36xf32>
    %402 = arith.mulf %401, %401 : vector<16x36xf32>
    %cst_180 = arith.constant dense<0.000000e+00> : vector<16xf32>
    %403 = vector.multi_reduction <add>, %402, %cst_180 [1] : vector<16x36xf32> to vector<16xf32>
    %404 = vector.shape_cast %403 : vector<16xf32> to vector<16x1xf32>
    %cst_181 = arith.constant 3.600000e+01 : f32
    %405 = vector.broadcast %cst_181 : f32 to vector<16x1xf32>
    %406 = arith.divf %404, %405 : vector<16x1xf32>
    %407 = vector.broadcast %399 : vector<16x1xf32> to vector<16x36xf32>
    %408 = arith.subf %391, %407 : vector<16x36xf32>
    %cst_182 = arith.constant 9.99999974E-6 : f32
    %409 = vector.broadcast %cst_182 : f32 to vector<16x1xf32>
    %410 = arith.addf %406, %409 : vector<16x1xf32>
    %411 = math.rsqrt %410 : vector<16x1xf32>
    %412 = vector.broadcast %411 : vector<16x1xf32> to vector<16x36xf32>
    %413 = arith.mulf %408, %412 : vector<16x36xf32>
    %414 = vector.broadcast %393 : vector<1x36xf32> to vector<16x36xf32>
    %415 = arith.mulf %413, %414 : vector<16x36xf32>
    %416 = vector.broadcast %395 : vector<1x36xf32> to vector<16x36xf32>
    %417 = arith.addf %415, %416 : vector<16x36xf32>
    %418 = arith.truncf %417 : vector<16x36xf32> to vector<16x36xbf16>
    %c2_183 = arith.constant 2 : index
    %c0_184 = arith.constant 0 : index
    %c0_185 = arith.constant 0 : index
    %419 = vector.load %arg12[%c2_183, %c0_184, %c0_185] : memref<3x36x2048xbf16, #tpu.memory_space<vmem>>, vector<1x36x2048xbf16>
    %420 = vector.shape_cast %419 : vector<1x36x2048xbf16> to vector<36x2048xbf16>
    %cst_186 = arith.constant dense<0.000000e+00> : vector<16x2048xf32>
    %421 = tpu.matmul %418, %420, %cst_186 {dimension_numbers = #tpu.dot_dimension_numbers<[1], [0], [0], [1], [0, 0, 1, 1], [], []>} : vector<16x36xbf16>, vector<36x2048xbf16>, vector<16x2048xf32> -> vector<16x2048xf32>
    %c2_187 = arith.constant 2 : index
    %c0_188 = arith.constant 0 : index
    %c0_189 = arith.constant 0 : index
    %422 = vector.load %arg13[%c2_187, %c0_188, %c0_189] : memref<3x1x2048xf32, #tpu.memory_space<vmem>>, vector<1x1x2048xf32>
    %423 = vector.shape_cast %422 : vector<1x1x2048xf32> to vector<1x2048xf32>
    %424 = vector.broadcast %423 : vector<1x2048xf32> to vector<16x2048xf32>
    %425 = arith.addf %421, %424 : vector<16x2048xf32>
    %cst_190 = arith.constant 0.000000e+00 : f32
    %426 = vector.broadcast %cst_190 : f32 to vector<16x2048xf32>
    %427 = arith.maximumf %425, %426 : vector<16x2048xf32>
    %428 = arith.truncf %427 : vector<16x2048xf32> to vector<16x2048xbf16>
    %c2_191 = arith.constant 2 : index
    %c0_192 = arith.constant 0 : index
    %c0_193 = arith.constant 0 : index
    %429 = vector.load %arg14[%c2_191, %c0_192, %c0_193] : memref<3x2048x36xbf16, #tpu.memory_space<vmem>>, vector<1x2048x36xbf16>
    %430 = vector.shape_cast %429 : vector<1x2048x36xbf16> to vector<2048x36xbf16>
    %cst_194 = arith.constant dense<0.000000e+00> : vector<16x36xf32>
    %431 = tpu.matmul %428, %430, %cst_194 {dimension_numbers = #tpu.dot_dimension_numbers<[1], [0], [0], [1], [0, 0, 1, 1], [], []>} : vector<16x2048xbf16>, vector<2048x36xbf16>, vector<16x36xf32> -> vector<16x36xf32>
    %c2_195 = arith.constant 2 : index
    %c0_196 = arith.constant 0 : index
    %c0_197 = arith.constant 0 : index
    %432 = vector.load %arg15[%c2_195, %c0_196, %c0_197] : memref<3x1x36xf32, #tpu.memory_space<vmem>>, vector<1x1x36xf32>
    %433 = vector.shape_cast %432 : vector<1x1x36xf32> to vector<1x36xf32>
    %434 = vector.broadcast %433 : vector<1x36xf32> to vector<16x36xf32>
    %435 = arith.addf %431, %434 : vector<16x36xf32>
    %436 = arith.addf %417, %435 : vector<16x36xf32>
    %c2_198 = arith.constant 2 : index
    %c0_199 = arith.constant 0 : index
    %c0_200 = arith.constant 0 : index
    %437 = vector.load %arg16[%c2_198, %c0_199, %c0_200] : memref<3x1x36xf32, #tpu.memory_space<vmem>>, vector<1x1x36xf32>
    %438 = vector.shape_cast %437 : vector<1x1x36xf32> to vector<1x36xf32>
    %c2_201 = arith.constant 2 : index
    %c0_202 = arith.constant 0 : index
    %c0_203 = arith.constant 0 : index
    %439 = vector.load %arg17[%c2_201, %c0_202, %c0_203] : memref<3x1x36xf32, #tpu.memory_space<vmem>>, vector<1x1x36xf32>
    %440 = vector.shape_cast %439 : vector<1x1x36xf32> to vector<1x36xf32>
    %cst_204 = arith.constant dense<0.000000e+00> : vector<16xf32>
    %441 = vector.multi_reduction <add>, %436, %cst_204 [1] : vector<16x36xf32> to vector<16xf32>
    %442 = vector.shape_cast %441 : vector<16xf32> to vector<16x1xf32>
    %cst_205 = arith.constant 3.600000e+01 : f32
    %443 = vector.broadcast %cst_205 : f32 to vector<16x1xf32>
    %444 = arith.divf %442, %443 : vector<16x1xf32>
    %445 = vector.broadcast %444 : vector<16x1xf32> to vector<16x36xf32>
    %446 = arith.subf %436, %445 : vector<16x36xf32>
    %447 = arith.mulf %446, %446 : vector<16x36xf32>
    %cst_206 = arith.constant dense<0.000000e+00> : vector<16xf32>
    %448 = vector.multi_reduction <add>, %447, %cst_206 [1] : vector<16x36xf32> to vector<16xf32>
    %449 = vector.shape_cast %448 : vector<16xf32> to vector<16x1xf32>
    %cst_207 = arith.constant 3.600000e+01 : f32
    %450 = vector.broadcast %cst_207 : f32 to vector<16x1xf32>
    %451 = arith.divf %449, %450 : vector<16x1xf32>
    %452 = vector.broadcast %444 : vector<16x1xf32> to vector<16x36xf32>
    %453 = arith.subf %436, %452 : vector<16x36xf32>
    %cst_208 = arith.constant 9.99999974E-6 : f32
    %454 = vector.broadcast %cst_208 : f32 to vector<16x1xf32>
    %455 = arith.addf %451, %454 : vector<16x1xf32>
    %456 = math.rsqrt %455 : vector<16x1xf32>
    %457 = vector.broadcast %456 : vector<16x1xf32> to vector<16x36xf32>
    %458 = arith.mulf %453, %457 : vector<16x36xf32>
    %459 = vector.broadcast %438 : vector<1x36xf32> to vector<16x36xf32>
    %460 = arith.mulf %458, %459 : vector<16x36xf32>
    %461 = vector.broadcast %440 : vector<1x36xf32> to vector<16x36xf32>
    %462 = arith.addf %460, %461 : vector<16x36xf32>
    %c0_209 = arith.constant 0 : index
    %c0_210 = arith.constant 0 : index
    %463 = vector.load %arg18[%c0_209, %c0_210] : memref<36x4xf32, #tpu.memory_space<vmem>>, vector<36x4xf32>
    %cst_211 = arith.constant dense<0.000000e+00> : vector<16x4xf32>
    %464 = tpu.matmul %462, %463, %cst_211 {dimension_numbers = #tpu.dot_dimension_numbers<[1], [0], [0], [1], [0, 0, 1, 1], [], []>} : vector<16x36xf32>, vector<36x4xf32>, vector<16x4xf32> -> vector<16x4xf32>
    %c0_212 = arith.constant 0 : index
    %c0_213 = arith.constant 0 : index
    %465 = vector.load %arg19[%c0_212, %c0_213] : memref<1x4xf32, #tpu.memory_space<vmem>>, vector<1x4xf32>
    %466 = vector.broadcast %465 : vector<1x4xf32> to vector<16x4xf32>
    %467 = arith.addf %464, %466 : vector<16x4xf32>
    %c0_214 = arith.constant 0 : index
    %c0_215 = arith.constant 0 : index
    %c0_216 = arith.constant 0 : index
    %468 = vector.load %arg20[%c0_214, %c0_215, %c0_216] : memref<1x16x4xf32, #tpu.memory_space<vmem>>, vector<1x16x4xf32>
    %469 = vector.shape_cast %468 : vector<1x16x4xf32> to vector<16x4xf32>
    %470 = vector.shape_cast %467 : vector<16x4xf32> to vector<1x16x4xf32>
    tpu.vector_store %arg20[%c0_214, %c0_215, %c0_216], %470 {strides = array<i32>} : memref<1x16x4xf32, #tpu.memory_space<vmem>>, vector<1x16x4xf32>,
    return
  }
  func.func @transform_0(%arg0: i32) -> (i32, i32, i32) {
    %c0_i32 = arith.constant 0 : i32
    %c0_i32_0 = arith.constant 0 : i32
    %c0_i32_1 = arith.constant 0 : i32
    return %arg0, %c0_i32, %c0_i32_0 : i32, i32, i32
  }
  func.func @transform_1(%arg0: i32) -> (i32, i32) {
    %c0_i32 = arith.constant 0 : i32
    %c0_i32_0 = arith.constant 0 : i32
    %c0_i32_1 = arith.constant 0 : i32
    return %c0_i32, %c0_i32_0 : i32, i32
  }
  func.func @transform_2(%arg0: i32) -> (i32, i32) {
    %c0_i32 = arith.constant 0 : i32
    %c0_i32_0 = arith.constant 0 : i32
    %c0_i32_1 = arith.constant 0 : i32
    return %c0_i32, %c0_i32_0 : i32, i32
  }
  func.func @transform_3(%arg0: i32) -> (i32, i32) {
    %c0_i32 = arith.constant 0 : i32
    %c0_i32_0 = arith.constant 0 : i32
    %c0_i32_1 = arith.constant 0 : i32
    return %c0_i32, %c0_i32_0 : i32, i32
  }
  func.func @transform_4(%arg0: i32) -> (i32, i32) {
    %c0_i32 = arith.constant 0 : i32
    %c0_i32_0 = arith.constant 0 : i32
    %c0_i32_1 = arith.constant 0 : i32
    return %c0_i32, %c0_i32_0 : i32, i32
  }
  func.func @transform_5(%arg0: i32) -> (i32, i32, i32) {
    %c0_i32 = arith.constant 0 : i32
    %c0_i32_0 = arith.constant 0 : i32
    %c0_i32_1 = arith.constant 0 : i32
    %c0_i32_2 = arith.constant 0 : i32
    return %c0_i32, %c0_i32_0, %c0_i32_1 : i32, i32, i32
  }
  func.func @transform_6(%arg0: i32) -> (i32, i32, i32) {
    %c0_i32 = arith.constant 0 : i32
    %c0_i32_0 = arith.constant 0 : i32
    %c0_i32_1 = arith.constant 0 : i32
    %c0_i32_2 = arith.constant 0 : i32
    return %c0_i32, %c0_i32_0, %c0_i32_1 : i32, i32, i32
  }
  func.func @transform_7(%arg0: i32) -> (i32, i32, i32) {
    %c0_i32 = arith.constant 0 : i32
    %c0_i32_0 = arith.constant 0 : i32
    %c0_i32_1 = arith.constant 0 : i32
    %c0_i32_2 = arith.constant 0 : i32
    return %c0_i32, %c0_i32_0, %c0_i32_1 : i32, i32, i32
  }
  func.func @transform_8(%arg0: i32) -> (i32, i32, i32) {
    %c0_i32 = arith.constant 0 : i32
    %c0_i32_0 = arith.constant 0 : i32
    %c0_i32_1 = arith.constant 0 : i32
    %c0_i32_2 = arith.constant 0 : i32
    return %c0_i32, %c0_i32_0, %c0_i32_1 : i32, i32, i32
  }
  func.func @transform_9(%arg0: i32) -> (i32, i32, i32) {
    %c0_i32 = arith.constant 0 : i32
    %c0_i32_0 = arith.constant 0 : i32
    %c0_i32_1 = arith.constant 0 : i32
    %c0_i32_2 = arith.constant 0 : i32
    return %c0_i32, %c0_i32_0, %c0_i32_1 : i32, i32, i32
  }
  func.func @transform_10(%arg0: i32) -> (i32, i32, i32) {
    %c0_i32 = arith.constant 0 : i32
    %c0_i32_0 = arith.constant 0 : i32
    %c0_i32_1 = arith.constant 0 : i32
    %c0_i32_2 = arith.constant 0 : i32
    return %c0_i32, %c0_i32_0, %c0_i32_1 : i32, i32, i32
  }
  func.func @transform_11(%arg0: i32) -> (i32, i32, i32) {
    %c0_i32 = arith.constant 0 : i32
    %c0_i32_0 = arith.constant 0 : i32
    %c0_i32_1 = arith.constant 0 : i32
    %c0_i32_2 = arith.constant 0 : i32
    return %c0_i32, %c0_i32_0, %c0_i32_1 : i32, i32, i32
  }
  func.func @transform_12(%arg0: i32) -> (i32, i32, i32) {
    %c0_i32 = arith.constant 0 : i32
    %c0_i32_0 = arith.constant 0 : i32
    %c0_i32_1 = arith.constant 0 : i32
    %c0_i32_2 = arith.constant 0 : i32
    return %c0_i32, %c0_i32_0, %c0_i32_1 : i32, i32, i32
  }
  func.func @transform_13(%arg0: i32) -> (i32, i32, i32) {
    %c0_i32 = arith.constant 0 : i32
    %c0_i32_0 = arith.constant 0 : i32
    %c0_i32_1 = arith.constant 0 : i32
    %c0_i32_2 = arith.constant 0 : i32
    return %c0_i32, %c0_i32_0, %c0_i32_1 : i32, i32, i32
  }
  func.func @transform_14(%arg0: i32) -> (i32, i32, i32) {
    %c0_i32 = arith.constant 0 : i32
    %c0_i32_0 = arith.constant 0 : i32
    %c0_i32_1 = arith.constant 0 : i32
    %c0_i32_2 = arith.constant 0 : i32
    return %c0_i32, %c0_i32_0, %c0_i32_1 : i32, i32, i32
  }
  func.func @transform_15(%arg0: i32) -> (i32, i32, i32) {
    %c0_i32 = arith.constant 0 : i32
    %c0_i32_0 = arith.constant 0 : i32
    %c0_i32_1 = arith.constant 0 : i32
    %c0_i32_2 = arith.constant 0 : i32
    return %c0_i32, %c0_i32_0, %c0_i32_1 : i32, i32, i32
  }
  func.func @transform_16(%arg0: i32) -> (i32, i32, i32) {
    %c0_i32 = arith.constant 0 : i32
    %c0_i32_0 = arith.constant 0 : i32
    %c0_i32_1 = arith.constant 0 : i32
    %c0_i32_2 = arith.constant 0 : i32
    return %c0_i32, %c0_i32_0, %c0_i32_1 : i32, i32, i32
  }
  func.func @transform_17(%arg0: i32) -> (i32, i32) {
    %c0_i32 = arith.constant 0 : i32
    %c0_i32_0 = arith.constant 0 : i32
    %c0_i32_1 = arith.constant 0 : i32
    return %c0_i32, %c0_i32_0 : i32, i32
  }
  func.func @transform_18(%arg0: i32) -> (i32, i32) {
    %c0_i32 = arith.constant 0 : i32
    %c0_i32_0 = arith.constant 0 : i32
    %c0_i32_1 = arith.constant 0 : i32
    return %c0_i32, %c0_i32_0 : i32, i32
  }
  func.func @transform_19(%arg0: i32) -> (i32, i32, i32) {
    %c0_i32 = arith.constant 0 : i32
    %c0_i32_0 = arith.constant 0 : i32
    %c0_i32_1 = arith.constant 0 : i32
    return %arg0, %c0_i32, %c0_i32_0 : i32, i32, i32
  }
}

</mosaic_0001>

<llo_original>
// kernel: transam_forward.1
$region0: #{transam_forward.1}
  #allocation0 [shape = 'u32[]', space=smem, size = 0x4, offset = 0x4, fixed_abs, tag = 'smem constant byte address 0x4 - core index']
  #allocation1 [shape = 'u32[144,128]{1,0:T(1,128)}', space=vmem, size = 0x12000, scoped, tag = 'internal scratch']
  %s0 = inlined_call_operand.vmem [shape: f32[1,16,4], index: 0, kind: input, shape index: {}]
  %s1 = inlined_call_operand.vmem [shape: f32[16,36], index: 1, kind: input, shape index: {}]
  %s2 = inlined_call_operand.vmem [shape: f32[16,16], index: 2, kind: input, shape index: {}]
  %s3 = inlined_call_operand.vmem [shape: f32[4,36], index: 3, kind: input, shape index: {}]
  %s4 = inlined_call_operand.vmem [shape: f32[1,36], index: 4, kind: input, shape index: {}]
  %s5 = inlined_call_operand.vmem [shape: f32[3,36,1536], index: 5, kind: input, shape index: {}]
  %s6 = inlined_call_operand.vmem [shape: f32[3,1,1536], index: 6, kind: input, shape index: {}]
  %s7 = inlined_call_operand.vmem [shape: f32[3,512,36], index: 7, kind: input, shape index: {}]
  %s8 = inlined_call_operand.vmem [shape: f32[3,1,36], index: 8, kind: input, shape index: {}]
  %s9 = inlined_call_operand.vmem [shape: f32[3,1,36], index: 9, kind: input, shape index: {}]
  %s10 = inlined_call_operand.vmem [shape: f32[3,1,36], index: 10, kind: input, shape index: {}]
  %s11 = inlined_call_operand.vmem [shape: bf16[3,36,2048], index: 11, kind: input, shape index: {}]
  %s12 = inlined_call_operand.vmem [shape: f32[3,1,2048], index: 12, kind: input, shape index: {}]
  %s13 = inlined_call_operand.vmem [shape: bf16[3,2048,36], index: 13, kind: input, shape index: {}]
  %s14 = inlined_call_operand.vmem [shape: f32[3,1,36], index: 14, kind: input, shape index: {}]
  %s15 = inlined_call_operand.vmem [shape: f32[3,1,36], index: 15, kind: input, shape index: {}]
  %s16 = inlined_call_operand.vmem [shape: f32[3,1,36], index: 16, kind: input, shape index: {}]
  %s17 = inlined_call_operand.vmem [shape: f32[36,4], index: 17, kind: input, shape index: {}]
  %s18 = inlined_call_operand.vmem [shape: f32[1,4], index: 18, kind: input, shape index: {}]
  %s19 = inlined_call_operand.vmem [shape: f32[1,16,4], index: 19, kind: output, shape index: {}]
  %s20 = sld [smem:[#allocation0]]
  $region86: #{transam_forward.1} parent=0
    _
  %s22 = ssub.s32 1, %s20
  %s23 = scalar_select 0, %s22, %s20
  // Predicated region
  $region2: #{transam_forward.1} parent=0 // pred_check
    _
  $region3: #{transam_forward.1} parent=0 // pred_check_branch
    %25 = sbr.rel (0) target = $region5
  $region4: #{transam_forward.1} parent=0 // pred_region
    _
  $region5: #{transam_forward.1} parent=0 // pred_fallthru
    _
  // Predicated region
  $region6: #{transam_forward.1} parent=0 // pred_check
    _
  $region7: #{transam_forward.1} parent=0 // pred_check_branch
    %27 = sbr.rel (0) target = $region9
  $region8: #{transam_forward.1} parent=0 // pred_region
    _
  $region9: #{transam_forward.1} parent=0 // pred_fallthru
    _
  // Predicated region
  $region10: #{transam_forward.1} parent=0 // pred_check
    _
  $region11: #{transam_forward.1} parent=0 // pred_check_branch
    %29 = sbr.rel (0) target = $region13
  $region12: #{transam_forward.1} parent=0 // pred_region
    _
  $region13: #{transam_forward.1} parent=0 // pred_fallthru
    _
  // Predicated region
  $region14: #{transam_forward.1} parent=0 // pred_check
    _
  $region15: #{transam_forward.1} parent=0 // pred_check_branch
    %31 = sbr.rel (0) target = $region17
  $region16: #{transam_forward.1} parent=0 // pred_region
    _
  $region17: #{transam_forward.1} parent=0 // pred_fallthru
    _
  // Predicated region
  $region18: #{transam_forward.1} parent=0 // pred_check
    _
  $region19: #{transam_forward.1} parent=0 // pred_check_branch
    %33 = sbr.rel (0) target = $region21
  $region20: #{transam_forward.1} parent=0 // pred_region
    _
  $region21: #{transam_forward.1} parent=0 // pred_fallthru
    _
  // Predicated region
  $region22: #{transam_forward.1} parent=0 // pred_check
    _
  $region23: #{transam_forward.1} parent=0 // pred_check_branch
    %35 = sbr.rel (0) target = $region25
  $region24: #{transam_forward.1} parent=0 // pred_region
    _
  $region25: #{transam_forward.1} parent=0 // pred_fallthru
    _
  // Predicated region
  $region26: #{transam_forward.1} parent=0 // pred_check
    _
  $region27: #{transam_forward.1} parent=0 // pred_check_branch
    %37 = sbr.rel (0) target = $region29
  $region28: #{transam_forward.1} parent=0 // pred_region
    _
  $region29: #{transam_forward.1} parent=0 // pred_fallthru
    _
  // Predicated region
  $region30: #{transam_forward.1} parent=0 // pred_check
    _
  $region31: #{transam_forward.1} parent=0 // pred_check_branch
    %39 = sbr.rel (0) target = $region33
  $region32: #{transam_forward.1} parent=0 // pred_region
    _
  $region33: #{transam_forward.1} parent=0 // pred_fallthru
    _
  // Predicated region
  $region34: #{transam_forward.1} parent=0 // pred_check
    _
  $region35: #{transam_forward.1} parent=0 // pred_check_branch
    %41 = sbr.rel (0) target = $region37
  $region36: #{transam_forward.1} parent=0 // pred_region
    _
  $region37: #{transam_forward.1} parent=0 // pred_fallthru
    _
  // Predicated region
  $region38: #{transam_forward.1} parent=0 // pred_check
    _
  $region39: #{transam_forward.1} parent=0 // pred_check_branch
    %43 = sbr.rel (0) target = $region41
  $region40: #{transam_forward.1} parent=0 // pred_region
    _
  $region41: #{transam_forward.1} parent=0 // pred_fallthru
    _
  // Predicated region
  $region42: #{transam_forward.1} parent=0 // pred_check
    _
  $region43: #{transam_forward.1} parent=0 // pred_check_branch
    %45 = sbr.rel (0) target = $region45
  $region44: #{transam_forward.1} parent=0 // pred_region
    _
  $region45: #{transam_forward.1} parent=0 // pred_fallthru
    _
  // Predicated region
  $region46: #{transam_forward.1} parent=0 // pred_check
    _
  $region47: #{transam_forward.1} parent=0 // pred_check_branch
    %47 = sbr.rel (0) target = $region49
  $region48: #{transam_forward.1} parent=0 // pred_region
    _
  $region49: #{transam_forward.1} parent=0 // pred_fallthru
    _
  // Predicated region
  $region50: #{transam_forward.1} parent=0 // pred_check
    _
  $region51: #{transam_forward.1} parent=0 // pred_check_branch
    %49 = sbr.rel (0) target = $region53
  $region52: #{transam_forward.1} parent=0 // pred_region
    _
  $region53: #{transam_forward.1} parent=0 // pred_fallthru
    _
  // Predicated region
  $region54: #{transam_forward.1} parent=0 // pred_check
    _
  $region55: #{transam_forward.1} parent=0 // pred_check_branch
    %51 = sbr.rel (0) target = $region57
  $region56: #{transam_forward.1} parent=0 // pred_region
    _
  $region57: #{transam_forward.1} parent=0 // pred_fallthru
    _
  // Predicated region
  $region58: #{transam_forward.1} parent=0 // pred_check
    _
  $region59: #{transam_forward.1} parent=0 // pred_check_branch
    %53 = sbr.rel (0) target = $region61
  $region60: #{transam_forward.1} parent=0 // pred_region
    _
  $region61: #{transam_forward.1} parent=0 // pred_fallthru
    _
  // Predicated region
  $region62: #{transam_forward.1} parent=0 // pred_check
    _
  $region63: #{transam_forward.1} parent=0 // pred_check_branch
    %55 = sbr.rel (0) target = $region65
  $region64: #{transam_forward.1} parent=0 // pred_region
    _
  $region65: #{transam_forward.1} parent=0 // pred_fallthru
    _
  // Predicated region
  $region66: #{transam_forward.1} parent=0 // pred_check
    _
  $region67: #{transam_forward.1} parent=0 // pred_check_branch
    %57 = sbr.rel (0) target = $region69
  $region68: #{transam_forward.1} parent=0 // pred_region
    _
  $region69: #{transam_forward.1} parent=0 // pred_fallthru
    _
  // Predicated region
  $region70: #{transam_forward.1} parent=0 // pred_check
    _
  $region71: #{transam_forward.1} parent=0 // pred_check_branch
    %59 = sbr.rel (0) target = $region73
  $region72: #{transam_forward.1} parent=0 // pred_region
    _
  $region73: #{transam_forward.1} parent=0 // pred_fallthru
    _
  // Predicated region
  $region74: #{transam_forward.1} parent=0 // pred_check
    _
  $region75: #{transam_forward.1} parent=0 // pred_check_branch
    %61 = sbr.rel (0) target = $region77
  $region76: #{transam_forward.1} parent=0 // pred_region
    _
  $region77: #{transam_forward.1} parent=0 // pred_fallthru
    _
  %v63 = vld [vmem:[%s2] sm:$0xff]
  %v64 = vld [vmem:[%s2 + $0x8] sm:$0xff]
  %v65 = vld [vmem:[%s0] sm:$0xff]
  %v66 = vld [vmem:[%s0 + $0x8] sm:$0xff]
  %v67 = vld [vmem:[%s3] sm:$0xf]
  %v68 = vld [vmem:[%s4] sm:$0x1]
  %v70 = vlaneseq
  %v71 = vshrl.u32 %v70, 7
  %v72 = vsub.s32 0, %v71
  %v73 = vrot.slane %v68, %v72
  %vm75 = vcmask 31744
  %v77 = vsel %vm75, %v65, 0
  %v80 = vsel %vm75, %v66, 0
  %vm82 = vcmask 1043456
  %v84 = vsel %vm82, %v67, 0
  %86 = vmatprep.subr.mxu0 0.0
  %87 = vmatpush1.msra.mxu0 %v84
  %88 = vmatprep.subr.mxu0 0.0
  %89 = vmatpush1.msra.mxu0 0.0
  %90 = vmatprep.subr.mxu0 0.0
  %91 = vmatpush1.msra.mxu0 0.0
  %92 = vmatprep.subr.mxu0 0.0
  %93 = vmatpush1.msra.mxu0 0.0
  %94 = vmatprep.subr.mxu0 0.0
  %95 = vmatpush1.msra.mxu0 0.0
  %96 = vmatprep.subr.mxu0 0.0
  %97 = vmatpush1.msra.mxu0 0.0
  %98 = vmatprep.subr.mxu0 0.0
  %99 = vmatpush1.msra.mxu0 0.0
  %100 = vmatprep.subr.mxu0 0.0
  %101 = vmatpush1.msra.mxu0 0.0
  %102 = vmatprep.subr.mxu0 0.0
  %103 = vmatpush1.msra.mxu0 0.0
  %104 = vmatprep.subr.mxu0 0.0
  %105 = vmatpush1.msra.mxu0 0.0
  %106 = vmatprep.subr.mxu0 0.0
  %107 = vmatpush1.msra.mxu0 0.0
  %108 = vmatprep.subr.mxu0 0.0
  %109 = vmatpush1.msra.mxu0 0.0
  %110 = vmatprep.subr.mxu0 0.0
  %111 = vmatpush1.msra.mxu0 0.0
  %112 = vmatprep.subr.mxu0 0.0
  %113 = vmatpush1.msra.mxu0 0.0
  %114 = vmatprep.subr.mxu0 0.0
  %115 = vmatpush1.msra.mxu0 0.0
  %116 = vmatprep.subr.mxu0 0.0
  %117 = vmatpush1.msra.mxu0 0.0
  %118 = vmatprep.subr.mxu0 0.0
  %119 = vmatpush1.msra.mxu0 0.0
  %120 = vmatprep.subr.mxu0 0.0
  %121 = vmatpush1.msra.mxu0 0.0
  %122 = vmatprep.subr.mxu0 0.0
  %123 = vmatpush1.msra.mxu0 0.0
  %124 = vmatprep.subr.mxu0 0.0
  %125 = vmatpush1.msra.mxu0 0.0
  %126 = vmatprep.subr.mxu0 0.0
  %127 = vmatpush1.msra.mxu0 0.0
  %128 = vmatprep.subr.mxu0 0.0
  %129 = vmatpush1.msra.mxu0 0.0
  %130 = vmatprep.subr.mxu0 0.0
  %131 = vmatpush1.msra.mxu0 0.0
  %132 = vmatprep.subr.mxu0 0.0
  %133 = vmatpush1.msra.mxu0 0.0
  %134 = vmatprep.subr.mxu0 0.0
  %135 = vmatpush1.msra.mxu0 0.0
  %136 = vmatprep.subr.mxu0 0.0
  %137 = vmatpush1.msra.mxu0 0.0
  %138 = vmatprep.subr.mxu0 0.0
  %139 = vmatpush1.msra.mxu0 0.0
  %140 = vmatprep.subr.mxu0 0.0
  %141 = vmatpush1.msra.mxu0 0.0
  %142 = vmatprep.subr.mxu0 0.0
  %143 = vmatpush1.msra.mxu0 0.0
  %144 = vmatprep.subr.mxu0 0.0
  %145 = vmatpush1.msra.mxu0 0.0
  %146 = vmatprep.subr.mxu0 0.0
  %147 = vmatpush1.msra.mxu0 0.0
  %148 = vmatprep.subr.mxu0 0.0
  %149 = vmatpush1.msra.mxu0 0.0
  %150 = vmatprep.mubr.f32.mxu0 0.0
  %151 = vmatmul.mubr.f32.gmra.mrb[0].mxu0 %v77
  %v152 = vpop.f32.mrb[0].mxu0
  %v153 = vadd.f32 %v73, %v152
  %v154 = vpop.f32.mrb[0].mxu0
  %155 = vmatprep.mubr.f32.mxu0 0.0
  %156 = vmatmul.mubr.f32.gmra.mrb[0].mxu0 %v80
  %v157 = vpop.f32.mrb[0].mxu0
  %v158 = vadd.f32 %v73, %v157
  %v159 = vpop.f32.mrb[0].mxu0
  %160 = vdwg.mxu0
  %v161 = vld [vmem:[%s1] sm:$0xff]
  %v162 = vld [vmem:[%s1 + $0x8] sm:$0xff]
  %v163 = vadd.f32 %v153, %v161
  %v164 = vadd.f32 %v158, %v162
  %v165 = vld [vmem:[%s5] sm:$0xff]
  %v166 = vld [vmem:[%s5 + $0x8] sm:$0xff]
  %v167 = vld [vmem:[%s5 + $0x10] sm:$0xff]
  %v168 = vld [vmem:[%s5 + $0x18] sm:$0xff]
  %v169 = vld [vmem:[%s5 + $0x20] sm:$0xff]
  %v170 = vld [vmem:[%s5 + $0x28] sm:$0xff]
  %v171 = vld [vmem:[%s5 + $0x30] sm:$0xff]
  %v172 = vld [vmem:[%s5 + $0x38] sm:$0xff]
  %v173 = vld [vmem:[%s5 + $0x40] sm:$0xff]
  %v174 = vld [vmem:[%s5 + $0x48] sm:$0xff]
  %v175 = vld [vmem:[%s5 + $0x50] sm:$0xff]
  %v176 = vld [vmem:[%s5 + $0x58] sm:$0xff]
  %v177 = vld [vmem:[%s5 + $0x60] sm:$0xff]
  %v178 = vld [vmem:[%s5 + $0x68] sm:$0xff]
  %v179 = vld [vmem:[%s5 + $0x70] sm:$0xff]
  %v180 = vld [vmem:[%s5 + $0x78] sm:$0xff]
  %v181 = vld [vmem:[%s5 + $0x80] sm:$0xff]
  %v182 = vld [vmem:[%s5 + $0x88] sm:$0xff]
  %v183 = vld [vmem:[%s5 + $0x90] sm:$0xff]
  %v184 = vld [vmem:[%s5 + $0x98] sm:$0xff]
  %v185 = vld [vmem:[%s5 + $0xa0] sm:$0xff]
  %v186 = vld [vmem:[%s5 + $0xa8] sm:$0xff]
  %v187 = vld [vmem:[%s5 + $0xb0] sm:$0xff]
  %v188 = vld [vmem:[%s5 + $0xb8] sm:$0xff]
  %v189 = vld [vmem:[%s5 + $0xc0] sm:$0xff]
  %v190 = vld [vmem:[%s5 + $0xc8] sm:$0xff]
  %v191 = vld [vmem:[%s5 + $0xd0] sm:$0xff]
  %v192 = vld [vmem:[%s5 + $0xd8] sm:$0xff]
  %v193 = vld [vmem:[%s5 + $0xe0] sm:$0xff]
  %v194 = vld [vmem:[%s5 + $0xe8] sm:$0xff]
  %v195 = vld [vmem:[%s5 + $0xf0] sm:$0xff]
  %v196 = vld [vmem:[%s5 + $0xf8] sm:$0xff]
  %v197 = vld [vmem:[%s5 + $0x100] sm:$0xff]
  %v198 = vld [vmem:[%s5 + $0x108] sm:$0xff]
  %v199 = vld [vmem:[%s5 + $0x110] sm:$0xff]
  %v200 = vld [vmem:[%s5 + $0x118] sm:$0xff]
  %v201 = vld [vmem:[%s5 + $0x120] sm:$0xff]
  %v202 = vld [vmem:[%s5 + $0x128] sm:$0xff]
  %v203 = vld [vmem:[%s5 + $0x130] sm:$0xff]
  %v204 = vld [vmem:[%s5 + $0x138] sm:$0xff]
  %v205 = vld [vmem:[%s5 + $0x140] sm:$0xff]
  %v206 = vld [vmem:[%s5 + $0x148] sm:$0xff]
  %v207 = vld [vmem:[%s5 + $0x150] sm:$0xff]
  %v208 = vld [vmem:[%s5 + $0x158] sm:$0xff]
  %v209 = vld [vmem:[%s5 + $0x160] sm:$0xff]
  %v210 = vld [vmem:[%s5 + $0x168] sm:$0xff]
  %v211 = vld [vmem:[%s5 + $0x170] sm:$0xff]
  %v212 = vld [vmem:[%s5 + $0x178] sm:$0xff]
  %v213 = vld [vmem:[%s5 + $0x180] sm:$0xf]
  %v214 = vld [vmem:[%s5 + $0x188] sm:$0xf]
  %v215 = vld [vmem:[%s5 + $0x190] sm:$0xf]
  %v216 = vld [vmem:[%s5 + $0x198] sm:$0xf]
  %v217 = vld [vmem:[%s5 + $0x1a0] sm:$0xf]
  %v218 = vld [vmem:[%s5 + $0x1a8] sm:$0xf]
  %v219 = vld [vmem:[%s5 + $0x1b0] sm:$0xf]
  %v220 = vld [vmem:[%s5 + $0x1b8] sm:$0xf]
  %v221 = vld [vmem:[%s5 + $0x1c0] sm:$0xf]
  %v222 = vld [vmem:[%s5 + $0x1c8] sm:$0xf]
  %v223 = vld [vmem:[%s5 + $0x1d0] sm:$0xf]
  %v224 = vld [vmem:[%s5 + $0x1d8] sm:$0xf]
  %v225 = vld [vmem:[%s6] sm:$0xff]
  %v226 = vld [vmem:[%s6 + $0x8] sm:$0xf]
  %v229 = vlaneseq
  %v230 = vshrl.u32 %v229, 7
  %v231 = vsub.s32 0, %v230
  %v232 = vrot.slane %v225, %v231
  %v233 = vlaneseq
  %v234 = vshrl.u32 %v233, 7
  %v235 = vsub.s32 1, %v234
  %v236 = vrot.slane %v225, %v235
  %v237 = vlaneseq
  %v238 = vshrl.u32 %v237, 7
  %v239 = vsub.s32 2, %v238
  %v240 = vrot.slane %v225, %v239
  %v241 = vlaneseq
  %v242 = vshrl.u32 %v241, 7
  %v243 = vsub.s32 3, %v242
  %v244 = vrot.slane %v225, %v243
  %v245 = vlaneseq
  %v246 = vshrl.u32 %v245, 7
  %v247 = vsub.s32 4, %v246
  %v248 = vrot.slane %v225, %v247
  %v249 = vlaneseq
  %v250 = vshrl.u32 %v249, 7
  %v251 = vsub.s32 5, %v250
  %v252 = vrot.slane %v225, %v251
  %v253 = vlaneseq
  %v254 = vshrl.u32 %v253, 7
  %v255 = vsub.s32 6, %v254
  %v256 = vrot.slane %v225, %v255
  %v257 = vlaneseq
  %v258 = vshrl.u32 %v257, 7
  %v259 = vsub.s32 7, %v258
  %v260 = vrot.slane %v225, %v259
  %v261 = vlaneseq
  %v262 = vshrl.u32 %v261, 7
  %v263 = vsub.s32 0, %v262
  %v264 = vrot.slane %v226, %v263
  %v265 = vlaneseq
  %v266 = vshrl.u32 %v265, 7
  %v267 = vsub.s32 1, %v266
  %v268 = vrot.slane %v226, %v267
  %v269 = vlaneseq
  %v270 = vshrl.u32 %v269, 7
  %v271 = vsub.s32 2, %v270
  %v272 = vrot.slane %v226, %v271
  %v273 = vlaneseq
  %v274 = vshrl.u32 %v273, 7
  %v275 = vsub.s32 3, %v274
  %v276 = vrot.slane %v226, %v275
  %vm289 = vcmask 293888
  %v291 = vsel %vm289, %v163, 0
  %v294 = vsel %vm289, %v164, 0
  %v297 = vsel %vm82, %v213, 0
  %v300 = vsel %vm82, %v214, 0
  %v303 = vsel %vm82, %v215, 0
  %v306 = vsel %vm82, %v216, 0
  %v309 = vsel %vm82, %v217, 0
  %v312 = vsel %vm82, %v218, 0
  %v315 = vsel %vm82, %v219, 0
  %v318 = vsel %vm82, %v220, 0
  %v321 = vsel %vm82, %v221, 0
  %v324 = vsel %vm82, %v222, 0
  %v327 = vsel %vm82, %v223, 0
  %v330 = vsel %vm82, %v224, 0
  %332 = vmatprep.subr.mxu0 %v166
  %333 = vmatpush1.msra.mxu0 %v165
  %334 = vmatprep.subr.mxu0 %v178
  %335 = vmatpush1.msra.mxu0 %v177
  %336 = vmatprep.subr.mxu0 %v190
  %337 = vmatpush1.msra.mxu0 %v189
  %338 = vmatprep.subr.mxu0 %v202
  %339 = vmatpush1.msra.mxu0 %v201
  %340 = vmatprep.subr.mxu0 %v300
  %341 = vmatpush1.msra.mxu0 %v297
  %342 = vmatprep.subr.mxu0 0.0
  %343 = vmatpush1.msra.mxu0 0.0
  %344 = vmatprep.subr.mxu0 0.0
  %345 = vmatpush1.msra.mxu0 0.0
  %346 = vmatprep.subr.mxu0 0.0
  %347 = vmatpush1.msra.mxu0 0.0
  %348 = vmatprep.subr.mxu0 0.0
  %349 = vmatpush1.msra.mxu0 0.0
  %350 = vmatprep.subr.mxu0 0.0
  %351 = vmatpush1.msra.mxu0 0.0
  %352 = vmatprep.subr.mxu0 0.0
  %353 = vmatpush1.msra.mxu0 0.0
  %354 = vmatprep.subr.mxu0 0.0
  %355 = vmatpush1.msra.mxu0 0.0
  %356 = vmatprep.subr.mxu0 0.0
  %357 = vmatpush1.msra.mxu0 0.0
  %358 = vmatprep.subr.mxu0 0.0
  %359 = vmatpush1.msra.mxu0 0.0
  %360 = vmatprep.subr.mxu0 0.0
  %361 = vmatpush1.msra.mxu0 0.0
  %362 = vmatprep.subr.mxu0 0.0
  %363 = vmatpush1.msra.mxu0 0.0
  %364 = vmatprep.subr.mxu0 0.0
  %365 = vmatpush1.msra.mxu0 0.0
  %366 = vmatprep.subr.mxu0 0.0
  %367 = vmatpush1.msra.mxu0 0.0
  %368 = vmatprep.subr.mxu0 0.0
  %369 = vmatpush1.msra.mxu0 0.0
  %370 = vmatprep.subr.mxu0 0.0
  %371 = vmatpush1.msra.mxu0 0.0
  %372 = vmatprep.subr.mxu0 0.0
  %373 = vmatpush1.msra.mxu0 0.0
  %374 = vmatprep.subr.mxu0 0.0
  %375 = vmatpush1.msra.mxu0 0.0
  %376 = vmatprep.subr.mxu0 0.0
  %377 = vmatpush1.msra.mxu0 0.0
  %378 = vmatprep.subr.mxu0 0.0
  %379 = vmatpush1.msra.mxu0 0.0
  %380 = vmatprep.subr.mxu0 0.0
  %381 = vmatpush1.msra.mxu0 0.0
  %382 = vmatprep.subr.mxu0 0.0
  %383 = vmatpush1.msra.mxu0 0.0
  %384 = vmatprep.subr.mxu0 0.0
  %385 = vmatpush1.msra.mxu0 0.0
  %386 = vmatprep.subr.mxu0 0.0
  %387 = vmatpush1.msra.mxu0 0.0
  %388 = vmatprep.subr.mxu0 0.0
  %389 = vmatpush1.msra.mxu0 0.0
  %390 = vmatprep.subr.mxu0 0.0
  %391 = vmatpush1.msra.mxu0 0.0
  %392 = vmatprep.subr.mxu0 0.0
  %393 = vmatpush1.msra.mxu0 0.0
  %394 = vmatprep.subr.mxu0 0.0
  %395 = vmatpush1.msra.mxu0 0.0
  %396 = vmatprep.mubr.f32.mxu0 0.0
  %397 = vmatmul.mubr.f32.gmra.mrb[0].mxu0 %v291
  %v398 = vpop.f32.mrb[0].mxu0
  %v399 = vadd.f32 %v232, %v398
  %v400 = vpop.f32.mrb[0].mxu0
  %v401 = vadd.f32 %v236, %v400
  %402 = vmatprep.mubr.f32.mxu0 0.0
  %403 = vmatmul.mubr.f32.gmra.mrb[0].mxu0 %v294
  %v404 = vpop.f32.mrb[0].mxu0
  %v405 = vadd.f32 %v232, %v404
  %v406 = vpop.f32.mrb[0].mxu0
  %v407 = vadd.f32 %v236, %v406
  %408 = vdwg.mxu0
  %409 = vmatprep.subr.mxu0 %v168
  %410 = vmatpush1.msra.mxu0 %v167
  %411 = vmatprep.subr.mxu0 %v180
  %412 = vmatpush1.msra.mxu0 %v179
  %413 = vmatprep.subr.mxu0 %v192
  %414 = vmatpush1.msra.mxu0 %v191
  %415 = vmatprep.subr.mxu0 %v204
  %416 = vmatpush1.msra.mxu0 %v203
  %417 = vmatprep.subr.mxu0 %v306
  %418 = vmatpush1.msra.mxu0 %v303
  %419 = vmatprep.subr.mxu0 0.0
  %420 = vmatpush1.msra.mxu0 0.0
  %421 = vmatprep.subr.mxu0 0.0
  %422 = vmatpush1.msra.mxu0 0.0
  %423 = vmatprep.subr.mxu0 0.0
  %424 = vmatpush1.msra.mxu0 0.0
  %425 = vmatprep.subr.mxu0 0.0
  %426 = vmatpush1.msra.mxu0 0.0
  %427 = vmatprep.subr.mxu0 0.0
  %428 = vmatpush1.msra.mxu0 0.0
  %429 = vmatprep.subr.mxu0 0.0
  %430 = vmatpush1.msra.mxu0 0.0
  %431 = vmatprep.subr.mxu0 0.0
  %432 = vmatpush1.msra.mxu0 0.0
  %433 = vmatprep.subr.mxu0 0.0
  %434 = vmatpush1.msra.mxu0 0.0
  %435 = vmatprep.subr.mxu0 0.0
  %436 = vmatpush1.msra.mxu0 0.0
  %437 = vmatprep.subr.mxu0 0.0
  %438 = vmatpush1.msra.mxu0 0.0
  %439 = vmatprep.subr.mxu0 0.0
  %440 = vmatpush1.msra.mxu0 0.0
  %441 = vmatprep.subr.mxu0 0.0
  %442 = vmatpush1.msra.mxu0 0.0
  %443 = vmatprep.subr.mxu0 0.0
  %444 = vmatpush1.msra.mxu0 0.0
  %445 = vmatprep.subr.mxu0 0.0
  %446 = vmatpush1.msra.mxu0 0.0
  %447 = vmatprep.subr.mxu0 0.0
  %448 = vmatpush1.msra.mxu0 0.0
  %449 = vmatprep.subr.mxu0 0.0
  %450 = vmatpush1.msra.mxu0 0.0
  %451 = vmatprep.subr.mxu0 0.0
  %452 = vmatpush1.msra.mxu0 0.0
  %453 = vmatprep.subr.mxu0 0.0
  %454 = vmatpush1.msra.mxu0 0.0
  %455 = vmatprep.subr.mxu0 0.0
  %456 = vmatpush1.msra.mxu0 0.0
  %457 = vmatprep.subr.mxu0 0.0
  %458 = vmatpush1.msra.mxu0 0.0
  %459 = vmatprep.subr.mxu0 0.0
  %460 = vmatpush1.msra.mxu0 0.0
  %461 = vmatprep.subr.mxu0 0.0
  %462 = vmatpush1.msra.mxu0 0.0
  %463 = vmatprep.subr.mxu0 0.0
  %464 = vmatpush1.msra.mxu0 0.0
  %465 = vmatprep.subr.mxu0 0.0
  %466 = vmatpush1.msra.mxu0 0.0
  %467 = vmatprep.subr.mxu0 0.0
  %468 = vmatpush1.msra.mxu0 0.0
  %469 = vmatprep.subr.mxu0 0.0
  %470 = vmatpush1.msra.mxu0 0.0
  %471 = vmatprep.subr.mxu0 0.0
  %472 = vmatpush1.msra.mxu0 0.0
  %473 = vmatprep.mubr.f32.mxu0 0.0
  %474 = vmatmul.mubr.f32.gmra.mrb[0].mxu0 %v291
  %v475 = vpop.f32.mrb[0].mxu0
  %v476 = vadd.f32 %v240, %v475
  %v477 = vpop.f32.mrb[0].mxu0
  %v478 = vadd.f32 %v244, %v477
  %479 = vmatprep.mubr.f32.mxu0 0.0
  %480 = vmatmul.mubr.f32.gmra.mrb[0].mxu0 %v294
  %v481 = vpop.f32.mrb[0].mxu0
  %v482 = vadd.f32 %v240, %v481
  %v483 = vpop.f32.mrb[0].mxu0
  %v484 = vadd.f32 %v244, %v483
  %485 = vdwg.mxu0
  %486 = vmatprep.subr.mxu0 %v170
  %487 = vmatpush1.msra.mxu0 %v169
  %488 = vmatprep.subr.mxu0 %v182
  %489 = vmatpush1.msra.mxu0 %v181
  %490 = vmatprep.subr.mxu0 %v194
  %491 = vmatpush1.msra.mxu0 %v193
  %492 = vmatprep.subr.mxu0 %v206
  %493 = vmatpush1.msra.mxu0 %v205
  %494 = vmatprep.subr.mxu0 %v312
  %495 = vmatpush1.msra.mxu0 %v309
  %496 = vmatprep.subr.mxu0 0.0
  %497 = vmatpush1.msra.mxu0 0.0
  %498 = vmatprep.subr.mxu0 0.0
  %499 = vmatpush1.msra.mxu0 0.0
  %500 = vmatprep.subr.mxu0 0.0
  %501 = vmatpush1.msra.mxu0 0.0
  %502 = vmatprep.subr.mxu0 0.0
  %503 = vmatpush1.msra.mxu0 0.0
  %504 = vmatprep.subr.mxu0 0.0
  %505 = vmatpush1.msra.mxu0 0.0
  %506 = vmatprep.subr.mxu0 0.0
  %507 = vmatpush1.msra.mxu0 0.0
  %508 = vmatprep.subr.mxu0 0.0
  %509 = vmatpush1.msra.mxu0 0.0
  %510 = vmatprep.subr.mxu0 0.0
  %511 = vmatpush1.msra.mxu0 0.0
  %512 = vmatprep.subr.mxu0 0.0
  %513 = vmatpush1.msra.mxu0 0.0
  %514 = vmatprep.subr.mxu0 0.0
  %515 = vmatpush1.msra.mxu0 0.0
  %516 = vmatprep.subr.mxu0 0.0
  %517 = vmatpush1.msra.mxu0 0.0
  %518 = vmatprep.subr.mxu0 0.0
  %519 = vmatpush1.msra.mxu0 0.0
  %520 = vmatprep.subr.mxu0 0.0
  %521 = vmatpush1.msra.mxu0 0.0
  %522 = vmatprep.subr.mxu0 0.0
  %523 = vmatpush1.msra.mxu0 0.0
  %524 = vmatprep.subr.mxu0 0.0
  %525 = vmatpush1.msra.mxu0 0.0
  %526 = vmatprep.subr.mxu0 0.0
  %527 = vmatpush1.msra.mxu0 0.0
  %528 = vmatprep.subr.mxu0 0.0
  %529 = vmatpush1.msra.mxu0 0.0
  %530 = vmatprep.subr.mxu0 0.0
  %531 = vmatpush1.msra.mxu0 0.0
  %532 = vmatprep.subr.mxu0 0.0
  %533 = vmatpush1.msra.mxu0 0.0
  %534 = vmatprep.subr.mxu0 0.0
  %535 = vmatpush1.msra.mxu0 0.0
  %536 = vmatprep.subr.mxu0 0.0
  %537 = vmatpush1.msra.mxu0 0.0
  %538 = vmatprep.subr.mxu0 0.0
  %539 = vmatpush1.msra.mxu0 0.0
  %540 = vmatprep.subr.mxu0 0.0
  %541 = vmatpush1.msra.mxu0 0.0
  %542 = vmatprep.subr.mxu0 0.0
  %543 = vmatpush1.msra.mxu0 0.0
  %544 = vmatprep.subr.mxu0 0.0
  %545 = vmatpush1.msra.mxu0 0.0
  %546 = vmatprep.subr.mxu0 0.0
  %547 = vmatpush1.msra.mxu0 0.0
  %548 = vmatprep.subr.mxu0 0.0
  %549 = vmatpush1.msra.mxu0 0.0
  %550 = vmatprep.mubr.f32.mxu0 0.0
  %551 = vmatmul.mubr.f32.gmra.mrb[0].mxu0 %v291
  %v552 = vpop.f32.mrb[0].mxu0
  %v553 = vadd.f32 %v248, %v552
  %v554 = vpop.f32.mrb[0].mxu0
  %v555 = vadd.f32 %v252, %v554
  %556 = vmatprep.mubr.f32.mxu0 0.0
  %557 = vmatmul.mubr.f32.gmra.mrb[0].mxu0 %v294
  %v558 = vpop.f32.mrb[0].mxu0
  %v559 = vadd.f32 %v248, %v558
  %v560 = vpop.f32.mrb[0].mxu0
  %v561 = vadd.f32 %v252, %v560
  %562 = vdwg.mxu0
  %563 = vmatprep.subr.mxu0 %v172
  %564 = vmatpush1.msra.mxu0 %v171
  %565 = vmatprep.subr.mxu0 %v184
  %566 = vmatpush1.msra.mxu0 %v183
  %567 = vmatprep.subr.mxu0 %v196
  %568 = vmatpush1.msra.mxu0 %v195
  %569 = vmatprep.subr.mxu0 %v208
  %570 = vmatpush1.msra.mxu0 %v207
  %571 = vmatprep.subr.mxu0 %v318
  %572 = vmatpush1.msra.mxu0 %v315
  %573 = vmatprep.subr.mxu0 0.0
  %574 = vmatpush1.msra.mxu0 0.0
  %575 = vmatprep.subr.mxu0 0.0
  %576 = vmatpush1.msra.mxu0 0.0
  %577 = vmatprep.subr.mxu0 0.0
  %578 = vmatpush1.msra.mxu0 0.0
  %579 = vmatprep.subr.mxu0 0.0
  %580 = vmatpush1.msra.mxu0 0.0
  %581 = vmatprep.subr.mxu0 0.0
  %582 = vmatpush1.msra.mxu0 0.0
  %583 = vmatprep.subr.mxu0 0.0
  %584 = vmatpush1.msra.mxu0 0.0
  %585 = vmatprep.subr.mxu0 0.0
  %586 = vmatpush1.msra.mxu0 0.0
  %587 = vmatprep.subr.mxu0 0.0
  %588 = vmatpush1.msra.mxu0 0.0
  %589 = vmatprep.subr.mxu0 0.0
  %590 = vmatpush1.msra.mxu0 0.0
  %591 = vmatprep.subr.mxu0 0.0
  %592 = vmatpush1.msra.mxu0 0.0
  %593 = vmatprep.subr.mxu0 0.0
  %594 = vmatpush1.msra.mxu0 0.0
  %595 = vmatprep.subr.mxu0 0.0
  %596 = vmatpush1.msra.mxu0 0.0
  %597 = vmatprep.subr.mxu0 0.0
  %598 = vmatpush1.msra.mxu0 0.0
  %599 = vmatprep.subr.mxu0 0.0
  %600 = vmatpush1.msra.mxu0 0.0
  %601 = vmatprep.subr.mxu0 0.0
  %602 = vmatpush1.msra.mxu0 0.0
  %603 = vmatprep.subr.mxu0 0.0
  %604 = vmatpush1.msra.mxu0 0.0
  %605 = vmatprep.subr.mxu0 0.0
  %606 = vmatpush1.msra.mxu0 0.0
  %607 = vmatprep.subr.mxu0 0.0
  %608 = vmatpush1.msra.mxu0 0.0
  %609 = vmatprep.subr.mxu0 0.0
  %610 = vmatpush1.msra.mxu0 0.0
  %611 = vmatprep.subr.mxu0 0.0
  %612 = vmatpush1.msra.mxu0 0.0
  %613 = vmatprep.subr.mxu0 0.0
  %614 = vmatpush1.msra.mxu0 0.0
  %615 = vmatprep.subr.mxu0 0.0
  %616 = vmatpush1.msra.mxu0 0.0
  %617 = vmatprep.subr.mxu0 0.0
  %618 = vmatpush1.msra.mxu0 0.0
  %619 = vmatprep.subr.mxu0 0.0
  %620 = vmatpush1.msra.mxu0 0.0
  %621 = vmatprep.subr.mxu0 0.0
  %622 = vmatpush1.msra.mxu0 0.0
  %623 = vmatprep.subr.mxu0 0.0
  %624 = vmatpush1.msra.mxu0 0.0
  %625 = vmatprep.subr.mxu0 0.0
  %626 = vmatpush1.msra.mxu0 0.0
  %627 = vmatprep.mubr.f32.mxu0 0.0
  %628 = vmatmul.mubr.f32.gmra.mrb[0].mxu0 %v291
  %v629 = vpop.f32.mrb[0].mxu0
  %v630 = vadd.f32 %v256, %v629
  %v631 = vpop.f32.mrb[0].mxu0
  %v632 = vadd.f32 %v260, %v631
  %633 = vmatprep.mubr.f32.mxu0 0.0
  %634 = vmatmul.mubr.f32.gmra.mrb[0].mxu0 %v294
  %v635 = vpop.f32.mrb[0].mxu0
  %v636 = vadd.f32 %v256, %v635
  %v637 = vpop.f32.mrb[0].mxu0
  %v638 = vadd.f32 %v260, %v637
  %639 = vdwg.mxu0
  %640 = vmatprep.subr.mxu0 %v174
  %641 = vmatpush1.msra.mxu0 %v173
  %642 = vmatprep.subr.mxu0 %v186
  %643 = vmatpush1.msra.mxu0 %v185
  %644 = vmatprep.subr.mxu0 %v198
  %645 = vmatpush1.msra.mxu0 %v197
  %646 = vmatprep.subr.mxu0 %v210
  %647 = vmatpush1.msra.mxu0 %v209
  %648 = vmatprep.subr.mxu0 %v324
  %649 = vmatpush1.msra.mxu0 %v321
  %650 = vmatprep.subr.mxu0 0.0
  %651 = vmatpush1.msra.mxu0 0.0
  %652 = vmatprep.subr.mxu0 0.0
  %653 = vmatpush1.msra.mxu0 0.0
  %654 = vmatprep.subr.mxu0 0.0
  %655 = vmatpush1.msra.mxu0 0.0
  %656 = vmatprep.subr.mxu0 0.0
  %657 = vmatpush1.msra.mxu0 0.0
  %658 = vmatprep.subr.mxu0 0.0
  %659 = vmatpush1.msra.mxu0 0.0
  %660 = vmatprep.subr.mxu0 0.0
  %661 = vmatpush1.msra.mxu0 0.0
  %662 = vmatprep.subr.mxu0 0.0
  %663 = vmatpush1.msra.mxu0 0.0
  %664 = vmatprep.subr.mxu0 0.0
  %665 = vmatpush1.msra.mxu0 0.0
  %666 = vmatprep.subr.mxu0 0.0
  %667 = vmatpush1.msra.mxu0 0.0
  %668 = vmatprep.subr.mxu0 0.0
  %669 = vmatpush1.msra.mxu0 0.0
  %670 = vmatprep.subr.mxu0 0.0
  %671 = vmatpush1.msra.mxu0 0.0
  %672 = vmatprep.subr.mxu0 0.0
  %673 = vmatpush1.msra.mxu0 0.0
  %674 = vmatprep.subr.mxu0 0.0
  %675 = vmatpush1.msra.mxu0 0.0
  %676 = vmatprep.subr.mxu0 0.0
  %677 = vmatpush1.msra.mxu0 0.0
  %678 = vmatprep.subr.mxu0 0.0
  %679 = vmatpush1.msra.mxu0 0.0
  %680 = vmatprep.subr.mxu0 0.0
  %681 = vmatpush1.msra.mxu0 0.0
  %682 = vmatprep.subr.mxu0 0.0
  %683 = vmatpush1.msra.mxu0 0.0
  %684 = vmatprep.subr.mxu0 0.0
  %685 = vmatpush1.msra.mxu0 0.0
  %686 = vmatprep.subr.mxu0 0.0
  %687 = vmatpush1.msra.mxu0 0.0
  %688 = vmatprep.subr.mxu0 0.0
  %689 = vmatpush1.msra.mxu0 0.0
  %690 = vmatprep.subr.mxu0 0.0
  %691 = vmatpush1.msra.mxu0 0.0
  %692 = vmatprep.subr.mxu0 0.0
  %693 = vmatpush1.msra.mxu0 0.0
  %694 = vmatprep.subr.mxu0 0.0
  %695 = vmatpush1.msra.mxu0 0.0
  %696 = vmatprep.subr.mxu0 0.0
  %697 = vmatpush1.msra.mxu0 0.0
  %698 = vmatprep.subr.mxu0 0.0
  %699 = vmatpush1.msra.mxu0 0.0
  %700 = vmatprep.subr.mxu0 0.0
  %701 = vmatpush1.msra.mxu0 0.0
  %702 = vmatprep.subr.mxu0 0.0
  %703 = vmatpush1.msra.mxu0 0.0
  %704 = vmatprep.mubr.f32.mxu0 0.0
  %705 = vmatmul.mubr.f32.gmra.mrb[0].mxu0 %v291
  %v706 = vpop.f32.mrb[0].mxu0
  %v707 = vadd.f32 %v264, %v706
  %v708 = vpop.f32.mrb[0].mxu0
  %v709 = vadd.f32 %v268, %v708
  %710 = vmatprep.mubr.f32.mxu0 0.0
  %711 = vmatmul.mubr.f32.gmra.mrb[0].mxu0 %v294
  %v712 = vpop.f32.mrb[0].mxu0
  %v713 = vadd.f32 %v264, %v712
  %v714 = vpop.f32.mrb[0].mxu0
  %v715 = vadd.f32 %v268, %v714
  %716 = vdwg.mxu0
  %717 = vmatprep.subr.mxu0 %v176
  %718 = vmatpush1.msra.mxu0 %v175
  %719 = vmatprep.subr.mxu0 %v188
  %720 = vmatpush1.msra.mxu0 %v187
  %721 = vmatprep.subr.mxu0 %v200
  %722 = vmatpush1.msra.mxu0 %v199
  %723 = vmatprep.subr.mxu0 %v212
  %724 = vmatpush1.msra.mxu0 %v211
  %725 = vmatprep.subr.mxu0 %v330
  %726 = vmatpush1.msra.mxu0 %v327
  %727 = vmatprep.subr.mxu0 0.0
  %728 = vmatpush1.msra.mxu0 0.0
  %729 = vmatprep.subr.mxu0 0.0
  %730 = vmatpush1.msra.mxu0 0.0
  %731 = vmatprep.subr.mxu0 0.0
  %732 = vmatpush1.msra.mxu0 0.0
  %733 = vmatprep.subr.mxu0 0.0
  %734 = vmatpush1.msra.mxu0 0.0
  %735 = vmatprep.subr.mxu0 0.0
  %736 = vmatpush1.msra.mxu0 0.0
  %737 = vmatprep.subr.mxu0 0.0
  %738 = vmatpush1.msra.mxu0 0.0
  %739 = vmatprep.subr.mxu0 0.0
  %740 = vmatpush1.msra.mxu0 0.0
  %741 = vmatprep.subr.mxu0 0.0
  %742 = vmatpush1.msra.mxu0 0.0
  %743 = vmatprep.subr.mxu0 0.0
  %744 = vmatpush1.msra.mxu0 0.0
  %745 = vmatprep.subr.mxu0 0.0
  %746 = vmatpush1.msra.mxu0 0.0
  %747 = vmatprep.subr.mxu0 0.0
  %748 = vmatpush1.msra.mxu0 0.0
  %749 = vmatprep.subr.mxu0 0.0
  %750 = vmatpush1.msra.mxu0 0.0
  %751 = vmatprep.subr.mxu0 0.0
  %752 = vmatpush1.msra.mxu0 0.0
  %753 = vmatprep.subr.mxu0 0.0
  %754 = vmatpush1.msra.mxu0 0.0
  %755 = vmatprep.subr.mxu0 0.0
  %756 = vmatpush1.msra.mxu0 0.0
  %757 = vmatprep.subr.mxu0 0.0
  %758 = vmatpush1.msra.mxu0 0.0
  %759 = vmatprep.subr.mxu0 0.0
  %760 = vmatpush1.msra.mxu0 0.0
  %761 = vmatprep.subr.mxu0 0.0
  %762 = vmatpush1.msra.mxu0 0.0
  %763 = vmatprep.subr.mxu0 0.0
  %764 = vmatpush1.msra.mxu0 0.0
  %765 = vmatprep.subr.mxu0 0.0
  %766 = vmatpush1.msra.mxu0 0.0
  %767 = vmatprep.subr.mxu0 0.0
  %768 = vmatpush1.msra.mxu0 0.0
  %769 = vmatprep.subr.mxu0 0.0
  %770 = vmatpush1.msra.mxu0 0.0
  %771 = vmatprep.subr.mxu0 0.0
  %772 = vmatpush1.msra.mxu0 0.0
  %773 = vmatprep.subr.mxu0 0.0
  %774 = vmatpush1.msra.mxu0 0.0
  %775 = vmatprep.subr.mxu0 0.0
  %776 = vmatpush1.msra.mxu0 0.0
  %777 = vmatprep.subr.mxu0 0.0
  %778 = vmatpush1.msra.mxu0 0.0
  %779 = vmatprep.subr.mxu0 0.0
  %780 = vmatpush1.msra.mxu0 0.0
  %781 = vmatprep.mubr.f32.mxu0 0.0
  %782 = vmatmul.mubr.f32.gmra.mrb[0].mxu0 %v291
  %v783 = vpop.f32.mrb[0].mxu0
  %v784 = vadd.f32 %v272, %v783
  %v785 = vpop.f32.mrb[0].mxu0
  %v786 = vadd.f32 %v276, %v785
  %787 = vmatprep.mubr.f32.mxu0 0.0
  %788 = vmatmul.mubr.f32.gmra.mrb[0].mxu0 %v294
  %v789 = vpop.f32.mrb[0].mxu0
  %v790 = vadd.f32 %v272, %v789
  %v791 = vpop.f32.mrb[0].mxu0
  %v792 = vadd.f32 %v276, %v791
  %793 = vdwg.mxu0
  %794 = vmatprep.subr.mxu0 0.0
  %795 = vmatpush1.xpose.msra.mxu0 %v553
  %796 = vmatprep.subr.mxu0 0.0
  %797 = vmatpush1.xpose.msra.mxu0 %v559
  %798 = vmatprep.subr.mxu0 0.0
  %799 = vmatpush1.xpose.msra.mxu0 0.0
  %800 = vmatprep.subr.mxu0 0.0
  %801 = vmatpush1.xpose.msra.mxu0 0.0
  %802 = vmatprep.subr.mxu0 0.0
  %803 = vmatpush1.xpose.msra.mxu0 0.0
  %804 = vmatprep.subr.mxu0 0.0
  %805 = vmatpush1.xpose.msra.mxu0 0.0
  %806 = vmatprep.subr.mxu0 0.0
  %807 = vmatpush1.xpose.msra.mxu0 0.0
  %808 = vmatprep.subr.mxu0 0.0
  %809 = vmatpush1.xpose.msra.mxu0 0.0
  %810 = vmatprep.subr.mxu0 0.0
  %811 = vmatpush1.xpose.msra.mxu0 0.0
  %812 = vmatprep.subr.mxu0 0.0
  %813 = vmatpush1.xpose.msra.mxu0 0.0
  %814 = vmatprep.subr.mxu0 0.0
  %815 = vmatpush1.xpose.msra.mxu0 0.0
  %816 = vmatprep.subr.mxu0 0.0
  %817 = vmatpush1.xpose.msra.mxu0 0.0
  %818 = vmatprep.subr.mxu0 0.0
  %819 = vmatpush1.xpose.msra.mxu0 0.0
  %820 = vmatprep.subr.mxu0 0.0
  %821 = vmatpush1.xpose.msra.mxu0 0.0
  %822 = vmatprep.subr.mxu0 0.0
  %823 = vmatpush1.xpose.msra.mxu0 0.0
  %824 = vmatprep.subr.mxu0 0.0
  %825 = vmatpush1.xpose.msra.mxu0 0.0
  %826 = vmatprep.subr.mxu0 0.0
  %827 = vmatpush1.xpose.msra.mxu0 0.0
  %828 = vmatprep.subr.mxu0 0.0
  %829 = vmatpush1.xpose.msra.mxu0 0.0
  %830 = vmatprep.subr.mxu0 0.0
  %831 = vmatpush1.xpose.msra.mxu0 0.0
  %832 = vmatprep.subr.mxu0 0.0
  %833 = vmatpush1.xpose.msra.mxu0 0.0
  %834 = vmatprep.subr.mxu0 0.0
  %835 = vmatpush1.xpose.msra.mxu0 0.0
  %836 = vmatprep.subr.mxu0 0.0
  %837 = vmatpush1.xpose.msra.mxu0 0.0
  %838 = vmatprep.subr.mxu0 0.0
  %839 = vmatpush1.xpose.msra.mxu0 0.0
  %840 = vmatprep.subr.mxu0 0.0
  %841 = vmatpush1.xpose.msra.mxu0 0.0
  %842 = vmatprep.subr.mxu0 0.0
  %843 = vmatpush1.xpose.msra.mxu0 0.0
  %844 = vmatprep.subr.mxu0 0.0
  %845 = vmatpush1.xpose.msra.mxu0 0.0
  %846 = vmatprep.subr.mxu0 0.0
  %847 = vmatpush1.xpose.msra.mxu0 0.0
  %848 = vmatprep.subr.mxu0 0.0
  %849 = vmatpush1.xpose.msra.mxu0 0.0
  %850 = vmatprep.subr.mxu0 0.0
  %851 = vmatpush1.xpose.msra.mxu0 0.0
  %852 = vmatprep.subr.mxu0 0.0
  %853 = vmatpush1.xpose.msra.mxu0 0.0
  %854 = vmatprep.subr.mxu0 0.0
  %855 = vmatpush1.xpose.msra.mxu0 0.0
  %856 = vmatprep.subr.mxu0 0.0
  %857 = vmatpush1.xpose.msra.mxu0 0.0
  %858 = vmatprep.mubr.f32.mxu0 0.0
  %859 = vmatmul.mubr.f32.gmra.mrb[0].mxu0 %v399
  %v860 = vpop.f32.mrb[0].mxu0
  %v861 = vadd.f32 %v63, %v860
  %v862 = vpop.f32.mrb[0].mxu0
  %863 = vmatprep.mubr.f32.mxu0 0.0
  %864 = vmatmul.mubr.f32.gmra.mrb[0].mxu0 %v405
  %v865 = vpop.f32.mrb[0].mxu0
  %v866 = vadd.f32 %v64, %v865
  %v867 = vpop.f32.mrb[0].mxu0
  %868 = vdwg.mxu0
  %vm869 = vcmask 130048
  %v870 = vsel %vm869, %v861, -inf
  %871 = vmax.xlane.f32.xlu0 %v870
  %v872 = vpop.xlane.xlu0 %871
  %v873 = vsel %vm869, %v866, -inf
  %874 = vmax.xlane.f32.xlu0 %v873
  %v875 = vpop.xlane.xlu0 %874
  %v876 = vsub.f32 %v861, %v872
  %v877 = vsub.f32 %v866, %v875
  %v878 = vmul.f32 %v876, 1.442695
  %v879 = vpow.pop %v878
  %v880 = vmul.f32 %v877, 1.442695
  %v881 = vpow.pop %v880
  %v882 = vsel %vm869, %v879, 0.0
  %883 = vadd.xlane.f32.xlu0 %v882
  %v884 = vpop.xlane.xlu0 %883
  %v885 = vsel %vm869, %v881, 0.0
  %886 = vadd.xlane.f32.xlu0 %v885
  %v887 = vpop.xlane.xlu0 %886
  %v888 = vrcp.pop %v884
  %v889 = vrcp.pop %v887
  %v890 = vmul.f32 %v879, %v888
  %v891 = vmul.f32 %v881, %v889
  %v893 = vsel %vm869, %v890, 0
  %v896 = vsel %vm869, %v891, 0
  %898 = vmatprep.subr.mxu0 0.0
  %899 = vmatpush1.msra.mxu0 %v707
  %900 = vmatprep.subr.mxu0 0.0
  %901 = vmatpush1.msra.mxu0 %v713
  %902 = vmatprep.subr.mxu0 0.0
  %903 = vmatpush1.msra.mxu0 0.0
  %904 = vmatprep.subr.mxu0 0.0
  %905 = vmatpush1.msra.mxu0 0.0
  %906 = vmatprep.subr.mxu0 0.0
  %907 = vmatpush1.msra.mxu0 0.0
  %908 = vmatprep.subr.mxu0 0.0
  %909 = vmatpush1.msra.mxu0 0.0
  %910 = vmatprep.subr.mxu0 0.0
  %911 = vmatpush1.msra.mxu0 0.0
  %912 = vmatprep.subr.mxu0 0.0
  %913 = vmatpush1.msra.mxu0 0.0
  %914 = vmatprep.subr.mxu0 0.0
  %915 = vmatpush1.msra.mxu0 0.0
  %916 = vmatprep.subr.mxu0 0.0
  %917 = vmatpush1.msra.mxu0 0.0
  %918 = vmatprep.subr.mxu0 0.0
  %919 = vmatpush1.msra.mxu0 0.0
  %920 = vmatprep.subr.mxu0 0.0
  %921 = vmatpush1.msra.mxu0 0.0
  %922 = vmatprep.subr.mxu0 0.0
  %923 = vmatpush1.msra.mxu0 0.0
  %924 = vmatprep.subr.mxu0 0.0
  %925 = vmatpush1.msra.mxu0 0.0
  %926 = vmatprep.subr.mxu0 0.0
  %927 = vmatpush1.msra.mxu0 0.0
  %928 = vmatprep.subr.mxu0 0.0
  %929 = vmatpush1.msra.mxu0 0.0
  %930 = vmatprep.subr.mxu0 0.0
  %931 = vmatpush1.msra.mxu0 0.0
  %932 = vmatprep.subr.mxu0 0.0
  %933 = vmatpush1.msra.mxu0 0.0
  %934 = vmatprep.subr.mxu0 0.0
  %935 = vmatpush1.msra.mxu0 0.0
  %936 = vmatprep.subr.mxu0 0.0
  %937 = vmatpush1.msra.mxu0 0.0
  %938 = vmatprep.subr.mxu0 0.0
  %939 = vmatpush1.msra.mxu0 0.0
  %940 = vmatprep.subr.mxu0 0.0
  %941 = vmatpush1.msra.mxu0 0.0
  %942 = vmatprep.subr.mxu0 0.0
  %943 = vmatpush1.msra.mxu0 0.0
  %944 = vmatprep.subr.mxu0 0.0
  %945 = vmatpush1.msra.mxu0 0.0
  %946 = vmatprep.subr.mxu0 0.0
  %947 = vmatpush1.msra.mxu0 0.0
  %948 = vmatprep.subr.mxu0 0.0
  %949 = vmatpush1.msra.mxu0 0.0
  %950 = vmatprep.subr.mxu0 0.0
  %951 = vmatpush1.msra.mxu0 0.0
  %952 = vmatprep.subr.mxu0 0.0
  %953 = vmatpush1.msra.mxu0 0.0
  %954 = vmatprep.subr.mxu0 0.0
  %955 = vmatpush1.msra.mxu0 0.0
  %956 = vmatprep.subr.mxu0 0.0
  %957 = vmatpush1.msra.mxu0 0.0
  %958 = vmatprep.subr.mxu0 0.0
  %959 = vmatpush1.msra.mxu0 0.0
  %960 = vmatprep.subr.mxu0 0.0
  %961 = vmatpush1.msra.mxu0 0.0
  %962 = vmatprep.mubr.f32.mxu0 0.0
  %963 = vmatmul.mubr.f32.gmra.mrb[0].mxu0 %v893
  %v964 = vpop.f32.mrb[0].mxu0
  %v965 = vadd.f32 0.0, %v964
  %v966 = vpop.f32.mrb[0].mxu0
  %967 = vmatprep.mubr.f32.mxu0 0.0
  %968 = vmatmul.mubr.f32.gmra.mrb[0].mxu0 %v896
  %v969 = vpop.f32.mrb[0].mxu0
  %v970 = vadd.f32 0.0, %v969
  %v971 = vpop.f32.mrb[0].mxu0
  %972 = vdwg.mxu0
  %973 = vmatprep.subr.mxu0 0.0
  %974 = vmatpush1.xpose.msra.mxu0 %v555
  %975 = vmatprep.subr.mxu0 0.0
  %976 = vmatpush1.xpose.msra.mxu0 %v561
  %977 = vmatprep.subr.mxu0 0.0
  %978 = vmatpush1.xpose.msra.mxu0 0.0
  %979 = vmatprep.subr.mxu0 0.0
  %980 = vmatpush1.xpose.msra.mxu0 0.0
  %981 = vmatprep.subr.mxu0 0.0
  %982 = vmatpush1.xpose.msra.mxu0 0.0
  %983 = vmatprep.subr.mxu0 0.0
  %984 = vmatpush1.xpose.msra.mxu0 0.0
  %985 = vmatprep.subr.mxu0 0.0
  %986 = vmatpush1.xpose.msra.mxu0 0.0
  %987 = vmatprep.subr.mxu0 0.0
  %988 = vmatpush1.xpose.msra.mxu0 0.0
  %989 = vmatprep.subr.mxu0 0.0
  %990 = vmatpush1.xpose.msra.mxu0 0.0
  %991 = vmatprep.subr.mxu0 0.0
  %992 = vmatpush1.xpose.msra.mxu0 0.0
  %993 = vmatprep.subr.mxu0 0.0
  %994 = vmatpush1.xpose.msra.mxu0 0.0
  %995 = vmatprep.subr.mxu0 0.0
  %996 = vmatpush1.xpose.msra.mxu0 0.0
  %997 = vmatprep.subr.mxu0 0.0
  %998 = vmatpush1.xpose.msra.mxu0 0.0
  %999 = vmatprep.subr.mxu0 0.0
  %1000 = vmatpush1.xpose.msra.mxu0 0.0
  %1001 = vmatprep.subr.mxu0 0.0
  %1002 = vmatpush1.xpose.msra.mxu0 0.0
  %1003 = vmatprep.subr.mxu0 0.0
  %1004 = vmatpush1.xpose.msra.mxu0 0.0
  %1005 = vmatprep.subr.mxu0 0.0
  %1006 = vmatpush1.xpose.msra.mxu0 0.0
  %1007 = vmatprep.subr.mxu0 0.0
  %1008 = vmatpush1.xpose.msra.mxu0 0.0
  %1009 = vmatprep.subr.mxu0 0.0
  %1010 = vmatpush1.xpose.msra.mxu0 0.0
  %1011 = vmatprep.subr.mxu0 0.0
  %1012 = vmatpush1.xpose.msra.mxu0 0.0
  %1013 = vmatprep.subr.mxu0 0.0
  %1014 = vmatpush1.xpose.msra.mxu0 0.0
  %1015 = vmatprep.subr.mxu0 0.0
  %1016 = vmatpush1.xpose.msra.mxu0 0.0
  %1017 = vmatprep.subr.mxu0 0.0
  %1018 = vmatpush1.xpose.msra.mxu0 0.0
  %1019 = vmatprep.subr.mxu0 0.0
  %1020 = vmatpush1.xpose.msra.mxu0 0.0
  %1021 = vmatprep.subr.mxu0 0.0
  %1022 = vmatpush1.xpose.msra.mxu0 0.0
  %1023 = vmatprep.subr.mxu0 0.0
  %1024 = vmatpush1.xpose.msra.mxu0 0.0
  %1025 = vmatprep.subr.mxu0 0.0
  %1026 = vmatpush1.xpose.msra.mxu0 0.0
  %1027 = vmatprep.subr.mxu0 0.0
  %1028 = vmatpush1.xpose.msra.mxu0 0.0
  %1029 = vmatprep.subr.mxu0 0.0
  %1030 = vmatpush1.xpose.msra.mxu0 0.0
  %1031 = vmatprep.subr.mxu0 0.0
  %1032 = vmatpush1.xpose.msra.mxu0 0.0
  %1033 = vmatprep.subr.mxu0 0.0
  %1034 = vmatpush1.xpose.msra.mxu0 0.0
  %1035 = vmatprep.subr.mxu0 0.0
  %1036 = vmatpush1.xpose.msra.mxu0 0.0
  %1037 = vmatprep.mubr.f32.mxu0 0.0
  %1038 = vmatmul.mubr.f32.gmra.mrb[0].mxu0 %v401
  %v1039 = vpop.f32.mrb[0].mxu0
  %v1040 = vadd.f32 %v63, %v1039
  %v1041 = vpop.f32.mrb[0].mxu0
  %1042 = vmatprep.mubr.f32.mxu0 0.0
  %1043 = vmatmul.mubr.f32.gmra.mrb[0].mxu0 %v407
  %v1044 = vpop.f32.mrb[0].mxu0
  %v1045 = vadd.f32 %v64, %v1044
  %v1046 = vpop.f32.mrb[0].mxu0
  %1047 = vdwg.mxu0
  %v1048 = vsel %vm869, %v1040, -inf
  %1049 = vmax.xlane.f32.xlu0 %v1048
  %v1050 = vpop.xlane.xlu0 %1049
  %v1051 = vsel %vm869, %v1045, -inf
  %1052 = vmax.xlane.f32.xlu0 %v1051
  %v1053 = vpop.xlane.xlu0 %1052
  %v1054 = vsub.f32 %v1040, %v1050
  %v1055 = vsub.f32 %v1045, %v1053
  %v1056 = vmul.f32 %v1054, 1.442695
  %v1057 = vpow.pop %v1056
  %v1058 = vmul.f32 %v1055, 1.442695
  %v1059 = vpow.pop %v1058
  %v1060 = vsel %vm869, %v1057, 0.0
  %1061 = vadd.xlane.f32.xlu0 %v1060
  %v1062 = vpop.xlane.xlu0 %1061
  %v1063 = vsel %vm869, %v1059, 0.0
  %1064 = vadd.xlane.f32.xlu0 %v1063
  %v1065 = vpop.xlane.xlu0 %1064
  %v1066 = vrcp.pop %v1062
  %v1067 = vrcp.pop %v1065
  %v1068 = vmul.f32 %v1057, %v1066
  %v1069 = vmul.f32 %v1059, %v1067
  %v1071 = vsel %vm869, %v1068, 0
  %v1074 = vsel %vm869, %v1069, 0
  %1076 = vmatprep.subr.mxu0 0.0
  %1077 = vmatpush1.msra.mxu0 %v709
  %1078 = vmatprep.subr.mxu0 0.0
  %1079 = vmatpush1.msra.mxu0 %v715
  %1080 = vmatprep.subr.mxu0 0.0
  %1081 = vmatpush1.msra.mxu0 0.0
  %1082 = vmatprep.subr.mxu0 0.0
  %1083 = vmatpush1.msra.mxu0 0.0
  %1084 = vmatprep.subr.mxu0 0.0
  %1085 = vmatpush1.msra.mxu0 0.0
  %1086 = vmatprep.subr.mxu0 0.0
  %1087 = vmatpush1.msra.mxu0 0.0
  %1088 = vmatprep.subr.mxu0 0.0
  %1089 = vmatpush1.msra.mxu0 0.0
  %1090 = vmatprep.subr.mxu0 0.0
  %1091 = vmatpush1.msra.mxu0 0.0
  %1092 = vmatprep.subr.mxu0 0.0
  %1093 = vmatpush1.msra.mxu0 0.0
  %1094 = vmatprep.subr.mxu0 0.0
  %1095 = vmatpush1.msra.mxu0 0.0
  %1096 = vmatprep.subr.mxu0 0.0
  %1097 = vmatpush1.msra.mxu0 0.0
  %1098 = vmatprep.subr.mxu0 0.0
  %1099 = vmatpush1.msra.mxu0 0.0
  %1100 = vmatprep.subr.mxu0 0.0
  %1101 = vmatpush1.msra.mxu0 0.0
  %1102 = vmatprep.subr.mxu0 0.0
  %1103 = vmatpush1.msra.mxu0 0.0
  %1104 = vmatprep.subr.mxu0 0.0
  %1105 = vmatpush1.msra.mxu0 0.0
  %1106 = vmatprep.subr.mxu0 0.0
  %1107 = vmatpush1.msra.mxu0 0.0
  %1108 = vmatprep.subr.mxu0 0.0
  %1109 = vmatpush1.msra.mxu0 0.0
  %1110 = vmatprep.subr.mxu0 0.0
  %1111 = vmatpush1.msra.mxu0 0.0
  %1112 = vmatprep.subr.mxu0 0.0
  %1113 = vmatpush1.msra.mxu0 0.0
  %1114 = vmatprep.subr.mxu0 0.0
  %1115 = vmatpush1.msra.mxu0 0.0
  %1116 = vmatprep.subr.mxu0 0.0
  %1117 = vmatpush1.msra.mxu0 0.0
  %1118 = vmatprep.subr.mxu0 0.0
  %1119 = vmatpush1.msra.mxu0 0.0
  %1120 = vmatprep.subr.mxu0 0.0
  %1121 = vmatpush1.msra.mxu0 0.0
  %1122 = vmatprep.subr.mxu0 0.0
  %1123 = vmatpush1.msra.mxu0 0.0
  %1124 = vmatprep.subr.mxu0 0.0
  %1125 = vmatpush1.msra.mxu0 0.0
  %1126 = vmatprep.subr.mxu0 0.0
  %1127 = vmatpush1.msra.mxu0 0.0
  %1128 = vmatprep.subr.mxu0 0.0
  %1129 = vmatpush1.msra.mxu0 0.0
  %1130 = vmatprep.subr.mxu0 0.0
  %1131 = vmatpush1.msra.mxu0 0.0
  %1132 = vmatprep.subr.mxu0 0.0
  %1133 = vmatpush1.msra.mxu0 0.0
  %1134 = vmatprep.subr.mxu0 0.0
  %1135 = vmatpush1.msra.mxu0 0.0
  %1136 = vmatprep.subr.mxu0 0.0
  %1137 = vmatpush1.msra.mxu0 0.0
  %1138 = vmatprep.subr.mxu0 0.0
  %1139 = vmatpush1.msra.mxu0 0.0
  %1140 = vmatprep.mubr.f32.mxu0 0.0
  %1141 = vmatmul.mubr.f32.gmra.mrb[0].mxu0 %v1071
  %v1142 = vpop.f32.mrb[0].mxu0
  %v1143 = vadd.f32 0.0, %v1142
  %v1144 = vpop.f32.mrb[0].mxu0
  %1145 = vmatprep.mubr.f32.mxu0 0.0
  %1146 = vmatmul.mubr.f32.gmra.mrb[0].mxu0 %v1074
  %v1147 = vpop.f32.mrb[0].mxu0
  %v1148 = vadd.f32 0.0, %v1147
  %v1149 = vpop.f32.mrb[0].mxu0
  %1150 = vdwg.mxu0
  %1151 = vmatprep.subr.mxu0 0.0
  %1152 = vmatpush1.xpose.msra.mxu0 %v630
  %1153 = vmatprep.subr.mxu0 0.0
  %1154 = vmatpush1.xpose.msra.mxu0 %v636
  %1155 = vmatprep.subr.mxu0 0.0
  %1156 = vmatpush1.xpose.msra.mxu0 0.0
  %1157 = vmatprep.subr.mxu0 0.0
  %1158 = vmatpush1.xpose.msra.mxu0 0.0
  %1159 = vmatprep.subr.mxu0 0.0
  %1160 = vmatpush1.xpose.msra.mxu0 0.0
  %1161 = vmatprep.subr.mxu0 0.0
  %1162 = vmatpush1.xpose.msra.mxu0 0.0
  %1163 = vmatprep.subr.mxu0 0.0
  %1164 = vmatpush1.xpose.msra.mxu0 0.0
  %1165 = vmatprep.subr.mxu0 0.0
  %1166 = vmatpush1.xpose.msra.mxu0 0.0
  %1167 = vmatprep.subr.mxu0 0.0
  %1168 = vmatpush1.xpose.msra.mxu0 0.0
  %1169 = vmatprep.subr.mxu0 0.0
  %1170 = vmatpush1.xpose.msra.mxu0 0.0
  %1171 = vmatprep.subr.mxu0 0.0
  %1172 = vmatpush1.xpose.msra.mxu0 0.0
  %1173 = vmatprep.subr.mxu0 0.0
  %1174 = vmatpush1.xpose.msra.mxu0 0.0
  %1175 = vmatprep.subr.mxu0 0.0
  %1176 = vmatpush1.xpose.msra.mxu0 0.0
  %1177 = vmatprep.subr.mxu0 0.0
  %1178 = vmatpush1.xpose.msra.mxu0 0.0
  %1179 = vmatprep.subr.mxu0 0.0
  %1180 = vmatpush1.xpose.msra.mxu0 0.0
  %1181 = vmatprep.subr.mxu0 0.0
  %1182 = vmatpush1.xpose.msra.mxu0 0.0
  %1183 = vmatprep.subr.mxu0 0.0
  %1184 = vmatpush1.xpose.msra.mxu0 0.0
  %1185 = vmatprep.subr.mxu0 0.0
  %1186 = vmatpush1.xpose.msra.mxu0 0.0
  %1187 = vmatprep.subr.mxu0 0.0
  %1188 = vmatpush1.xpose.msra.mxu0 0.0
  %1189 = vmatprep.subr.mxu0 0.0
  %1190 = vmatpush1.xpose.msra.mxu0 0.0
  %1191 = vmatprep.subr.mxu0 0.0
  %1192 = vmatpush1.xpose.msra.mxu0 0.0
  %1193 = vmatprep.subr.mxu0 0.0
  %1194 = vmatpush1.xpose.msra.mxu0 0.0
  %1195 = vmatprep.subr.mxu0 0.0
  %1196 = vmatpush1.xpose.msra.mxu0 0.0
  %1197 = vmatprep.subr.mxu0 0.0
  %1198 = vmatpush1.xpose.msra.mxu0 0.0
  %1199 = vmatprep.subr.mxu0 0.0
  %1200 = vmatpush1.xpose.msra.mxu0 0.0
  %1201 = vmatprep.subr.mxu0 0.0
  %1202 = vmatpush1.xpose.msra.mxu0 0.0
  %1203 = vmatprep.subr.mxu0 0.0
  %1204 = vmatpush1.xpose.msra.mxu0 0.0
  %1205 = vmatprep.subr.mxu0 0.0
  %1206 = vmatpush1.xpose.msra.mxu0 0.0
  %1207 = vmatprep.subr.mxu0 0.0
  %1208 = vmatpush1.xpose.msra.mxu0 0.0
  %1209 = vmatprep.subr.mxu0 0.0
  %1210 = vmatpush1.xpose.msra.mxu0 0.0
  %1211 = vmatprep.subr.mxu0 0.0
  %1212 = vmatpush1.xpose.msra.mxu0 0.0
  %1213 = vmatprep.subr.mxu0 0.0
  %1214 = vmatpush1.xpose.msra.mxu0 0.0
  %1215 = vmatprep.mubr.f32.mxu0 0.0
  %1216 = vmatmul.mubr.f32.gmra.mrb[0].mxu0 %v476
  %v1217 = vpop.f32.mrb[0].mxu0
  %v1218 = vadd.f32 %v63, %v1217
  %v1219 = vpop.f32.mrb[0].mxu0
  %1220 = vmatprep.mubr.f32.mxu0 0.0
  %1221 = vmatmul.mubr.f32.gmra.mrb[0].mxu0 %v482
  %v1222 = vpop.f32.mrb[0].mxu0
  %v1223 = vadd.f32 %v64, %v1222
  %v1224 = vpop.f32.mrb[0].mxu0
  %1225 = vdwg.mxu0
  %v1226 = vsel %vm869, %v1218, -inf
  %1227 = vmax.xlane.f32.xlu0 %v1226
  %v1228 = vpop.xlane.xlu0 %1227
  %v1229 = vsel %vm869, %v1223, -inf
  %1230 = vmax.xlane.f32.xlu0 %v1229
  %v1231 = vpop.xlane.xlu0 %1230
  %v1232 = vsub.f32 %v1218, %v1228
  %v1233 = vsub.f32 %v1223, %v1231
  %v1234 = vmul.f32 %v1232, 1.442695
  %v1235 = vpow.pop %v1234
  %v1236 = vmul.f32 %v1233, 1.442695
  %v1237 = vpow.pop %v1236
  %v1238 = vsel %vm869, %v1235, 0.0
  %1239 = vadd.xlane.f32.xlu0 %v1238
  %v1240 = vpop.xlane.xlu0 %1239
  %v1241 = vsel %vm869, %v1237, 0.0
  %1242 = vadd.xlane.f32.xlu0 %v1241
  %v1243 = vpop.xlane.xlu0 %1242
  %v1244 = vrcp.pop %v1240
  %v1245 = vrcp.pop %v1243
  %v1246 = vmul.f32 %v1235, %v1244
  %v1247 = vmul.f32 %v1237, %v1245
  %v1249 = vsel %vm869, %v1246, 0
  %v1252 = vsel %vm869, %v1247, 0
  %1254 = vmatprep.subr.mxu0 0.0
  %1255 = vmatpush1.msra.mxu0 %v784
  %1256 = vmatprep.subr.mxu0 0.0
  %1257 = vmatpush1.msra.mxu0 %v790
  %1258 = vmatprep.subr.mxu0 0.0
  %1259 = vmatpush1.msra.mxu0 0.0
  %1260 = vmatprep.subr.mxu0 0.0
  %1261 = vmatpush1.msra.mxu0 0.0
  %1262 = vmatprep.subr.mxu0 0.0
  %1263 = vmatpush1.msra.mxu0 0.0
  %1264 = vmatprep.subr.mxu0 0.0
  %1265 = vmatpush1.msra.mxu0 0.0
  %1266 = vmatprep.subr.mxu0 0.0
  %1267 = vmatpush1.msra.mxu0 0.0
  %1268 = vmatprep.subr.mxu0 0.0
  %1269 = vmatpush1.msra.mxu0 0.0
  %1270 = vmatprep.subr.mxu0 0.0
  %1271 = vmatpush1.msra.mxu0 0.0
  %1272 = vmatprep.subr.mxu0 0.0
  %1273 = vmatpush1.msra.mxu0 0.0
  %1274 = vmatprep.subr.mxu0 0.0
  %1275 = vmatpush1.msra.mxu0 0.0
  %1276 = vmatprep.subr.mxu0 0.0
  %1277 = vmatpush1.msra.mxu0 0.0
  %1278 = vmatprep.subr.mxu0 0.0
  %1279 = vmatpush1.msra.mxu0 0.0
  %1280 = vmatprep.subr.mxu0 0.0
  %1281 = vmatpush1.msra.mxu0 0.0
  %1282 = vmatprep.subr.mxu0 0.0
  %1283 = vmatpush1.msra.mxu0 0.0
  %1284 = vmatprep.subr.mxu0 0.0
  %1285 = vmatpush1.msra.mxu0 0.0
  %1286 = vmatprep.subr.mxu0 0.0
  %1287 = vmatpush1.msra.mxu0 0.0
  %1288 = vmatprep.subr.mxu0 0.0
  %1289 = vmatpush1.msra.mxu0 0.0
  %1290 = vmatprep.subr.mxu0 0.0
  %1291 = vmatpush1.msra.mxu0 0.0
  %1292 = vmatprep.subr.mxu0 0.0
  %1293 = vmatpush1.msra.mxu0 0.0
  %1294 = vmatprep.subr.mxu0 0.0
  %1295 = vmatpush1.msra.mxu0 0.0
  %1296 = vmatprep.subr.mxu0 0.0
  %1297 = vmatpush1.msra.mxu0 0.0
  %1298 = vmatprep.subr.mxu0 0.0
  %1299 = vmatpush1.msra.mxu0 0.0
  %1300 = vmatprep.subr.mxu0 0.0
  %1301 = vmatpush1.msra.mxu0 0.0
  %1302 = vmatprep.subr.mxu0 0.0
  %1303 = vmatpush1.msra.mxu0 0.0
  %1304 = vmatprep.subr.mxu0 0.0
  %1305 = vmatpush1.msra.mxu0 0.0
  %1306 = vmatprep.subr.mxu0 0.0
  %1307 = vmatpush1.msra.mxu0 0.0
  %1308 = vmatprep.subr.mxu0 0.0
  %1309 = vmatpush1.msra.mxu0 0.0
  %1310 = vmatprep.subr.mxu0 0.0
  %1311 = vmatpush1.msra.mxu0 0.0
  %1312 = vmatprep.subr.mxu0 0.0
  %1313 = vmatpush1.msra.mxu0 0.0
  %1314 = vmatprep.subr.mxu0 0.0
  %1315 = vmatpush1.msra.mxu0 0.0
  %1316 = vmatprep.subr.mxu0 0.0
  %1317 = vmatpush1.msra.mxu0 0.0
  %1318 = vmatprep.mubr.f32.mxu0 0.0
  %1319 = vmatmul.mubr.f32.gmra.mrb[0].mxu0 %v1249
  %v1320 = vpop.f32.mrb[0].mxu0
  %v1321 = vadd.f32 0.0, %v1320
  %v1322 = vpop.f32.mrb[0].mxu0
  %1323 = vmatprep.mubr.f32.mxu0 0.0
  %1324 = vmatmul.mubr.f32.gmra.mrb[0].mxu0 %v1252
  %v1325 = vpop.f32.mrb[0].mxu0
  %v1326 = vadd.f32 0.0, %v1325
  %v1327 = vpop.f32.mrb[0].mxu0
  %1328 = vdwg.mxu0
  %1329 = vmatprep.subr.mxu0 0.0
  %1330 = vmatpush1.xpose.msra.mxu0 %v632
  %1331 = vmatprep.subr.mxu0 0.0
  %1332 = vmatpush1.xpose.msra.mxu0 %v638
  %1333 = vmatprep.subr.mxu0 0.0
  %1334 = vmatpush1.xpose.msra.mxu0 0.0
  %1335 = vmatprep.subr.mxu0 0.0
  %1336 = vmatpush1.xpose.msra.mxu0 0.0
  %1337 = vmatprep.subr.mxu0 0.0
  %1338 = vmatpush1.xpose.msra.mxu0 0.0
  %1339 = vmatprep.subr.mxu0 0.0
  %1340 = vmatpush1.xpose.msra.mxu0 0.0
  %1341 = vmatprep.subr.mxu0 0.0
  %1342 = vmatpush1.xpose.msra.mxu0 0.0
  %1343 = vmatprep.subr.mxu0 0.0
  %1344 = vmatpush1.xpose.msra.mxu0 0.0
  %1345 = vmatprep.subr.mxu0 0.0
  %1346 = vmatpush1.xpose.msra.mxu0 0.0
  %1347 = vmatprep.subr.mxu0 0.0
  %1348 = vmatpush1.xpose.msra.mxu0 0.0
  %1349 = vmatprep.subr.mxu0 0.0
  %1350 = vmatpush1.xpose.msra.mxu0 0.0
  %1351 = vmatprep.subr.mxu0 0.0
  %1352 = vmatpush1.xpose.msra.mxu0 0.0
  %1353 = vmatprep.subr.mxu0 0.0
  %1354 = vmatpush1.xpose.msra.mxu0 0.0
  %1355 = vmatprep.subr.mxu0 0.0
  %1356 = vmatpush1.xpose.msra.mxu0 0.0
  %1357 = vmatprep.subr.mxu0 0.0
  %1358 = vmatpush1.xpose.msra.mxu0 0.0
  %1359 = vmatprep.subr.mxu0 0.0
  %1360 = vmatpush1.xpose.msra.mxu0 0.0
  %1361 = vmatprep.subr.mxu0 0.0
  %1362 = vmatpush1.xpose.msra.mxu0 0.0
  %1363 = vmatprep.subr.mxu0 0.0
  %1364 = vmatpush1.xpose.msra.mxu0 0.0
  %1365 = vmatprep.subr.mxu0 0.0
  %1366 = vmatpush1.xpose.msra.mxu0 0.0
  %1367 = vmatprep.subr.mxu0 0.0
  %1368 = vmatpush1.xpose.msra.mxu0 0.0
  %1369 = vmatprep.subr.mxu0 0.0
  %1370 = vmatpush1.xpose.msra.mxu0 0.0
  %1371 = vmatprep.subr.mxu0 0.0
  %1372 = vmatpush1.xpose.msra.mxu0 0.0
  %1373 = vmatprep.subr.mxu0 0.0
  %1374 = vmatpush1.xpose.msra.mxu0 0.0
  %1375 = vmatprep.subr.mxu0 0.0
  %1376 = vmatpush1.xpose.msra.mxu0 0.0
  %1377 = vmatprep.subr.mxu0 0.0
  %1378 = vmatpush1.xpose.msra.mxu0 0.0
  %1379 = vmatprep.subr.mxu0 0.0
  %1380 = vmatpush1.xpose.msra.mxu0 0.0
  %1381 = vmatprep.subr.mxu0 0.0
  %1382 = vmatpush1.xpose.msra.mxu0 0.0
  %1383 = vmatprep.subr.mxu0 0.0
  %1384 = vmatpush1.xpose.msra.mxu0 0.0
  %1385 = vmatprep.subr.mxu0 0.0
  %1386 = vmatpush1.xpose.msra.mxu0 0.0
  %1387 = vmatprep.subr.mxu0 0.0
  %1388 = vmatpush1.xpose.msra.mxu0 0.0
  %1389 = vmatprep.subr.mxu0 0.0
  %1390 = vmatpush1.xpose.msra.mxu0 0.0
  %1391 = vmatprep.subr.mxu0 0.0
  %1392 = vmatpush1.xpose.msra.mxu0 0.0
  %1393 = vmatprep.mubr.f32.mxu0 0.0
  %1394 = vmatmul.mubr.f32.gmra.mrb[0].mxu0 %v478
  %v1395 = vpop.f32.mrb[0].mxu0
  %v1396 = vadd.f32 %v63, %v1395
  %v1397 = vpop.f32.mrb[0].mxu0
  %1398 = vmatprep.mubr.f32.mxu0 0.0
  %1399 = vmatmul.mubr.f32.gmra.mrb[0].mxu0 %v484
  %v1400 = vpop.f32.mrb[0].mxu0
  %v1401 = vadd.f32 %v64, %v1400
  %v1402 = vpop.f32.mrb[0].mxu0
  %1403 = vdwg.mxu0
  %v1404 = vsel %vm869, %v1396, -inf
  %1405 = vmax.xlane.f32.xlu0 %v1404
  %v1406 = vpop.xlane.xlu0 %1405
  %v1407 = vsel %vm869, %v1401, -inf
  %1408 = vmax.xlane.f32.xlu0 %v1407
  %v1409 = vpop.xlane.xlu0 %1408
  %v1410 = vsub.f32 %v1396, %v1406
  %v1411 = vsub.f32 %v1401, %v1409
  %v1412 = vmul.f32 %v1410, 1.442695
  %v1413 = vpow.pop %v1412
  %v1414 = vmul.f32 %v1411, 1.442695
  %v1415 = vpow.pop %v1414
  %v1416 = vsel %vm869, %v1413, 0.0
  %1417 = vadd.xlane.f32.xlu0 %v1416
  %v1418 = vpop.xlane.xlu0 %1417
  %v1419 = vsel %vm869, %v1415, 0.0
  %1420 = vadd.xlane.f32.xlu0 %v1419
  %v1421 = vpop.xlane.xlu0 %1420
  %v1422 = vrcp.pop %v1418
  %v1423 = vrcp.pop %v1421
  %v1424 = vmul.f32 %v1413, %v1422
  %v1425 = vmul.f32 %v1415, %v1423
  %v1427 = vsel %vm869, %v1424, 0
  %v1430 = vsel %vm869, %v1425, 0
  %1432 = vmatprep.subr.mxu0 0.0
  %1433 = vmatpush1.msra.mxu0 %v786
  %1434 = vmatprep.subr.mxu0 0.0
  %1435 = vmatpush1.msra.mxu0 %v792
  %1436 = vmatprep.subr.mxu0 0.0
  %1437 = vmatpush1.msra.mxu0 0.0
  %1438 = vmatprep.subr.mxu0 0.0
  %1439 = vmatpush1.msra.mxu0 0.0
  %1440 = vmatprep.subr.mxu0 0.0
  %1441 = vmatpush1.msra.mxu0 0.0
  %1442 = vmatprep.subr.mxu0 0.0
  %1443 = vmatpush1.msra.mxu0 0.0
  %1444 = vmatprep.subr.mxu0 0.0
  %1445 = vmatpush1.msra.mxu0 0.0
  %1446 = vmatprep.subr.mxu0 0.0
  %1447 = vmatpush1.msra.mxu0 0.0
  %1448 = vmatprep.subr.mxu0 0.0
  %1449 = vmatpush1.msra.mxu0 0.0
  %1450 = vmatprep.subr.mxu0 0.0
  %1451 = vmatpush1.msra.mxu0 0.0
  %1452 = vmatprep.subr.mxu0 0.0
  %1453 = vmatpush1.msra.mxu0 0.0
  %1454 = vmatprep.subr.mxu0 0.0
  %1455 = vmatpush1.msra.mxu0 0.0
  %1456 = vmatprep.subr.mxu0 0.0
  %1457 = vmatpush1.msra.mxu0 0.0
  %1458 = vmatprep.subr.mxu0 0.0
  %1459 = vmatpush1.msra.mxu0 0.0
  %1460 = vmatprep.subr.mxu0 0.0
  %1461 = vmatpush1.msra.mxu0 0.0
  %1462 = vmatprep.subr.mxu0 0.0
  %1463 = vmatpush1.msra.mxu0 0.0
  %1464 = vmatprep.subr.mxu0 0.0
  %1465 = vmatpush1.msra.mxu0 0.0
  %1466 = vmatprep.subr.mxu0 0.0
  %1467 = vmatpush1.msra.mxu0 0.0
  %1468 = vmatprep.subr.mxu0 0.0
  %1469 = vmatpush1.msra.mxu0 0.0
  %1470 = vmatprep.subr.mxu0 0.0
  %1471 = vmatpush1.msra.mxu0 0.0
  %1472 = vmatprep.subr.mxu0 0.0
  %1473 = vmatpush1.msra.mxu0 0.0
  %1474 = vmatprep.subr.mxu0 0.0
  %1475 = vmatpush1.msra.mxu0 0.0
  %1476 = vmatprep.subr.mxu0 0.0
  %1477 = vmatpush1.msra.mxu0 0.0
  %1478 = vmatprep.subr.mxu0 0.0
  %1479 = vmatpush1.msra.mxu0 0.0
  %1480 = vmatprep.subr.mxu0 0.0
  %1481 = vmatpush1.msra.mxu0 0.0
  %1482 = vmatprep.subr.mxu0 0.0
  %1483 = vmatpush1.msra.mxu0 0.0
  %1484 = vmatprep.subr.mxu0 0.0
  %1485 = vmatpush1.msra.mxu0 0.0
  %1486 = vmatprep.subr.mxu0 0.0
  %1487 = vmatpush1.msra.mxu0 0.0
  %1488 = vmatprep.subr.mxu0 0.0
  %1489 = vmatpush1.msra.mxu0 0.0
  %1490 = vmatprep.subr.mxu0 0.0
  %1491 = vmatpush1.msra.mxu0 0.0
  %1492 = vmatprep.subr.mxu0 0.0
  %1493 = vmatpush1.msra.mxu0 0.0
  %1494 = vmatprep.subr.mxu0 0.0
  %1495 = vmatpush1.msra.mxu0 0.0
  %1496 = vmatprep.mubr.f32.mxu0 0.0
  %1497 = vmatmul.mubr.f32.gmra.mrb[0].mxu0 %v1427
  %v1498 = vpop.f32.mrb[0].mxu0
  %v1499 = vadd.f32 0.0, %v1498
  %v1500 = vpop.f32.mrb[0].mxu0
  %1501 = vmatprep.mubr.f32.mxu0 0.0
  %1502 = vmatmul.mubr.f32.gmra.mrb[0].mxu0 %v1430
  %v1503 = vpop.f32.mrb[0].mxu0
  %v1504 = vadd.f32 0.0, %v1503
  %v1505 = vpop.f32.mrb[0].mxu0
  %1506 = vdwg.mxu0
  %v1507 = vld [vmem:[%s7] sm:$0xff]
  %v1508 = vld [vmem:[%s7 + $0x8] sm:$0xff]
  %v1509 = vld [vmem:[%s7 + $0x10] sm:$0xff]
  %v1510 = vld [vmem:[%s7 + $0x18] sm:$0xff]
  %v1511 = vld [vmem:[%s7 + $0x20] sm:$0xff]
  %v1512 = vld [vmem:[%s7 + $0x28] sm:$0xff]
  %v1513 = vld [vmem:[%s7 + $0x30] sm:$0xff]
  %v1514 = vld [vmem:[%s7 + $0x38] sm:$0xff]
  %v1515 = vld [vmem:[%s7 + $0x40] sm:$0xff]
  %v1516 = vld [vmem:[%s7 + $0x48] sm:$0xff]
  %v1517 = vld [vmem:[%s7 + $0x50] sm:$0xff]
  %v1518 = vld [vmem:[%s7 + $0x58] sm:$0xff]
  %v1519 = vld [vmem:[%s7 + $0x60] sm:$0xff]
  %v1520 = vld [vmem:[%s7 + $0x68] sm:$0xff]
  %v1521 = vld [vmem:[%s7 + $0x70] sm:$0xff]
  %v1522 = vld [vmem:[%s7 + $0x78] sm:$0xff]
  %v1523 = vld [vmem:[%s7 + $0x80] sm:$0xff]
  %v1524 = vld [vmem:[%s7 + $0x88] sm:$0xff]
  %v1525 = vld [vmem:[%s7 + $0x90] sm:$0xff]
  %v1526 = vld [vmem:[%s7 + $0x98] sm:$0xff]
  %v1527 = vld [vmem:[%s7 + $0xa0] sm:$0xff]
  %v1528 = vld [vmem:[%s7 + $0xa8] sm:$0xff]
  %v1529 = vld [vmem:[%s7 + $0xb0] sm:$0xff]
  %v1530 = vld [vmem:[%s7 + $0xb8] sm:$0xff]
  %v1531 = vld [vmem:[%s7 + $0xc0] sm:$0xff]
  %v1532 = vld [vmem:[%s7 + $0xc8] sm:$0xff]
  %v1533 = vld [vmem:[%s7 + $0xd0] sm:$0xff]
  %v1534 = vld [vmem:[%s7 + $0xd8] sm:$0xff]
  %v1535 = vld [vmem:[%s7 + $0xe0] sm:$0xff]
  %v1536 = vld [vmem:[%s7 + $0xe8] sm:$0xff]
  %v1537 = vld [vmem:[%s7 + $0xf0] sm:$0xff]
  %v1538 = vld [vmem:[%s7 + $0xf8] sm:$0xff]
  %v1539 = vld [vmem:[%s7 + $0x100] sm:$0xff]
  %v1540 = vld [vmem:[%s7 + $0x108] sm:$0xff]
  %v1541 = vld [vmem:[%s7 + $0x110] sm:$0xff]
  %v1542 = vld [vmem:[%s7 + $0x118] sm:$0xff]
  %v1543 = vld [vmem:[%s7 + $0x120] sm:$0xff]
  %v1544 = vld [vmem:[%s7 + $0x128] sm:$0xff]
  %v1545 = vld [vmem:[%s7 + $0x130] sm:$0xff]
  %v1546 = vld [vmem:[%s7 + $0x138] sm:$0xff]
  %v1547 = vld [vmem:[%s7 + $0x140] sm:$0xff]
  %v1548 = vld [vmem:[%s7 + $0x148] sm:$0xff]
  %v1549 = vld [vmem:[%s7 + $0x150] sm:$0xff]
  %v1550 = vld [vmem:[%s7 + $0x158] sm:$0xff]
  %v1551 = vld [vmem:[%s7 + $0x160] sm:$0xff]
  %v1552 = vld [vmem:[%s7 + $0x168] sm:$0xff]
  %v1553 = vld [vmem:[%s7 + $0x170] sm:$0xff]
  %v1554 = vld [vmem:[%s7 + $0x178] sm:$0xff]
  %v1555 = vld [vmem:[%s7 + $0x180] sm:$0xff]
  %v1556 = vld [vmem:[%s7 + $0x188] sm:$0xff]
  %v1557 = vld [vmem:[%s7 + $0x190] sm:$0xff]
  %v1558 = vld [vmem:[%s7 + $0x198] sm:$0xff]
  %v1559 = vld [vmem:[%s7 + $0x1a0] sm:$0xff]
  %v1560 = vld [vmem:[%s7 + $0x1a8] sm:$0xff]
  %v1561 = vld [vmem:[%s7 + $0x1b0] sm:$0xff]
  %v1562 = vld [vmem:[%s7 + $0x1b8] sm:$0xff]
  %v1563 = vld [vmem:[%s7 + $0x1c0] sm:$0xff]
  %v1564 = vld [vmem:[%s7 + $0x1c8] sm:$0xff]
  %v1565 = vld [vmem:[%s7 + $0x1d0] sm:$0xff]
  %v1566 = vld [vmem:[%s7 + $0x1d8] sm:$0xff]
  %v1567 = vld [vmem:[%s7 + $0x1e0] sm:$0xff]
  %v1568 = vld [vmem:[%s7 + $0x1e8] sm:$0xff]
  %v1569 = vld [vmem:[%s7 + $0x1f0] sm:$0xff]
  %v1570 = vld [vmem:[%s7 + $0x1f8] sm:$0xff]
  %v1571 = vld [vmem:[%s8] sm:$0x1]
  %v1573 = vlaneseq
  %v1574 = vshrl.u32 %v1573, 7
  %v1575 = vsub.s32 0, %v1574
  %v1576 = vrot.slane %v1571, %v1575
  %1578 = vmatprep.subr.mxu0 0.0
  %1579 = vmatpush1.msra.mxu0 %v1507
  %1580 = vmatprep.subr.mxu0 0.0
  %1581 = vmatpush1.msra.mxu0 %v1508
  %1582 = vmatprep.subr.mxu0 0.0
  %1583 = vmatpush1.msra.mxu0 %v1509
  %1584 = vmatprep.subr.mxu0 0.0
  %1585 = vmatpush1.msra.mxu0 %v1510
  %1586 = vmatprep.subr.mxu0 0.0
  %1587 = vmatpush1.msra.mxu0 %v1511
  %1588 = vmatprep.subr.mxu0 0.0
  %1589 = vmatpush1.msra.mxu0 %v1512
  %1590 = vmatprep.subr.mxu0 0.0
  %1591 = vmatpush1.msra.mxu0 %v1513
  %1592 = vmatprep.subr.mxu0 0.0
  %1593 = vmatpush1.msra.mxu0 %v1514
  %1594 = vmatprep.subr.mxu0 0.0
  %1595 = vmatpush1.msra.mxu0 %v1515
  %1596 = vmatprep.subr.mxu0 0.0
  %1597 = vmatpush1.msra.mxu0 %v1516
  %1598 = vmatprep.subr.mxu0 0.0
  %1599 = vmatpush1.msra.mxu0 %v1517
  %1600 = vmatprep.subr.mxu0 0.0
  %1601 = vmatpush1.msra.mxu0 %v1518
  %1602 = vmatprep.subr.mxu0 0.0
  %1603 = vmatpush1.msra.mxu0 %v1519
  %1604 = vmatprep.subr.mxu0 0.0
  %1605 = vmatpush1.msra.mxu0 %v1520
  %1606 = vmatprep.subr.mxu0 0.0
  %1607 = vmatpush1.msra.mxu0 %v1521
  %1608 = vmatprep.subr.mxu0 0.0
  %1609 = vmatpush1.msra.mxu0 %v1522
  %1610 = vmatprep.subr.mxu0 0.0
  %1611 = vmatpush1.msra.mxu0 %v1523
  %1612 = vmatprep.subr.mxu0 0.0
  %1613 = vmatpush1.msra.mxu0 %v1524
  %1614 = vmatprep.subr.mxu0 0.0
  %1615 = vmatpush1.msra.mxu0 %v1525
  %1616 = vmatprep.subr.mxu0 0.0
  %1617 = vmatpush1.msra.mxu0 %v1526
  %1618 = vmatprep.subr.mxu0 0.0
  %1619 = vmatpush1.msra.mxu0 %v1527
  %1620 = vmatprep.subr.mxu0 0.0
  %1621 = vmatpush1.msra.mxu0 %v1528
  %1622 = vmatprep.subr.mxu0 0.0
  %1623 = vmatpush1.msra.mxu0 %v1529
  %1624 = vmatprep.subr.mxu0 0.0
  %1625 = vmatpush1.msra.mxu0 %v1530
  %1626 = vmatprep.subr.mxu0 0.0
  %1627 = vmatpush1.msra.mxu0 %v1531
  %1628 = vmatprep.subr.mxu0 0.0
  %1629 = vmatpush1.msra.mxu0 %v1532
  %1630 = vmatprep.subr.mxu0 0.0
  %1631 = vmatpush1.msra.mxu0 %v1533
  %1632 = vmatprep.subr.mxu0 0.0
  %1633 = vmatpush1.msra.mxu0 %v1534
  %1634 = vmatprep.subr.mxu0 0.0
  %1635 = vmatpush1.msra.mxu0 %v1535
  %1636 = vmatprep.subr.mxu0 0.0
  %1637 = vmatpush1.msra.mxu0 %v1536
  %1638 = vmatprep.subr.mxu0 0.0
  %1639 = vmatpush1.msra.mxu0 %v1537
  %1640 = vmatprep.subr.mxu0 0.0
  %1641 = vmatpush1.msra.mxu0 %v1538
  %1642 = vmatprep.mubr.f32.mxu0 %v1143
  %1643 = vmatmul.mubr.f32.gmra.mrb[0].mxu0 %v965
  %v1644 = vpop.f32.mrb[0].mxu0
  %v1645 = vadd.f32 %v1576, %v1644
  %v1646 = vpop.f32.mrb[0].mxu0
  %1647 = vmatprep.mubr.f32.mxu0 %v1148
  %1648 = vmatmul.mubr.f32.gmra.mrb[0].mxu0 %v970
  %v1649 = vpop.f32.mrb[0].mxu0
  %v1650 = vadd.f32 %v1576, %v1649
  %v1651 = vpop.f32.mrb[0].mxu0
  %1652 = vdwg.mxu0
  %1653 = vmatprep.subr.mxu0 0.0
  %1654 = vmatpush1.msra.mxu0 %v1539
  %1655 = vmatprep.subr.mxu0 0.0
  %1656 = vmatpush1.msra.mxu0 %v1540
  %1657 = vmatprep.subr.mxu0 0.0
  %1658 = vmatpush1.msra.mxu0 %v1541
  %1659 = vmatprep.subr.mxu0 0.0
  %1660 = vmatpush1.msra.mxu0 %v1542
  %1661 = vmatprep.subr.mxu0 0.0
  %1662 = vmatpush1.msra.mxu0 %v1543
  %1663 = vmatprep.subr.mxu0 0.0
  %1664 = vmatpush1.msra.mxu0 %v1544
  %1665 = vmatprep.subr.mxu0 0.0
  %1666 = vmatpush1.msra.mxu0 %v1545
  %1667 = vmatprep.subr.mxu0 0.0
  %1668 = vmatpush1.msra.mxu0 %v1546
  %1669 = vmatprep.subr.mxu0 0.0
  %1670 = vmatpush1.msra.mxu0 %v1547
  %1671 = vmatprep.subr.mxu0 0.0
  %1672 = vmatpush1.msra.mxu0 %v1548
  %1673 = vmatprep.subr.mxu0 0.0
  %1674 = vmatpush1.msra.mxu0 %v1549
  %1675 = vmatprep.subr.mxu0 0.0
  %1676 = vmatpush1.msra.mxu0 %v1550
  %1677 = vmatprep.subr.mxu0 0.0
  %1678 = vmatpush1.msra.mxu0 %v1551
  %1679 = vmatprep.subr.mxu0 0.0
  %1680 = vmatpush1.msra.mxu0 %v1552
  %1681 = vmatprep.subr.mxu0 0.0
  %1682 = vmatpush1.msra.mxu0 %v1553
  %1683 = vmatprep.subr.mxu0 0.0
  %1684 = vmatpush1.msra.mxu0 %v1554
  %1685 = vmatprep.subr.mxu0 0.0
  %1686 = vmatpush1.msra.mxu0 %v1555
  %1687 = vmatprep.subr.mxu0 0.0
  %1688 = vmatpush1.msra.mxu0 %v1556
  %1689 = vmatprep.subr.mxu0 0.0
  %1690 = vmatpush1.msra.mxu0 %v1557
  %1691 = vmatprep.subr.mxu0 0.0
  %1692 = vmatpush1.msra.mxu0 %v1558
  %1693 = vmatprep.subr.mxu0 0.0
  %1694 = vmatpush1.msra.mxu0 %v1559
  %1695 = vmatprep.subr.mxu0 0.0
  %1696 = vmatpush1.msra.mxu0 %v1560
  %1697 = vmatprep.subr.mxu0 0.0
  %1698 = vmatpush1.msra.mxu0 %v1561
  %1699 = vmatprep.subr.mxu0 0.0
  %1700 = vmatpush1.msra.mxu0 %v1562
  %1701 = vmatprep.subr.mxu0 0.0
  %1702 = vmatpush1.msra.mxu0 %v1563
  %1703 = vmatprep.subr.mxu0 0.0
  %1704 = vmatpush1.msra.mxu0 %v1564
  %1705 = vmatprep.subr.mxu0 0.0
  %1706 = vmatpush1.msra.mxu0 %v1565
  %1707 = vmatprep.subr.mxu0 0.0
  %1708 = vmatpush1.msra.mxu0 %v1566
  %1709 = vmatprep.subr.mxu0 0.0
  %1710 = vmatpush1.msra.mxu0 %v1567
  %1711 = vmatprep.subr.mxu0 0.0
  %1712 = vmatpush1.msra.mxu0 %v1568
  %1713 = vmatprep.subr.mxu0 0.0
  %1714 = vmatpush1.msra.mxu0 %v1569
  %1715 = vmatprep.subr.mxu0 0.0
  %1716 = vmatpush1.msra.mxu0 %v1570
  %1717 = vmatprep.mubr.f32.mxu0 %v1499
  %1718 = vmatmul.mubr.f32.gmra.mrb[0].mxu0 %v1321
  %v1719 = vpop.f32.mrb[0].mxu0
  %v1720 = vadd.f32 %v1645, %v1719
  %v1721 = vpop.f32.mrb[0].mxu0
  %1722 = vmatprep.mubr.f32.mxu0 %v1504
  %1723 = vmatmul.mubr.f32.gmra.mrb[0].mxu0 %v1326
  %v1724 = vpop.f32.mrb[0].mxu0
  %v1725 = vadd.f32 %v1650, %v1724
  %v1726 = vpop.f32.mrb[0].mxu0
  %1727 = vdwg.mxu0
  %v1728 = vadd.f32 %v163, %v1720
  %v1729 = vadd.f32 %v164, %v1725
  %v1730 = vld [vmem:[%s9] sm:$0x1]
  %v1731 = vld [vmem:[%s10] sm:$0x1]
  %v1732 = vsel %vm289, %v1728, 0.0
  %1733 = vadd.xlane.f32.xlu0 %v1732
  %v1734 = vpop.xlane.xlu0 %1733
  %v1735 = vsel %vm289, %v1729, 0.0
  %1736 = vadd.xlane.f32.xlu0 %v1735
  %v1737 = vpop.xlane.xlu0 %1736
  %v1738 = vrcp.pop 36.0
  %v1739 = vmul.f32 %v1734, %v1738
  %v1740 = vmul.f32 %v1737, %v1738
  %v1741 = vsub.f32 %v1728, %v1739
  %v1742 = vsub.f32 %v1729, %v1740
  %v1743 = vmul.f32 %v1741, %v1741
  %v1744 = vmul.f32 %v1742, %v1742
  %v1745 = vsel %vm289, %v1743, 0.0
  %1746 = vadd.xlane.f32.xlu0 %v1745
  %v1747 = vpop.xlane.xlu0 %1746
  %v1748 = vsel %vm289, %v1744, 0.0
  %1749 = vadd.xlane.f32.xlu0 %v1748
  %v1750 = vpop.xlane.xlu0 %1749
  %v1751 = vmul.f32 %v1747, %v1738
  %v1752 = vmul.f32 %v1750, %v1738
  %v1753 = vadd.f32 %v1751, 1e-05
  %v1754 = vadd.f32 %v1752, 1e-05
  %v1755 = vrsqrt.pop %v1753
  %v1756 = vrsqrt.pop %v1754
  %v1757 = vmul.f32 %v1741, %v1755
  %v1758 = vmul.f32 %v1742, %v1756
  %v1760 = vlaneseq
  %v1761 = vshrl.u32 %v1760, 7
  %v1762 = vsub.s32 0, %v1761
  %v1763 = vrot.slane %v1730, %v1762
  %v1765 = vmul.f32 %v1757, %v1763
  %v1766 = vmul.f32 %v1758, %v1763
  %v1768 = vlaneseq
  %v1769 = vshrl.u32 %v1768, 7
  %v1770 = vsub.s32 0, %v1769
  %v1771 = vrot.slane %v1731, %v1770
  %v1773 = vadd.f32 %v1765, %v1771
  %v1774 = vadd.f32 %v1766, %v1771
  %v1775 = vpack.c.bf16 %v1774, %v1773
  %v1776 = vld [vmem:[%s11] sm:$0xff]
  %v1777 = vld [vmem:[%s11 + $0x8] sm:$0xff]
  %v1778 = vld [vmem:[%s11 + $0x10] sm:$0xff]
  %v1779 = vld [vmem:[%s11 + $0x18] sm:$0xff]
  %v1780 = vld [vmem:[%s11 + $0x20] sm:$0xff]
  %v1781 = vld [vmem:[%s11 + $0x28] sm:$0xff]
  %v1782 = vld [vmem:[%s11 + $0x30] sm:$0xff]
  %v1783 = vld [vmem:[%s11 + $0x38] sm:$0xff]
  %v1784 = vld [vmem:[%s11 + $0x40] sm:$0xff]
  %v1785 = vld [vmem:[%s11 + $0x48] sm:$0xff]
  %v1786 = vld [vmem:[%s11 + $0x50] sm:$0xff]
  %v1787 = vld [vmem:[%s11 + $0x58] sm:$0xff]
  %v1788 = vld [vmem:[%s11 + $0x60] sm:$0xff]
  %v1789 = vld [vmem:[%s11 + $0x68] sm:$0xff]
  %v1790 = vld [vmem:[%s11 + $0x70] sm:$0xff]
  %v1791 = vld [vmem:[%s11 + $0x78] sm:$0xff]
  %v1792 = vld [vmem:[%s11 + $0x80] sm:$0xff]
  %v1793 = vld [vmem:[%s11 + $0x88] sm:$0xff]
  %v1794 = vld [vmem:[%s11 + $0x90] sm:$0xff]
  %v1795 = vld [vmem:[%s11 + $0x98] sm:$0xff]
  %v1796 = vld [vmem:[%s11 + $0xa0] sm:$0xff]
  %v1797 = vld [vmem:[%s11 + $0xa8] sm:$0xff]
  %v1798 = vld [vmem:[%s11 + $0xb0] sm:$0xff]
  %v1799 = vld [vmem:[%s11 + $0xb8] sm:$0xff]
  %v1800 = vld [vmem:[%s11 + $0xc0] sm:$0xff]
  %v1801 = vld [vmem:[%s11 + $0xc8] sm:$0xff]
  %v1802 = vld [vmem:[%s11 + $0xd0] sm:$0xff]
  %v1803 = vld [vmem:[%s11 + $0xd8] sm:$0xff]
  %v1804 = vld [vmem:[%s11 + $0xe0] sm:$0xff]
  %v1805 = vld [vmem:[%s11 + $0xe8] sm:$0xff]
  %v1806 = vld [vmem:[%s11 + $0xf0] sm:$0xff]
  %v1807 = vld [vmem:[%s11 + $0xf8] sm:$0xff]
  %v1808 = vld [vmem:[%s11 + $0x100] sm:$0x33]
  %v1809 = vld [vmem:[%s11 + $0x108] sm:$0x33]
  %v1810 = vld [vmem:[%s11 + $0x110] sm:$0x33]
  %v1811 = vld [vmem:[%s11 + $0x118] sm:$0x33]
  %v1812 = vld [vmem:[%s11 + $0x120] sm:$0x33]
  %v1813 = vld [vmem:[%s11 + $0x128] sm:$0x33]
  %v1814 = vld [vmem:[%s11 + $0x130] sm:$0x33]
  %v1815 = vld [vmem:[%s11 + $0x138] sm:$0x33]
  %v1816 = vld [vmem:[%s12] sm:$0xff]
  %v1817 = vld [vmem:[%s12 + $0x8] sm:$0xff]
  %v1820 = vlaneseq
  %v1821 = vshrl.u32 %v1820, 7
  %v1822 = vsub.s32 0, %v1821
  %v1823 = vrot.slane %v1816, %v1822
  %v1824 = vlaneseq
  %v1825 = vshrl.u32 %v1824, 7
  %v1826 = vsub.s32 1, %v1825
  %v1827 = vrot.slane %v1816, %v1826
  %v1828 = vlaneseq
  %v1829 = vshrl.u32 %v1828, 7
  %v1830 = vsub.s32 2, %v1829
  %v1831 = vrot.slane %v1816, %v1830
  %v1832 = vlaneseq
  %v1833 = vshrl.u32 %v1832, 7
  %v1834 = vsub.s32 3, %v1833
  %v1835 = vrot.slane %v1816, %v1834
  %v1836 = vlaneseq
  %v1837 = vshrl.u32 %v1836, 7
  %v1838 = vsub.s32 4, %v1837
  %v1839 = vrot.slane %v1816, %v1838
  %v1840 = vlaneseq
  %v1841 = vshrl.u32 %v1840, 7
  %v1842 = vsub.s32 5, %v1841
  %v1843 = vrot.slane %v1816, %v1842
  %v1844 = vlaneseq
  %v1845 = vshrl.u32 %v1844, 7
  %v1846 = vsub.s32 6, %v1845
  %v1847 = vrot.slane %v1816, %v1846
  %v1848 = vlaneseq
  %v1849 = vshrl.u32 %v1848, 7
  %v1850 = vsub.s32 7, %v1849
  %v1851 = vrot.slane %v1816, %v1850
  %v1852 = vlaneseq
  %v1853 = vshrl.u32 %v1852, 7
  %v1854 = vsub.s32 0, %v1853
  %v1855 = vrot.slane %v1817, %v1854
  %v1856 = vlaneseq
  %v1857 = vshrl.u32 %v1856, 7
  %v1858 = vsub.s32 1, %v1857
  %v1859 = vrot.slane %v1817, %v1858
  %v1860 = vlaneseq
  %v1861 = vshrl.u32 %v1860, 7
  %v1862 = vsub.s32 2, %v1861
  %v1863 = vrot.slane %v1817, %v1862
  %v1864 = vlaneseq
  %v1865 = vshrl.u32 %v1864, 7
  %v1866 = vsub.s32 3, %v1865
  %v1867 = vrot.slane %v1817, %v1866
  %v1868 = vlaneseq
  %v1869 = vshrl.u32 %v1868, 7
  %v1870 = vsub.s32 4, %v1869
  %v1871 = vrot.slane %v1817, %v1870
  %v1872 = vlaneseq
  %v1873 = vshrl.u32 %v1872, 7
  %v1874 = vsub.s32 5, %v1873
  %v1875 = vrot.slane %v1817, %v1874
  %v1876 = vlaneseq
  %v1877 = vshrl.u32 %v1876, 7
  %v1878 = vsub.s32 6, %v1877
  %v1879 = vrot.slane %v1817, %v1878
  %v1880 = vlaneseq
  %v1881 = vshrl.u32 %v1880, 7
  %v1882 = vsub.s32 7, %v1881
  %v1883 = vrot.slane %v1817, %v1882
  %v1940 = vunpack.c.l.b16 %v1776
  %v1941 = vunpack.c.h.b16 %v1776
  %v1942 = vunpack.c.l.b16 %v1777
  %v1943 = vunpack.c.h.b16 %v1777
  %v1944 = vunpack.c.l.b16 %v1778
  %v1945 = vunpack.c.h.b16 %v1778
  %v1946 = vunpack.c.l.b16 %v1779
  %v1947 = vunpack.c.h.b16 %v1779
  %v1948 = vunpack.c.l.b16 %v1780
  %v1949 = vunpack.c.h.b16 %v1780
  %v1950 = vunpack.c.l.b16 %v1781
  %v1951 = vunpack.c.h.b16 %v1781
  %v1952 = vunpack.c.l.b16 %v1782
  %v1953 = vunpack.c.h.b16 %v1782
  %v1954 = vunpack.c.l.b16 %v1783
  %v1955 = vunpack.c.h.b16 %v1783
  %v1956 = vunpack.c.l.b16 %v1784
  %v1957 = vunpack.c.h.b16 %v1784
  %v1958 = vunpack.c.l.b16 %v1785
  %v1959 = vunpack.c.h.b16 %v1785
  %v1960 = vunpack.c.l.b16 %v1786
  %v1961 = vunpack.c.h.b16 %v1786
  %v1962 = vunpack.c.l.b16 %v1787
  %v1963 = vunpack.c.h.b16 %v1787
  %v1964 = vunpack.c.l.b16 %v1788
  %v1965 = vunpack.c.h.b16 %v1788
  %v1966 = vunpack.c.l.b16 %v1789
  %v1967 = vunpack.c.h.b16 %v1789
  %v1968 = vunpack.c.l.b16 %v1790
  %v1969 = vunpack.c.h.b16 %v1790
  %v1970 = vunpack.c.l.b16 %v1791
  %v1971 = vunpack.c.h.b16 %v1791
  %v1972 = vunpack.c.l.b16 %v1792
  %v1973 = vunpack.c.h.b16 %v1792
  %v1974 = vunpack.c.l.b16 %v1793
  %v1975 = vunpack.c.h.b16 %v1793
  %v1976 = vunpack.c.l.b16 %v1794
  %v1977 = vunpack.c.h.b16 %v1794
  %v1978 = vunpack.c.l.b16 %v1795
  %v1979 = vunpack.c.h.b16 %v1795
  %v1980 = vunpack.c.l.b16 %v1796
  %v1981 = vunpack.c.h.b16 %v1796
  %v1982 = vunpack.c.l.b16 %v1797
  %v1983 = vunpack.c.h.b16 %v1797
  %v1984 = vunpack.c.l.b16 %v1798
  %v1985 = vunpack.c.h.b16 %v1798
  %v1986 = vunpack.c.l.b16 %v1799
  %v1987 = vunpack.c.h.b16 %v1799
  %v1988 = vunpack.c.l.b16 %v1800
  %v1989 = vunpack.c.h.b16 %v1800
  %v1990 = vunpack.c.l.b16 %v1801
  %v1991 = vunpack.c.h.b16 %v1801
  %v1992 = vunpack.c.l.b16 %v1802
  %v1993 = vunpack.c.h.b16 %v1802
  %v1994 = vunpack.c.l.b16 %v1803
  %v1995 = vunpack.c.h.b16 %v1803
  %v1996 = vunpack.c.l.b16 %v1804
  %v1997 = vunpack.c.h.b16 %v1804
  %v1998 = vunpack.c.l.b16 %v1805
  %v1999 = vunpack.c.h.b16 %v1805
  %v2000 = vunpack.c.l.b16 %v1806
  %v2001 = vunpack.c.h.b16 %v1806
  %v2002 = vunpack.c.l.b16 %v1807
  %v2003 = vunpack.c.h.b16 %v1807
  %v2004 = vunpack.c.l.b16 %v1808
  %v2005 = vunpack.c.h.b16 %v1808
  %v2006 = vunpack.c.l.b16 %v1809
  %v2007 = vunpack.c.h.b16 %v1809
  %v2008 = vunpack.c.l.b16 %v1810
  %v2009 = vunpack.c.h.b16 %v1810
  %v2010 = vunpack.c.l.b16 %v1811
  %v2011 = vunpack.c.h.b16 %v1811
  %v2012 = vunpack.c.l.b16 %v1812
  %v2013 = vunpack.c.h.b16 %v1812
  %v2014 = vunpack.c.l.b16 %v1813
  %v2015 = vunpack.c.h.b16 %v1813
  %v2016 = vunpack.c.l.b16 %v1814
  %v2017 = vunpack.c.h.b16 %v1814
  %v2018 = vunpack.c.l.b16 %v1815
  %v2019 = vunpack.c.h.b16 %v1815
  %v2020 = vpack.c.b16 %v1956, %v1940
  %v2021 = vpack.c.b16 %v1957, %v1941
  %v2022 = vpack.c.b16 %v1958, %v1942
  %v2023 = vpack.c.b16 %v1959, %v1943
  %v2024 = vpack.c.b16 %v1960, %v1944
  %v2025 = vpack.c.b16 %v1961, %v1945
  %v2026 = vpack.c.b16 %v1962, %v1946
  %v2027 = vpack.c.b16 %v1963, %v1947
  %v2028 = vpack.c.b16 %v1964, %v1948
  %v2029 = vpack.c.b16 %v1965, %v1949
  %v2030 = vpack.c.b16 %v1966, %v1950
  %v2031 = vpack.c.b16 %v1967, %v1951
  %v2032 = vpack.c.b16 %v1968, %v1952
  %v2033 = vpack.c.b16 %v1969, %v1953
  %v2034 = vpack.c.b16 %v1970, %v1954
  %v2035 = vpack.c.b16 %v1971, %v1955
  %v2036 = vpack.c.b16 %v1988, %v1972
  %v2037 = vpack.c.b16 %v1989, %v1973
  %v2038 = vpack.c.b16 %v1990, %v1974
  %v2039 = vpack.c.b16 %v1991, %v1975
  %v2040 = vpack.c.b16 %v1992, %v1976
  %v2041 = vpack.c.b16 %v1993, %v1977
  %v2042 = vpack.c.b16 %v1994, %v1978
  %v2043 = vpack.c.b16 %v1995, %v1979
  %v2044 = vpack.c.b16 %v1996, %v1980
  %v2045 = vpack.c.b16 %v1997, %v1981
  %v2046 = vpack.c.b16 %v1998, %v1982
  %v2047 = vpack.c.b16 %v1999, %v1983
  %v2048 = vpack.c.b16 %v2000, %v1984
  %v2049 = vpack.c.b16 %v2001, %v1985
  %v2050 = vpack.c.b16 %v2002, %v1986
  %v2051 = vpack.c.b16 %v2003, %v1987
  %v2052 = vpack.c.b16 %v2004, %v2004
  %v2053 = vpack.c.b16 %v2005, %v2005
  %v2054 = vpack.c.b16 %v2006, %v2006
  %v2055 = vpack.c.b16 %v2007, %v2007
  %v2056 = vpack.c.b16 %v2008, %v2008
  %v2057 = vpack.c.b16 %v2009, %v2009
  %v2058 = vpack.c.b16 %v2010, %v2010
  %v2059 = vpack.c.b16 %v2011, %v2011
  %v2060 = vpack.c.b16 %v2012, %v2012
  %v2061 = vpack.c.b16 %v2013, %v2013
  %v2062 = vpack.c.b16 %v2014, %v2014
  %v2063 = vpack.c.b16 %v2015, %v2015
  %v2064 = vpack.c.b16 %v2016, %v2016
  %v2065 = vpack.c.b16 %v2017, %v2017
  %v2066 = vpack.c.b16 %v2018, %v2018
  %v2067 = vpack.c.b16 %v2019, %v2019
  %v2101 = vsel %vm289, %v1775, 0
  %vm2103 = vcmask 1041408
  %v2105 = vsel %vm2103, %v2052, 0
  %v2108 = vsel %vm2103, %v2053, 0
  %v2111 = vsel %vm2103, %v2054, 0
  %v2114 = vsel %vm2103, %v2055, 0
  %v2117 = vsel %vm2103, %v2056, 0
  %v2120 = vsel %vm2103, %v2057, 0
  %v2123 = vsel %vm2103, %v2058, 0
  %v2126 = vsel %vm2103, %v2059, 0
  %v2129 = vsel %vm2103, %v2060, 0
  %v2132 = vsel %vm2103, %v2061, 0
  %v2135 = vsel %vm2103, %v2062, 0
  %v2138 = vsel %vm2103, %v2063, 0
  %v2141 = vsel %vm2103, %v2064, 0
  %v2144 = vsel %vm2103, %v2065, 0
  %v2147 = vsel %vm2103, %v2066, 0
  %v2150 = vsel %vm2103, %v2067, 0
  %2152 = vmatprep.subr.bf16.mxu0 %v2021
  %2153 = vmatpush1.bf16.msra.mxu0 %v2020
  %2154 = vmatprep.subr.bf16.mxu0 %v2037
  %2155 = vmatpush1.bf16.msra.mxu0 %v2036
  %2156 = vmatprep.subr.bf16.mxu0 %v2108
  %2157 = vmatpush1.bf16.msra.mxu0 %v2105
  %2158 = vmatprep.subr.bf16.mxu0 0
  %2159 = vmatpush1.bf16.msra.mxu0 0
  %2160 = vmatprep.subr.bf16.mxu0 0
  %2161 = vmatpush1.bf16.msra.mxu0 0
  %2162 = vmatprep.subr.bf16.mxu0 0
  %2163 = vmatpush1.bf16.msra.mxu0 0
  %2164 = vmatprep.subr.bf16.mxu0 0
  %2165 = vmatpush1.bf16.msra.mxu0 0
  %2166 = vmatprep.subr.bf16.mxu0 0
  %2167 = vmatpush1.bf16.msra.mxu0 0
  %2168 = vmatprep.subr.bf16.mxu0 0
  %2169 = vmatpush1.bf16.msra.mxu0 0
  %2170 = vmatprep.subr.bf16.mxu0 0
  %2171 = vmatpush1.bf16.msra.mxu0 0
  %2172 = vmatprep.subr.bf16.mxu0 0
  %2173 = vmatpush1.bf16.msra.mxu0 0
  %2174 = vmatprep.subr.bf16.mxu0 0
  %2175 = vmatpush1.bf16.msra.mxu0 0
  %2176 = vmatprep.subr.bf16.mxu0 0
  %2177 = vmatpush1.bf16.msra.mxu0 0
  %2178 = vmatprep.subr.bf16.mxu0 0
  %2179 = vmatpush1.bf16.msra.mxu0 0
  %2180 = vmatprep.subr.bf16.mxu0 0
  %2181 = vmatpush1.bf16.msra.mxu0 0
  %2182 = vmatprep.subr.bf16.mxu0 0
  %2183 = vmatpush1.bf16.msra.mxu0 0
  %2184 = vmatprep.mubr.bf16.mxu0 0
  %2185 = vmatmul.mubr.bf16.gmra.mrb[0].mxu0 %v2101
  %v2186 = vpop.f32.mrb[0].mxu0
  %v2187 = vadd.f32 %v1823, %v2186
  %v2188 = vpop.f32.mrb[0].mxu0
  %v2189 = vadd.f32 %v1827, %v2188
  %v2190 = vpop.f32.mrb[0].mxu0
  %v2191 = vadd.f32 %v1823, %v2190
  %v2192 = vpop.f32.mrb[0].mxu0
  %v2193 = vadd.f32 %v1827, %v2192
  %2194 = vdwg.mxu0
  %2195 = vmatprep.subr.bf16.mxu0 %v2023
  %2196 = vmatpush1.bf16.msra.mxu0 %v2022
  %2197 = vmatprep.subr.bf16.mxu0 %v2039
  %2198 = vmatpush1.bf16.msra.mxu0 %v2038
  %2199 = vmatprep.subr.bf16.mxu0 %v2114
  %2200 = vmatpush1.bf16.msra.mxu0 %v2111
  %2201 = vmatprep.subr.bf16.mxu0 0
  %2202 = vmatpush1.bf16.msra.mxu0 0
  %2203 = vmatprep.subr.bf16.mxu0 0
  %2204 = vmatpush1.bf16.msra.mxu0 0
  %2205 = vmatprep.subr.bf16.mxu0 0
  %2206 = vmatpush1.bf16.msra.mxu0 0
  %2207 = vmatprep.subr.bf16.mxu0 0
  %2208 = vmatpush1.bf16.msra.mxu0 0
  %2209 = vmatprep.subr.bf16.mxu0 0
  %2210 = vmatpush1.bf16.msra.mxu0 0
  %2211 = vmatprep.subr.bf16.mxu0 0
  %2212 = vmatpush1.bf16.msra.mxu0 0
  %2213 = vmatprep.subr.bf16.mxu0 0
  %2214 = vmatpush1.bf16.msra.mxu0 0
  %2215 = vmatprep.subr.bf16.mxu0 0
  %2216 = vmatpush1.bf16.msra.mxu0 0
  %2217 = vmatprep.subr.bf16.mxu0 0
  %2218 = vmatpush1.bf16.msra.mxu0 0
  %2219 = vmatprep.subr.bf16.mxu0 0
  %2220 = vmatpush1.bf16.msra.mxu0 0
  %2221 = vmatprep.subr.bf16.mxu0 0
  %2222 = vmatpush1.bf16.msra.mxu0 0
  %2223 = vmatprep.subr.bf16.mxu0 0
  %2224 = vmatpush1.bf16.msra.mxu0 0
  %2225 = vmatprep.subr.bf16.mxu0 0
  %2226 = vmatpush1.bf16.msra.mxu0 0
  %2227 = vmatprep.mubr.bf16.mxu0 0
  %2228 = vmatmul.mubr.bf16.gmra.mrb[0].mxu0 %v2101
  %v2229 = vpop.f32.mrb[0].mxu0
  %v2230 = vadd.f32 %v1831, %v2229
  %v2231 = vpop.f32.mrb[0].mxu0
  %v2232 = vadd.f32 %v1835, %v2231
  %v2233 = vpop.f32.mrb[0].mxu0
  %v2234 = vadd.f32 %v1831, %v2233
  %v2235 = vpop.f32.mrb[0].mxu0
  %v2236 = vadd.f32 %v1835, %v2235
  %2237 = vdwg.mxu0
  %2238 = vmatprep.subr.bf16.mxu0 %v2025
  %2239 = vmatpush1.bf16.msra.mxu0 %v2024
  %2240 = vmatprep.subr.bf16.mxu0 %v2041
  %2241 = vmatpush1.bf16.msra.mxu0 %v2040
  %2242 = vmatprep.subr.bf16.mxu0 %v2120
  %2243 = vmatpush1.bf16.msra.mxu0 %v2117
  %2244 = vmatprep.subr.bf16.mxu0 0
  %2245 = vmatpush1.bf16.msra.mxu0 0
  %2246 = vmatprep.subr.bf16.mxu0 0
  %2247 = vmatpush1.bf16.msra.mxu0 0
  %2248 = vmatprep.subr.bf16.mxu0 0
  %2249 = vmatpush1.bf16.msra.mxu0 0
  %2250 = vmatprep.subr.bf16.mxu0 0
  %2251 = vmatpush1.bf16.msra.mxu0 0
  %2252 = vmatprep.subr.bf16.mxu0 0
  %2253 = vmatpush1.bf16.msra.mxu0 0
  %2254 = vmatprep.subr.bf16.mxu0 0
  %2255 = vmatpush1.bf16.msra.mxu0 0
  %2256 = vmatprep.subr.bf16.mxu0 0
  %2257 = vmatpush1.bf16.msra.mxu0 0
  %2258 = vmatprep.subr.bf16.mxu0 0
  %2259 = vmatpush1.bf16.msra.mxu0 0
  %2260 = vmatprep.subr.bf16.mxu0 0
  %2261 = vmatpush1.bf16.msra.mxu0 0
  %2262 = vmatprep.subr.bf16.mxu0 0
  %2263 = vmatpush1.bf16.msra.mxu0 0
  %2264 = vmatprep.subr.bf16.mxu0 0
  %2265 = vmatpush1.bf16.msra.mxu0 0
  %2266 = vmatprep.subr.bf16.mxu0 0
  %2267 = vmatpush1.bf16.msra.mxu0 0
  %2268 = vmatprep.subr.bf16.mxu0 0
  %2269 = vmatpush1.bf16.msra.mxu0 0
  %2270 = vmatprep.mubr.bf16.mxu0 0
  %2271 = vmatmul.mubr.bf16.gmra.mrb[0].mxu0 %v2101
  %v2272 = vpop.f32.mrb[0].mxu0
  %v2273 = vadd.f32 %v1839, %v2272
  %v2274 = vpop.f32.mrb[0].mxu0
  %v2275 = vadd.f32 %v1843, %v2274
  %v2276 = vpop.f32.mrb[0].mxu0
  %v2277 = vadd.f32 %v1839, %v2276
  %v2278 = vpop.f32.mrb[0].mxu0
  %v2279 = vadd.f32 %v1843, %v2278
  %2280 = vdwg.mxu0
  %2281 = vmatprep.subr.bf16.mxu0 %v2027
  %2282 = vmatpush1.bf16.msra.mxu0 %v2026
  %2283 = vmatprep.subr.bf16.mxu0 %v2043
  %2284 = vmatpush1.bf16.msra.mxu0 %v2042
  %2285 = vmatprep.subr.bf16.mxu0 %v2126
  %2286 = vmatpush1.bf16.msra.mxu0 %v2123
  %2287 = vmatprep.subr.bf16.mxu0 0
  %2288 = vmatpush1.bf16.msra.mxu0 0
  %2289 = vmatprep.subr.bf16.mxu0 0
  %2290 = vmatpush1.bf16.msra.mxu0 0
  %2291 = vmatprep.subr.bf16.mxu0 0
  %2292 = vmatpush1.bf16.msra.mxu0 0
  %2293 = vmatprep.subr.bf16.mxu0 0
  %2294 = vmatpush1.bf16.msra.mxu0 0
  %2295 = vmatprep.subr.bf16.mxu0 0
  %2296 = vmatpush1.bf16.msra.mxu0 0
  %2297 = vmatprep.subr.bf16.mxu0 0
  %2298 = vmatpush1.bf16.msra.mxu0 0
  %2299 = vmatprep.subr.bf16.mxu0 0
  %2300 = vmatpush1.bf16.msra.mxu0 0
  %2301 = vmatprep.subr.bf16.mxu0 0
  %2302 = vmatpush1.bf16.msra.mxu0 0
  %2303 = vmatprep.subr.bf16.mxu0 0
  %2304 = vmatpush1.bf16.msra.mxu0 0
  %2305 = vmatprep.subr.bf16.mxu0 0
  %2306 = vmatpush1.bf16.msra.mxu0 0
  %2307 = vmatprep.subr.bf16.mxu0 0
  %2308 = vmatpush1.bf16.msra.mxu0 0
  %2309 = vmatprep.subr.bf16.mxu0 0
  %2310 = vmatpush1.bf16.msra.mxu0 0
  %2311 = vmatprep.subr.bf16.mxu0 0
  %2312 = vmatpush1.bf16.msra.mxu0 0
  %2313 = vmatprep.mubr.bf16.mxu0 0
  %2314 = vmatmul.mubr.bf16.gmra.mrb[0].mxu0 %v2101
  %v2315 = vpop.f32.mrb[0].mxu0
  %v2316 = vadd.f32 %v1847, %v2315
  %v2317 = vpop.f32.mrb[0].mxu0
  %v2318 = vadd.f32 %v1851, %v2317
  %v2319 = vpop.f32.mrb[0].mxu0
  %v2320 = vadd.f32 %v1847, %v2319
  %v2321 = vpop.f32.mrb[0].mxu0
  %v2322 = vadd.f32 %v1851, %v2321
  %2323 = vdwg.mxu0
  %2324 = vmatprep.subr.bf16.mxu0 %v2029
  %2325 = vmatpush1.bf16.msra.mxu0 %v2028
  %2326 = vmatprep.subr.bf16.mxu0 %v2045
  %2327 = vmatpush1.bf16.msra.mxu0 %v2044
  %2328 = vmatprep.subr.bf16.mxu0 %v2132
  %2329 = vmatpush1.bf16.msra.mxu0 %v2129
  %2330 = vmatprep.subr.bf16.mxu0 0
  %2331 = vmatpush1.bf16.msra.mxu0 0
  %2332 = vmatprep.subr.bf16.mxu0 0
  %2333 = vmatpush1.bf16.msra.mxu0 0
  %2334 = vmatprep.subr.bf16.mxu0 0
  %2335 = vmatpush1.bf16.msra.mxu0 0
  %2336 = vmatprep.subr.bf16.mxu0 0
  %2337 = vmatpush1.bf16.msra.mxu0 0
  %2338 = vmatprep.subr.bf16.mxu0 0
  %2339 = vmatpush1.bf16.msra.mxu0 0
  %2340 = vmatprep.subr.bf16.mxu0 0
  %2341 = vmatpush1.bf16.msra.mxu0 0
  %2342 = vmatprep.subr.bf16.mxu0 0
  %2343 = vmatpush1.bf16.msra.mxu0 0
  %2344 = vmatprep.subr.bf16.mxu0 0
  %2345 = vmatpush1.bf16.msra.mxu0 0
  %2346 = vmatprep.subr.bf16.mxu0 0
  %2347 = vmatpush1.bf16.msra.mxu0 0
  %2348 = vmatprep.subr.bf16.mxu0 0
  %2349 = vmatpush1.bf16.msra.mxu0 0
  %2350 = vmatprep.subr.bf16.mxu0 0
  %2351 = vmatpush1.bf16.msra.mxu0 0
  %2352 = vmatprep.subr.bf16.mxu0 0
  %2353 = vmatpush1.bf16.msra.mxu0 0
  %2354 = vmatprep.subr.bf16.mxu0 0
  %2355 = vmatpush1.bf16.msra.mxu0 0
  %2356 = vmatprep.mubr.bf16.mxu0 0
  %2357 = vmatmul.mubr.bf16.gmra.mrb[0].mxu0 %v2101
  %v2358 = vpop.f32.mrb[0].mxu0
  %v2359 = vadd.f32 %v1855, %v2358
  %v2360 = vpop.f32.mrb[0].mxu0
  %v2361 = vadd.f32 %v1859, %v2360
  %v2362 = vpop.f32.mrb[0].mxu0
  %v2363 = vadd.f32 %v1855, %v2362
  %v2364 = vpop.f32.mrb[0].mxu0
  %v2365 = vadd.f32 %v1859, %v2364
  %2366 = vdwg.mxu0
  %2367 = vmatprep.subr.bf16.mxu0 %v2031
  %2368 = vmatpush1.bf16.msra.mxu0 %v2030
  %2369 = vmatprep.subr.bf16.mxu0 %v2047
  %2370 = vmatpush1.bf16.msra.mxu0 %v2046
  %2371 = vmatprep.subr.bf16.mxu0 %v2138
  %2372 = vmatpush1.bf16.msra.mxu0 %v2135
  %2373 = vmatprep.subr.bf16.mxu0 0
  %2374 = vmatpush1.bf16.msra.mxu0 0
  %2375 = vmatprep.subr.bf16.mxu0 0
  %2376 = vmatpush1.bf16.msra.mxu0 0
  %2377 = vmatprep.subr.bf16.mxu0 0
  %2378 = vmatpush1.bf16.msra.mxu0 0
  %2379 = vmatprep.subr.bf16.mxu0 0
  %2380 = vmatpush1.bf16.msra.mxu0 0
  %2381 = vmatprep.subr.bf16.mxu0 0
  %2382 = vmatpush1.bf16.msra.mxu0 0
  %2383 = vmatprep.subr.bf16.mxu0 0
  %2384 = vmatpush1.bf16.msra.mxu0 0
  %2385 = vmatprep.subr.bf16.mxu0 0
  %2386 = vmatpush1.bf16.msra.mxu0 0
  %2387 = vmatprep.subr.bf16.mxu0 0
  %2388 = vmatpush1.bf16.msra.mxu0 0
  %2389 = vmatprep.subr.bf16.mxu0 0
  %2390 = vmatpush1.bf16.msra.mxu0 0
  %2391 = vmatprep.subr.bf16.mxu0 0
  %2392 = vmatpush1.bf16.msra.mxu0 0
  %2393 = vmatprep.subr.bf16.mxu0 0
  %2394 = vmatpush1.bf16.msra.mxu0 0
  %2395 = vmatprep.subr.bf16.mxu0 0
  %2396 = vmatpush1.bf16.msra.mxu0 0
  %2397 = vmatprep.subr.bf16.mxu0 0
  %2398 = vmatpush1.bf16.msra.mxu0 0
  %2399 = vmatprep.mubr.bf16.mxu0 0
  %2400 = vmatmul.mubr.bf16.gmra.mrb[0].mxu0 %v2101
  %v2401 = vpop.f32.mrb[0].mxu0
  %v2402 = vadd.f32 %v1863, %v2401
  %v2403 = vpop.f32.mrb[0].mxu0
  %v2404 = vadd.f32 %v1867, %v2403
  %v2405 = vpop.f32.mrb[0].mxu0
  %v2406 = vadd.f32 %v1863, %v2405
  %v2407 = vpop.f32.mrb[0].mxu0
  %v2408 = vadd.f32 %v1867, %v2407
  %2409 = vdwg.mxu0
  %2410 = vmatprep.subr.bf16.mxu0 %v2033
  %2411 = vmatpush1.bf16.msra.mxu0 %v2032
  %2412 = vmatprep.subr.bf16.mxu0 %v2049
  %2413 = vmatpush1.bf16.msra.mxu0 %v2048
  %2414 = vmatprep.subr.bf16.mxu0 %v2144
  %2415 = vmatpush1.bf16.msra.mxu0 %v2141
  %2416 = vmatprep.subr.bf16.mxu0 0
  %2417 = vmatpush1.bf16.msra.mxu0 0
  %2418 = vmatprep.subr.bf16.mxu0 0
  %2419 = vmatpush1.bf16.msra.mxu0 0
  %2420 = vmatprep.subr.bf16.mxu0 0
  %2421 = vmatpush1.bf16.msra.mxu0 0
  %2422 = vmatprep.subr.bf16.mxu0 0
  %2423 = vmatpush1.bf16.msra.mxu0 0
  %2424 = vmatprep.subr.bf16.mxu0 0
  %2425 = vmatpush1.bf16.msra.mxu0 0
  %2426 = vmatprep.subr.bf16.mxu0 0
  %2427 = vmatpush1.bf16.msra.mxu0 0
  %2428 = vmatprep.subr.bf16.mxu0 0
  %2429 = vmatpush1.bf16.msra.mxu0 0
  %2430 = vmatprep.subr.bf16.mxu0 0
  %2431 = vmatpush1.bf16.msra.mxu0 0
  %2432 = vmatprep.subr.bf16.mxu0 0
  %2433 = vmatpush1.bf16.msra.mxu0 0
  %2434 = vmatprep.subr.bf16.mxu0 0
  %2435 = vmatpush1.bf16.msra.mxu0 0
  %2436 = vmatprep.subr.bf16.mxu0 0
  %2437 = vmatpush1.bf16.msra.mxu0 0
  %2438 = vmatprep.subr.bf16.mxu0 0
  %2439 = vmatpush1.bf16.msra.mxu0 0
  %2440 = vmatprep.subr.bf16.mxu0 0
  %2441 = vmatpush1.bf16.msra.mxu0 0
  %2442 = vmatprep.mubr.bf16.mxu0 0
  %2443 = vmatmul.mubr.bf16.gmra.mrb[0].mxu0 %v2101
  %v2444 = vpop.f32.mrb[0].mxu0
  %v2445 = vadd.f32 %v1871, %v2444
  %v2446 = vpop.f32.mrb[0].mxu0
  %v2447 = vadd.f32 %v1875, %v2446
  %v2448 = vpop.f32.mrb[0].mxu0
  %v2449 = vadd.f32 %v1871, %v2448
  %v2450 = vpop.f32.mrb[0].mxu0
  %v2451 = vadd.f32 %v1875, %v2450
  %2452 = vdwg.mxu0
  %2453 = vmatprep.subr.bf16.mxu0 %v2035
  %2454 = vmatpush1.bf16.msra.mxu0 %v2034
  %2455 = vmatprep.subr.bf16.mxu0 %v2051
  %2456 = vmatpush1.bf16.msra.mxu0 %v2050
  %2457 = vmatprep.subr.bf16.mxu0 %v2150
  %2458 = vmatpush1.bf16.msra.mxu0 %v2147
  %2459 = vmatprep.subr.bf16.mxu0 0
  %2460 = vmatpush1.bf16.msra.mxu0 0
  %2461 = vmatprep.subr.bf16.mxu0 0
  %2462 = vmatpush1.bf16.msra.mxu0 0
  %2463 = vmatprep.subr.bf16.mxu0 0
  %2464 = vmatpush1.bf16.msra.mxu0 0
  %2465 = vmatprep.subr.bf16.mxu0 0
  %2466 = vmatpush1.bf16.msra.mxu0 0
  %2467 = vmatprep.subr.bf16.mxu0 0
  %2468 = vmatpush1.bf16.msra.mxu0 0
  %2469 = vmatprep.subr.bf16.mxu0 0
  %2470 = vmatpush1.bf16.msra.mxu0 0
  %2471 = vmatprep.subr.bf16.mxu0 0
  %2472 = vmatpush1.bf16.msra.mxu0 0
  %2473 = vmatprep.subr.bf16.mxu0 0
  %2474 = vmatpush1.bf16.msra.mxu0 0
  %2475 = vmatprep.subr.bf16.mxu0 0
  %2476 = vmatpush1.bf16.msra.mxu0 0
  %2477 = vmatprep.subr.bf16.mxu0 0
  %2478 = vmatpush1.bf16.msra.mxu0 0
  %2479 = vmatprep.subr.bf16.mxu0 0
  %2480 = vmatpush1.bf16.msra.mxu0 0
  %2481 = vmatprep.subr.bf16.mxu0 0
  %2482 = vmatpush1.bf16.msra.mxu0 0
  %2483 = vmatprep.subr.bf16.mxu0 0
  %2484 = vmatpush1.bf16.msra.mxu0 0
  %2485 = vmatprep.mubr.bf16.mxu0 0
  %2486 = vmatmul.mubr.bf16.gmra.mrb[0].mxu0 %v2101
  %v2487 = vpop.f32.mrb[0].mxu0
  %v2488 = vadd.f32 %v1879, %v2487
  %v2489 = vpop.f32.mrb[0].mxu0
  %v2490 = vadd.f32 %v1883, %v2489
  %v2491 = vpop.f32.mrb[0].mxu0
  %v2492 = vadd.f32 %v1879, %v2491
  %v2493 = vpop.f32.mrb[0].mxu0
  %v2494 = vadd.f32 %v1883, %v2493
  %2495 = vdwg.mxu0
  %v2496 = vmax.f32 %v2187, 0.0
  %v2497 = vmax.f32 %v2189, 0.0
  %v2498 = vmax.f32 %v2230, 0.0
  %v2499 = vmax.f32 %v2232, 0.0
  %v2500 = vmax.f32 %v2273, 0.0
  %v2501 = vmax.f32 %v2275, 0.0
  %v2502 = vmax.f32 %v2316, 0.0
  %v2503 = vmax.f32 %v2318, 0.0
  %v2504 = vmax.f32 %v2359, 0.0
  %v2505 = vmax.f32 %v2361, 0.0
  %v2506 = vmax.f32 %v2402, 0.0
  %v2507 = vmax.f32 %v2404, 0.0
  %v2508 = vmax.f32 %v2445, 0.0
  %v2509 = vmax.f32 %v2447, 0.0
  %v2510 = vmax.f32 %v2488, 0.0
  %v2511 = vmax.f32 %v2490, 0.0
  %v2512 = vmax.f32 %v2191, 0.0
  %v2513 = vmax.f32 %v2193, 0.0
  %v2514 = vmax.f32 %v2234, 0.0
  %v2515 = vmax.f32 %v2236, 0.0
  %v2516 = vmax.f32 %v2277, 0.0
  %v2517 = vmax.f32 %v2279, 0.0
  %v2518 = vmax.f32 %v2320, 0.0
  %v2519 = vmax.f32 %v2322, 0.0
  %v2520 = vmax.f32 %v2363, 0.0
  %v2521 = vmax.f32 %v2365, 0.0
  %v2522 = vmax.f32 %v2406, 0.0
  %v2523 = vmax.f32 %v2408, 0.0
  %v2524 = vmax.f32 %v2449, 0.0
  %v2525 = vmax.f32 %v2451, 0.0
  %v2526 = vmax.f32 %v2492, 0.0
  %v2527 = vmax.f32 %v2494, 0.0
  %v2528 = vpack.c.bf16 %v2512, %v2496
  %v2529 = vpack.c.bf16 %v2513, %v2497
  %v2530 = vpack.c.bf16 %v2514, %v2498
  %v2531 = vpack.c.bf16 %v2515, %v2499
  %v2532 = vpack.c.bf16 %v2516, %v2500
  %v2533 = vpack.c.bf16 %v2517, %v2501
  %v2534 = vpack.c.bf16 %v2518, %v2502
  %v2535 = vpack.c.bf16 %v2519, %v2503
  %v2536 = vpack.c.bf16 %v2520, %v2504
  %v2537 = vpack.c.bf16 %v2521, %v2505
  %v2538 = vpack.c.bf16 %v2522, %v2506
  %v2539 = vpack.c.bf16 %v2523, %v2507
  %v2540 = vpack.c.bf16 %v2524, %v2508
  %v2541 = vpack.c.bf16 %v2525, %v2509
  %v2542 = vpack.c.bf16 %v2526, %v2510
  %v2543 = vpack.c.bf16 %v2527, %v2511
  %v2544 = vld [vmem:[%s13] sm:$0xf]
  %v2545 = vld [vmem:[%s13 + $0x4] sm:$0xf]
  %v2546 = vld [vmem:[%s13 + $0x8] sm:$0xf]
  %v2547 = vld [vmem:[%s13 + $0xc] sm:$0xf]
  %v2548 = vld [vmem:[%s13 + $0x10] sm:$0xf]
  %v2549 = vld [vmem:[%s13 + $0x14] sm:$0xf]
  %v2550 = vld [vmem:[%s13 + $0x18] sm:$0xf]
  %v2551 = vld [vmem:[%s13 + $0x1c] sm:$0xf]
  %v2552 = vld [vmem:[%s13 + $0x20] sm:$0xf]
  %v2553 = vld [vmem:[%s13 + $0x24] sm:$0xf]
  %v2554 = vld [vmem:[%s13 + $0x28] sm:$0xf]
  %v2555 = vld [vmem:[%s13 + $0x2c] sm:$0xf]
  %v2556 = vld [vmem:[%s13 + $0x30] sm:$0xf]
  %v2557 = vld [vmem:[%s13 + $0x34] sm:$0xf]
  %v2558 = vld [vmem:[%s13 + $0x38] sm:$0xf]
  %v2559 = vld [vmem:[%s13 + $0x3c] sm:$0xf]
  %v2560 = vld [vmem:[%s13 + $0x40] sm:$0xf]
  %v2561 = vld [vmem:[%s13 + $0x44] sm:$0xf]
  %v2562 = vld [vmem:[%s13 + $0x48] sm:$0xf]
  %v2563 = vld [vmem:[%s13 + $0x4c] sm:$0xf]
  %v2564 = vld [vmem:[%s13 + $0x50] sm:$0xf]
  %v2565 = vld [vmem:[%s13 + $0x54] sm:$0xf]
  %v2566 = vld [vmem:[%s13 + $0x58] sm:$0xf]
  %v2567 = vld [vmem:[%s13 + $0x5c] sm:$0xf]
  %v2568 = vld [vmem:[%s13 + $0x60] sm:$0xf]
  %v2569 = vld [vmem:[%s13 + $0x64] sm:$0xf]
  %v2570 = vld [vmem:[%s13 + $0x68] sm:$0xf]
  %v2571 = vld [vmem:[%s13 + $0x6c] sm:$0xf]
  %v2572 = vld [vmem:[%s13 + $0x70] sm:$0xf]
  %v2573 = vld [vmem:[%s13 + $0x74] sm:$0xf]
  %v2574 = vld [vmem:[%s13 + $0x78] sm:$0xf]
  %v2575 = vld [vmem:[%s13 + $0x7c] sm:$0xf]
  %v2576 = vld [vmem:[%s13 + $0x80] sm:$0xf]
  %v2577 = vld [vmem:[%s13 + $0x84] sm:$0xf]
  %v2578 = vld [vmem:[%s13 + $0x88] sm:$0xf]
  %v2579 = vld [vmem:[%s13 + $0x8c] sm:$0xf]
  %v2580 = vld [vmem:[%s13 + $0x90] sm:$0xf]
  %v2581 = vld [vmem:[%s13 + $0x94] sm:$0xf]
  %v2582 = vld [vmem:[%s13 + $0x98] sm:$0xf]
  %v2583 = vld [vmem:[%s13 + $0x9c] sm:$0xf]
  %v2584 = vld [vmem:[%s13 + $0xa0] sm:$0xf]
  %v2585 = vld [vmem:[%s13 + $0xa4] sm:$0xf]
  %v2586 = vld [vmem:[%s13 + $0xa8] sm:$0xf]
  %v2587 = vld [vmem:[%s13 + $0xac] sm:$0xf]
  %v2588 = vld [vmem:[%s13 + $0xb0] sm:$0xf]
  %v2589 = vld [vmem:[%s13 + $0xb4] sm:$0xf]
  %v2590 = vld [vmem:[%s13 + $0xb8] sm:$0xf]
  %v2591 = vld [vmem:[%s13 + $0xbc] sm:$0xf]
  %v2592 = vld [vmem:[%s13 + $0xc0] sm:$0xf]
  %v2593 = vld [vmem:[%s13 + $0xc4] sm:$0xf]
  %v2594 = vld [vmem:[%s13 + $0xc8] sm:$0xf]
  %v2595 = vld [vmem:[%s13 + $0xcc] sm:$0xf]
  %v2596 = vld [vmem:[%s13 + $0xd0] sm:$0xf]
  %v2597 = vld [vmem:[%s13 + $0xd4] sm:$0xf]
  %v2598 = vld [vmem:[%s13 + $0xd8] sm:$0xf]
  %v2599 = vld [vmem:[%s13 + $0xdc] sm:$0xf]
  %v2600 = vld [vmem:[%s13 + $0xe0] sm:$0xf]
  %v2601 = vld [vmem:[%s13 + $0xe4] sm:$0xf]
  %v2602 = vld [vmem:[%s13 + $0xe8] sm:$0xf]
  %v2603 = vld [vmem:[%s13 + $0xec] sm:$0xf]
  %v2604 = vld [vmem:[%s13 + $0xf0] sm:$0xf]
  %v2605 = vld [vmem:[%s13 + $0xf4] sm:$0xf]
  %v2606 = vld [vmem:[%s13 + $0xf8] sm:$0xf]
  %v2607 = vld [vmem:[%s13 + $0xfc] sm:$0xf]
  %v2608 = vld [vmem:[%s13 + $0x100] sm:$0xf]
  %v2609 = vld [vmem:[%s13 + $0x104] sm:$0xf]
  %v2610 = vld [vmem:[%s13 + $0x108] sm:$0xf]
  %v2611 = vld [vmem:[%s13 + $0x10c] sm:$0xf]
  %v2612 = vld [vmem:[%s13 + $0x110] sm:$0xf]
  %v2613 = vld [vmem:[%s13 + $0x114] sm:$0xf]
  %v2614 = vld [vmem:[%s13 + $0x118] sm:$0xf]
  %v2615 = vld [vmem:[%s13 + $0x11c] sm:$0xf]
  %v2616 = vld [vmem:[%s13 + $0x120] sm:$0xf]
  %v2617 = vld [vmem:[%s13 + $0x124] sm:$0xf]
  %v2618 = vld [vmem:[%s13 + $0x128] sm:$0xf]
  %v2619 = vld [vmem:[%s13 + $0x12c] sm:$0xf]
  %v2620 = vld [vmem:[%s13 + $0x130] sm:$0xf]
  %v2621 = vld [vmem:[%s13 + $0x134] sm:$0xf]
  %v2622 = vld [vmem:[%s13 + $0x138] sm:$0xf]
  %v2623 = vld [vmem:[%s13 + $0x13c] sm:$0xf]
  %v2624 = vld [vmem:[%s13 + $0x140] sm:$0xf]
  %v2625 = vld [vmem:[%s13 + $0x144] sm:$0xf]
  %v2626 = vld [vmem:[%s13 + $0x148] sm:$0xf]
  %v2627 = vld [vmem:[%s13 + $0x14c] sm:$0xf]
  %v2628 = vld [vmem:[%s13 + $0x150] sm:$0xf]
  %v2629 = vld [vmem:[%s13 + $0x154] sm:$0xf]
  %v2630 = vld [vmem:[%s13 + $0x158] sm:$0xf]
  %v2631 = vld [vmem:[%s13 + $0x15c] sm:$0xf]
  %v2632 = vld [vmem:[%s13 + $0x160] sm:$0xf]
  %v2633 = vld [vmem:[%s13 + $0x164] sm:$0xf]
  %v2634 = vld [vmem:[%s13 + $0x168] sm:$0xf]
  %v2635 = vld [vmem:[%s13 + $0x16c] sm:$0xf]
  %v2636 = vld [vmem:[%s13 + $0x170] sm:$0xf]
  %v2637 = vld [vmem:[%s13 + $0x174] sm:$0xf]
  %v2638 = vld [vmem:[%s13 + $0x178] sm:$0xf]
  %v2639 = vld [vmem:[%s13 + $0x17c] sm:$0xf]
  %v2640 = vld [vmem:[%s13 + $0x180] sm:$0xf]
  %v2641 = vld [vmem:[%s13 + $0x184] sm:$0xf]
  %v2642 = vld [vmem:[%s13 + $0x188] sm:$0xf]
  %v2643 = vld [vmem:[%s13 + $0x18c] sm:$0xf]
  %v2644 = vld [vmem:[%s13 + $0x190] sm:$0xf]
  %v2645 = vld [vmem:[%s13 + $0x194] sm:$0xf]
  %v2646 = vld [vmem:[%s13 + $0x198] sm:$0xf]
  %v2647 = vld [vmem:[%s13 + $0x19c] sm:$0xf]
  %v2648 = vld [vmem:[%s13 + $0x1a0] sm:$0xf]
  %v2649 = vld [vmem:[%s13 + $0x1a4] sm:$0xf]
  %v2650 = vld [vmem:[%s13 + $0x1a8] sm:$0xf]
  %v2651 = vld [vmem:[%s13 + $0x1ac] sm:$0xf]
  %v2652 = vld [vmem:[%s13 + $0x1b0] sm:$0xf]
  %v2653 = vld [vmem:[%s13 + $0x1b4] sm:$0xf]
  %v2654 = vld [vmem:[%s13 + $0x1b8] sm:$0xf]
  %v2655 = vld [vmem:[%s13 + $0x1bc] sm:$0xf]
  %v2656 = vld [vmem:[%s13 + $0x1c0] sm:$0xf]
  %v2657 = vld [vmem:[%s13 + $0x1c4] sm:$0xf]
  %v2658 = vld [vmem:[%s13 + $0x1c8] sm:$0xf]
  %v2659 = vld [vmem:[%s13 + $0x1cc] sm:$0xf]
  %v2660 = vld [vmem:[%s13 + $0x1d0] sm:$0xf]
  %v2661 = vld [vmem:[%s13 + $0x1d4] sm:$0xf]
  %v2662 = vld [vmem:[%s13 + $0x1d8] sm:$0xf]
  %v2663 = vld [vmem:[%s13 + $0x1dc] sm:$0xf]
  %v2664 = vld [vmem:[%s13 + $0x1e0] sm:$0xf]
  %v2665 = vld [vmem:[%s13 + $0x1e4] sm:$0xf]
  %v2666 = vld [vmem:[%s13 + $0x1e8] sm:$0xf]
  %v2667 = vld [vmem:[%s13 + $0x1ec] sm:$0xf]
  %v2668 = vld [vmem:[%s13 + $0x1f0] sm:$0xf]
  %v2669 = vld [vmem:[%s13 + $0x1f4] sm:$0xf]
  %v2670 = vld [vmem:[%s13 + $0x1f8] sm:$0xf]
  %v2671 = vld [vmem:[%s13 + $0x1fc] sm:$0xf]
  %v2672 = vld [vmem:[%s13 + $0x200] sm:$0xf]
  %v2673 = vld [vmem:[%s13 + $0x204] sm:$0xf]
  %v2674 = vld [vmem:[%s13 + $0x208] sm:$0xf]
  %v2675 = vld [vmem:[%s13 + $0x20c] sm:$0xf]
  %v2676 = vld [vmem:[%s13 + $0x210] sm:$0xf]
  %v2677 = vld [vmem:[%s13 + $0x214] sm:$0xf]
  %v2678 = vld [vmem:[%s13 + $0x218] sm:$0xf]
  %v2679 = vld [vmem:[%s13 + $0x21c] sm:$0xf]
  %v2680 = vld [vmem:[%s13 + $0x220] sm:$0xf]
  %v2681 = vld [vmem:[%s13 + $0x224] sm:$0xf]
  %v2682 = vld [vmem:[%s13 + $0x228] sm:$0xf]
  %v2683 = vld [vmem:[%s13 + $0x22c] sm:$0xf]
  %v2684 = vld [vmem:[%s13 + $0x230] sm:$0xf]
  %v2685 = vld [vmem:[%s13 + $0x234] sm:$0xf]
  %v2686 = vld [vmem:[%s13 + $0x238] sm:$0xf]
  %v2687 = vld [vmem:[%s13 + $0x23c] sm:$0xf]
  %v2688 = vld [vmem:[%s13 + $0x240] sm:$0xf]
  %v2689 = vld [vmem:[%s13 + $0x244] sm:$0xf]
  %v2690 = vld [vmem:[%s13 + $0x248] sm:$0xf]
  %v2691 = vld [vmem:[%s13 + $0x24c] sm:$0xf]
  %v2692 = vld [vmem:[%s13 + $0x250] sm:$0xf]
  %v2693 = vld [vmem:[%s13 + $0x254] sm:$0xf]
  %v2694 = vld [vmem:[%s13 + $0x258] sm:$0xf]
  %v2695 = vld [vmem:[%s13 + $0x25c] sm:$0xf]
  %v2696 = vld [vmem:[%s13 + $0x260] sm:$0xf]
  %v2697 = vld [vmem:[%s13 + $0x264] sm:$0xf]
  %v2698 = vld [vmem:[%s13 + $0x268] sm:$0xf]
  %v2699 = vld [vmem:[%s13 + $0x26c] sm:$0xf]
  %v2700 = vld [vmem:[%s13 + $0x270] sm:$0xf]
  %v2701 = vld [vmem:[%s13 + $0x274] sm:$0xf]
  %v2702 = vld [vmem:[%s13 + $0x278] sm:$0xf]
  %v2703 = vld [vmem:[%s13 + $0x27c] sm:$0xf]
  %v2704 = vld [vmem:[%s13 + $0x280] sm:$0xf]
  %v2705 = vld [vmem:[%s13 + $0x284] sm:$0xf]
  %v2706 = vld [vmem:[%s13 + $0x288] sm:$0xf]
  %v2707 = vld [vmem:[%s13 + $0x28c] sm:$0xf]
  %v2708 = vld [vmem:[%s13 + $0x290] sm:$0xf]
  %v2709 = vld [vmem:[%s13 + $0x294] sm:$0xf]
  %v2710 = vld [vmem:[%s13 + $0x298] sm:$0xf]
  %v2711 = vld [vmem:[%s13 + $0x29c] sm:$0xf]
  %v2712 = vld [vmem:[%s13 + $0x2a0] sm:$0xf]
  %v2713 = vld [vmem:[%s13 + $0x2a4] sm:$0xf]
  %v2714 = vld [vmem:[%s13 + $0x2a8] sm:$0xf]
  %v2715 = vld [vmem:[%s13 + $0x2ac] sm:$0xf]
  %v2716 = vld [vmem:[%s13 + $0x2b0] sm:$0xf]
  %v2717 = vld [vmem:[%s13 + $0x2b4] sm:$0xf]
  %v2718 = vld [vmem:[%s13 + $0x2b8] sm:$0xf]
  %v2719 = vld [vmem:[%s13 + $0x2bc] sm:$0xf]
  %v2720 = vld [vmem:[%s13 + $0x2c0] sm:$0xf]
  %v2721 = vld [vmem:[%s13 + $0x2c4] sm:$0xf]
  %v2722 = vld [vmem:[%s13 + $0x2c8] sm:$0xf]
  %v2723 = vld [vmem:[%s13 + $0x2cc] sm:$0xf]
  %v2724 = vld [vmem:[%s13 + $0x2d0] sm:$0xf]
  %v2725 = vld [vmem:[%s13 + $0x2d4] sm:$0xf]
  %v2726 = vld [vmem:[%s13 + $0x2d8] sm:$0xf]
  %v2727 = vld [vmem:[%s13 + $0x2dc] sm:$0xf]
  %v2728 = vld [vmem:[%s13 + $0x2e0] sm:$0xf]
  %v2729 = vld [vmem:[%s13 + $0x2e4] sm:$0xf]
  %v2730 = vld [vmem:[%s13 + $0x2e8] sm:$0xf]
  %v2731 = vld [vmem:[%s13 + $0x2ec] sm:$0xf]
  %v2732 = vld [vmem:[%s13 + $0x2f0] sm:$0xf]
  %v2733 = vld [vmem:[%s13 + $0x2f4] sm:$0xf]
  %v2734 = vld [vmem:[%s13 + $0x2f8] sm:$0xf]
  %v2735 = vld [vmem:[%s13 + $0x2fc] sm:$0xf]
  %v2736 = vld [vmem:[%s13 + $0x300] sm:$0xf]
  %v2737 = vld [vmem:[%s13 + $0x304] sm:$0xf]
  %v2738 = vld [vmem:[%s13 + $0x308] sm:$0xf]
  %v2739 = vld [vmem:[%s13 + $0x30c] sm:$0xf]
  %v2740 = vld [vmem:[%s13 + $0x310] sm:$0xf]
  %v2741 = vld [vmem:[%s13 + $0x314] sm:$0xf]
  %v2742 = vld [vmem:[%s13 + $0x318] sm:$0xf]
  %v2743 = vld [vmem:[%s13 + $0x31c] sm:$0xf]
  %v2744 = vld [vmem:[%s13 + $0x320] sm:$0xf]
  %v2745 = vld [vmem:[%s13 + $0x324] sm:$0xf]
  %v2746 = vld [vmem:[%s13 + $0x328] sm:$0xf]
  %v2747 = vld [vmem:[%s13 + $0x32c] sm:$0xf]
  %v2748 = vld [vmem:[%s13 + $0x330] sm:$0xf]
  %v2749 = vld [vmem:[%s13 + $0x334] sm:$0xf]
  %v2750 = vld [vmem:[%s13 + $0x338] sm:$0xf]
  %v2751 = vld [vmem:[%s13 + $0x33c] sm:$0xf]
  %v2752 = vld [vmem:[%s13 + $0x340] sm:$0xf]
  %v2753 = vld [vmem:[%s13 + $0x344] sm:$0xf]
  %v2754 = vld [vmem:[%s13 + $0x348] sm:$0xf]
  %v2755 = vld [vmem:[%s13 + $0x34c] sm:$0xf]
  %v2756 = vld [vmem:[%s13 + $0x350] sm:$0xf]
  %v2757 = vld [vmem:[%s13 + $0x354] sm:$0xf]
  %v2758 = vld [vmem:[%s13 + $0x358] sm:$0xf]
  %v2759 = vld [vmem:[%s13 + $0x35c] sm:$0xf]
  %v2760 = vld [vmem:[%s13 + $0x360] sm:$0xf]
  %v2761 = vld [vmem:[%s13 + $0x364] sm:$0xf]
  %v2762 = vld [vmem:[%s13 + $0x368] sm:$0xf]
  %v2763 = vld [vmem:[%s13 + $0x36c] sm:$0xf]
  %v2764 = vld [vmem:[%s13 + $0x370] sm:$0xf]
  %v2765 = vld [vmem:[%s13 + $0x374] sm:$0xf]
  %v2766 = vld [vmem:[%s13 + $0x378] sm:$0xf]
  %v2767 = vld [vmem:[%s13 + $0x37c] sm:$0xf]
  %v2768 = vld [vmem:[%s13 + $0x380] sm:$0xf]
  %v2769 = vld [vmem:[%s13 + $0x384] sm:$0xf]
  %v2770 = vld [vmem:[%s13 + $0x388] sm:$0xf]
  %v2771 = vld [vmem:[%s13 + $0x38c] sm:$0xf]
  %v2772 = vld [vmem:[%s13 + $0x390] sm:$0xf]
  %v2773 = vld [vmem:[%s13 + $0x394] sm:$0xf]
  %v2774 = vld [vmem:[%s13 + $0x398] sm:$0xf]
  %v2775 = vld [vmem:[%s13 + $0x39c] sm:$0xf]
  %v2776 = vld [vmem:[%s13 + $0x3a0] sm:$0xf]
  %v2777 = vld [vmem:[%s13 + $0x3a4] sm:$0xf]
  %v2778 = vld [vmem:[%s13 + $0x3a8] sm:$0xf]
  %v2779 = vld [vmem:[%s13 + $0x3ac] sm:$0xf]
  %v2780 = vld [vmem:[%s13 + $0x3b0] sm:$0xf]
  %v2781 = vld [vmem:[%s13 + $0x3b4] sm:$0xf]
  %v2782 = vld [vmem:[%s13 + $0x3b8] sm:$0xf]
  %v2783 = vld [vmem:[%s13 + $0x3bc] sm:$0xf]
  %v2784 = vld [vmem:[%s13 + $0x3c0] sm:$0xf]
  %v2785 = vld [vmem:[%s13 + $0x3c4] sm:$0xf]
  %v2786 = vld [vmem:[%s13 + $0x3c8] sm:$0xf]
  %v2787 = vld [vmem:[%s13 + $0x3cc] sm:$0xf]
  %v2788 = vld [vmem:[%s13 + $0x3d0] sm:$0xf]
  %v2789 = vld [vmem:[%s13 + $0x3d4] sm:$0xf]
  %v2790 = vld [vmem:[%s13 + $0x3d8] sm:$0xf]
  %v2791 = vld [vmem:[%s13 + $0x3dc] sm:$0xf]
  %v2792 = vld [vmem:[%s13 + $0x3e0] sm:$0xf]
  %v2793 = vld [vmem:[%s13 + $0x3e4] sm:$0xf]
  %v2794 = vld [vmem:[%s13 + $0x3e8] sm:$0xf]
  %v2795 = vld [vmem:[%s13 + $0x3ec] sm:$0xf]
  %v2796 = vld [vmem:[%s13 + $0x3f0] sm:$0xf]
  %v2797 = vld [vmem:[%s13 + $0x3f4] sm:$0xf]
  %v2798 = vld [vmem:[%s13 + $0x3f8] sm:$0xf]
  %v2799 = vld [vmem:[%s13 + $0x3fc] sm:$0xf]
  %v2800 = vld [vmem:[%s14] sm:$0x1]
  %v2802 = vlaneseq
  %v2803 = vshrl.u32 %v2802, 7
  %v2804 = vsub.s32 0, %v2803
  %v2805 = vrot.slane %v2800, %v2804
  %v3063 = vunpack.c.l.b16 %v2544
  %v3064 = vunpack.c.l.b16 %v2545
  %v3065 = vunpack.c.l.b16 %v2546
  %v3066 = vunpack.c.l.b16 %v2547
  %v3067 = vunpack.c.l.b16 %v2548
  %v3068 = vunpack.c.l.b16 %v2549
  %v3069 = vunpack.c.l.b16 %v2550
  %v3070 = vunpack.c.l.b16 %v2551
  %v3071 = vunpack.c.l.b16 %v2552
  %v3072 = vunpack.c.l.b16 %v2553
  %v3073 = vunpack.c.l.b16 %v2554
  %v3074 = vunpack.c.l.b16 %v2555
  %v3075 = vunpack.c.l.b16 %v2556
  %v3076 = vunpack.c.l.b16 %v2557
  %v3077 = vunpack.c.l.b16 %v2558
  %v3078 = vunpack.c.l.b16 %v2559
  %v3079 = vunpack.c.l.b16 %v2560
  %v3080 = vunpack.c.l.b16 %v2561
  %v3081 = vunpack.c.l.b16 %v2562
  %v3082 = vunpack.c.l.b16 %v2563
  %v3083 = vunpack.c.l.b16 %v2564
  %v3084 = vunpack.c.l.b16 %v2565
  %v3085 = vunpack.c.l.b16 %v2566
  %v3086 = vunpack.c.l.b16 %v2567
  %v3087 = vunpack.c.l.b16 %v2568
  %v3088 = vunpack.c.l.b16 %v2569
  %v3089 = vunpack.c.l.b16 %v2570
  %v3090 = vunpack.c.l.b16 %v2571
  %v3091 = vunpack.c.l.b16 %v2572
  %v3092 = vunpack.c.l.b16 %v2573
  %v3093 = vunpack.c.l.b16 %v2574
  %v3094 = vunpack.c.l.b16 %v2575
  %v3095 = vunpack.c.l.b16 %v2576
  %v3096 = vunpack.c.l.b16 %v2577
  %v3097 = vunpack.c.l.b16 %v2578
  %v3098 = vunpack.c.l.b16 %v2579
  %v3099 = vunpack.c.l.b16 %v2580
  %v3100 = vunpack.c.l.b16 %v2581
  %v3101 = vunpack.c.l.b16 %v2582
  %v3102 = vunpack.c.l.b16 %v2583
  %v3103 = vunpack.c.l.b16 %v2584
  %v3104 = vunpack.c.l.b16 %v2585
  %v3105 = vunpack.c.l.b16 %v2586
  %v3106 = vunpack.c.l.b16 %v2587
  %v3107 = vunpack.c.l.b16 %v2588
  %v3108 = vunpack.c.l.b16 %v2589
  %v3109 = vunpack.c.l.b16 %v2590
  %v3110 = vunpack.c.l.b16 %v2591
  %v3111 = vunpack.c.l.b16 %v2592
  %v3112 = vunpack.c.l.b16 %v2593
  %v3113 = vunpack.c.l.b16 %v2594
  %v3114 = vunpack.c.l.b16 %v2595
  %v3115 = vunpack.c.l.b16 %v2596
  %v3116 = vunpack.c.l.b16 %v2597
  %v3117 = vunpack.c.l.b16 %v2598
  %v3118 = vunpack.c.l.b16 %v2599
  %v3119 = vunpack.c.l.b16 %v2600
  %v3120 = vunpack.c.l.b16 %v2601
  %v3121 = vunpack.c.l.b16 %v2602
  %v3122 = vunpack.c.l.b16 %v2603
  %v3123 = vunpack.c.l.b16 %v2604
  %v3124 = vunpack.c.l.b16 %v2605
  %v3125 = vunpack.c.l.b16 %v2606
  %v3126 = vunpack.c.l.b16 %v2607
  %v3127 = vunpack.c.l.b16 %v2608
  %v3128 = vunpack.c.l.b16 %v2609
  %v3129 = vunpack.c.l.b16 %v2610
  %v3130 = vunpack.c.l.b16 %v2611
  %v3131 = vunpack.c.l.b16 %v2612
  %v3132 = vunpack.c.l.b16 %v2613
  %v3133 = vunpack.c.l.b16 %v2614
  %v3134 = vunpack.c.l.b16 %v2615
  %v3135 = vunpack.c.l.b16 %v2616
  %v3136 = vunpack.c.l.b16 %v2617
  %v3137 = vunpack.c.l.b16 %v2618
  %v3138 = vunpack.c.l.b16 %v2619
  %v3139 = vunpack.c.l.b16 %v2620
  %v3140 = vunpack.c.l.b16 %v2621
  %v3141 = vunpack.c.l.b16 %v2622
  %v3142 = vunpack.c.l.b16 %v2623
  %v3143 = vunpack.c.l.b16 %v2624
  %v3144 = vunpack.c.l.b16 %v2625
  %v3145 = vunpack.c.l.b16 %v2626
  %v3146 = vunpack.c.l.b16 %v2627
  %v3147 = vunpack.c.l.b16 %v2628
  %v3148 = vunpack.c.l.b16 %v2629
  %v3149 = vunpack.c.l.b16 %v2630
  %v3150 = vunpack.c.l.b16 %v2631
  %v3151 = vunpack.c.l.b16 %v2632
  %v3152 = vunpack.c.l.b16 %v2633
  %v3153 = vunpack.c.l.b16 %v2634
  %v3154 = vunpack.c.l.b16 %v2635
  %v3155 = vunpack.c.l.b16 %v2636
  %v3156 = vunpack.c.l.b16 %v2637
  %v3157 = vunpack.c.l.b16 %v2638
  %v3158 = vunpack.c.l.b16 %v2639
  %v3159 = vunpack.c.l.b16 %v2640
  %v3160 = vunpack.c.l.b16 %v2641
  %v3161 = vunpack.c.l.b16 %v2642
  %v3162 = vunpack.c.l.b16 %v2643
  %v3163 = vunpack.c.l.b16 %v2644
  %v3164 = vunpack.c.l.b16 %v2645
  %v3165 = vunpack.c.l.b16 %v2646
  %v3166 = vunpack.c.l.b16 %v2647
  %v3167 = vunpack.c.l.b16 %v2648
  %v3168 = vunpack.c.l.b16 %v2649
  %v3169 = vunpack.c.l.b16 %v2650
  %v3170 = vunpack.c.l.b16 %v2651
  %v3171 = vunpack.c.l.b16 %v2652
  %v3172 = vunpack.c.l.b16 %v2653
  %v3173 = vunpack.c.l.b16 %v2654
  %v3174 = vunpack.c.l.b16 %v2655
  %v3175 = vunpack.c.l.b16 %v2656
  %v3176 = vunpack.c.l.b16 %v2657
  %v3177 = vunpack.c.l.b16 %v2658
  %v3178 = vunpack.c.l.b16 %v2659
  %v3179 = vunpack.c.l.b16 %v2660
  %v3180 = vunpack.c.l.b16 %v2661
  %v3181 = vunpack.c.l.b16 %v2662
  %v3182 = vunpack.c.l.b16 %v2663
  %v3183 = vunpack.c.l.b16 %v2664
  %v3184 = vunpack.c.l.b16 %v2665
  %v3185 = vunpack.c.l.b16 %v2666
  %v3186 = vunpack.c.l.b16 %v2667
  %v3187 = vunpack.c.l.b16 %v2668
  %v3188 = vunpack.c.l.b16 %v2669
  %v3189 = vunpack.c.l.b16 %v2670
  %v3190 = vunpack.c.l.b16 %v2671
  %v3191 = vunpack.c.l.b16 %v2672
  %v3192 = vunpack.c.l.b16 %v2673
  %v3193 = vunpack.c.l.b16 %v2674
  %v3194 = vunpack.c.l.b16 %v2675
  %v3195 = vunpack.c.l.b16 %v2676
  %v3196 = vunpack.c.l.b16 %v2677
  %v3197 = vunpack.c.l.b16 %v2678
  %v3198 = vunpack.c.l.b16 %v2679
  %v3199 = vunpack.c.l.b16 %v2680
  %v3200 = vunpack.c.l.b16 %v2681
  %v3201 = vunpack.c.l.b16 %v2682
  %v3202 = vunpack.c.l.b16 %v2683
  %v3203 = vunpack.c.l.b16 %v2684
  %v3204 = vunpack.c.l.b16 %v2685
  %v3205 = vunpack.c.l.b16 %v2686
  %v3206 = vunpack.c.l.b16 %v2687
  %v3207 = vunpack.c.l.b16 %v2688
  %v3208 = vunpack.c.l.b16 %v2689
  %v3209 = vunpack.c.l.b16 %v2690
  %v3210 = vunpack.c.l.b16 %v2691
  %v3211 = vunpack.c.l.b16 %v2692
  %v3212 = vunpack.c.l.b16 %v2693
  %v3213 = vunpack.c.l.b16 %v2694
  %v3214 = vunpack.c.l.b16 %v2695
  %v3215 = vunpack.c.l.b16 %v2696
  %v3216 = vunpack.c.l.b16 %v2697
  %v3217 = vunpack.c.l.b16 %v2698
  %v3218 = vunpack.c.l.b16 %v2699
  %v3219 = vunpack.c.l.b16 %v2700
  %v3220 = vunpack.c.l.b16 %v2701
  %v3221 = vunpack.c.l.b16 %v2702
  %v3222 = vunpack.c.l.b16 %v2703
  %v3223 = vunpack.c.l.b16 %v2704
  %v3224 = vunpack.c.l.b16 %v2705
  %v3225 = vunpack.c.l.b16 %v2706
  %v3226 = vunpack.c.l.b16 %v2707
  %v3227 = vunpack.c.l.b16 %v2708
  %v3228 = vunpack.c.l.b16 %v2709
  %v3229 = vunpack.c.l.b16 %v2710
  %v3230 = vunpack.c.l.b16 %v2711
  %v3231 = vunpack.c.l.b16 %v2712
  %v3232 = vunpack.c.l.b16 %v2713
  %v3233 = vunpack.c.l.b16 %v2714
  %v3234 = vunpack.c.l.b16 %v2715
  %v3235 = vunpack.c.l.b16 %v2716
  %v3236 = vunpack.c.l.b16 %v2717
  %v3237 = vunpack.c.l.b16 %v2718
  %v3238 = vunpack.c.l.b16 %v2719
  %v3239 = vunpack.c.l.b16 %v2720
  %v3240 = vunpack.c.l.b16 %v2721
  %v3241 = vunpack.c.l.b16 %v2722
  %v3242 = vunpack.c.l.b16 %v2723
  %v3243 = vunpack.c.l.b16 %v2724
  %v3244 = vunpack.c.l.b16 %v2725
  %v3245 = vunpack.c.l.b16 %v2726
  %v3246 = vunpack.c.l.b16 %v2727
  %v3247 = vunpack.c.l.b16 %v2728
  %v3248 = vunpack.c.l.b16 %v2729
  %v3249 = vunpack.c.l.b16 %v2730
  %v3250 = vunpack.c.l.b16 %v2731
  %v3251 = vunpack.c.l.b16 %v2732
  %v3252 = vunpack.c.l.b16 %v2733
  %v3253 = vunpack.c.l.b16 %v2734
  %v3254 = vunpack.c.l.b16 %v2735
  %v3255 = vunpack.c.l.b16 %v2736
  %v3256 = vunpack.c.l.b16 %v2737
  %v3257 = vunpack.c.l.b16 %v2738
  %v3258 = vunpack.c.l.b16 %v2739
  %v3259 = vunpack.c.l.b16 %v2740
  %v3260 = vunpack.c.l.b16 %v2741
  %v3261 = vunpack.c.l.b16 %v2742
  %v3262 = vunpack.c.l.b16 %v2743
  %v3263 = vunpack.c.l.b16 %v2744
  %v3264 = vunpack.c.l.b16 %v2745
  %v3265 = vunpack.c.l.b16 %v2746
  %v3266 = vunpack.c.l.b16 %v2747
  %v3267 = vunpack.c.l.b16 %v2748
  %v3268 = vunpack.c.l.b16 %v2749
  %v3269 = vunpack.c.l.b16 %v2750
  %v3270 = vunpack.c.l.b16 %v2751
  %v3271 = vunpack.c.l.b16 %v2752
  %v3272 = vunpack.c.l.b16 %v2753
  %v3273 = vunpack.c.l.b16 %v2754
  %v3274 = vunpack.c.l.b16 %v2755
  %v3275 = vunpack.c.l.b16 %v2756
  %v3276 = vunpack.c.l.b16 %v2757
  %v3277 = vunpack.c.l.b16 %v2758
  %v3278 = vunpack.c.l.b16 %v2759
  %v3279 = vunpack.c.l.b16 %v2760
  %v3280 = vunpack.c.l.b16 %v2761
  %v3281 = vunpack.c.l.b16 %v2762
  %v3282 = vunpack.c.l.b16 %v2763
  %v3283 = vunpack.c.l.b16 %v2764
  %v3284 = vunpack.c.l.b16 %v2765
  %v3285 = vunpack.c.l.b16 %v2766
  %v3286 = vunpack.c.l.b16 %v2767
  %v3287 = vunpack.c.l.b16 %v2768
  %v3288 = vunpack.c.l.b16 %v2769
  %v3289 = vunpack.c.l.b16 %v2770
  %v3290 = vunpack.c.l.b16 %v2771
  %v3291 = vunpack.c.l.b16 %v2772
  %v3292 = vunpack.c.l.b16 %v2773
  %v3293 = vunpack.c.l.b16 %v2774
  %v3294 = vunpack.c.l.b16 %v2775
  %v3295 = vunpack.c.l.b16 %v2776
  %v3296 = vunpack.c.l.b16 %v2777
  %v3297 = vunpack.c.l.b16 %v2778
  %v3298 = vunpack.c.l.b16 %v2779
  %v3299 = vunpack.c.l.b16 %v2780
  %v3300 = vunpack.c.l.b16 %v2781
  %v3301 = vunpack.c.l.b16 %v2782
  %v3302 = vunpack.c.l.b16 %v2783
  %v3303 = vunpack.c.l.b16 %v2784
  %v3304 = vunpack.c.l.b16 %v2785
  %v3305 = vunpack.c.l.b16 %v2786
  %v3306 = vunpack.c.l.b16 %v2787
  %v3307 = vunpack.c.l.b16 %v2788
  %v3308 = vunpack.c.l.b16 %v2789
  %v3309 = vunpack.c.l.b16 %v2790
  %v3310 = vunpack.c.l.b16 %v2791
  %v3311 = vunpack.c.l.b16 %v2792
  %v3312 = vunpack.c.l.b16 %v2793
  %v3313 = vunpack.c.l.b16 %v2794
  %v3314 = vunpack.c.l.b16 %v2795
  %v3315 = vunpack.c.l.b16 %v2796
  %v3316 = vunpack.c.l.b16 %v2797
  %v3317 = vunpack.c.l.b16 %v2798
  %v3318 = vunpack.c.l.b16 %v2799
  %v3319 = vpack.c.b16 %v3064, %v3063
  %v3320 = vpack.c.b16 %v3066, %v3065
  %v3321 = vpack.c.b16 %v3068, %v3067
  %v3322 = vpack.c.b16 %v3070, %v3069
  %v3323 = vpack.c.b16 %v3072, %v3071
  %v3324 = vpack.c.b16 %v3074, %v3073
  %v3325 = vpack.c.b16 %v3076, %v3075
  %v3326 = vpack.c.b16 %v3078, %v3077
  %v3327 = vpack.c.b16 %v3080, %v3079
  %v3328 = vpack.c.b16 %v3082, %v3081
  %v3329 = vpack.c.b16 %v3084, %v3083
  %v3330 = vpack.c.b16 %v3086, %v3085
  %v3331 = vpack.c.b16 %v3088, %v3087
  %v3332 = vpack.c.b16 %v3090, %v3089
  %v3333 = vpack.c.b16 %v3092, %v3091
  %v3334 = vpack.c.b16 %v3094, %v3093
  %v3335 = vpack.c.b16 %v3096, %v3095
  %v3336 = vpack.c.b16 %v3098, %v3097
  %v3337 = vpack.c.b16 %v3100, %v3099
  %v3338 = vpack.c.b16 %v3102, %v3101
  %v3339 = vpack.c.b16 %v3104, %v3103
  %v3340 = vpack.c.b16 %v3106, %v3105
  %v3341 = vpack.c.b16 %v3108, %v3107
  %v3342 = vpack.c.b16 %v3110, %v3109
  %v3343 = vpack.c.b16 %v3112, %v3111
  %v3344 = vpack.c.b16 %v3114, %v3113
  %v3345 = vpack.c.b16 %v3116, %v3115
  %v3346 = vpack.c.b16 %v3118, %v3117
  %v3347 = vpack.c.b16 %v3120, %v3119
  %v3348 = vpack.c.b16 %v3122, %v3121
  %v3349 = vpack.c.b16 %v3124, %v3123
  %v3350 = vpack.c.b16 %v3126, %v3125
  %v3351 = vpack.c.b16 %v3128, %v3127
  %v3352 = vpack.c.b16 %v3130, %v3129
  %v3353 = vpack.c.b16 %v3132, %v3131
  %v3354 = vpack.c.b16 %v3134, %v3133
  %v3355 = vpack.c.b16 %v3136, %v3135
  %v3356 = vpack.c.b16 %v3138, %v3137
  %v3357 = vpack.c.b16 %v3140, %v3139
  %v3358 = vpack.c.b16 %v3142, %v3141
  %v3359 = vpack.c.b16 %v3144, %v3143
  %v3360 = vpack.c.b16 %v3146, %v3145
  %v3361 = vpack.c.b16 %v3148, %v3147
  %v3362 = vpack.c.b16 %v3150, %v3149
  %v3363 = vpack.c.b16 %v3152, %v3151
  %v3364 = vpack.c.b16 %v3154, %v3153
  %v3365 = vpack.c.b16 %v3156, %v3155
  %v3366 = vpack.c.b16 %v3158, %v3157
  %v3367 = vpack.c.b16 %v3160, %v3159
  %v3368 = vpack.c.b16 %v3162, %v3161
  %v3369 = vpack.c.b16 %v3164, %v3163
  %v3370 = vpack.c.b16 %v3166, %v3165
  %v3371 = vpack.c.b16 %v3168, %v3167
  %v3372 = vpack.c.b16 %v3170, %v3169
  %v3373 = vpack.c.b16 %v3172, %v3171
  %v3374 = vpack.c.b16 %v3174, %v3173
  %v3375 = vpack.c.b16 %v3176, %v3175
  %v3376 = vpack.c.b16 %v3178, %v3177
  %v3377 = vpack.c.b16 %v3180, %v3179
  %v3378 = vpack.c.b16 %v3182, %v3181
  %v3379 = vpack.c.b16 %v3184, %v3183
  %v3380 = vpack.c.b16 %v3186, %v3185
  %v3381 = vpack.c.b16 %v3188, %v3187
  %v3382 = vpack.c.b16 %v3190, %v3189
  %v3383 = vpack.c.b16 %v3192, %v3191
  %v3384 = vpack.c.b16 %v3194, %v3193
  %v3385 = vpack.c.b16 %v3196, %v3195
  %v3386 = vpack.c.b16 %v3198, %v3197
  %v3387 = vpack.c.b16 %v3200, %v3199
  %v3388 = vpack.c.b16 %v3202, %v3201
  %v3389 = vpack.c.b16 %v3204, %v3203
  %v3390 = vpack.c.b16 %v3206, %v3205
  %v3391 = vpack.c.b16 %v3208, %v3207
  %v3392 = vpack.c.b16 %v3210, %v3209
  %v3393 = vpack.c.b16 %v3212, %v3211
  %v3394 = vpack.c.b16 %v3214, %v3213
  %v3395 = vpack.c.b16 %v3216, %v3215
  %v3396 = vpack.c.b16 %v3218, %v3217
  %v3397 = vpack.c.b16 %v3220, %v3219
  %v3398 = vpack.c.b16 %v3222, %v3221
  %v3399 = vpack.c.b16 %v3224, %v3223
  %v3400 = vpack.c.b16 %v3226, %v3225
  %v3401 = vpack.c.b16 %v3228, %v3227
  %v3402 = vpack.c.b16 %v3230, %v3229
  %v3403 = vpack.c.b16 %v3232, %v3231
  %v3404 = vpack.c.b16 %v3234, %v3233
  %v3405 = vpack.c.b16 %v3236, %v3235
  %v3406 = vpack.c.b16 %v3238, %v3237
  %v3407 = vpack.c.b16 %v3240, %v3239
  %v3408 = vpack.c.b16 %v3242, %v3241
  %v3409 = vpack.c.b16 %v3244, %v3243
  %v3410 = vpack.c.b16 %v3246, %v3245
  %v3411 = vpack.c.b16 %v3248, %v3247
  %v3412 = vpack.c.b16 %v3250, %v3249
  %v3413 = vpack.c.b16 %v3252, %v3251
  %v3414 = vpack.c.b16 %v3254, %v3253
  %v3415 = vpack.c.b16 %v3256, %v3255
  %v3416 = vpack.c.b16 %v3258, %v3257
  %v3417 = vpack.c.b16 %v3260, %v3259
  %v3418 = vpack.c.b16 %v3262, %v3261
  %v3419 = vpack.c.b16 %v3264, %v3263
  %v3420 = vpack.c.b16 %v3266, %v3265
  %v3421 = vpack.c.b16 %v3268, %v3267
  %v3422 = vpack.c.b16 %v3270, %v3269
  %v3423 = vpack.c.b16 %v3272, %v3271
  %v3424 = vpack.c.b16 %v3274, %v3273
  %v3425 = vpack.c.b16 %v3276, %v3275
  %v3426 = vpack.c.b16 %v3278, %v3277
  %v3427 = vpack.c.b16 %v3280, %v3279
  %v3428 = vpack.c.b16 %v3282, %v3281
  %v3429 = vpack.c.b16 %v3284, %v3283
  %v3430 = vpack.c.b16 %v3286, %v3285
  %v3431 = vpack.c.b16 %v3288, %v3287
  %v3432 = vpack.c.b16 %v3290, %v3289
  %v3433 = vpack.c.b16 %v3292, %v3291
  %v3434 = vpack.c.b16 %v3294, %v3293
  %v3435 = vpack.c.b16 %v3296, %v3295
  %v3436 = vpack.c.b16 %v3298, %v3297
  %v3437 = vpack.c.b16 %v3300, %v3299
  %v3438 = vpack.c.b16 %v3302, %v3301
  %v3439 = vpack.c.b16 %v3304, %v3303
  %v3440 = vpack.c.b16 %v3306, %v3305
  %v3441 = vpack.c.b16 %v3308, %v3307
  %v3442 = vpack.c.b16 %v3310, %v3309
  %v3443 = vpack.c.b16 %v3312, %v3311
  %v3444 = vpack.c.b16 %v3314, %v3313
  %v3445 = vpack.c.b16 %v3316, %v3315
  %v3446 = vpack.c.b16 %v3318, %v3317
  %3575 = vmatprep.subr.bf16.mxu0 0
  %3576 = vmatpush1.bf16.msra.mxu0 %v3319
  %3577 = vmatprep.subr.bf16.mxu0 0
  %3578 = vmatpush1.bf16.msra.mxu0 %v3320
  %3579 = vmatprep.subr.bf16.mxu0 0
  %3580 = vmatpush1.bf16.msra.mxu0 %v3321
  %3581 = vmatprep.subr.bf16.mxu0 0
  %3582 = vmatpush1.bf16.msra.mxu0 %v3322
  %3583 = vmatprep.subr.bf16.mxu0 0
  %3584 = vmatpush1.bf16.msra.mxu0 %v3323
  %3585 = vmatprep.subr.bf16.mxu0 0
  %3586 = vmatpush1.bf16.msra.mxu0 %v3324
  %3587 = vmatprep.subr.bf16.mxu0 0
  %3588 = vmatpush1.bf16.msra.mxu0 %v3325
  %3589 = vmatprep.subr.bf16.mxu0 0
  %3590 = vmatpush1.bf16.msra.mxu0 %v3326
  %3591 = vmatprep.subr.bf16.mxu0 0
  %3592 = vmatpush1.bf16.msra.mxu0 %v3327
  %3593 = vmatprep.subr.bf16.mxu0 0
  %3594 = vmatpush1.bf16.msra.mxu0 %v3328
  %3595 = vmatprep.subr.bf16.mxu0 0
  %3596 = vmatpush1.bf16.msra.mxu0 %v3329
  %3597 = vmatprep.subr.bf16.mxu0 0
  %3598 = vmatpush1.bf16.msra.mxu0 %v3330
  %3599 = vmatprep.subr.bf16.mxu0 0
  %3600 = vmatpush1.bf16.msra.mxu0 %v3331
  %3601 = vmatprep.subr.bf16.mxu0 0
  %3602 = vmatpush1.bf16.msra.mxu0 %v3332
  %3603 = vmatprep.subr.bf16.mxu0 0
  %3604 = vmatpush1.bf16.msra.mxu0 %v3333
  %3605 = vmatprep.subr.bf16.mxu0 0
  %3606 = vmatpush1.bf16.msra.mxu0 %v3334
  %3607 = vmatprep.mubr.bf16.mxu0 %v2529
  %3608 = vmatmul.mubr.bf16.gmra.mrb[0].mxu0 %v2528
  %v3609 = vpop.f32.mrb[0].mxu0
  %v3610 = vadd.f32 %v2805, %v3609
  %v3611 = vpop.f32.mrb[0].mxu0
  %v3612 = vpop.f32.mrb[0].mxu0
  %v3613 = vadd.f32 %v2805, %v3612
  %v3614 = vpop.f32.mrb[0].mxu0
  %3615 = vdwg.mxu0
  %3616 = vmatprep.subr.bf16.mxu0 0
  %3617 = vmatpush1.bf16.msra.mxu0 %v3335
  %3618 = vmatprep.subr.bf16.mxu0 0
  %3619 = vmatpush1.bf16.msra.mxu0 %v3336
  %3620 = vmatprep.subr.bf16.mxu0 0
  %3621 = vmatpush1.bf16.msra.mxu0 %v3337
  %3622 = vmatprep.subr.bf16.mxu0 0
  %3623 = vmatpush1.bf16.msra.mxu0 %v3338
  %3624 = vmatprep.subr.bf16.mxu0 0
  %3625 = vmatpush1.bf16.msra.mxu0 %v3339
  %3626 = vmatprep.subr.bf16.mxu0 0
  %3627 = vmatpush1.bf16.msra.mxu0 %v3340
  %3628 = vmatprep.subr.bf16.mxu0 0
  %3629 = vmatpush1.bf16.msra.mxu0 %v3341
  %3630 = vmatprep.subr.bf16.mxu0 0
  %3631 = vmatpush1.bf16.msra.mxu0 %v3342
  %3632 = vmatprep.subr.bf16.mxu0 0
  %3633 = vmatpush1.bf16.msra.mxu0 %v3343
  %3634 = vmatprep.subr.bf16.mxu0 0
  %3635 = vmatpush1.bf16.msra.mxu0 %v3344
  %3636 = vmatprep.subr.bf16.mxu0 0
  %3637 = vmatpush1.bf16.msra.mxu0 %v3345
  %3638 = vmatprep.subr.bf16.mxu0 0
  %3639 = vmatpush1.bf16.msra.mxu0 %v3346
  %3640 = vmatprep.subr.bf16.mxu0 0
  %3641 = vmatpush1.bf16.msra.mxu0 %v3347
  %3642 = vmatprep.subr.bf16.mxu0 0
  %3643 = vmatpush1.bf16.msra.mxu0 %v3348
  %3644 = vmatprep.subr.bf16.mxu0 0
  %3645 = vmatpush1.bf16.msra.mxu0 %v3349
  %3646 = vmatprep.subr.bf16.mxu0 0
  %3647 = vmatpush1.bf16.msra.mxu0 %v3350
  %3648 = vmatprep.mubr.bf16.mxu0 %v2531
  %3649 = vmatmul.mubr.bf16.gmra.mrb[0].mxu0 %v2530
  %v3650 = vpop.f32.mrb[0].mxu0
  %v3651 = vadd.f32 %v3610, %v3650
  %v3652 = vpop.f32.mrb[0].mxu0
  %v3653 = vpop.f32.mrb[0].mxu0
  %v3654 = vadd.f32 %v3613, %v3653
  %v3655 = vpop.f32.mrb[0].mxu0
  %3656 = vdwg.mxu0
  %3657 = vmatprep.subr.bf16.mxu0 0
  %3658 = vmatpush1.bf16.msra.mxu0 %v3351
  %3659 = vmatprep.subr.bf16.mxu0 0
  %3660 = vmatpush1.bf16.msra.mxu0 %v3352
  %3661 = vmatprep.subr.bf16.mxu0 0
  %3662 = vmatpush1.bf16.msra.mxu0 %v3353
  %3663 = vmatprep.subr.bf16.mxu0 0
  %3664 = vmatpush1.bf16.msra.mxu0 %v3354
  %3665 = vmatprep.subr.bf16.mxu0 0
  %3666 = vmatpush1.bf16.msra.mxu0 %v3355
  %3667 = vmatprep.subr.bf16.mxu0 0
  %3668 = vmatpush1.bf16.msra.mxu0 %v3356
  %3669 = vmatprep.subr.bf16.mxu0 0
  %3670 = vmatpush1.bf16.msra.mxu0 %v3357
  %3671 = vmatprep.subr.bf16.mxu0 0
  %3672 = vmatpush1.bf16.msra.mxu0 %v3358
  %3673 = vmatprep.subr.bf16.mxu0 0
  %3674 = vmatpush1.bf16.msra.mxu0 %v3359
  %3675 = vmatprep.subr.bf16.mxu0 0
  %3676 = vmatpush1.bf16.msra.mxu0 %v3360
  %3677 = vmatprep.subr.bf16.mxu0 0
  %3678 = vmatpush1.bf16.msra.mxu0 %v3361
  %3679 = vmatprep.subr.bf16.mxu0 0
  %3680 = vmatpush1.bf16.msra.mxu0 %v3362
  %3681 = vmatprep.subr.bf16.mxu0 0
  %3682 = vmatpush1.bf16.msra.mxu0 %v3363
  %3683 = vmatprep.subr.bf16.mxu0 0
  %3684 = vmatpush1.bf16.msra.mxu0 %v3364
  %3685 = vmatprep.subr.bf16.mxu0 0
  %3686 = vmatpush1.bf16.msra.mxu0 %v3365
  %3687 = vmatprep.subr.bf16.mxu0 0
  %3688 = vmatpush1.bf16.msra.mxu0 %v3366
  %3689 = vmatprep.mubr.bf16.mxu0 %v2533
  %3690 = vmatmul.mubr.bf16.gmra.mrb[0].mxu0 %v2532
  %v3691 = vpop.f32.mrb[0].mxu0
  %v3692 = vadd.f32 %v3651, %v3691
  %v3693 = vpop.f32.mrb[0].mxu0
  %v3694 = vpop.f32.mrb[0].mxu0
  %v3695 = vadd.f32 %v3654, %v3694
  %v3696 = vpop.f32.mrb[0].mxu0
  %3697 = vdwg.mxu0
  %3698 = vmatprep.subr.bf16.mxu0 0
  %3699 = vmatpush1.bf16.msra.mxu0 %v3367
  %3700 = vmatprep.subr.bf16.mxu0 0
  %3701 = vmatpush1.bf16.msra.mxu0 %v3368
  %3702 = vmatprep.subr.bf16.mxu0 0
  %3703 = vmatpush1.bf16.msra.mxu0 %v3369
  %3704 = vmatprep.subr.bf16.mxu0 0
  %3705 = vmatpush1.bf16.msra.mxu0 %v3370
  %3706 = vmatprep.subr.bf16.mxu0 0
  %3707 = vmatpush1.bf16.msra.mxu0 %v3371
  %3708 = vmatprep.subr.bf16.mxu0 0
  %3709 = vmatpush1.bf16.msra.mxu0 %v3372
  %3710 = vmatprep.subr.bf16.mxu0 0
  %3711 = vmatpush1.bf16.msra.mxu0 %v3373
  %3712 = vmatprep.subr.bf16.mxu0 0
  %3713 = vmatpush1.bf16.msra.mxu0 %v3374
  %3714 = vmatprep.subr.bf16.mxu0 0
  %3715 = vmatpush1.bf16.msra.mxu0 %v3375
  %3716 = vmatprep.subr.bf16.mxu0 0
  %3717 = vmatpush1.bf16.msra.mxu0 %v3376
  %3718 = vmatprep.subr.bf16.mxu0 0
  %3719 = vmatpush1.bf16.msra.mxu0 %v3377
  %3720 = vmatprep.subr.bf16.mxu0 0
  %3721 = vmatpush1.bf16.msra.mxu0 %v3378
  %3722 = vmatprep.subr.bf16.mxu0 0
  %3723 = vmatpush1.bf16.msra.mxu0 %v3379
  %3724 = vmatprep.subr.bf16.mxu0 0
  %3725 = vmatpush1.bf16.msra.mxu0 %v3380
  %3726 = vmatprep.subr.bf16.mxu0 0
  %3727 = vmatpush1.bf16.msra.mxu0 %v3381
  %3728 = vmatprep.subr.bf16.mxu0 0
  %3729 = vmatpush1.bf16.msra.mxu0 %v3382
  %3730 = vmatprep.mubr.bf16.mxu0 %v2535
  %3731 = vmatmul.mubr.bf16.gmra.mrb[0].mxu0 %v2534
  %v3732 = vpop.f32.mrb[0].mxu0
  %v3733 = vadd.f32 %v3692, %v3732
  %v3734 = vpop.f32.mrb[0].mxu0
  %v3735 = vpop.f32.mrb[0].mxu0
  %v3736 = vadd.f32 %v3695, %v3735
  %v3737 = vpop.f32.mrb[0].mxu0
  %3738 = vdwg.mxu0
  %3739 = vmatprep.subr.bf16.mxu0 0
  %3740 = vmatpush1.bf16.msra.mxu0 %v3383
  %3741 = vmatprep.subr.bf16.mxu0 0
  %3742 = vmatpush1.bf16.msra.mxu0 %v3384
  %3743 = vmatprep.subr.bf16.mxu0 0
  %3744 = vmatpush1.bf16.msra.mxu0 %v3385
  %3745 = vmatprep.subr.bf16.mxu0 0
  %3746 = vmatpush1.bf16.msra.mxu0 %v3386
  %3747 = vmatprep.subr.bf16.mxu0 0
  %3748 = vmatpush1.bf16.msra.mxu0 %v3387
  %3749 = vmatprep.subr.bf16.mxu0 0
  %3750 = vmatpush1.bf16.msra.mxu0 %v3388
  %3751 = vmatprep.subr.bf16.mxu0 0
  %3752 = vmatpush1.bf16.msra.mxu0 %v3389
  %3753 = vmatprep.subr.bf16.mxu0 0
  %3754 = vmatpush1.bf16.msra.mxu0 %v3390
  %3755 = vmatprep.subr.bf16.mxu0 0
  %3756 = vmatpush1.bf16.msra.mxu0 %v3391
  %3757 = vmatprep.subr.bf16.mxu0 0
  %3758 = vmatpush1.bf16.msra.mxu0 %v3392
  %3759 = vmatprep.subr.bf16.mxu0 0
  %3760 = vmatpush1.bf16.msra.mxu0 %v3393
  %3761 = vmatprep.subr.bf16.mxu0 0
  %3762 = vmatpush1.bf16.msra.mxu0 %v3394
  %3763 = vmatprep.subr.bf16.mxu0 0
  %3764 = vmatpush1.bf16.msra.mxu0 %v3395
  %3765 = vmatprep.subr.bf16.mxu0 0
  %3766 = vmatpush1.bf16.msra.mxu0 %v3396
  %3767 = vmatprep.subr.bf16.mxu0 0
  %3768 = vmatpush1.bf16.msra.mxu0 %v3397
  %3769 = vmatprep.subr.bf16.mxu0 0
  %3770 = vmatpush1.bf16.msra.mxu0 %v3398
  %3771 = vmatprep.mubr.bf16.mxu0 %v2537
  %3772 = vmatmul.mubr.bf16.gmra.mrb[0].mxu0 %v2536
  %v3773 = vpop.f32.mrb[0].mxu0
  %v3774 = vadd.f32 %v3733, %v3773
  %v3775 = vpop.f32.mrb[0].mxu0
  %v3776 = vpop.f32.mrb[0].mxu0
  %v3777 = vadd.f32 %v3736, %v3776
  %v3778 = vpop.f32.mrb[0].mxu0
  %3779 = vdwg.mxu0
  %3780 = vmatprep.subr.bf16.mxu0 0
  %3781 = vmatpush1.bf16.msra.mxu0 %v3399
  %3782 = vmatprep.subr.bf16.mxu0 0
  %3783 = vmatpush1.bf16.msra.mxu0 %v3400
  %3784 = vmatprep.subr.bf16.mxu0 0
  %3785 = vmatpush1.bf16.msra.mxu0 %v3401
  %3786 = vmatprep.subr.bf16.mxu0 0
  %3787 = vmatpush1.bf16.msra.mxu0 %v3402
  %3788 = vmatprep.subr.bf16.mxu0 0
  %3789 = vmatpush1.bf16.msra.mxu0 %v3403
  %3790 = vmatprep.subr.bf16.mxu0 0
  %3791 = vmatpush1.bf16.msra.mxu0 %v3404
  %3792 = vmatprep.subr.bf16.mxu0 0
  %3793 = vmatpush1.bf16.msra.mxu0 %v3405
  %3794 = vmatprep.subr.bf16.mxu0 0
  %3795 = vmatpush1.bf16.msra.mxu0 %v3406
  %3796 = vmatprep.subr.bf16.mxu0 0
  %3797 = vmatpush1.bf16.msra.mxu0 %v3407
  %3798 = vmatprep.subr.bf16.mxu0 0
  %3799 = vmatpush1.bf16.msra.mxu0 %v3408
  %3800 = vmatprep.subr.bf16.mxu0 0
  %3801 = vmatpush1.bf16.msra.mxu0 %v3409
  %3802 = vmatprep.subr.bf16.mxu0 0
  %3803 = vmatpush1.bf16.msra.mxu0 %v3410
  %3804 = vmatprep.subr.bf16.mxu0 0
  %3805 = vmatpush1.bf16.msra.mxu0 %v3411
  %3806 = vmatprep.subr.bf16.mxu0 0
  %3807 = vmatpush1.bf16.msra.mxu0 %v3412
  %3808 = vmatprep.subr.bf16.mxu0 0
  %3809 = vmatpush1.bf16.msra.mxu0 %v3413
  %3810 = vmatprep.subr.bf16.mxu0 0
  %3811 = vmatpush1.bf16.msra.mxu0 %v3414
  %3812 = vmatprep.mubr.bf16.mxu0 %v2539
  %3813 = vmatmul.mubr.bf16.gmra.mrb[0].mxu0 %v2538
  %v3814 = vpop.f32.mrb[0].mxu0
  %v3815 = vadd.f32 %v3774, %v3814
  %v3816 = vpop.f32.mrb[0].mxu0
  %v3817 = vpop.f32.mrb[0].mxu0
  %v3818 = vadd.f32 %v3777, %v3817
  %v3819 = vpop.f32.mrb[0].mxu0
  %3820 = vdwg.mxu0
  %3821 = vmatprep.subr.bf16.mxu0 0
  %3822 = vmatpush1.bf16.msra.mxu0 %v3415
  %3823 = vmatprep.subr.bf16.mxu0 0
  %3824 = vmatpush1.bf16.msra.mxu0 %v3416
  %3825 = vmatprep.subr.bf16.mxu0 0
  %3826 = vmatpush1.bf16.msra.mxu0 %v3417
  %3827 = vmatprep.subr.bf16.mxu0 0
  %3828 = vmatpush1.bf16.msra.mxu0 %v3418
  %3829 = vmatprep.subr.bf16.mxu0 0
  %3830 = vmatpush1.bf16.msra.mxu0 %v3419
  %3831 = vmatprep.subr.bf16.mxu0 0
  %3832 = vmatpush1.bf16.msra.mxu0 %v3420
  %3833 = vmatprep.subr.bf16.mxu0 0
  %3834 = vmatpush1.bf16.msra.mxu0 %v3421
  %3835 = vmatprep.subr.bf16.mxu0 0
  %3836 = vmatpush1.bf16.msra.mxu0 %v3422
  %3837 = vmatprep.subr.bf16.mxu0 0
  %3838 = vmatpush1.bf16.msra.mxu0 %v3423
  %3839 = vmatprep.subr.bf16.mxu0 0
  %3840 = vmatpush1.bf16.msra.mxu0 %v3424
  %3841 = vmatprep.subr.bf16.mxu0 0
  %3842 = vmatpush1.bf16.msra.mxu0 %v3425
  %3843 = vmatprep.subr.bf16.mxu0 0
  %3844 = vmatpush1.bf16.msra.mxu0 %v3426
  %3845 = vmatprep.subr.bf16.mxu0 0
  %3846 = vmatpush1.bf16.msra.mxu0 %v3427
  %3847 = vmatprep.subr.bf16.mxu0 0
  %3848 = vmatpush1.bf16.msra.mxu0 %v3428
  %3849 = vmatprep.subr.bf16.mxu0 0
  %3850 = vmatpush1.bf16.msra.mxu0 %v3429
  %3851 = vmatprep.subr.bf16.mxu0 0
  %3852 = vmatpush1.bf16.msra.mxu0 %v3430
  %3853 = vmatprep.mubr.bf16.mxu0 %v2541
  %3854 = vmatmul.mubr.bf16.gmra.mrb[0].mxu0 %v2540
  %v3855 = vpop.f32.mrb[0].mxu0
  %v3856 = vadd.f32 %v3815, %v3855
  %v3857 = vpop.f32.mrb[0].mxu0
  %v3858 = vpop.f32.mrb[0].mxu0
  %v3859 = vadd.f32 %v3818, %v3858
  %v3860 = vpop.f32.mrb[0].mxu0
  %3861 = vdwg.mxu0
  %3862 = vmatprep.subr.bf16.mxu0 0
  %3863 = vmatpush1.bf16.msra.mxu0 %v3431
  %3864 = vmatprep.subr.bf16.mxu0 0
  %3865 = vmatpush1.bf16.msra.mxu0 %v3432
  %3866 = vmatprep.subr.bf16.mxu0 0
  %3867 = vmatpush1.bf16.msra.mxu0 %v3433
  %3868 = vmatprep.subr.bf16.mxu0 0
  %3869 = vmatpush1.bf16.msra.mxu0 %v3434
  %3870 = vmatprep.subr.bf16.mxu0 0
  %3871 = vmatpush1.bf16.msra.mxu0 %v3435
  %3872 = vmatprep.subr.bf16.mxu0 0
  %3873 = vmatpush1.bf16.msra.mxu0 %v3436
  %3874 = vmatprep.subr.bf16.mxu0 0
  %3875 = vmatpush1.bf16.msra.mxu0 %v3437
  %3876 = vmatprep.subr.bf16.mxu0 0
  %3877 = vmatpush1.bf16.msra.mxu0 %v3438
  %3878 = vmatprep.subr.bf16.mxu0 0
  %3879 = vmatpush1.bf16.msra.mxu0 %v3439
  %3880 = vmatprep.subr.bf16.mxu0 0
  %3881 = vmatpush1.bf16.msra.mxu0 %v3440
  %3882 = vmatprep.subr.bf16.mxu0 0
  %3883 = vmatpush1.bf16.msra.mxu0 %v3441
  %3884 = vmatprep.subr.bf16.mxu0 0
  %3885 = vmatpush1.bf16.msra.mxu0 %v3442
  %3886 = vmatprep.subr.bf16.mxu0 0
  %3887 = vmatpush1.bf16.msra.mxu0 %v3443
  %3888 = vmatprep.subr.bf16.mxu0 0
  %3889 = vmatpush1.bf16.msra.mxu0 %v3444
  %3890 = vmatprep.subr.bf16.mxu0 0
  %3891 = vmatpush1.bf16.msra.mxu0 %v3445
  %3892 = vmatprep.subr.bf16.mxu0 0
  %3893 = vmatpush1.bf16.msra.mxu0 %v3446
  %3894 = vmatprep.mubr.bf16.mxu0 %v2543
  %3895 = vmatmul.mubr.bf16.gmra.mrb[0].mxu0 %v2542
  %v3896 = vpop.f32.mrb[0].mxu0
  %v3897 = vadd.f32 %v3856, %v3896
  %v3898 = vpop.f32.mrb[0].mxu0
  %v3899 = vpop.f32.mrb[0].mxu0
  %v3900 = vadd.f32 %v3859, %v3899
  %v3901 = vpop.f32.mrb[0].mxu0
  %3902 = vdwg.mxu0
  %v3903 = vadd.f32 %v1773, %v3897
  %v3904 = vadd.f32 %v1774, %v3900
  %v3905 = vld [vmem:[%s15] sm:$0x1]
  %v3906 = vld [vmem:[%s16] sm:$0x1]
  %v3907 = vsel %vm289, %v3903, 0.0
  %3908 = vadd.xlane.f32.xlu0 %v3907
  %v3909 = vpop.xlane.xlu0 %3908
  %v3910 = vsel %vm289, %v3904, 0.0
  %3911 = vadd.xlane.f32.xlu0 %v3910
  %v3912 = vpop.xlane.xlu0 %3911
  %v3913 = vmul.f32 %v3909, %v1738
  %v3914 = vmul.f32 %v3912, %v1738
  %v3915 = vsub.f32 %v3903, %v3913
  %v3916 = vsub.f32 %v3904, %v3914
  %v3917 = vmul.f32 %v3915, %v3915
  %v3918 = vmul.f32 %v3916, %v3916
  %v3919 = vsel %vm289, %v3917, 0.0
  %3920 = vadd.xlane.f32.xlu0 %v3919
  %v3921 = vpop.xlane.xlu0 %3920
  %v3922 = vsel %vm289, %v3918, 0.0
  %3923 = vadd.xlane.f32.xlu0 %v3922
  %v3924 = vpop.xlane.xlu0 %3923
  %v3925 = vmul.f32 %v3921, %v1738
  %v3926 = vmul.f32 %v3924, %v1738
  %v3927 = vadd.f32 %v3925, 1e-05
  %v3928 = vadd.f32 %v3926, 1e-05
  %v3929 = vrsqrt.pop %v3927
  %v3930 = vrsqrt.pop %v3928
  %v3931 = vmul.f32 %v3915, %v3929
  %v3932 = vmul.f32 %v3916, %v3930
  %v3934 = vlaneseq
  %v3935 = vshrl.u32 %v3934, 7
  %v3936 = vsub.s32 0, %v3935
  %v3937 = vrot.slane %v3905, %v3936
  %v3939 = vmul.f32 %v3931, %v3937
  %v3940 = vmul.f32 %v3932, %v3937
  %v3942 = vlaneseq
  %v3943 = vshrl.u32 %v3942, 7
  %v3944 = vsub.s32 0, %v3943
  %v3945 = vrot.slane %v3906, %v3944
  %v3947 = vadd.f32 %v3939, %v3945
  %v3948 = vadd.f32 %v3940, %v3945
  %s3949 = scalar_lea.vmem %s5, 480
  %v3950 = vld [vmem:[%s3949] sm:$0xff]
  %v3951 = vld [vmem:[%s3949 + $0x8] sm:$0xff]
  %v3952 = vld [vmem:[%s3949 + $0x10] sm:$0xff]
  %v3953 = vld [vmem:[%s3949 + $0x18] sm:$0xff]
  %v3954 = vld [vmem:[%s3949 + $0x20] sm:$0xff]
  %v3955 = vld [vmem:[%s3949 + $0x28] sm:$0xff]
  %v3956 = vld [vmem:[%s3949 + $0x30] sm:$0xff]
  %v3957 = vld [vmem:[%s3949 + $0x38] sm:$0xff]
  %v3958 = vld [vmem:[%s3949 + $0x40] sm:$0xff]
  %v3959 = vld [vmem:[%s3949 + $0x48] sm:$0xff]
  %v3960 = vld [vmem:[%s3949 + $0x50] sm:$0xff]
  %v3961 = vld [vmem:[%s3949 + $0x58] sm:$0xff]
  %v3962 = vld [vmem:[%s3949 + $0x60] sm:$0xff]
  %v3963 = vld [vmem:[%s3949 + $0x68] sm:$0xff]
  %v3964 = vld [vmem:[%s3949 + $0x70] sm:$0xff]
  %v3965 = vld [vmem:[%s3949 + $0x78] sm:$0xff]
  %v3966 = vld [vmem:[%s3949 + $0x80] sm:$0xff]
  %v3967 = vld [vmem:[%s3949 + $0x88] sm:$0xff]
  %v3968 = vld [vmem:[%s3949 + $0x90] sm:$0xff]
  %v3969 = vld [vmem:[%s3949 + $0x98] sm:$0xff]
  %v3970 = vld [vmem:[%s3949 + $0xa0] sm:$0xff]
  %v3971 = vld [vmem:[%s3949 + $0xa8] sm:$0xff]
  %v3972 = vld [vmem:[%s3949 + $0xb0] sm:$0xff]
  %v3973 = vld [vmem:[%s3949 + $0xb8] sm:$0xff]
  %v3974 = vld [vmem:[%s3949 + $0xc0] sm:$0xff]
  %v3975 = vld [vmem:[%s3949 + $0xc8] sm:$0xff]
  %v3976 = vld [vmem:[%s3949 + $0xd0] sm:$0xff]
  %v3977 = vld [vmem:[%s3949 + $0xd8] sm:$0xff]
  %v3978 = vld [vmem:[%s3949 + $0xe0] sm:$0xff]
  %v3979 = vld [vmem:[%s3949 + $0xe8] sm:$0xff]
  %v3980 = vld [vmem:[%s3949 + $0xf0] sm:$0xff]
  %v3981 = vld [vmem:[%s3949 + $0xf8] sm:$0xff]
  %v3982 = vld [vmem:[%s3949 + $0x100] sm:$0xff]
  %v3983 = vld [vmem:[%s3949 + $0x108] sm:$0xff]
  %v3984 = vld [vmem:[%s3949 + $0x110] sm:$0xff]
  %v3985 = vld [vmem:[%s3949 + $0x118] sm:$0xff]
  %v3986 = vld [vmem:[%s3949 + $0x120] sm:$0xff]
  %v3987 = vld [vmem:[%s3949 + $0x128] sm:$0xff]
  %v3988 = vld [vmem:[%s3949 + $0x130] sm:$0xff]
  %v3989 = vld [vmem:[%s3949 + $0x138] sm:$0xff]
  %v3990 = vld [vmem:[%s3949 + $0x140] sm:$0xff]
  %v3991 = vld [vmem:[%s3949 + $0x148] sm:$0xff]
  %v3992 = vld [vmem:[%s3949 + $0x150] sm:$0xff]
  %v3993 = vld [vmem:[%s3949 + $0x158] sm:$0xff]
  %v3994 = vld [vmem:[%s3949 + $0x160] sm:$0xff]
  %v3995 = vld [vmem:[%s3949 + $0x168] sm:$0xff]
  %v3996 = vld [vmem:[%s3949 + $0x170] sm:$0xff]
  %v3997 = vld [vmem:[%s3949 + $0x178] sm:$0xff]
  %v3998 = vld [vmem:[%s3949 + $0x180] sm:$0xf]
  %v3999 = vld [vmem:[%s3949 + $0x188] sm:$0xf]
  %v4000 = vld [vmem:[%s3949 + $0x190] sm:$0xf]
  %v4001 = vld [vmem:[%s3949 + $0x198] sm:$0xf]
  %v4002 = vld [vmem:[%s3949 + $0x1a0] sm:$0xf]
  %v4003 = vld [vmem:[%s3949 + $0x1a8] sm:$0xf]
  %v4004 = vld [vmem:[%s3949 + $0x1b0] sm:$0xf]
  %v4005 = vld [vmem:[%s3949 + $0x1b8] sm:$0xf]
  %v4006 = vld [vmem:[%s3949 + $0x1c0] sm:$0xf]
  %v4007 = vld [vmem:[%s3949 + $0x1c8] sm:$0xf]
  %v4008 = vld [vmem:[%s3949 + $0x1d0] sm:$0xf]
  %v4009 = vld [vmem:[%s3949 + $0x1d8] sm:$0xf]
  %s4010 = scalar_lea.vmem %s6, 12
  %v4011 = vld [vmem:[%s4010] sm:$0xff]
  %v4012 = vld [vmem:[%s4010 + $0x8] sm:$0xf]
  %v4015 = vlaneseq
  %v4016 = vshrl.u32 %v4015, 7
  %v4017 = vsub.s32 0, %v4016
  %v4018 = vrot.slane %v4011, %v4017
  %v4019 = vlaneseq
  %v4020 = vshrl.u32 %v4019, 7
  %v4021 = vsub.s32 1, %v4020
  %v4022 = vrot.slane %v4011, %v4021
  %v4023 = vlaneseq
  %v4024 = vshrl.u32 %v4023, 7
  %v4025 = vsub.s32 2, %v4024
  %v4026 = vrot.slane %v4011, %v4025
  %v4027 = vlaneseq
  %v4028 = vshrl.u32 %v4027, 7
  %v4029 = vsub.s32 3, %v4028
  %v4030 = vrot.slane %v4011, %v4029
  %v4031 = vlaneseq
  %v4032 = vshrl.u32 %v4031, 7
  %v4033 = vsub.s32 4, %v4032
  %v4034 = vrot.slane %v4011, %v4033
  %v4035 = vlaneseq
  %v4036 = vshrl.u32 %v4035, 7
  %v4037 = vsub.s32 5, %v4036
  %v4038 = vrot.slane %v4011, %v4037
  %v4039 = vlaneseq
  %v4040 = vshrl.u32 %v4039, 7
  %v4041 = vsub.s32 6, %v4040
  %v4042 = vrot.slane %v4011, %v4041
  %v4043 = vlaneseq
  %v4044 = vshrl.u32 %v4043, 7
  %v4045 = vsub.s32 7, %v4044
  %v4046 = vrot.slane %v4011, %v4045
  %v4047 = vlaneseq
  %v4048 = vshrl.u32 %v4047, 7
  %v4049 = vsub.s32 0, %v4048
  %v4050 = vrot.slane %v4012, %v4049
  %v4051 = vlaneseq
  %v4052 = vshrl.u32 %v4051, 7
  %v4053 = vsub.s32 1, %v4052
  %v4054 = vrot.slane %v4012, %v4053
  %v4055 = vlaneseq
  %v4056 = vshrl.u32 %v4055, 7
  %v4057 = vsub.s32 2, %v4056
  %v4058 = vrot.slane %v4012, %v4057
  %v4059 = vlaneseq
  %v4060 = vshrl.u32 %v4059, 7
  %v4061 = vsub.s32 3, %v4060
  %v4062 = vrot.slane %v4012, %v4061
  %v4076 = vsel %vm289, %v3947, 0
  %v4079 = vsel %vm289, %v3948, 0
  %v4082 = vsel %vm82, %v3998, 0
  %v4085 = vsel %vm82, %v3999, 0
  %v4088 = vsel %vm82, %v4000, 0
  %v4091 = vsel %vm82, %v4001, 0
  %v4094 = vsel %vm82, %v4002, 0
  %v4097 = vsel %vm82, %v4003, 0
  %v4100 = vsel %vm82, %v4004, 0
  %v4103 = vsel %vm82, %v4005, 0
  %v4106 = vsel %vm82, %v4006, 0
  %v4109 = vsel %vm82, %v4007, 0
  %v4112 = vsel %vm82, %v4008, 0
  %v4115 = vsel %vm82, %v4009, 0
  %4117 = vmatprep.subr.mxu0 %v3951
  %4118 = vmatpush1.msra.mxu0 %v3950
  %4119 = vmatprep.subr.mxu0 %v3963
  %4120 = vmatpush1.msra.mxu0 %v3962
  %4121 = vmatprep.subr.mxu0 %v3975
  %4122 = vmatpush1.msra.mxu0 %v3974
  %4123 = vmatprep.subr.mxu0 %v3987
  %4124 = vmatpush1.msra.mxu0 %v3986
  %4125 = vmatprep.subr.mxu0 %v4085
  %4126 = vmatpush1.msra.mxu0 %v4082
  %4127 = vmatprep.subr.mxu0 0.0
  %4128 = vmatpush1.msra.mxu0 0.0
  %4129 = vmatprep.subr.mxu0 0.0
  %4130 = vmatpush1.msra.mxu0 0.0
  %4131 = vmatprep.subr.mxu0 0.0
  %4132 = vmatpush1.msra.mxu0 0.0
  %4133 = vmatprep.subr.mxu0 0.0
  %4134 = vmatpush1.msra.mxu0 0.0
  %4135 = vmatprep.subr.mxu0 0.0
  %4136 = vmatpush1.msra.mxu0 0.0
  %4137 = vmatprep.subr.mxu0 0.0
  %4138 = vmatpush1.msra.mxu0 0.0
  %4139 = vmatprep.subr.mxu0 0.0
  %4140 = vmatpush1.msra.mxu0 0.0
  %4141 = vmatprep.subr.mxu0 0.0
  %4142 = vmatpush1.msra.mxu0 0.0
  %4143 = vmatprep.subr.mxu0 0.0
  %4144 = vmatpush1.msra.mxu0 0.0
  %4145 = vmatprep.subr.mxu0 0.0
  %4146 = vmatpush1.msra.mxu0 0.0
  %4147 = vmatprep.subr.mxu0 0.0
  %4148 = vmatpush1.msra.mxu0 0.0
  %4149 = vmatprep.subr.mxu0 0.0
  %4150 = vmatpush1.msra.mxu0 0.0
  %4151 = vmatprep.subr.mxu0 0.0
  %4152 = vmatpush1.msra.mxu0 0.0
  %4153 = vmatprep.subr.mxu0 0.0
  %4154 = vmatpush1.msra.mxu0 0.0
  %4155 = vmatprep.subr.mxu0 0.0
  %4156 = vmatpush1.msra.mxu0 0.0
  %4157 = vmatprep.subr.mxu0 0.0
  %4158 = vmatpush1.msra.mxu0 0.0
  %4159 = vmatprep.subr.mxu0 0.0
  %4160 = vmatpush1.msra.mxu0 0.0
  %4161 = vmatprep.subr.mxu0 0.0
  %4162 = vmatpush1.msra.mxu0 0.0
  %4163 = vmatprep.subr.mxu0 0.0
  %4164 = vmatpush1.msra.mxu0 0.0
  %4165 = vmatprep.subr.mxu0 0.0
  %4166 = vmatpush1.msra.mxu0 0.0
  %4167 = vmatprep.subr.mxu0 0.0
  %4168 = vmatpush1.msra.mxu0 0.0
  %4169 = vmatprep.subr.mxu0 0.0
  %4170 = vmatpush1.msra.mxu0 0.0
  %4171 = vmatprep.subr.mxu0 0.0
  %4172 = vmatpush1.msra.mxu0 0.0
  %4173 = vmatprep.subr.mxu0 0.0
  %4174 = vmatpush1.msra.mxu0 0.0
  %4175 = vmatprep.subr.mxu0 0.0
  %4176 = vmatpush1.msra.mxu0 0.0
  %4177 = vmatprep.subr.mxu0 0.0
  %4178 = vmatpush1.msra.mxu0 0.0
  %4179 = vmatprep.subr.mxu0 0.0
  %4180 = vmatpush1.msra.mxu0 0.0
  %4181 = vmatprep.mubr.f32.mxu0 0.0
  %4182 = vmatmul.mubr.f32.gmra.mrb[0].mxu0 %v4076
  %v4183 = vpop.f32.mrb[0].mxu0
  %v4184 = vadd.f32 %v4018, %v4183
  %v4185 = vpop.f32.mrb[0].mxu0
  %v4186 = vadd.f32 %v4022, %v4185
  %4187 = vmatprep.mubr.f32.mxu0 0.0
  %4188 = vmatmul.mubr.f32.gmra.mrb[0].mxu0 %v4079
  %v4189 = vpop.f32.mrb[0].mxu0
  %v4190 = vadd.f32 %v4018, %v4189
  %v4191 = vpop.f32.mrb[0].mxu0
  %v4192 = vadd.f32 %v4022, %v4191
  %4193 = vdwg.mxu0
  %4194 = vmatprep.subr.mxu0 %v3953
  %4195 = vmatpush1.msra.mxu0 %v3952
  %4196 = vmatprep.subr.mxu0 %v3965
  %4197 = vmatpush1.msra.mxu0 %v3964
  %4198 = vmatprep.subr.mxu0 %v3977
  %4199 = vmatpush1.msra.mxu0 %v3976
  %4200 = vmatprep.subr.mxu0 %v3989
  %4201 = vmatpush1.msra.mxu0 %v3988
  %4202 = vmatprep.subr.mxu0 %v4091
  %4203 = vmatpush1.msra.mxu0 %v4088
  %4204 = vmatprep.subr.mxu0 0.0
  %4205 = vmatpush1.msra.mxu0 0.0
  %4206 = vmatprep.subr.mxu0 0.0
  %4207 = vmatpush1.msra.mxu0 0.0
  %4208 = vmatprep.subr.mxu0 0.0
  %4209 = vmatpush1.msra.mxu0 0.0
  %4210 = vmatprep.subr.mxu0 0.0
  %4211 = vmatpush1.msra.mxu0 0.0
  %4212 = vmatprep.subr.mxu0 0.0
  %4213 = vmatpush1.msra.mxu0 0.0
  %4214 = vmatprep.subr.mxu0 0.0
  %4215 = vmatpush1.msra.mxu0 0.0
  %4216 = vmatprep.subr.mxu0 0.0
  %4217 = vmatpush1.msra.mxu0 0.0
  %4218 = vmatprep.subr.mxu0 0.0
  %4219 = vmatpush1.msra.mxu0 0.0
  %4220 = vmatprep.subr.mxu0 0.0
  %4221 = vmatpush1.msra.mxu0 0.0
  %4222 = vmatprep.subr.mxu0 0.0
  %4223 = vmatpush1.msra.mxu0 0.0
  %4224 = vmatprep.subr.mxu0 0.0
  %4225 = vmatpush1.msra.mxu0 0.0
  %4226 = vmatprep.subr.mxu0 0.0
  %4227 = vmatpush1.msra.mxu0 0.0
  %4228 = vmatprep.subr.mxu0 0.0
  %4229 = vmatpush1.msra.mxu0 0.0
  %4230 = vmatprep.subr.mxu0 0.0
  %4231 = vmatpush1.msra.mxu0 0.0
  %4232 = vmatprep.subr.mxu0 0.0
  %4233 = vmatpush1.msra.mxu0 0.0
  %4234 = vmatprep.subr.mxu0 0.0
  %4235 = vmatpush1.msra.mxu0 0.0
  %4236 = vmatprep.subr.mxu0 0.0
  %4237 = vmatpush1.msra.mxu0 0.0
  %4238 = vmatprep.subr.mxu0 0.0
  %4239 = vmatpush1.msra.mxu0 0.0
  %4240 = vmatprep.subr.mxu0 0.0
  %4241 = vmatpush1.msra.mxu0 0.0
  %4242 = vmatprep.subr.mxu0 0.0
  %4243 = vmatpush1.msra.mxu0 0.0
  %4244 = vmatprep.subr.mxu0 0.0
  %4245 = vmatpush1.msra.mxu0 0.0
  %4246 = vmatprep.subr.mxu0 0.0
  %4247 = vmatpush1.msra.mxu0 0.0
  %4248 = vmatprep.subr.mxu0 0.0
  %4249 = vmatpush1.msra.mxu0 0.0
  %4250 = vmatprep.subr.mxu0 0.0
  %4251 = vmatpush1.msra.mxu0 0.0
  %4252 = vmatprep.subr.mxu0 0.0
  %4253 = vmatpush1.msra.mxu0 0.0
  %4254 = vmatprep.subr.mxu0 0.0
  %4255 = vmatpush1.msra.mxu0 0.0
  %4256 = vmatprep.subr.mxu0 0.0
  %4257 = vmatpush1.msra.mxu0 0.0
  %4258 = vmatprep.mubr.f32.mxu0 0.0
  %4259 = vmatmul.mubr.f32.gmra.mrb[0].mxu0 %v4076
  %v4260 = vpop.f32.mrb[0].mxu0
  %v4261 = vadd.f32 %v4026, %v4260
  %v4262 = vpop.f32.mrb[0].mxu0
  %v4263 = vadd.f32 %v4030, %v4262
  %4264 = vmatprep.mubr.f32.mxu0 0.0
  %4265 = vmatmul.mubr.f32.gmra.mrb[0].mxu0 %v4079
  %v4266 = vpop.f32.mrb[0].mxu0
  %v4267 = vadd.f32 %v4026, %v4266
  %v4268 = vpop.f32.mrb[0].mxu0
  %v4269 = vadd.f32 %v4030, %v4268
  %4270 = vdwg.mxu0
  %4271 = vmatprep.subr.mxu0 %v3955
  %4272 = vmatpush1.msra.mxu0 %v3954
  %4273 = vmatprep.subr.mxu0 %v3967
  %4274 = vmatpush1.msra.mxu0 %v3966
  %4275 = vmatprep.subr.mxu0 %v3979
  %4276 = vmatpush1.msra.mxu0 %v3978
  %4277 = vmatprep.subr.mxu0 %v3991
  %4278 = vmatpush1.msra.mxu0 %v3990
  %4279 = vmatprep.subr.mxu0 %v4097
  %4280 = vmatpush1.msra.mxu0 %v4094
  %4281 = vmatprep.subr.mxu0 0.0
  %4282 = vmatpush1.msra.mxu0 0.0
  %4283 = vmatprep.subr.mxu0 0.0
  %4284 = vmatpush1.msra.mxu0 0.0
  %4285 = vmatprep.subr.mxu0 0.0
  %4286 = vmatpush1.msra.mxu0 0.0
  %4287 = vmatprep.subr.mxu0 0.0
  %4288 = vmatpush1.msra.mxu0 0.0
  %4289 = vmatprep.subr.mxu0 0.0
  %4290 = vmatpush1.msra.mxu0 0.0
  %4291 = vmatprep.subr.mxu0 0.0
  %4292 = vmatpush1.msra.mxu0 0.0
  %4293 = vmatprep.subr.mxu0 0.0
  %4294 = vmatpush1.msra.mxu0 0.0
  %4295 = vmatprep.subr.mxu0 0.0
  %4296 = vmatpush1.msra.mxu0 0.0
  %4297 = vmatprep.subr.mxu0 0.0
  %4298 = vmatpush1.msra.mxu0 0.0
  %4299 = vmatprep.subr.mxu0 0.0
  %4300 = vmatpush1.msra.mxu0 0.0
  %4301 = vmatprep.subr.mxu0 0.0
  %4302 = vmatpush1.msra.mxu0 0.0
  %4303 = vmatprep.subr.mxu0 0.0
  %4304 = vmatpush1.msra.mxu0 0.0
  %4305 = vmatprep.subr.mxu0 0.0
  %4306 = vmatpush1.msra.mxu0 0.0
  %4307 = vmatprep.subr.mxu0 0.0
  %4308 = vmatpush1.msra.mxu0 0.0
  %4309 = vmatprep.subr.mxu0 0.0
  %4310 = vmatpush1.msra.mxu0 0.0
  %4311 = vmatprep.subr.mxu0 0.0
  %4312 = vmatpush1.msra.mxu0 0.0
  %4313 = vmatprep.subr.mxu0 0.0
  %4314 = vmatpush1.msra.mxu0 0.0
  %4315 = vmatprep.subr.mxu0 0.0
  %4316 = vmatpush1.msra.mxu0 0.0
  %4317 = vmatprep.subr.mxu0 0.0
  %4318 = vmatpush1.msra.mxu0 0.0
  %4319 = vmatprep.subr.mxu0 0.0
  %4320 = vmatpush1.msra.mxu0 0.0
  %4321 = vmatprep.subr.mxu0 0.0
  %4322 = vmatpush1.msra.mxu0 0.0
  %4323 = vmatprep.subr.mxu0 0.0
  %4324 = vmatpush1.msra.mxu0 0.0
  %4325 = vmatprep.subr.mxu0 0.0
  %4326 = vmatpush1.msra.mxu0 0.0
  %4327 = vmatprep.subr.mxu0 0.0
  %4328 = vmatpush1.msra.mxu0 0.0
  %4329 = vmatprep.subr.mxu0 0.0
  %4330 = vmatpush1.msra.mxu0 0.0
  %4331 = vmatprep.subr.mxu0 0.0
  %4332 = vmatpush1.msra.mxu0 0.0
  %4333 = vmatprep.subr.mxu0 0.0
  %4334 = vmatpush1.msra.mxu0 0.0
  %4335 = vmatprep.mubr.f32.mxu0 0.0
  %4336 = vmatmul.mubr.f32.gmra.mrb[0].mxu0 %v4076
  %v4337 = vpop.f32.mrb[0].mxu0
  %v4338 = vadd.f32 %v4034, %v4337
  %v4339 = vpop.f32.mrb[0].mxu0
  %v4340 = vadd.f32 %v4038, %v4339
  %4341 = vmatprep.mubr.f32.mxu0 0.0
  %4342 = vmatmul.mubr.f32.gmra.mrb[0].mxu0 %v4079
  %v4343 = vpop.f32.mrb[0].mxu0
  %v4344 = vadd.f32 %v4034, %v4343
  %v4345 = vpop.f32.mrb[0].mxu0
  %v4346 = vadd.f32 %v4038, %v4345
  %4347 = vdwg.mxu0
  %4348 = vmatprep.subr.mxu0 %v3957
  %4349 = vmatpush1.msra.mxu0 %v3956
  %4350 = vmatprep.subr.mxu0 %v3969
  %4351 = vmatpush1.msra.mxu0 %v3968
  %4352 = vmatprep.subr.mxu0 %v3981
  %4353 = vmatpush1.msra.mxu0 %v3980
  %4354 = vmatprep.subr.mxu0 %v3993
  %4355 = vmatpush1.msra.mxu0 %v3992
  %4356 = vmatprep.subr.mxu0 %v4103
  %4357 = vmatpush1.msra.mxu0 %v4100
  %4358 = vmatprep.subr.mxu0 0.0
  %4359 = vmatpush1.msra.mxu0 0.0
  %4360 = vmatprep.subr.mxu0 0.0
  %4361 = vmatpush1.msra.mxu0 0.0
  %4362 = vmatprep.subr.mxu0 0.0
  %4363 = vmatpush1.msra.mxu0 0.0
  %4364 = vmatprep.subr.mxu0 0.0
  %4365 = vmatpush1.msra.mxu0 0.0
  %4366 = vmatprep.subr.mxu0 0.0
  %4367 = vmatpush1.msra.mxu0 0.0
  %4368 = vmatprep.subr.mxu0 0.0
  %4369 = vmatpush1.msra.mxu0 0.0
  %4370 = vmatprep.subr.mxu0 0.0
  %4371 = vmatpush1.msra.mxu0 0.0
  %4372 = vmatprep.subr.mxu0 0.0
  %4373 = vmatpush1.msra.mxu0 0.0
  %4374 = vmatprep.subr.mxu0 0.0
  %4375 = vmatpush1.msra.mxu0 0.0
  %4376 = vmatprep.subr.mxu0 0.0
  %4377 = vmatpush1.msra.mxu0 0.0
  %4378 = vmatprep.subr.mxu0 0.0
  %4379 = vmatpush1.msra.mxu0 0.0
  %4380 = vmatprep.subr.mxu0 0.0
  %4381 = vmatpush1.msra.mxu0 0.0
  %4382 = vmatprep.subr.mxu0 0.0
  %4383 = vmatpush1.msra.mxu0 0.0
  %4384 = vmatprep.subr.mxu0 0.0
  %4385 = vmatpush1.msra.mxu0 0.0
  %4386 = vmatprep.subr.mxu0 0.0
  %4387 = vmatpush1.msra.mxu0 0.0
  %4388 = vmatprep.subr.mxu0 0.0
  %4389 = vmatpush1.msra.mxu0 0.0
  %4390 = vmatprep.subr.mxu0 0.0
  %4391 = vmatpush1.msra.mxu0 0.0
  %4392 = vmatprep.subr.mxu0 0.0
  %4393 = vmatpush1.msra.mxu0 0.0
  %4394 = vmatprep.subr.mxu0 0.0
  %4395 = vmatpush1.msra.mxu0 0.0
  %4396 = vmatprep.subr.mxu0 0.0
  %4397 = vmatpush1.msra.mxu0 0.0
  %4398 = vmatprep.subr.mxu0 0.0
  %4399 = vmatpush1.msra.mxu0 0.0
  %4400 = vmatprep.subr.mxu0 0.0
  %4401 = vmatpush1.msra.mxu0 0.0
  %4402 = vmatprep.subr.mxu0 0.0
  %4403 = vmatpush1.msra.mxu0 0.0
  %4404 = vmatprep.subr.mxu0 0.0
  %4405 = vmatpush1.msra.mxu0 0.0
  %4406 = vmatprep.subr.mxu0 0.0
  %4407 = vmatpush1.msra.mxu0 0.0
  %4408 = vmatprep.subr.mxu0 0.0
  %4409 = vmatpush1.msra.mxu0 0.0
  %4410 = vmatprep.subr.mxu0 0.0
  %4411 = vmatpush1.msra.mxu0 0.0
  %4412 = vmatprep.mubr.f32.mxu0 0.0
  %4413 = vmatmul.mubr.f32.gmra.mrb[0].mxu0 %v4076
  %v4414 = vpop.f32.mrb[0].mxu0
  %v4415 = vadd.f32 %v4042, %v4414
  %v4416 = vpop.f32.mrb[0].mxu0
  %v4417 = vadd.f32 %v4046, %v4416
  %4418 = vmatprep.mubr.f32.mxu0 0.0
  %4419 = vmatmul.mubr.f32.gmra.mrb[0].mxu0 %v4079
  %v4420 = vpop.f32.mrb[0].mxu0
  %v4421 = vadd.f32 %v4042, %v4420
  %v4422 = vpop.f32.mrb[0].mxu0
  %v4423 = vadd.f32 %v4046, %v4422
  %4424 = vdwg.mxu0
  %4425 = vmatprep.subr.mxu0 %v3959
  %4426 = vmatpush1.msra.mxu0 %v3958
  %4427 = vmatprep.subr.mxu0 %v3971
  %4428 = vmatpush1.msra.mxu0 %v3970
  %4429 = vmatprep.subr.mxu0 %v3983
  %4430 = vmatpush1.msra.mxu0 %v3982
  %4431 = vmatprep.subr.mxu0 %v3995
  %4432 = vmatpush1.msra.mxu0 %v3994
  %4433 = vmatprep.subr.mxu0 %v4109
  %4434 = vmatpush1.msra.mxu0 %v4106
  %4435 = vmatprep.subr.mxu0 0.0
  %4436 = vmatpush1.msra.mxu0 0.0
  %4437 = vmatprep.subr.mxu0 0.0
  %4438 = vmatpush1.msra.mxu0 0.0
  %4439 = vmatprep.subr.mxu0 0.0
  %4440 = vmatpush1.msra.mxu0 0.0
  %4441 = vmatprep.subr.mxu0 0.0
  %4442 = vmatpush1.msra.mxu0 0.0
  %4443 = vmatprep.subr.mxu0 0.0
  %4444 = vmatpush1.msra.mxu0 0.0
  %4445 = vmatprep.subr.mxu0 0.0
  %4446 = vmatpush1.msra.mxu0 0.0
  %4447 = vmatprep.subr.mxu0 0.0
  %4448 = vmatpush1.msra.mxu0 0.0
  %4449 = vmatprep.subr.mxu0 0.0
  %4450 = vmatpush1.msra.mxu0 0.0
  %4451 = vmatprep.subr.mxu0 0.0
  %4452 = vmatpush1.msra.mxu0 0.0
  %4453 = vmatprep.subr.mxu0 0.0
  %4454 = vmatpush1.msra.mxu0 0.0
  %4455 = vmatprep.subr.mxu0 0.0
  %4456 = vmatpush1.msra.mxu0 0.0
  %4457 = vmatprep.subr.mxu0 0.0
  %4458 = vmatpush1.msra.mxu0 0.0
  %4459 = vmatprep.subr.mxu0 0.0
  %4460 = vmatpush1.msra.mxu0 0.0
  %4461 = vmatprep.subr.mxu0 0.0
  %4462 = vmatpush1.msra.mxu0 0.0
  %4463 = vmatprep.subr.mxu0 0.0
  %4464 = vmatpush1.msra.mxu0 0.0
  %4465 = vmatprep.subr.mxu0 0.0
  %4466 = vmatpush1.msra.mxu0 0.0
  %4467 = vmatprep.subr.mxu0 0.0
  %4468 = vmatpush1.msra.mxu0 0.0
  %4469 = vmatprep.subr.mxu0 0.0
  %4470 = vmatpush1.msra.mxu0 0.0
  %4471 = vmatprep.subr.mxu0 0.0
  %4472 = vmatpush1.msra.mxu0 0.0
  %4473 = vmatprep.subr.mxu0 0.0
  %4474 = vmatpush1.msra.mxu0 0.0
  %4475 = vmatprep.subr.mxu0 0.0
  %4476 = vmatpush1.msra.mxu0 0.0
  %4477 = vmatprep.subr.mxu0 0.0
  %4478 = vmatpush1.msra.mxu0 0.0
  %4479 = vmatprep.subr.mxu0 0.0
  %4480 = vmatpush1.msra.mxu0 0.0
  %4481 = vmatprep.subr.mxu0 0.0
  %4482 = vmatpush1.msra.mxu0 0.0
  %4483 = vmatprep.subr.mxu0 0.0
  %4484 = vmatpush1.msra.mxu0 0.0
  %4485 = vmatprep.subr.mxu0 0.0
  %4486 = vmatpush1.msra.mxu0 0.0
  %4487 = vmatprep.subr.mxu0 0.0
  %4488 = vmatpush1.msra.mxu0 0.0
  %4489 = vmatprep.mubr.f32.mxu0 0.0
  %4490 = vmatmul.mubr.f32.gmra.mrb[0].mxu0 %v4076
  %v4491 = vpop.f32.mrb[0].mxu0
  %v4492 = vadd.f32 %v4050, %v4491
  %v4493 = vpop.f32.mrb[0].mxu0
  %v4494 = vadd.f32 %v4054, %v4493
  %4495 = vmatprep.mubr.f32.mxu0 0.0
  %4496 = vmatmul.mubr.f32.gmra.mrb[0].mxu0 %v4079
  %v4497 = vpop.f32.mrb[0].mxu0
  %v4498 = vadd.f32 %v4050, %v4497
  %v4499 = vpop.f32.mrb[0].mxu0
  %v4500 = vadd.f32 %v4054, %v4499
  %4501 = vdwg.mxu0
  %4502 = vmatprep.subr.mxu0 %v3961
  %4503 = vmatpush1.msra.mxu0 %v3960
  %4504 = vmatprep.subr.mxu0 %v3973
  %4505 = vmatpush1.msra.mxu0 %v3972
  %4506 = vmatprep.subr.mxu0 %v3985
  %4507 = vmatpush1.msra.mxu0 %v3984
  %4508 = vmatprep.subr.mxu0 %v3997
  %4509 = vmatpush1.msra.mxu0 %v3996
  %4510 = vmatprep.subr.mxu0 %v4115
  %4511 = vmatpush1.msra.mxu0 %v4112
  %4512 = vmatprep.subr.mxu0 0.0
  %4513 = vmatpush1.msra.mxu0 0.0
  %4514 = vmatprep.subr.mxu0 0.0
  %4515 = vmatpush1.msra.mxu0 0.0
  %4516 = vmatprep.subr.mxu0 0.0
  %4517 = vmatpush1.msra.mxu0 0.0
  %4518 = vmatprep.subr.mxu0 0.0
  %4519 = vmatpush1.msra.mxu0 0.0
  %4520 = vmatprep.subr.mxu0 0.0
  %4521 = vmatpush1.msra.mxu0 0.0
  %4522 = vmatprep.subr.mxu0 0.0
  %4523 = vmatpush1.msra.mxu0 0.0
  %4524 = vmatprep.subr.mxu0 0.0
  %4525 = vmatpush1.msra.mxu0 0.0
  %4526 = vmatprep.subr.mxu0 0.0
  %4527 = vmatpush1.msra.mxu0 0.0
  %4528 = vmatprep.subr.mxu0 0.0
  %4529 = vmatpush1.msra.mxu0 0.0
  %4530 = vmatprep.subr.mxu0 0.0
  %4531 = vmatpush1.msra.mxu0 0.0
  %4532 = vmatprep.subr.mxu0 0.0
  %4533 = vmatpush1.msra.mxu0 0.0
  %4534 = vmatprep.subr.mxu0 0.0
  %4535 = vmatpush1.msra.mxu0 0.0
  %4536 = vmatprep.subr.mxu0 0.0
  %4537 = vmatpush1.msra.mxu0 0.0
  %4538 = vmatprep.subr.mxu0 0.0
  %4539 = vmatpush1.msra.mxu0 0.0
  %4540 = vmatprep.subr.mxu0 0.0
  %4541 = vmatpush1.msra.mxu0 0.0
  %4542 = vmatprep.subr.mxu0 0.0
  %4543 = vmatpush1.msra.mxu0 0.0
  %4544 = vmatprep.subr.mxu0 0.0
  %4545 = vmatpush1.msra.mxu0 0.0
  %4546 = vmatprep.subr.mxu0 0.0
  %4547 = vmatpush1.msra.mxu0 0.0
  %4548 = vmatprep.subr.mxu0 0.0
  %4549 = vmatpush1.msra.mxu0 0.0
  %4550 = vmatprep.subr.mxu0 0.0
  %4551 = vmatpush1.msra.mxu0 0.0
  %4552 = vmatprep.subr.mxu0 0.0
  %4553 = vmatpush1.msra.mxu0 0.0
  %4554 = vmatprep.subr.mxu0 0.0
  %4555 = vmatpush1.msra.mxu0 0.0
  %4556 = vmatprep.subr.mxu0 0.0
  %4557 = vmatpush1.msra.mxu0 0.0
  %4558 = vmatprep.subr.mxu0 0.0
  %4559 = vmatpush1.msra.mxu0 0.0
  %4560 = vmatprep.subr.mxu0 0.0
  %4561 = vmatpush1.msra.mxu0 0.0
  %4562 = vmatprep.subr.mxu0 0.0
  %4563 = vmatpush1.msra.mxu0 0.0
  %4564 = vmatprep.subr.mxu0 0.0
  %4565 = vmatpush1.msra.mxu0 0.0
  %4566 = vmatprep.mubr.f32.mxu0 0.0
  %4567 = vmatmul.mubr.f32.gmra.mrb[0].mxu0 %v4076
  %v4568 = vpop.f32.mrb[0].mxu0
  %v4569 = vadd.f32 %v4058, %v4568
  %v4570 = vpop.f32.mrb[0].mxu0
  %v4571 = vadd.f32 %v4062, %v4570
  %4572 = vmatprep.mubr.f32.mxu0 0.0
  %4573 = vmatmul.mubr.f32.gmra.mrb[0].mxu0 %v4079
  %v4574 = vpop.f32.mrb[0].mxu0
  %v4575 = vadd.f32 %v4058, %v4574
  %v4576 = vpop.f32.mrb[0].mxu0
  %v4577 = vadd.f32 %v4062, %v4576
  %4578 = vdwg.mxu0
  %4579 = vmatprep.subr.mxu0 0.0
  %4580 = vmatpush1.xpose.msra.mxu0 %v4338
  %4581 = vmatprep.subr.mxu0 0.0
  %4582 = vmatpush1.xpose.msra.mxu0 %v4344
  %4583 = vmatprep.subr.mxu0 0.0
  %4584 = vmatpush1.xpose.msra.mxu0 0.0
  %4585 = vmatprep.subr.mxu0 0.0
  %4586 = vmatpush1.xpose.msra.mxu0 0.0
  %4587 = vmatprep.subr.mxu0 0.0
  %4588 = vmatpush1.xpose.msra.mxu0 0.0
  %4589 = vmatprep.subr.mxu0 0.0
  %4590 = vmatpush1.xpose.msra.mxu0 0.0
  %4591 = vmatprep.subr.mxu0 0.0
  %4592 = vmatpush1.xpose.msra.mxu0 0.0
  %4593 = vmatprep.subr.mxu0 0.0
  %4594 = vmatpush1.xpose.msra.mxu0 0.0
  %4595 = vmatprep.subr.mxu0 0.0
  %4596 = vmatpush1.xpose.msra.mxu0 0.0
  %4597 = vmatprep.subr.mxu0 0.0
  %4598 = vmatpush1.xpose.msra.mxu0 0.0
  %4599 = vmatprep.subr.mxu0 0.0
  %4600 = vmatpush1.xpose.msra.mxu0 0.0
  %4601 = vmatprep.subr.mxu0 0.0
  %4602 = vmatpush1.xpose.msra.mxu0 0.0
  %4603 = vmatprep.subr.mxu0 0.0
  %4604 = vmatpush1.xpose.msra.mxu0 0.0
  %4605 = vmatprep.subr.mxu0 0.0
  %4606 = vmatpush1.xpose.msra.mxu0 0.0
  %4607 = vmatprep.subr.mxu0 0.0
  %4608 = vmatpush1.xpose.msra.mxu0 0.0
  %4609 = vmatprep.subr.mxu0 0.0
  %4610 = vmatpush1.xpose.msra.mxu0 0.0
  %4611 = vmatprep.subr.mxu0 0.0
  %4612 = vmatpush1.xpose.msra.mxu0 0.0
  %4613 = vmatprep.subr.mxu0 0.0
  %4614 = vmatpush1.xpose.msra.mxu0 0.0
  %4615 = vmatprep.subr.mxu0 0.0
  %4616 = vmatpush1.xpose.msra.mxu0 0.0
  %4617 = vmatprep.subr.mxu0 0.0
  %4618 = vmatpush1.xpose.msra.mxu0 0.0
  %4619 = vmatprep.subr.mxu0 0.0
  %4620 = vmatpush1.xpose.msra.mxu0 0.0
  %4621 = vmatprep.subr.mxu0 0.0
  %4622 = vmatpush1.xpose.msra.mxu0 0.0
  %4623 = vmatprep.subr.mxu0 0.0
  %4624 = vmatpush1.xpose.msra.mxu0 0.0
  %4625 = vmatprep.subr.mxu0 0.0
  %4626 = vmatpush1.xpose.msra.mxu0 0.0
  %4627 = vmatprep.subr.mxu0 0.0
  %4628 = vmatpush1.xpose.msra.mxu0 0.0
  %4629 = vmatprep.subr.mxu0 0.0
  %4630 = vmatpush1.xpose.msra.mxu0 0.0
  %4631 = vmatprep.subr.mxu0 0.0
  %4632 = vmatpush1.xpose.msra.mxu0 0.0
  %4633 = vmatprep.subr.mxu0 0.0
  %4634 = vmatpush1.xpose.msra.mxu0 0.0
  %4635 = vmatprep.subr.mxu0 0.0
  %4636 = vmatpush1.xpose.msra.mxu0 0.0
  %4637 = vmatprep.subr.mxu0 0.0
  %4638 = vmatpush1.xpose.msra.mxu0 0.0
  %4639 = vmatprep.subr.mxu0 0.0
  %4640 = vmatpush1.xpose.msra.mxu0 0.0
  %4641 = vmatprep.subr.mxu0 0.0
  %4642 = vmatpush1.xpose.msra.mxu0 0.0
  %4643 = vmatprep.mubr.f32.mxu0 0.0
  %4644 = vmatmul.mubr.f32.gmra.mrb[0].mxu0 %v4184
  %v4645 = vpop.f32.mrb[0].mxu0
  %v4646 = vadd.f32 %v63, %v4645
  %v4647 = vpop.f32.mrb[0].mxu0
  %4648 = vmatprep.mubr.f32.mxu0 0.0
  %4649 = vmatmul.mubr.f32.gmra.mrb[0].mxu0 %v4190
  %v4650 = vpop.f32.mrb[0].mxu0
  %v4651 = vadd.f32 %v64, %v4650
  %v4652 = vpop.f32.mrb[0].mxu0
  %4653 = vdwg.mxu0
  %v4654 = vsel %vm869, %v4646, -inf
  %4655 = vmax.xlane.f32.xlu0 %v4654
  %v4656 = vpop.xlane.xlu0 %4655
  %v4657 = vsel %vm869, %v4651, -inf
  %4658 = vmax.xlane.f32.xlu0 %v4657
  %v4659 = vpop.xlane.xlu0 %4658
  %v4660 = vsub.f32 %v4646, %v4656
  %v4661 = vsub.f32 %v4651, %v4659
  %v4662 = vmul.f32 %v4660, 1.442695
  %v4663 = vpow.pop %v4662
  %v4664 = vmul.f32 %v4661, 1.442695
  %v4665 = vpow.pop %v4664
  %v4666 = vsel %vm869, %v4663, 0.0
  %4667 = vadd.xlane.f32.xlu0 %v4666
  %v4668 = vpop.xlane.xlu0 %4667
  %v4669 = vsel %vm869, %v4665, 0.0
  %4670 = vadd.xlane.f32.xlu0 %v4669
  %v4671 = vpop.xlane.xlu0 %4670
  %v4672 = vrcp.pop %v4668
  %v4673 = vrcp.pop %v4671
  %v4674 = vmul.f32 %v4663, %v4672
  %v4675 = vmul.f32 %v4665, %v4673
  %v4677 = vsel %vm869, %v4674, 0
  %v4680 = vsel %vm869, %v4675, 0
  %4682 = vmatprep.subr.mxu0 0.0
  %4683 = vmatpush1.msra.mxu0 %v4492
  %4684 = vmatprep.subr.mxu0 0.0
  %4685 = vmatpush1.msra.mxu0 %v4498
  %4686 = vmatprep.subr.mxu0 0.0
  %4687 = vmatpush1.msra.mxu0 0.0
  %4688 = vmatprep.subr.mxu0 0.0
  %4689 = vmatpush1.msra.mxu0 0.0
  %4690 = vmatprep.subr.mxu0 0.0
  %4691 = vmatpush1.msra.mxu0 0.0
  %4692 = vmatprep.subr.mxu0 0.0
  %4693 = vmatpush1.msra.mxu0 0.0
  %4694 = vmatprep.subr.mxu0 0.0
  %4695 = vmatpush1.msra.mxu0 0.0
  %4696 = vmatprep.subr.mxu0 0.0
  %4697 = vmatpush1.msra.mxu0 0.0
  %4698 = vmatprep.subr.mxu0 0.0
  %4699 = vmatpush1.msra.mxu0 0.0
  %4700 = vmatprep.subr.mxu0 0.0
  %4701 = vmatpush1.msra.mxu0 0.0
  %4702 = vmatprep.subr.mxu0 0.0
  %4703 = vmatpush1.msra.mxu0 0.0
  %4704 = vmatprep.subr.mxu0 0.0
  %4705 = vmatpush1.msra.mxu0 0.0
  %4706 = vmatprep.subr.mxu0 0.0
  %4707 = vmatpush1.msra.mxu0 0.0
  %4708 = vmatprep.subr.mxu0 0.0
  %4709 = vmatpush1.msra.mxu0 0.0
  %4710 = vmatprep.subr.mxu0 0.0
  %4711 = vmatpush1.msra.mxu0 0.0
  %4712 = vmatprep.subr.mxu0 0.0
  %4713 = vmatpush1.msra.mxu0 0.0
  %4714 = vmatprep.subr.mxu0 0.0
  %4715 = vmatpush1.msra.mxu0 0.0
  %4716 = vmatprep.subr.mxu0 0.0
  %4717 = vmatpush1.msra.mxu0 0.0
  %4718 = vmatprep.subr.mxu0 0.0
  %4719 = vmatpush1.msra.mxu0 0.0
  %4720 = vmatprep.subr.mxu0 0.0
  %4721 = vmatpush1.msra.mxu0 0.0
  %4722 = vmatprep.subr.mxu0 0.0
  %4723 = vmatpush1.msra.mxu0 0.0
  %4724 = vmatprep.subr.mxu0 0.0
  %4725 = vmatpush1.msra.mxu0 0.0
  %4726 = vmatprep.subr.mxu0 0.0
  %4727 = vmatpush1.msra.mxu0 0.0
  %4728 = vmatprep.subr.mxu0 0.0
  %4729 = vmatpush1.msra.mxu0 0.0
  %4730 = vmatprep.subr.mxu0 0.0
  %4731 = vmatpush1.msra.mxu0 0.0
  %4732 = vmatprep.subr.mxu0 0.0
  %4733 = vmatpush1.msra.mxu0 0.0
  %4734 = vmatprep.subr.mxu0 0.0
  %4735 = vmatpush1.msra.mxu0 0.0
  %4736 = vmatprep.subr.mxu0 0.0
  %4737 = vmatpush1.msra.mxu0 0.0
  %4738 = vmatprep.subr.mxu0 0.0
  %4739 = vmatpush1.msra.mxu0 0.0
  %4740 = vmatprep.subr.mxu0 0.0
  %4741 = vmatpush1.msra.mxu0 0.0
  %4742 = vmatprep.subr.mxu0 0.0
  %4743 = vmatpush1.msra.mxu0 0.0
  %4744 = vmatprep.subr.mxu0 0.0
  %4745 = vmatpush1.msra.mxu0 0.0
  %4746 = vmatprep.mubr.f32.mxu0 0.0
  %4747 = vmatmul.mubr.f32.gmra.mrb[0].mxu0 %v4677
  %v4748 = vpop.f32.mrb[0].mxu0
  %v4749 = vadd.f32 0.0, %v4748
  %v4750 = vpop.f32.mrb[0].mxu0
  %4751 = vmatprep.mubr.f32.mxu0 0.0
  %4752 = vmatmul.mubr.f32.gmra.mrb[0].mxu0 %v4680
  %v4753 = vpop.f32.mrb[0].mxu0
  %v4754 = vadd.f32 0.0, %v4753
  %v4755 = vpop.f32.mrb[0].mxu0
  %4756 = vdwg.mxu0
  %4757 = vmatprep.subr.mxu0 0.0
  %4758 = vmatpush1.xpose.msra.mxu0 %v4340
  %4759 = vmatprep.subr.mxu0 0.0
  %4760 = vmatpush1.xpose.msra.mxu0 %v4346
  %4761 = vmatprep.subr.mxu0 0.0
  %4762 = vmatpush1.xpose.msra.mxu0 0.0
  %4763 = vmatprep.subr.mxu0 0.0
  %4764 = vmatpush1.xpose.msra.mxu0 0.0
  %4765 = vmatprep.subr.mxu0 0.0
  %4766 = vmatpush1.xpose.msra.mxu0 0.0
  %4767 = vmatprep.subr.mxu0 0.0
  %4768 = vmatpush1.xpose.msra.mxu0 0.0
  %4769 = vmatprep.subr.mxu0 0.0
  %4770 = vmatpush1.xpose.msra.mxu0 0.0
  %4771 = vmatprep.subr.mxu0 0.0
  %4772 = vmatpush1.xpose.msra.mxu0 0.0
  %4773 = vmatprep.subr.mxu0 0.0
  %4774 = vmatpush1.xpose.msra.mxu0 0.0
  %4775 = vmatprep.subr.mxu0 0.0
  %4776 = vmatpush1.xpose.msra.mxu0 0.0
  %4777 = vmatprep.subr.mxu0 0.0
  %4778 = vmatpush1.xpose.msra.mxu0 0.0
  %4779 = vmatprep.subr.mxu0 0.0
  %4780 = vmatpush1.xpose.msra.mxu0 0.0
  %4781 = vmatprep.subr.mxu0 0.0
  %4782 = vmatpush1.xpose.msra.mxu0 0.0
  %4783 = vmatprep.subr.mxu0 0.0
  %4784 = vmatpush1.xpose.msra.mxu0 0.0
  %4785 = vmatprep.subr.mxu0 0.0
  %4786 = vmatpush1.xpose.msra.mxu0 0.0
  %4787 = vmatprep.subr.mxu0 0.0
  %4788 = vmatpush1.xpose.msra.mxu0 0.0
  %4789 = vmatprep.subr.mxu0 0.0
  %4790 = vmatpush1.xpose.msra.mxu0 0.0
  %4791 = vmatprep.subr.mxu0 0.0
  %4792 = vmatpush1.xpose.msra.mxu0 0.0
  %4793 = vmatprep.subr.mxu0 0.0
  %4794 = vmatpush1.xpose.msra.mxu0 0.0
  %4795 = vmatprep.subr.mxu0 0.0
  %4796 = vmatpush1.xpose.msra.mxu0 0.0
  %4797 = vmatprep.subr.mxu0 0.0
  %4798 = vmatpush1.xpose.msra.mxu0 0.0
  %4799 = vmatprep.subr.mxu0 0.0
  %4800 = vmatpush1.xpose.msra.mxu0 0.0
  %4801 = vmatprep.subr.mxu0 0.0
  %4802 = vmatpush1.xpose.msra.mxu0 0.0
  %4803 = vmatprep.subr.mxu0 0.0
  %4804 = vmatpush1.xpose.msra.mxu0 0.0
  %4805 = vmatprep.subr.mxu0 0.0
  %4806 = vmatpush1.xpose.msra.mxu0 0.0
  %4807 = vmatprep.subr.mxu0 0.0
  %4808 = vmatpush1.xpose.msra.mxu0 0.0
  %4809 = vmatprep.subr.mxu0 0.0
  %4810 = vmatpush1.xpose.msra.mxu0 0.0
  %4811 = vmatprep.subr.mxu0 0.0
  %4812 = vmatpush1.xpose.msra.mxu0 0.0
  %4813 = vmatprep.subr.mxu0 0.0
  %4814 = vmatpush1.xpose.msra.mxu0 0.0
  %4815 = vmatprep.subr.mxu0 0.0
  %4816 = vmatpush1.xpose.msra.mxu0 0.0
  %4817 = vmatprep.subr.mxu0 0.0
  %4818 = vmatpush1.xpose.msra.mxu0 0.0
  %4819 = vmatprep.subr.mxu0 0.0
  %4820 = vmatpush1.xpose.msra.mxu0 0.0
  %4821 = vmatprep.mubr.f32.mxu0 0.0
  %4822 = vmatmul.mubr.f32.gmra.mrb[0].mxu0 %v4186
  %v4823 = vpop.f32.mrb[0].mxu0
  %v4824 = vadd.f32 %v63, %v4823
  %v4825 = vpop.f32.mrb[0].mxu0
  %4826 = vmatprep.mubr.f32.mxu0 0.0
  %4827 = vmatmul.mubr.f32.gmra.mrb[0].mxu0 %v4192
  %v4828 = vpop.f32.mrb[0].mxu0
  %v4829 = vadd.f32 %v64, %v4828
  %v4830 = vpop.f32.mrb[0].mxu0
  %4831 = vdwg.mxu0
  %v4832 = vsel %vm869, %v4824, -inf
  %4833 = vmax.xlane.f32.xlu0 %v4832
  %v4834 = vpop.xlane.xlu0 %4833
  %v4835 = vsel %vm869, %v4829, -inf
  %4836 = vmax.xlane.f32.xlu0 %v4835
  %v4837 = vpop.xlane.xlu0 %4836
  %v4838 = vsub.f32 %v4824, %v4834
  %v4839 = vsub.f32 %v4829, %v4837
  %v4840 = vmul.f32 %v4838, 1.442695
  %v4841 = vpow.pop %v4840
  %v4842 = vmul.f32 %v4839, 1.442695
  %v4843 = vpow.pop %v4842
  %v4844 = vsel %vm869, %v4841, 0.0
  %4845 = vadd.xlane.f32.xlu0 %v4844
  %v4846 = vpop.xlane.xlu0 %4845
  %v4847 = vsel %vm869, %v4843, 0.0
  %4848 = vadd.xlane.f32.xlu0 %v4847
  %v4849 = vpop.xlane.xlu0 %4848
  %v4850 = vrcp.pop %v4846
  %v4851 = vrcp.pop %v4849
  %v4852 = vmul.f32 %v4841, %v4850
  %v4853 = vmul.f32 %v4843, %v4851
  %v4855 = vsel %vm869, %v4852, 0
  %v4858 = vsel %vm869, %v4853, 0
  %4860 = vmatprep.subr.mxu0 0.0
  %4861 = vmatpush1.msra.mxu0 %v4494
  %4862 = vmatprep.subr.mxu0 0.0
  %4863 = vmatpush1.msra.mxu0 %v4500
  %4864 = vmatprep.subr.mxu0 0.0
  %4865 = vmatpush1.msra.mxu0 0.0
  %4866 = vmatprep.subr.mxu0 0.0
  %4867 = vmatpush1.msra.mxu0 0.0
  %4868 = vmatprep.subr.mxu0 0.0
  %4869 = vmatpush1.msra.mxu0 0.0
  %4870 = vmatprep.subr.mxu0 0.0
  %4871 = vmatpush1.msra.mxu0 0.0
  %4872 = vmatprep.subr.mxu0 0.0
  %4873 = vmatpush1.msra.mxu0 0.0
  %4874 = vmatprep.subr.mxu0 0.0
  %4875 = vmatpush1.msra.mxu0 0.0
  %4876 = vmatprep.subr.mxu0 0.0
  %4877 = vmatpush1.msra.mxu0 0.0
  %4878 = vmatprep.subr.mxu0 0.0
  %4879 = vmatpush1.msra.mxu0 0.0
  %4880 = vmatprep.subr.mxu0 0.0
  %4881 = vmatpush1.msra.mxu0 0.0
  %4882 = vmatprep.subr.mxu0 0.0
  %4883 = vmatpush1.msra.mxu0 0.0
  %4884 = vmatprep.subr.mxu0 0.0
  %4885 = vmatpush1.msra.mxu0 0.0
  %4886 = vmatprep.subr.mxu0 0.0
  %4887 = vmatpush1.msra.mxu0 0.0
  %4888 = vmatprep.subr.mxu0 0.0
  %4889 = vmatpush1.msra.mxu0 0.0
  %4890 = vmatprep.subr.mxu0 0.0
  %4891 = vmatpush1.msra.mxu0 0.0
  %4892 = vmatprep.subr.mxu0 0.0
  %4893 = vmatpush1.msra.mxu0 0.0
  %4894 = vmatprep.subr.mxu0 0.0
  %4895 = vmatpush1.msra.mxu0 0.0
  %4896 = vmatprep.subr.mxu0 0.0
  %4897 = vmatpush1.msra.mxu0 0.0
  %4898 = vmatprep.subr.mxu0 0.0
  %4899 = vmatpush1.msra.mxu0 0.0
  %4900 = vmatprep.subr.mxu0 0.0
  %4901 = vmatpush1.msra.mxu0 0.0
  %4902 = vmatprep.subr.mxu0 0.0
  %4903 = vmatpush1.msra.mxu0 0.0
  %4904 = vmatprep.subr.mxu0 0.0
  %4905 = vmatpush1.msra.mxu0 0.0
  %4906 = vmatprep.subr.mxu0 0.0
  %4907 = vmatpush1.msra.mxu0 0.0
  %4908 = vmatprep.subr.mxu0 0.0
  %4909 = vmatpush1.msra.mxu0 0.0
  %4910 = vmatprep.subr.mxu0 0.0
  %4911 = vmatpush1.msra.mxu0 0.0
  %4912 = vmatprep.subr.mxu0 0.0
  %4913 = vmatpush1.msra.mxu0 0.0
  %4914 = vmatprep.subr.mxu0 0.0
  %4915 = vmatpush1.msra.mxu0 0.0
  %4916 = vmatprep.subr.mxu0 0.0
  %4917 = vmatpush1.msra.mxu0 0.0
  %4918 = vmatprep.subr.mxu0 0.0
  %4919 = vmatpush1.msra.mxu0 0.0
  %4920 = vmatprep.subr.mxu0 0.0
  %4921 = vmatpush1.msra.mxu0 0.0
  %4922 = vmatprep.subr.mxu0 0.0
  %4923 = vmatpush1.msra.mxu0 0.0
  %4924 = vmatprep.mubr.f32.mxu0 0.0
  %4925 = vmatmul.mubr.f32.gmra.mrb[0].mxu0 %v4855
  %v4926 = vpop.f32.mrb[0].mxu0
  %v4927 = vadd.f32 0.0, %v4926
  %v4928 = vpop.f32.mrb[0].mxu0
  %4929 = vmatprep.mubr.f32.mxu0 0.0
  %4930 = vmatmul.mubr.f32.gmra.mrb[0].mxu0 %v4858
  %v4931 = vpop.f32.mrb[0].mxu0
  %v4932 = vadd.f32 0.0, %v4931
  %v4933 = vpop.f32.mrb[0].mxu0
  %4934 = vdwg.mxu0
  %4935 = vmatprep.subr.mxu0 0.0
  %4936 = vmatpush1.xpose.msra.mxu0 %v4415
  %4937 = vmatprep.subr.mxu0 0.0
  %4938 = vmatpush1.xpose.msra.mxu0 %v4421
  %4939 = vmatprep.subr.mxu0 0.0
  %4940 = vmatpush1.xpose.msra.mxu0 0.0
  %4941 = vmatprep.subr.mxu0 0.0
  %4942 = vmatpush1.xpose.msra.mxu0 0.0
  %4943 = vmatprep.subr.mxu0 0.0
  %4944 = vmatpush1.xpose.msra.mxu0 0.0
  %4945 = vmatprep.subr.mxu0 0.0
  %4946 = vmatpush1.xpose.msra.mxu0 0.0
  %4947 = vmatprep.subr.mxu0 0.0
  %4948 = vmatpush1.xpose.msra.mxu0 0.0
  %4949 = vmatprep.subr.mxu0 0.0
  %4950 = vmatpush1.xpose.msra.mxu0 0.0
  %4951 = vmatprep.subr.mxu0 0.0
  %4952 = vmatpush1.xpose.msra.mxu0 0.0
  %4953 = vmatprep.subr.mxu0 0.0
  %4954 = vmatpush1.xpose.msra.mxu0 0.0
  %4955 = vmatprep.subr.mxu0 0.0
  %4956 = vmatpush1.xpose.msra.mxu0 0.0
  %4957 = vmatprep.subr.mxu0 0.0
  %4958 = vmatpush1.xpose.msra.mxu0 0.0
  %4959 = vmatprep.subr.mxu0 0.0
  %4960 = vmatpush1.xpose.msra.mxu0 0.0
  %4961 = vmatprep.subr.mxu0 0.0
  %4962 = vmatpush1.xpose.msra.mxu0 0.0
  %4963 = vmatprep.subr.mxu0 0.0
  %4964 = vmatpush1.xpose.msra.mxu0 0.0
  %4965 = vmatprep.subr.mxu0 0.0
  %4966 = vmatpush1.xpose.msra.mxu0 0.0
  %4967 = vmatprep.subr.mxu0 0.0
  %4968 = vmatpush1.xpose.msra.mxu0 0.0
  %4969 = vmatprep.subr.mxu0 0.0
  %4970 = vmatpush1.xpose.msra.mxu0 0.0
  %4971 = vmatprep.subr.mxu0 0.0
  %4972 = vmatpush1.xpose.msra.mxu0 0.0
  %4973 = vmatprep.subr.mxu0 0.0
  %4974 = vmatpush1.xpose.msra.mxu0 0.0
  %4975 = vmatprep.subr.mxu0 0.0
  %4976 = vmatpush1.xpose.msra.mxu0 0.0
  %4977 = vmatprep.subr.mxu0 0.0
  %4978 = vmatpush1.xpose.msra.mxu0 0.0
  %4979 = vmatprep.subr.mxu0 0.0
  %4980 = vmatpush1.xpose.msra.mxu0 0.0
  %4981 = vmatprep.subr.mxu0 0.0
  %4982 = vmatpush1.xpose.msra.mxu0 0.0
  %4983 = vmatprep.subr.mxu0 0.0
  %4984 = vmatpush1.xpose.msra.mxu0 0.0
  %4985 = vmatprep.subr.mxu0 0.0
  %4986 = vmatpush1.xpose.msra.mxu0 0.0
  %4987 = vmatprep.subr.mxu0 0.0
  %4988 = vmatpush1.xpose.msra.mxu0 0.0
  %4989 = vmatprep.subr.mxu0 0.0
  %4990 = vmatpush1.xpose.msra.mxu0 0.0
  %4991 = vmatprep.subr.mxu0 0.0
  %4992 = vmatpush1.xpose.msra.mxu0 0.0
  %4993 = vmatprep.subr.mxu0 0.0
  %4994 = vmatpush1.xpose.msra.mxu0 0.0
  %4995 = vmatprep.subr.mxu0 0.0
  %4996 = vmatpush1.xpose.msra.mxu0 0.0
  %4997 = vmatprep.subr.mxu0 0.0
  %4998 = vmatpush1.xpose.msra.mxu0 0.0
  %4999 = vmatprep.mubr.f32.mxu0 0.0
  %5000 = vmatmul.mubr.f32.gmra.mrb[0].mxu0 %v4261
  %v5001 = vpop.f32.mrb[0].mxu0
  %v5002 = vadd.f32 %v63, %v5001
  %v5003 = vpop.f32.mrb[0].mxu0
  %5004 = vmatprep.mubr.f32.mxu0 0.0
  %5005 = vmatmul.mubr.f32.gmra.mrb[0].mxu0 %v4267
  %v5006 = vpop.f32.mrb[0].mxu0
  %v5007 = vadd.f32 %v64, %v5006
  %v5008 = vpop.f32.mrb[0].mxu0
  %5009 = vdwg.mxu0
  %v5010 = vsel %vm869, %v5002, -inf
  %5011 = vmax.xlane.f32.xlu0 %v5010
  %v5012 = vpop.xlane.xlu0 %5011
  %v5013 = vsel %vm869, %v5007, -inf
  %5014 = vmax.xlane.f32.xlu0 %v5013
  %v5015 = vpop.xlane.xlu0 %5014
  %v5016 = vsub.f32 %v5002, %v5012
  %v5017 = vsub.f32 %v5007, %v5015
  %v5018 = vmul.f32 %v5016, 1.442695
  %v5019 = vpow.pop %v5018
  %v5020 = vmul.f32 %v5017, 1.442695
  %v5021 = vpow.pop %v5020
  %v5022 = vsel %vm869, %v5019, 0.0
  %5023 = vadd.xlane.f32.xlu0 %v5022
  %v5024 = vpop.xlane.xlu0 %5023
  %v5025 = vsel %vm869, %v5021, 0.0
  %5026 = vadd.xlane.f32.xlu0 %v5025
  %v5027 = vpop.xlane.xlu0 %5026
  %v5028 = vrcp.pop %v5024
  %v5029 = vrcp.pop %v5027
  %v5030 = vmul.f32 %v5019, %v5028
  %v5031 = vmul.f32 %v5021, %v5029
  %v5033 = vsel %vm869, %v5030, 0
  %v5036 = vsel %vm869, %v5031, 0
  %5038 = vmatprep.subr.mxu0 0.0
  %5039 = vmatpush1.msra.mxu0 %v4569
  %5040 = vmatprep.subr.mxu0 0.0
  %5041 = vmatpush1.msra.mxu0 %v4575
  %5042 = vmatprep.subr.mxu0 0.0
  %5043 = vmatpush1.msra.mxu0 0.0
  %5044 = vmatprep.subr.mxu0 0.0
  %5045 = vmatpush1.msra.mxu0 0.0
  %5046 = vmatprep.subr.mxu0 0.0
  %5047 = vmatpush1.msra.mxu0 0.0
  %5048 = vmatprep.subr.mxu0 0.0
  %5049 = vmatpush1.msra.mxu0 0.0
  %5050 = vmatprep.subr.mxu0 0.0
  %5051 = vmatpush1.msra.mxu0 0.0
  %5052 = vmatprep.subr.mxu0 0.0
  %5053 = vmatpush1.msra.mxu0 0.0
  %5054 = vmatprep.subr.mxu0 0.0
  %5055 = vmatpush1.msra.mxu0 0.0
  %5056 = vmatprep.subr.mxu0 0.0
  %5057 = vmatpush1.msra.mxu0 0.0
  %5058 = vmatprep.subr.mxu0 0.0
  %5059 = vmatpush1.msra.mxu0 0.0
  %5060 = vmatprep.subr.mxu0 0.0
  %5061 = vmatpush1.msra.mxu0 0.0
  %5062 = vmatprep.subr.mxu0 0.0
  %5063 = vmatpush1.msra.mxu0 0.0
  %5064 = vmatprep.subr.mxu0 0.0
  %5065 = vmatpush1.msra.mxu0 0.0
  %5066 = vmatprep.subr.mxu0 0.0
  %5067 = vmatpush1.msra.mxu0 0.0
  %5068 = vmatprep.subr.mxu0 0.0
  %5069 = vmatpush1.msra.mxu0 0.0
  %5070 = vmatprep.subr.mxu0 0.0
  %5071 = vmatpush1.msra.mxu0 0.0
  %5072 = vmatprep.subr.mxu0 0.0
  %5073 = vmatpush1.msra.mxu0 0.0
  %5074 = vmatprep.subr.mxu0 0.0
  %5075 = vmatpush1.msra.mxu0 0.0
  %5076 = vmatprep.subr.mxu0 0.0
  %5077 = vmatpush1.msra.mxu0 0.0
  %5078 = vmatprep.subr.mxu0 0.0
  %5079 = vmatpush1.msra.mxu0 0.0
  %5080 = vmatprep.subr.mxu0 0.0
  %5081 = vmatpush1.msra.mxu0 0.0
  %5082 = vmatprep.subr.mxu0 0.0
  %5083 = vmatpush1.msra.mxu0 0.0
  %5084 = vmatprep.subr.mxu0 0.0
  %5085 = vmatpush1.msra.mxu0 0.0
  %5086 = vmatprep.subr.mxu0 0.0
  %5087 = vmatpush1.msra.mxu0 0.0
  %5088 = vmatprep.subr.mxu0 0.0
  %5089 = vmatpush1.msra.mxu0 0.0
  %5090 = vmatprep.subr.mxu0 0.0
  %5091 = vmatpush1.msra.mxu0 0.0
  %5092 = vmatprep.subr.mxu0 0.0
  %5093 = vmatpush1.msra.mxu0 0.0
  %5094 = vmatprep.subr.mxu0 0.0
  %5095 = vmatpush1.msra.mxu0 0.0
  %5096 = vmatprep.subr.mxu0 0.0
  %5097 = vmatpush1.msra.mxu0 0.0
  %5098 = vmatprep.subr.mxu0 0.0
  %5099 = vmatpush1.msra.mxu0 0.0
  %5100 = vmatprep.subr.mxu0 0.0
  %5101 = vmatpush1.msra.mxu0 0.0
  %5102 = vmatprep.mubr.f32.mxu0 0.0
  %5103 = vmatmul.mubr.f32.gmra.mrb[0].mxu0 %v5033
  %v5104 = vpop.f32.mrb[0].mxu0
  %v5105 = vadd.f32 0.0, %v5104
  %v5106 = vpop.f32.mrb[0].mxu0
  %5107 = vmatprep.mubr.f32.mxu0 0.0
  %5108 = vmatmul.mubr.f32.gmra.mrb[0].mxu0 %v5036
  %v5109 = vpop.f32.mrb[0].mxu0
  %v5110 = vadd.f32 0.0, %v5109
  %v5111 = vpop.f32.mrb[0].mxu0
  %5112 = vdwg.mxu0
  %5113 = vmatprep.subr.mxu0 0.0
  %5114 = vmatpush1.xpose.msra.mxu0 %v4417
  %5115 = vmatprep.subr.mxu0 0.0
  %5116 = vmatpush1.xpose.msra.mxu0 %v4423
  %5117 = vmatprep.subr.mxu0 0.0
  %5118 = vmatpush1.xpose.msra.mxu0 0.0
  %5119 = vmatprep.subr.mxu0 0.0
  %5120 = vmatpush1.xpose.msra.mxu0 0.0
  %5121 = vmatprep.subr.mxu0 0.0
  %5122 = vmatpush1.xpose.msra.mxu0 0.0
  %5123 = vmatprep.subr.mxu0 0.0
  %5124 = vmatpush1.xpose.msra.mxu0 0.0
  %5125 = vmatprep.subr.mxu0 0.0
  %5126 = vmatpush1.xpose.msra.mxu0 0.0
  %5127 = vmatprep.subr.mxu0 0.0
  %5128 = vmatpush1.xpose.msra.mxu0 0.0
  %5129 = vmatprep.subr.mxu0 0.0
  %5130 = vmatpush1.xpose.msra.mxu0 0.0
  %5131 = vmatprep.subr.mxu0 0.0
  %5132 = vmatpush1.xpose.msra.mxu0 0.0
  %5133 = vmatprep.subr.mxu0 0.0
  %5134 = vmatpush1.xpose.msra.mxu0 0.0
  %5135 = vmatprep.subr.mxu0 0.0
  %5136 = vmatpush1.xpose.msra.mxu0 0.0
  %5137 = vmatprep.subr.mxu0 0.0
  %5138 = vmatpush1.xpose.msra.mxu0 0.0
  %5139 = vmatprep.subr.mxu0 0.0
  %5140 = vmatpush1.xpose.msra.mxu0 0.0
  %5141 = vmatprep.subr.mxu0 0.0
  %5142 = vmatpush1.xpose.msra.mxu0 0.0
  %5143 = vmatprep.subr.mxu0 0.0
  %5144 = vmatpush1.xpose.msra.mxu0 0.0
  %5145 = vmatprep.subr.mxu0 0.0
  %5146 = vmatpush1.xpose.msra.mxu0 0.0
  %5147 = vmatprep.subr.mxu0 0.0
  %5148 = vmatpush1.xpose.msra.mxu0 0.0
  %5149 = vmatprep.subr.mxu0 0.0
  %5150 = vmatpush1.xpose.msra.mxu0 0.0
  %5151 = vmatprep.subr.mxu0 0.0
  %5152 = vmatpush1.xpose.msra.mxu0 0.0
  %5153 = vmatprep.subr.mxu0 0.0
  %5154 = vmatpush1.xpose.msra.mxu0 0.0
  %5155 = vmatprep.subr.mxu0 0.0
  %5156 = vmatpush1.xpose.msra.mxu0 0.0
  %5157 = vmatprep.subr.mxu0 0.0
  %5158 = vmatpush1.xpose.msra.mxu0 0.0
  %5159 = vmatprep.subr.mxu0 0.0
  %5160 = vmatpush1.xpose.msra.mxu0 0.0
  %5161 = vmatprep.subr.mxu0 0.0
  %5162 = vmatpush1.xpose.msra.mxu0 0.0
  %5163 = vmatprep.subr.mxu0 0.0
  %5164 = vmatpush1.xpose.msra.mxu0 0.0
  %5165 = vmatprep.subr.mxu0 0.0
  %5166 = vmatpush1.xpose.msra.mxu0 0.0
  %5167 = vmatprep.subr.mxu0 0.0
  %5168 = vmatpush1.xpose.msra.mxu0 0.0
  %5169 = vmatprep.subr.mxu0 0.0
  %5170 = vmatpush1.xpose.msra.mxu0 0.0
  %5171 = vmatprep.subr.mxu0 0.0
  %5172 = vmatpush1.xpose.msra.mxu0 0.0
  %5173 = vmatprep.subr.mxu0 0.0
  %5174 = vmatpush1.xpose.msra.mxu0 0.0
  %5175 = vmatprep.subr.mxu0 0.0
  %5176 = vmatpush1.xpose.msra.mxu0 0.0
  %5177 = vmatprep.mubr.f32.mxu0 0.0
  %5178 = vmatmul.mubr.f32.gmra.mrb[0].mxu0 %v4263
  %v5179 = vpop.f32.mrb[0].mxu0
  %v5180 = vadd.f32 %v63, %v5179
  %v5181 = vpop.f32.mrb[0].mxu0
  %5182 = vmatprep.mubr.f32.mxu0 0.0
  %5183 = vmatmul.mubr.f32.gmra.mrb[0].mxu0 %v4269
  %v5184 = vpop.f32.mrb[0].mxu0
  %v5185 = vadd.f32 %v64, %v5184
  %v5186 = vpop.f32.mrb[0].mxu0
  %5187 = vdwg.mxu0
  %v5188 = vsel %vm869, %v5180, -inf
  %5189 = vmax.xlane.f32.xlu0 %v5188
  %v5190 = vpop.xlane.xlu0 %5189
  %v5191 = vsel %vm869, %v5185, -inf
  %5192 = vmax.xlane.f32.xlu0 %v5191
  %v5193 = vpop.xlane.xlu0 %5192
  %v5194 = vsub.f32 %v5180, %v5190
  %v5195 = vsub.f32 %v5185, %v5193
  %v5196 = vmul.f32 %v5194, 1.442695
  %v5197 = vpow.pop %v5196
  %v5198 = vmul.f32 %v5195, 1.442695
  %v5199 = vpow.pop %v5198
  %v5200 = vsel %vm869, %v5197, 0.0
  %5201 = vadd.xlane.f32.xlu0 %v5200
  %v5202 = vpop.xlane.xlu0 %5201
  %v5203 = vsel %vm869, %v5199, 0.0
  %5204 = vadd.xlane.f32.xlu0 %v5203
  %v5205 = vpop.xlane.xlu0 %5204
  %v5206 = vrcp.pop %v5202
  %v5207 = vrcp.pop %v5205
  %v5208 = vmul.f32 %v5197, %v5206
  %v5209 = vmul.f32 %v5199, %v5207
  %v5211 = vsel %vm869, %v5208, 0
  %v5214 = vsel %vm869, %v5209, 0
  %5216 = vmatprep.subr.mxu0 0.0
  %5217 = vmatpush1.msra.mxu0 %v4571
  %5218 = vmatprep.subr.mxu0 0.0
  %5219 = vmatpush1.msra.mxu0 %v4577
  %5220 = vmatprep.subr.mxu0 0.0
  %5221 = vmatpush1.msra.mxu0 0.0
  %5222 = vmatprep.subr.mxu0 0.0
  %5223 = vmatpush1.msra.mxu0 0.0
  %5224 = vmatprep.subr.mxu0 0.0
  %5225 = vmatpush1.msra.mxu0 0.0
  %5226 = vmatprep.subr.mxu0 0.0
  %5227 = vmatpush1.msra.mxu0 0.0
  %5228 = vmatprep.subr.mxu0 0.0
  %5229 = vmatpush1.msra.mxu0 0.0
  %5230 = vmatprep.subr.mxu0 0.0
  %5231 = vmatpush1.msra.mxu0 0.0
  %5232 = vmatprep.subr.mxu0 0.0
  %5233 = vmatpush1.msra.mxu0 0.0
  %5234 = vmatprep.subr.mxu0 0.0
  %5235 = vmatpush1.msra.mxu0 0.0
  %5236 = vmatprep.subr.mxu0 0.0
  %5237 = vmatpush1.msra.mxu0 0.0
  %5238 = vmatprep.subr.mxu0 0.0
  %5239 = vmatpush1.msra.mxu0 0.0
  %5240 = vmatprep.subr.mxu0 0.0
  %5241 = vmatpush1.msra.mxu0 0.0
  %5242 = vmatprep.subr.mxu0 0.0
  %5243 = vmatpush1.msra.mxu0 0.0
  %5244 = vmatprep.subr.mxu0 0.0
  %5245 = vmatpush1.msra.mxu0 0.0
  %5246 = vmatprep.subr.mxu0 0.0
  %5247 = vmatpush1.msra.mxu0 0.0
  %5248 = vmatprep.subr.mxu0 0.0
  %5249 = vmatpush1.msra.mxu0 0.0
  %5250 = vmatprep.subr.mxu0 0.0
  %5251 = vmatpush1.msra.mxu0 0.0
  %5252 = vmatprep.subr.mxu0 0.0
  %5253 = vmatpush1.msra.mxu0 0.0
  %5254 = vmatprep.subr.mxu0 0.0
  %5255 = vmatpush1.msra.mxu0 0.0
  %5256 = vmatprep.subr.mxu0 0.0
  %5257 = vmatpush1.msra.mxu0 0.0
  %5258 = vmatprep.subr.mxu0 0.0
  %5259 = vmatpush1.msra.mxu0 0.0
  %5260 = vmatprep.subr.mxu0 0.0
  %5261 = vmatpush1.msra.mxu0 0.0
  %5262 = vmatprep.subr.mxu0 0.0
  %5263 = vmatpush1.msra.mxu0 0.0
  %5264 = vmatprep.subr.mxu0 0.0
  %5265 = vmatpush1.msra.mxu0 0.0
  %5266 = vmatprep.subr.mxu0 0.0
  %5267 = vmatpush1.msra.mxu0 0.0
  %5268 = vmatprep.subr.mxu0 0.0
  %5269 = vmatpush1.msra.mxu0 0.0
  %5270 = vmatprep.subr.mxu0 0.0
  %5271 = vmatpush1.msra.mxu0 0.0
  %5272 = vmatprep.subr.mxu0 0.0
  %5273 = vmatpush1.msra.mxu0 0.0
  %5274 = vmatprep.subr.mxu0 0.0
  %5275 = vmatpush1.msra.mxu0 0.0
  %5276 = vmatprep.subr.mxu0 0.0
  %5277 = vmatpush1.msra.mxu0 0.0
  %5278 = vmatprep.subr.mxu0 0.0
  %5279 = vmatpush1.msra.mxu0 0.0
  %5280 = vmatprep.mubr.f32.mxu0 0.0
  %5281 = vmatmul.mubr.f32.gmra.mrb[0].mxu0 %v5211
  %v5282 = vpop.f32.mrb[0].mxu0
  %v5283 = vadd.f32 0.0, %v5282
  %v5284 = vpop.f32.mrb[0].mxu0
  %5285 = vmatprep.mubr.f32.mxu0 0.0
  %5286 = vmatmul.mubr.f32.gmra.mrb[0].mxu0 %v5214
  %v5287 = vpop.f32.mrb[0].mxu0
  %v5288 = vadd.f32 0.0, %v5287
  %v5289 = vpop.f32.mrb[0].mxu0
  %5290 = vdwg.mxu0
  %s5291 = scalar_lea.vmem %s7, 512
  %v5292 = vld [vmem:[%s5291] sm:$0xff]
  %v5293 = vld [vmem:[%s5291 + $0x8] sm:$0xff]
  %v5294 = vld [vmem:[%s5291 + $0x10] sm:$0xff]
  %v5295 = vld [vmem:[%s5291 + $0x18] sm:$0xff]
  %v5296 = vld [vmem:[%s5291 + $0x20] sm:$0xff]
  %v5297 = vld [vmem:[%s5291 + $0x28] sm:$0xff]
  %v5298 = vld [vmem:[%s5291 + $0x30] sm:$0xff]
  %v5299 = vld [vmem:[%s5291 + $0x38] sm:$0xff]
  %v5300 = vld [vmem:[%s5291 + $0x40] sm:$0xff]
  %v5301 = vld [vmem:[%s5291 + $0x48] sm:$0xff]
  %v5302 = vld [vmem:[%s5291 + $0x50] sm:$0xff]
  %v5303 = vld [vmem:[%s5291 + $0x58] sm:$0xff]
  %v5304 = vld [vmem:[%s5291 + $0x60] sm:$0xff]
  %v5305 = vld [vmem:[%s5291 + $0x68] sm:$0xff]
  %v5306 = vld [vmem:[%s5291 + $0x70] sm:$0xff]
  %v5307 = vld [vmem:[%s5291 + $0x78] sm:$0xff]
  %v5308 = vld [vmem:[%s5291 + $0x80] sm:$0xff]
  %v5309 = vld [vmem:[%s5291 + $0x88] sm:$0xff]
  %v5310 = vld [vmem:[%s5291 + $0x90] sm:$0xff]
  %v5311 = vld [vmem:[%s5291 + $0x98] sm:$0xff]
  %v5312 = vld [vmem:[%s5291 + $0xa0] sm:$0xff]
  %v5313 = vld [vmem:[%s5291 + $0xa8] sm:$0xff]
  %v5314 = vld [vmem:[%s5291 + $0xb0] sm:$0xff]
  %v5315 = vld [vmem:[%s5291 + $0xb8] sm:$0xff]
  %v5316 = vld [vmem:[%s5291 + $0xc0] sm:$0xff]
  %v5317 = vld [vmem:[%s5291 + $0xc8] sm:$0xff]
  %v5318 = vld [vmem:[%s5291 + $0xd0] sm:$0xff]
  %v5319 = vld [vmem:[%s5291 + $0xd8] sm:$0xff]
  %v5320 = vld [vmem:[%s5291 + $0xe0] sm:$0xff]
  %v5321 = vld [vmem:[%s5291 + $0xe8] sm:$0xff]
  %v5322 = vld [vmem:[%s5291 + $0xf0] sm:$0xff]
  %v5323 = vld [vmem:[%s5291 + $0xf8] sm:$0xff]
  %v5324 = vld [vmem:[%s5291 + $0x100] sm:$0xff]
  %v5325 = vld [vmem:[%s5291 + $0x108] sm:$0xff]
  %v5326 = vld [vmem:[%s5291 + $0x110] sm:$0xff]
  %v5327 = vld [vmem:[%s5291 + $0x118] sm:$0xff]
  %v5328 = vld [vmem:[%s5291 + $0x120] sm:$0xff]
  %v5329 = vld [vmem:[%s5291 + $0x128] sm:$0xff]
  %v5330 = vld [vmem:[%s5291 + $0x130] sm:$0xff]
  %v5331 = vld [vmem:[%s5291 + $0x138] sm:$0xff]
  %v5332 = vld [vmem:[%s5291 + $0x140] sm:$0xff]
  %v5333 = vld [vmem:[%s5291 + $0x148] sm:$0xff]
  %v5334 = vld [vmem:[%s5291 + $0x150] sm:$0xff]
  %v5335 = vld [vmem:[%s5291 + $0x158] sm:$0xff]
  %v5336 = vld [vmem:[%s5291 + $0x160] sm:$0xff]
  %v5337 = vld [vmem:[%s5291 + $0x168] sm:$0xff]
  %v5338 = vld [vmem:[%s5291 + $0x170] sm:$0xff]
  %v5339 = vld [vmem:[%s5291 + $0x178] sm:$0xff]
  %v5340 = vld [vmem:[%s5291 + $0x180] sm:$0xff]
  %v5341 = vld [vmem:[%s5291 + $0x188] sm:$0xff]
  %v5342 = vld [vmem:[%s5291 + $0x190] sm:$0xff]
  %v5343 = vld [vmem:[%s5291 + $0x198] sm:$0xff]
  %v5344 = vld [vmem:[%s5291 + $0x1a0] sm:$0xff]
  %v5345 = vld [vmem:[%s5291 + $0x1a8] sm:$0xff]
  %v5346 = vld [vmem:[%s5291 + $0x1b0] sm:$0xff]
  %v5347 = vld [vmem:[%s5291 + $0x1b8] sm:$0xff]
  %v5348 = vld [vmem:[%s5291 + $0x1c0] sm:$0xff]
  %v5349 = vld [vmem:[%s5291 + $0x1c8] sm:$0xff]
  %v5350 = vld [vmem:[%s5291 + $0x1d0] sm:$0xff]
  %v5351 = vld [vmem:[%s5291 + $0x1d8] sm:$0xff]
  %v5352 = vld [vmem:[%s5291 + $0x1e0] sm:$0xff]
  %v5353 = vld [vmem:[%s5291 + $0x1e8] sm:$0xff]
  %v5354 = vld [vmem:[%s5291 + $0x1f0] sm:$0xff]
  %v5355 = vld [vmem:[%s5291 + $0x1f8] sm:$0xff]
  %s5356 = scalar_lea.vmem %s8, 1
  %v5357 = vld [vmem:[%s5356] sm:$0x1]
  %v5359 = vlaneseq
  %v5360 = vshrl.u32 %v5359, 7
  %v5361 = vsub.s32 0, %v5360
  %v5362 = vrot.slane %v5357, %v5361
  %5364 = vmatprep.subr.mxu0 0.0
  %5365 = vmatpush1.msra.mxu0 %v5292
  %5366 = vmatprep.subr.mxu0 0.0
  %5367 = vmatpush1.msra.mxu0 %v5293
  %5368 = vmatprep.subr.mxu0 0.0
  %5369 = vmatpush1.msra.mxu0 %v5294
  %5370 = vmatprep.subr.mxu0 0.0
  %5371 = vmatpush1.msra.mxu0 %v5295
  %5372 = vmatprep.subr.mxu0 0.0
  %5373 = vmatpush1.msra.mxu0 %v5296
  %5374 = vmatprep.subr.mxu0 0.0
  %5375 = vmatpush1.msra.mxu0 %v5297
  %5376 = vmatprep.subr.mxu0 0.0
  %5377 = vmatpush1.msra.mxu0 %v5298
  %5378 = vmatprep.subr.mxu0 0.0
  %5379 = vmatpush1.msra.mxu0 %v5299
  %5380 = vmatprep.subr.mxu0 0.0
  %5381 = vmatpush1.msra.mxu0 %v5300
  %5382 = vmatprep.subr.mxu0 0.0
  %5383 = vmatpush1.msra.mxu0 %v5301
  %5384 = vmatprep.subr.mxu0 0.0
  %5385 = vmatpush1.msra.mxu0 %v5302
  %5386 = vmatprep.subr.mxu0 0.0
  %5387 = vmatpush1.msra.mxu0 %v5303
  %5388 = vmatprep.subr.mxu0 0.0
  %5389 = vmatpush1.msra.mxu0 %v5304
  %5390 = vmatprep.subr.mxu0 0.0
  %5391 = vmatpush1.msra.mxu0 %v5305
  %5392 = vmatprep.subr.mxu0 0.0
  %5393 = vmatpush1.msra.mxu0 %v5306
  %5394 = vmatprep.subr.mxu0 0.0
  %5395 = vmatpush1.msra.mxu0 %v5307
  %5396 = vmatprep.subr.mxu0 0.0
  %5397 = vmatpush1.msra.mxu0 %v5308
  %5398 = vmatprep.subr.mxu0 0.0
  %5399 = vmatpush1.msra.mxu0 %v5309
  %5400 = vmatprep.subr.mxu0 0.0
  %5401 = vmatpush1.msra.mxu0 %v5310
  %5402 = vmatprep.subr.mxu0 0.0
  %5403 = vmatpush1.msra.mxu0 %v5311
  %5404 = vmatprep.subr.mxu0 0.0
  %5405 = vmatpush1.msra.mxu0 %v5312
  %5406 = vmatprep.subr.mxu0 0.0
  %5407 = vmatpush1.msra.mxu0 %v5313
  %5408 = vmatprep.subr.mxu0 0.0
  %5409 = vmatpush1.msra.mxu0 %v5314
  %5410 = vmatprep.subr.mxu0 0.0
  %5411 = vmatpush1.msra.mxu0 %v5315
  %5412 = vmatprep.subr.mxu0 0.0
  %5413 = vmatpush1.msra.mxu0 %v5316
  %5414 = vmatprep.subr.mxu0 0.0
  %5415 = vmatpush1.msra.mxu0 %v5317
  %5416 = vmatprep.subr.mxu0 0.0
  %5417 = vmatpush1.msra.mxu0 %v5318
  %5418 = vmatprep.subr.mxu0 0.0
  %5419 = vmatpush1.msra.mxu0 %v5319
  %5420 = vmatprep.subr.mxu0 0.0
  %5421 = vmatpush1.msra.mxu0 %v5320
  %5422 = vmatprep.subr.mxu0 0.0
  %5423 = vmatpush1.msra.mxu0 %v5321
  %5424 = vmatprep.subr.mxu0 0.0
  %5425 = vmatpush1.msra.mxu0 %v5322
  %5426 = vmatprep.subr.mxu0 0.0
  %5427 = vmatpush1.msra.mxu0 %v5323
  %5428 = vmatprep.mubr.f32.mxu0 %v4927
  %5429 = vmatmul.mubr.f32.gmra.mrb[0].mxu0 %v4749
  %v5430 = vpop.f32.mrb[0].mxu0
  %v5431 = vadd.f32 %v5362, %v5430
  %v5432 = vpop.f32.mrb[0].mxu0
  %5433 = vmatprep.mubr.f32.mxu0 %v4932
  %5434 = vmatmul.mubr.f32.gmra.mrb[0].mxu0 %v4754
  %v5435 = vpop.f32.mrb[0].mxu0
  %v5436 = vadd.f32 %v5362, %v5435
  %v5437 = vpop.f32.mrb[0].mxu0
  %5438 = vdwg.mxu0
  %5439 = vmatprep.subr.mxu0 0.0
  %5440 = vmatpush1.msra.mxu0 %v5324
  %5441 = vmatprep.subr.mxu0 0.0
  %5442 = vmatpush1.msra.mxu0 %v5325
  %5443 = vmatprep.subr.mxu0 0.0
  %5444 = vmatpush1.msra.mxu0 %v5326
  %5445 = vmatprep.subr.mxu0 0.0
  %5446 = vmatpush1.msra.mxu0 %v5327
  %5447 = vmatprep.subr.mxu0 0.0
  %5448 = vmatpush1.msra.mxu0 %v5328
  %5449 = vmatprep.subr.mxu0 0.0
  %5450 = vmatpush1.msra.mxu0 %v5329
  %5451 = vmatprep.subr.mxu0 0.0
  %5452 = vmatpush1.msra.mxu0 %v5330
  %5453 = vmatprep.subr.mxu0 0.0
  %5454 = vmatpush1.msra.mxu0 %v5331
  %5455 = vmatprep.subr.mxu0 0.0
  %5456 = vmatpush1.msra.mxu0 %v5332
  %5457 = vmatprep.subr.mxu0 0.0
  %5458 = vmatpush1.msra.mxu0 %v5333
  %5459 = vmatprep.subr.mxu0 0.0
  %5460 = vmatpush1.msra.mxu0 %v5334
  %5461 = vmatprep.subr.mxu0 0.0
  %5462 = vmatpush1.msra.mxu0 %v5335
  %5463 = vmatprep.subr.mxu0 0.0
  %5464 = vmatpush1.msra.mxu0 %v5336
  %5465 = vmatprep.subr.mxu0 0.0
  %5466 = vmatpush1.msra.mxu0 %v5337
  %5467 = vmatprep.subr.mxu0 0.0
  %5468 = vmatpush1.msra.mxu0 %v5338
  %5469 = vmatprep.subr.mxu0 0.0
  %5470 = vmatpush1.msra.mxu0 %v5339
  %5471 = vmatprep.subr.mxu0 0.0
  %5472 = vmatpush1.msra.mxu0 %v5340
  %5473 = vmatprep.subr.mxu0 0.0
  %5474 = vmatpush1.msra.mxu0 %v5341
  %5475 = vmatprep.subr.mxu0 0.0
  %5476 = vmatpush1.msra.mxu0 %v5342
  %5477 = vmatprep.subr.mxu0 0.0
  %5478 = vmatpush1.msra.mxu0 %v5343
  %5479 = vmatprep.subr.mxu0 0.0
  %5480 = vmatpush1.msra.mxu0 %v5344
  %5481 = vmatprep.subr.mxu0 0.0
  %5482 = vmatpush1.msra.mxu0 %v5345
  %5483 = vmatprep.subr.mxu0 0.0
  %5484 = vmatpush1.msra.mxu0 %v5346
  %5485 = vmatprep.subr.mxu0 0.0
  %5486 = vmatpush1.msra.mxu0 %v5347
  %5487 = vmatprep.subr.mxu0 0.0
  %5488 = vmatpush1.msra.mxu0 %v5348
  %5489 = vmatprep.subr.mxu0 0.0
  %5490 = vmatpush1.msra.mxu0 %v5349
  %5491 = vmatprep.subr.mxu0 0.0
  %5492 = vmatpush1.msra.mxu0 %v5350
  %5493 = vmatprep.subr.mxu0 0.0
  %5494 = vmatpush1.msra.mxu0 %v5351
  %5495 = vmatprep.subr.mxu0 0.0
  %5496 = vmatpush1.msra.mxu0 %v5352
  %5497 = vmatprep.subr.mxu0 0.0
  %5498 = vmatpush1.msra.mxu0 %v5353
  %5499 = vmatprep.subr.mxu0 0.0
  %5500 = vmatpush1.msra.mxu0 %v5354
  %5501 = vmatprep.subr.mxu0 0.0
  %5502 = vmatpush1.msra.mxu0 %v5355
  %5503 = vmatprep.mubr.f32.mxu0 %v5283
  %5504 = vmatmul.mubr.f32.gmra.mrb[0].mxu0 %v5105
  %v5505 = vpop.f32.mrb[0].mxu0
  %v5506 = vadd.f32 %v5431, %v5505
  %v5507 = vpop.f32.mrb[0].mxu0
  %5508 = vmatprep.mubr.f32.mxu0 %v5288
  %5509 = vmatmul.mubr.f32.gmra.mrb[0].mxu0 %v5110
  %v5510 = vpop.f32.mrb[0].mxu0
  %v5511 = vadd.f32 %v5436, %v5510
  %v5512 = vpop.f32.mrb[0].mxu0
  %5513 = vdwg.mxu0
  %v5514 = vadd.f32 %v3947, %v5506
  %v5515 = vadd.f32 %v3948, %v5511
  %s5516 = scalar_lea.vmem %s9, 1
  %v5517 = vld [vmem:[%s5516] sm:$0x1]
  %s5518 = scalar_lea.vmem %s10, 1
  %v5519 = vld [vmem:[%s5518] sm:$0x1]
  %v5520 = vsel %vm289, %v5514, 0.0
  %5521 = vadd.xlane.f32.xlu0 %v5520
  %v5522 = vpop.xlane.xlu0 %5521
  %v5523 = vsel %vm289, %v5515, 0.0
  %5524 = vadd.xlane.f32.xlu0 %v5523
  %v5525 = vpop.xlane.xlu0 %5524
  %v5526 = vmul.f32 %v5522, %v1738
  %v5527 = vmul.f32 %v5525, %v1738
  %v5528 = vsub.f32 %v5514, %v5526
  %v5529 = vsub.f32 %v5515, %v5527
  %v5530 = vmul.f32 %v5528, %v5528
  %v5531 = vmul.f32 %v5529, %v5529
  %v5532 = vsel %vm289, %v5530, 0.0
  %5533 = vadd.xlane.f32.xlu0 %v5532
  %v5534 = vpop.xlane.xlu0 %5533
  %v5535 = vsel %vm289, %v5531, 0.0
  %5536 = vadd.xlane.f32.xlu0 %v5535
  %v5537 = vpop.xlane.xlu0 %5536
  %v5538 = vmul.f32 %v5534, %v1738
  %v5539 = vmul.f32 %v5537, %v1738
  %v5540 = vadd.f32 %v5538, 1e-05
  %v5541 = vadd.f32 %v5539, 1e-05
  %v5542 = vrsqrt.pop %v5540
  %v5543 = vrsqrt.pop %v5541
  %v5544 = vmul.f32 %v5528, %v5542
  %v5545 = vmul.f32 %v5529, %v5543
  %v5547 = vlaneseq
  %v5548 = vshrl.u32 %v5547, 7
  %v5549 = vsub.s32 0, %v5548
  %v5550 = vrot.slane %v5517, %v5549
  %v5552 = vmul.f32 %v5544, %v5550
  %v5553 = vmul.f32 %v5545, %v5550
  %v5555 = vlaneseq
  %v5556 = vshrl.u32 %v5555, 7
  %v5557 = vsub.s32 0, %v5556
  %v5558 = vrot.slane %v5519, %v5557
  %v5560 = vadd.f32 %v5552, %v5558
  %v5561 = vadd.f32 %v5553, %v5558
  %v5562 = vpack.c.bf16 %v5561, %v5560
  %s5563 = scalar_lea.vmem %s11, 320
  %v5564 = vld [vmem:[%s5563] sm:$0xff]
  %v5565 = vld [vmem:[%s5563 + $0x8] sm:$0xff]
  %v5566 = vld [vmem:[%s5563 + $0x10] sm:$0xff]
  %v5567 = vld [vmem:[%s5563 + $0x18] sm:$0xff]
  %v5568 = vld [vmem:[%s5563 + $0x20] sm:$0xff]
  %v5569 = vld [vmem:[%s5563 + $0x28] sm:$0xff]
  %v5570 = vld [vmem:[%s5563 + $0x30] sm:$0xff]
  %v5571 = vld [vmem:[%s5563 + $0x38] sm:$0xff]
  %v5572 = vld [vmem:[%s5563 + $0x40] sm:$0xff]
  %v5573 = vld [vmem:[%s5563 + $0x48] sm:$0xff]
  %v5574 = vld [vmem:[%s5563 + $0x50] sm:$0xff]
  %v5575 = vld [vmem:[%s5563 + $0x58] sm:$0xff]
  %v5576 = vld [vmem:[%s5563 + $0x60] sm:$0xff]
  %v5577 = vld [vmem:[%s5563 + $0x68] sm:$0xff]
  %v5578 = vld [vmem:[%s5563 + $0x70] sm:$0xff]
  %v5579 = vld [vmem:[%s5563 + $0x78] sm:$0xff]
  %v5580 = vld [vmem:[%s5563 + $0x80] sm:$0xff]
  %v5581 = vld [vmem:[%s5563 + $0x88] sm:$0xff]
  %v5582 = vld [vmem:[%s5563 + $0x90] sm:$0xff]
  %v5583 = vld [vmem:[%s5563 + $0x98] sm:$0xff]
  %v5584 = vld [vmem:[%s5563 + $0xa0] sm:$0xff]
  %v5585 = vld [vmem:[%s5563 + $0xa8] sm:$0xff]
  %v5586 = vld [vmem:[%s5563 + $0xb0] sm:$0xff]
  %v5587 = vld [vmem:[%s5563 + $0xb8] sm:$0xff]
  %v5588 = vld [vmem:[%s5563 + $0xc0] sm:$0xff]
  %v5589 = vld [vmem:[%s5563 + $0xc8] sm:$0xff]
  %v5590 = vld [vmem:[%s5563 + $0xd0] sm:$0xff]
  %v5591 = vld [vmem:[%s5563 + $0xd8] sm:$0xff]
  %v5592 = vld [vmem:[%s5563 + $0xe0] sm:$0xff]
  %v5593 = vld [vmem:[%s5563 + $0xe8] sm:$0xff]
  %v5594 = vld [vmem:[%s5563 + $0xf0] sm:$0xff]
  %v5595 = vld [vmem:[%s5563 + $0xf8] sm:$0xff]
  %v5596 = vld [vmem:[%s5563 + $0x100] sm:$0x33]
  %v5597 = vld [vmem:[%s5563 + $0x108] sm:$0x33]
  %v5598 = vld [vmem:[%s5563 + $0x110] sm:$0x33]
  %v5599 = vld [vmem:[%s5563 + $0x118] sm:$0x33]
  %v5600 = vld [vmem:[%s5563 + $0x120] sm:$0x33]
  %v5601 = vld [vmem:[%s5563 + $0x128] sm:$0x33]
  %v5602 = vld [vmem:[%s5563 + $0x130] sm:$0x33]
  %v5603 = vld [vmem:[%s5563 + $0x138] sm:$0x33]
  %s5604 = scalar_lea.vmem %s12, 16
  %v5605 = vld [vmem:[%s5604] sm:$0xff]
  %v5606 = vld [vmem:[%s5604 + $0x8] sm:$0xff]
  %v5609 = vlaneseq
  %v5610 = vshrl.u32 %v5609, 7
  %v5611 = vsub.s32 0, %v5610
  %v5612 = vrot.slane %v5605, %v5611
  %v5613 = vlaneseq
  %v5614 = vshrl.u32 %v5613, 7
  %v5615 = vsub.s32 1, %v5614
  %v5616 = vrot.slane %v5605, %v5615
  %v5617 = vlaneseq
  %v5618 = vshrl.u32 %v5617, 7
  %v5619 = vsub.s32 2, %v5618
  %v5620 = vrot.slane %v5605, %v5619
  %v5621 = vlaneseq
  %v5622 = vshrl.u32 %v5621, 7
  %v5623 = vsub.s32 3, %v5622
  %v5624 = vrot.slane %v5605, %v5623
  %v5625 = vlaneseq
  %v5626 = vshrl.u32 %v5625, 7
  %v5627 = vsub.s32 4, %v5626
  %v5628 = vrot.slane %v5605, %v5627
  %v5629 = vlaneseq
  %v5630 = vshrl.u32 %v5629, 7
  %v5631 = vsub.s32 5, %v5630
  %v5632 = vrot.slane %v5605, %v5631
  %v5633 = vlaneseq
  %v5634 = vshrl.u32 %v5633, 7
  %v5635 = vsub.s32 6, %v5634
  %v5636 = vrot.slane %v5605, %v5635
  %v5637 = vlaneseq
  %v5638 = vshrl.u32 %v5637, 7
  %v5639 = vsub.s32 7, %v5638
  %v5640 = vrot.slane %v5605, %v5639
  %v5641 = vlaneseq
  %v5642 = vshrl.u32 %v5641, 7
  %v5643 = vsub.s32 0, %v5642
  %v5644 = vrot.slane %v5606, %v5643
  %v5645 = vlaneseq
  %v5646 = vshrl.u32 %v5645, 7
  %v5647 = vsub.s32 1, %v5646
  %v5648 = vrot.slane %v5606, %v5647
  %v5649 = vlaneseq
  %v5650 = vshrl.u32 %v5649, 7
  %v5651 = vsub.s32 2, %v5650
  %v5652 = vrot.slane %v5606, %v5651
  %v5653 = vlaneseq
  %v5654 = vshrl.u32 %v5653, 7
  %v5655 = vsub.s32 3, %v5654
  %v5656 = vrot.slane %v5606, %v5655
  %v5657 = vlaneseq
  %v5658 = vshrl.u32 %v5657, 7
  %v5659 = vsub.s32 4, %v5658
  %v5660 = vrot.slane %v5606, %v5659
  %v5661 = vlaneseq
  %v5662 = vshrl.u32 %v5661, 7
  %v5663 = vsub.s32 5, %v5662
  %v5664 = vrot.slane %v5606, %v5663
  %v5665 = vlaneseq
  %v5666 = vshrl.u32 %v5665, 7
  %v5667 = vsub.s32 6, %v5666
  %v5668 = vrot.slane %v5606, %v5667
  %v5669 = vlaneseq
  %v5670 = vshrl.u32 %v5669, 7
  %v5671 = vsub.s32 7, %v5670
  %v5672 = vrot.slane %v5606, %v5671
  %v5729 = vunpack.c.l.b16 %v5564
  %v5730 = vunpack.c.h.b16 %v5564
  %v5731 = vunpack.c.l.b16 %v5565
  %v5732 = vunpack.c.h.b16 %v5565
  %v5733 = vunpack.c.l.b16 %v5566
  %v5734 = vunpack.c.h.b16 %v5566
  %v5735 = vunpack.c.l.b16 %v5567
  %v5736 = vunpack.c.h.b16 %v5567
  %v5737 = vunpack.c.l.b16 %v5568
  %v5738 = vunpack.c.h.b16 %v5568
  %v5739 = vunpack.c.l.b16 %v5569
  %v5740 = vunpack.c.h.b16 %v5569
  %v5741 = vunpack.c.l.b16 %v5570
  %v5742 = vunpack.c.h.b16 %v5570
  %v5743 = vunpack.c.l.b16 %v5571
  %v5744 = vunpack.c.h.b16 %v5571
  %v5745 = vunpack.c.l.b16 %v5572
  %v5746 = vunpack.c.h.b16 %v5572
  %v5747 = vunpack.c.l.b16 %v5573
  %v5748 = vunpack.c.h.b16 %v5573
  %v5749 = vunpack.c.l.b16 %v5574
  %v5750 = vunpack.c.h.b16 %v5574
  %v5751 = vunpack.c.l.b16 %v5575
  %v5752 = vunpack.c.h.b16 %v5575
  %v5753 = vunpack.c.l.b16 %v5576
  %v5754 = vunpack.c.h.b16 %v5576
  %v5755 = vunpack.c.l.b16 %v5577
  %v5756 = vunpack.c.h.b16 %v5577
  %v5757 = vunpack.c.l.b16 %v5578
  %v5758 = vunpack.c.h.b16 %v5578
  %v5759 = vunpack.c.l.b16 %v5579
  %v5760 = vunpack.c.h.b16 %v5579
  %v5761 = vunpack.c.l.b16 %v5580
  %v5762 = vunpack.c.h.b16 %v5580
  %v5763 = vunpack.c.l.b16 %v5581
  %v5764 = vunpack.c.h.b16 %v5581
  %v5765 = vunpack.c.l.b16 %v5582
  %v5766 = vunpack.c.h.b16 %v5582
  %v5767 = vunpack.c.l.b16 %v5583
  %v5768 = vunpack.c.h.b16 %v5583
  %v5769 = vunpack.c.l.b16 %v5584
  %v5770 = vunpack.c.h.b16 %v5584
  %v5771 = vunpack.c.l.b16 %v5585
  %v5772 = vunpack.c.h.b16 %v5585
  %v5773 = vunpack.c.l.b16 %v5586
  %v5774 = vunpack.c.h.b16 %v5586
  %v5775 = vunpack.c.l.b16 %v5587
  %v5776 = vunpack.c.h.b16 %v5587
  %v5777 = vunpack.c.l.b16 %v5588
  %v5778 = vunpack.c.h.b16 %v5588
  %v5779 = vunpack.c.l.b16 %v5589
  %v5780 = vunpack.c.h.b16 %v5589
  %v5781 = vunpack.c.l.b16 %v5590
  %v5782 = vunpack.c.h.b16 %v5590
  %v5783 = vunpack.c.l.b16 %v5591
  %v5784 = vunpack.c.h.b16 %v5591
  %v5785 = vunpack.c.l.b16 %v5592
  %v5786 = vunpack.c.h.b16 %v5592
  %v5787 = vunpack.c.l.b16 %v5593
  %v5788 = vunpack.c.h.b16 %v5593
  %v5789 = vunpack.c.l.b16 %v5594
  %v5790 = vunpack.c.h.b16 %v5594
  %v5791 = vunpack.c.l.b16 %v5595
  %v5792 = vunpack.c.h.b16 %v5595
  %v5793 = vunpack.c.l.b16 %v5596
  %v5794 = vunpack.c.h.b16 %v5596
  %v5795 = vunpack.c.l.b16 %v5597
  %v5796 = vunpack.c.h.b16 %v5597
  %v5797 = vunpack.c.l.b16 %v5598
  %v5798 = vunpack.c.h.b16 %v5598
  %v5799 = vunpack.c.l.b16 %v5599
  %v5800 = vunpack.c.h.b16 %v5599
  %v5801 = vunpack.c.l.b16 %v5600
  %v5802 = vunpack.c.h.b16 %v5600
  %v5803 = vunpack.c.l.b16 %v5601
  %v5804 = vunpack.c.h.b16 %v5601
  %v5805 = vunpack.c.l.b16 %v5602
  %v5806 = vunpack.c.h.b16 %v5602
  %v5807 = vunpack.c.l.b16 %v5603
  %v5808 = vunpack.c.h.b16 %v5603
  %v5809 = vpack.c.b16 %v5745, %v5729
  %v5810 = vpack.c.b16 %v5746, %v5730
  %v5811 = vpack.c.b16 %v5747, %v5731
  %v5812 = vpack.c.b16 %v5748, %v5732
  %v5813 = vpack.c.b16 %v5749, %v5733
  %v5814 = vpack.c.b16 %v5750, %v5734
  %v5815 = vpack.c.b16 %v5751, %v5735
  %v5816 = vpack.c.b16 %v5752, %v5736
  %v5817 = vpack.c.b16 %v5753, %v5737
  %v5818 = vpack.c.b16 %v5754, %v5738
  %v5819 = vpack.c.b16 %v5755, %v5739
  %v5820 = vpack.c.b16 %v5756, %v5740
  %v5821 = vpack.c.b16 %v5757, %v5741
  %v5822 = vpack.c.b16 %v5758, %v5742
  %v5823 = vpack.c.b16 %v5759, %v5743
  %v5824 = vpack.c.b16 %v5760, %v5744
  %v5825 = vpack.c.b16 %v5777, %v5761
  %v5826 = vpack.c.b16 %v5778, %v5762
  %v5827 = vpack.c.b16 %v5779, %v5763
  %v5828 = vpack.c.b16 %v5780, %v5764
  %v5829 = vpack.c.b16 %v5781, %v5765
  %v5830 = vpack.c.b16 %v5782, %v5766
  %v5831 = vpack.c.b16 %v5783, %v5767
  %v5832 = vpack.c.b16 %v5784, %v5768
  %v5833 = vpack.c.b16 %v5785, %v5769
  %v5834 = vpack.c.b16 %v5786, %v5770
  %v5835 = vpack.c.b16 %v5787, %v5771
  %v5836 = vpack.c.b16 %v5788, %v5772
  %v5837 = vpack.c.b16 %v5789, %v5773
  %v5838 = vpack.c.b16 %v5790, %v5774
  %v5839 = vpack.c.b16 %v5791, %v5775
  %v5840 = vpack.c.b16 %v5792, %v5776
  %v5841 = vpack.c.b16 %v5793, %v5793
  %v5842 = vpack.c.b16 %v5794, %v5794
  %v5843 = vpack.c.b16 %v5795, %v5795
  %v5844 = vpack.c.b16 %v5796, %v5796
  %v5845 = vpack.c.b16 %v5797, %v5797
  %v5846 = vpack.c.b16 %v5798, %v5798
  %v5847 = vpack.c.b16 %v5799, %v5799
  %v5848 = vpack.c.b16 %v5800, %v5800
  %v5849 = vpack.c.b16 %v5801, %v5801
  %v5850 = vpack.c.b16 %v5802, %v5802
  %v5851 = vpack.c.b16 %v5803, %v5803
  %v5852 = vpack.c.b16 %v5804, %v5804
  %v5853 = vpack.c.b16 %v5805, %v5805
  %v5854 = vpack.c.b16 %v5806, %v5806
  %v5855 = vpack.c.b16 %v5807, %v5807
  %v5856 = vpack.c.b16 %v5808, %v5808
  %v5890 = vsel %vm289, %v5562, 0
  %v5893 = vsel %vm2103, %v5841, 0
  %v5896 = vsel %vm2103, %v5842, 0
  %v5899 = vsel %vm2103, %v5843, 0
  %v5902 = vsel %vm2103, %v5844, 0
  %v5905 = vsel %vm2103, %v5845, 0
  %v5908 = vsel %vm2103, %v5846, 0
  %v5911 = vsel %vm2103, %v5847, 0
  %v5914 = vsel %vm2103, %v5848, 0
  %v5917 = vsel %vm2103, %v5849, 0
  %v5920 = vsel %vm2103, %v5850, 0
  %v5923 = vsel %vm2103, %v5851, 0
  %v5926 = vsel %vm2103, %v5852, 0
  %v5929 = vsel %vm2103, %v5853, 0
  %v5932 = vsel %vm2103, %v5854, 0
  %v5935 = vsel %vm2103, %v5855, 0
  %v5938 = vsel %vm2103, %v5856, 0
  %5940 = vmatprep.subr.bf16.mxu0 %v5810
  %5941 = vmatpush1.bf16.msra.mxu0 %v5809
  %5942 = vmatprep.subr.bf16.mxu0 %v5826
  %5943 = vmatpush1.bf16.msra.mxu0 %v5825
  %5944 = vmatprep.subr.bf16.mxu0 %v5896
  %5945 = vmatpush1.bf16.msra.mxu0 %v5893
  %5946 = vmatprep.subr.bf16.mxu0 0
  %5947 = vmatpush1.bf16.msra.mxu0 0
  %5948 = vmatprep.subr.bf16.mxu0 0
  %5949 = vmatpush1.bf16.msra.mxu0 0
  %5950 = vmatprep.subr.bf16.mxu0 0
  %5951 = vmatpush1.bf16.msra.mxu0 0
  %5952 = vmatprep.subr.bf16.mxu0 0
  %5953 = vmatpush1.bf16.msra.mxu0 0
  %5954 = vmatprep.subr.bf16.mxu0 0
  %5955 = vmatpush1.bf16.msra.mxu0 0
  %5956 = vmatprep.subr.bf16.mxu0 0
  %5957 = vmatpush1.bf16.msra.mxu0 0
  %5958 = vmatprep.subr.bf16.mxu0 0
  %5959 = vmatpush1.bf16.msra.mxu0 0
  %5960 = vmatprep.subr.bf16.mxu0 0
  %5961 = vmatpush1.bf16.msra.mxu0 0
  %5962 = vmatprep.subr.bf16.mxu0 0
  %5963 = vmatpush1.bf16.msra.mxu0 0
  %5964 = vmatprep.subr.bf16.mxu0 0
  %5965 = vmatpush1.bf16.msra.mxu0 0
  %5966 = vmatprep.subr.bf16.mxu0 0
  %5967 = vmatpush1.bf16.msra.mxu0 0
  %5968 = vmatprep.subr.bf16.mxu0 0
  %5969 = vmatpush1.bf16.msra.mxu0 0
  %5970 = vmatprep.subr.bf16.mxu0 0
  %5971 = vmatpush1.bf16.msra.mxu0 0
  %5972 = vmatprep.mubr.bf16.mxu0 0
  %5973 = vmatmul.mubr.bf16.gmra.mrb[0].mxu0 %v5890
  %v5974 = vpop.f32.mrb[0].mxu0
  %v5975 = vadd.f32 %v5612, %v5974
  %v5976 = vpop.f32.mrb[0].mxu0
  %v5977 = vadd.f32 %v5616, %v5976
  %v5978 = vpop.f32.mrb[0].mxu0
  %v5979 = vadd.f32 %v5612, %v5978
  %v5980 = vpop.f32.mrb[0].mxu0
  %v5981 = vadd.f32 %v5616, %v5980
  %5982 = vdwg.mxu0
  %5983 = vmatprep.subr.bf16.mxu0 %v5812
  %5984 = vmatpush1.bf16.msra.mxu0 %v5811
  %5985 = vmatprep.subr.bf16.mxu0 %v5828
  %5986 = vmatpush1.bf16.msra.mxu0 %v5827
  %5987 = vmatprep.subr.bf16.mxu0 %v5902
  %5988 = vmatpush1.bf16.msra.mxu0 %v5899
  %5989 = vmatprep.subr.bf16.mxu0 0
  %5990 = vmatpush1.bf16.msra.mxu0 0
  %5991 = vmatprep.subr.bf16.mxu0 0
  %5992 = vmatpush1.bf16.msra.mxu0 0
  %5993 = vmatprep.subr.bf16.mxu0 0
  %5994 = vmatpush1.bf16.msra.mxu0 0
  %5995 = vmatprep.subr.bf16.mxu0 0
  %5996 = vmatpush1.bf16.msra.mxu0 0
  %5997 = vmatprep.subr.bf16.mxu0 0
  %5998 = vmatpush1.bf16.msra.mxu0 0
  %5999 = vmatprep.subr.bf16.mxu0 0
  %6000 = vmatpush1.bf16.msra.mxu0 0
  %6001 = vmatprep.subr.bf16.mxu0 0
  %6002 = vmatpush1.bf16.msra.mxu0 0
  %6003 = vmatprep.subr.bf16.mxu0 0
  %6004 = vmatpush1.bf16.msra.mxu0 0
  %6005 = vmatprep.subr.bf16.mxu0 0
  %6006 = vmatpush1.bf16.msra.mxu0 0
  %6007 = vmatprep.subr.bf16.mxu0 0
  %6008 = vmatpush1.bf16.msra.mxu0 0
  %6009 = vmatprep.subr.bf16.mxu0 0
  %6010 = vmatpush1.bf16.msra.mxu0 0
  %6011 = vmatprep.subr.bf16.mxu0 0
  %6012 = vmatpush1.bf16.msra.mxu0 0
  %6013 = vmatprep.subr.bf16.mxu0 0
  %6014 = vmatpush1.bf16.msra.mxu0 0
  %6015 = vmatprep.mubr.bf16.mxu0 0
  %6016 = vmatmul.mubr.bf16.gmra.mrb[0].mxu0 %v5890
  %v6017 = vpop.f32.mrb[0].mxu0
  %v6018 = vadd.f32 %v5620, %v6017
  %v6019 = vpop.f32.mrb[0].mxu0
  %v6020 = vadd.f32 %v5624, %v6019
  %v6021 = vpop.f32.mrb[0].mxu0
  %v6022 = vadd.f32 %v5620, %v6021
  %v6023 = vpop.f32.mrb[0].mxu0
  %v6024 = vadd.f32 %v5624, %v6023
  %6025 = vdwg.mxu0
  %6026 = vmatprep.subr.bf16.mxu0 %v5814
  %6027 = vmatpush1.bf16.msra.mxu0 %v5813
  %6028 = vmatprep.subr.bf16.mxu0 %v5830
  %6029 = vmatpush1.bf16.msra.mxu0 %v5829
  %6030 = vmatprep.subr.bf16.mxu0 %v5908
  %6031 = vmatpush1.bf16.msra.mxu0 %v5905
  %6032 = vmatprep.subr.bf16.mxu0 0
  %6033 = vmatpush1.bf16.msra.mxu0 0
  %6034 = vmatprep.subr.bf16.mxu0 0
  %6035 = vmatpush1.bf16.msra.mxu0 0
  %6036 = vmatprep.subr.bf16.mxu0 0
  %6037 = vmatpush1.bf16.msra.mxu0 0
  %6038 = vmatprep.subr.bf16.mxu0 0
  %6039 = vmatpush1.bf16.msra.mxu0 0
  %6040 = vmatprep.subr.bf16.mxu0 0
  %6041 = vmatpush1.bf16.msra.mxu0 0
  %6042 = vmatprep.subr.bf16.mxu0 0
  %6043 = vmatpush1.bf16.msra.mxu0 0
  %6044 = vmatprep.subr.bf16.mxu0 0
  %6045 = vmatpush1.bf16.msra.mxu0 0
  %6046 = vmatprep.subr.bf16.mxu0 0
  %6047 = vmatpush1.bf16.msra.mxu0 0
  %6048 = vmatprep.subr.bf16.mxu0 0
  %6049 = vmatpush1.bf16.msra.mxu0 0
  %6050 = vmatprep.subr.bf16.mxu0 0
  %6051 = vmatpush1.bf16.msra.mxu0 0
  %6052 = vmatprep.subr.bf16.mxu0 0
  %6053 = vmatpush1.bf16.msra.mxu0 0
  %6054 = vmatprep.subr.bf16.mxu0 0
  %6055 = vmatpush1.bf16.msra.mxu0 0
  %6056 = vmatprep.subr.bf16.mxu0 0
  %6057 = vmatpush1.bf16.msra.mxu0 0
  %6058 = vmatprep.mubr.bf16.mxu0 0
  %6059 = vmatmul.mubr.bf16.gmra.mrb[0].mxu0 %v5890
  %v6060 = vpop.f32.mrb[0].mxu0
  %v6061 = vadd.f32 %v5628, %v6060
  %v6062 = vpop.f32.mrb[0].mxu0
  %v6063 = vadd.f32 %v5632, %v6062
  %v6064 = vpop.f32.mrb[0].mxu0
  %v6065 = vadd.f32 %v5628, %v6064
  %v6066 = vpop.f32.mrb[0].mxu0
  %v6067 = vadd.f32 %v5632, %v6066
  %6068 = vdwg.mxu0
  %6069 = vmatprep.subr.bf16.mxu0 %v5816
  %6070 = vmatpush1.bf16.msra.mxu0 %v5815
  %6071 = vmatprep.subr.bf16.mxu0 %v5832
  %6072 = vmatpush1.bf16.msra.mxu0 %v5831
  %6073 = vmatprep.subr.bf16.mxu0 %v5914
  %6074 = vmatpush1.bf16.msra.mxu0 %v5911
  %6075 = vmatprep.subr.bf16.mxu0 0
  %6076 = vmatpush1.bf16.msra.mxu0 0
  %6077 = vmatprep.subr.bf16.mxu0 0
  %6078 = vmatpush1.bf16.msra.mxu0 0
  %6079 = vmatprep.subr.bf16.mxu0 0
  %6080 = vmatpush1.bf16.msra.mxu0 0
  %6081 = vmatprep.subr.bf16.mxu0 0
  %6082 = vmatpush1.bf16.msra.mxu0 0
  %6083 = vmatprep.subr.bf16.mxu0 0
  %6084 = vmatpush1.bf16.msra.mxu0 0
  %6085 = vmatprep.subr.bf16.mxu0 0
  %6086 = vmatpush1.bf16.msra.mxu0 0
  %6087 = vmatprep.subr.bf16.mxu0 0
  %6088 = vmatpush1.bf16.msra.mxu0 0
  %6089 = vmatprep.subr.bf16.mxu0 0
  %6090 = vmatpush1.bf16.msra.mxu0 0
  %6091 = vmatprep.subr.bf16.mxu0 0
  %6092 = vmatpush1.bf16.msra.mxu0 0
  %6093 = vmatprep.subr.bf16.mxu0 0
  %6094 = vmatpush1.bf16.msra.mxu0 0
  %6095 = vmatprep.subr.bf16.mxu0 0
  %6096 = vmatpush1.bf16.msra.mxu0 0
  %6097 = vmatprep.subr.bf16.mxu0 0
  %6098 = vmatpush1.bf16.msra.mxu0 0
  %6099 = vmatprep.subr.bf16.mxu0 0
  %6100 = vmatpush1.bf16.msra.mxu0 0
  %6101 = vmatprep.mubr.bf16.mxu0 0
  %6102 = vmatmul.mubr.bf16.gmra.mrb[0].mxu0 %v5890
  %v6103 = vpop.f32.mrb[0].mxu0
  %v6104 = vadd.f32 %v5636, %v6103
  %v6105 = vpop.f32.mrb[0].mxu0
  %v6106 = vadd.f32 %v5640, %v6105
  %v6107 = vpop.f32.mrb[0].mxu0
  %v6108 = vadd.f32 %v5636, %v6107
  %v6109 = vpop.f32.mrb[0].mxu0
  %v6110 = vadd.f32 %v5640, %v6109
  %6111 = vdwg.mxu0
  %6112 = vmatprep.subr.bf16.mxu0 %v5818
  %6113 = vmatpush1.bf16.msra.mxu0 %v5817
  %6114 = vmatprep.subr.bf16.mxu0 %v5834
  %6115 = vmatpush1.bf16.msra.mxu0 %v5833
  %6116 = vmatprep.subr.bf16.mxu0 %v5920
  %6117 = vmatpush1.bf16.msra.mxu0 %v5917
  %6118 = vmatprep.subr.bf16.mxu0 0
  %6119 = vmatpush1.bf16.msra.mxu0 0
  %6120 = vmatprep.subr.bf16.mxu0 0
  %6121 = vmatpush1.bf16.msra.mxu0 0
  %6122 = vmatprep.subr.bf16.mxu0 0
  %6123 = vmatpush1.bf16.msra.mxu0 0
  %6124 = vmatprep.subr.bf16.mxu0 0
  %6125 = vmatpush1.bf16.msra.mxu0 0
  %6126 = vmatprep.subr.bf16.mxu0 0
  %6127 = vmatpush1.bf16.msra.mxu0 0
  %6128 = vmatprep.subr.bf16.mxu0 0
  %6129 = vmatpush1.bf16.msra.mxu0 0
  %6130 = vmatprep.subr.bf16.mxu0 0
  %6131 = vmatpush1.bf16.msra.mxu0 0
  %6132 = vmatprep.subr.bf16.mxu0 0
  %6133 = vmatpush1.bf16.msra.mxu0 0
  %6134 = vmatprep.subr.bf16.mxu0 0
  %6135 = vmatpush1.bf16.msra.mxu0 0
  %6136 = vmatprep.subr.bf16.mxu0 0
  %6137 = vmatpush1.bf16.msra.mxu0 0
  %6138 = vmatprep.subr.bf16.mxu0 0
  %6139 = vmatpush1.bf16.msra.mxu0 0
  %6140 = vmatprep.subr.bf16.mxu0 0
  %6141 = vmatpush1.bf16.msra.mxu0 0
  %6142 = vmatprep.subr.bf16.mxu0 0
  %6143 = vmatpush1.bf16.msra.mxu0 0
  %6144 = vmatprep.mubr.bf16.mxu0 0
  %6145 = vmatmul.mubr.bf16.gmra.mrb[0].mxu0 %v5890
  %v6146 = vpop.f32.mrb[0].mxu0
  %v6147 = vadd.f32 %v5644, %v6146
  %v6148 = vpop.f32.mrb[0].mxu0
  %v6149 = vadd.f32 %v5648, %v6148
  %v6150 = vpop.f32.mrb[0].mxu0
  %v6151 = vadd.f32 %v5644, %v6150
  %v6152 = vpop.f32.mrb[0].mxu0
  %v6153 = vadd.f32 %v5648, %v6152
  %6154 = vdwg.mxu0
  %6155 = vmatprep.subr.bf16.mxu0 %v5820
  %6156 = vmatpush1.bf16.msra.mxu0 %v5819
  %6157 = vmatprep.subr.bf16.mxu0 %v5836
  %6158 = vmatpush1.bf16.msra.mxu0 %v5835
  %6159 = vmatprep.subr.bf16.mxu0 %v5926
  %6160 = vmatpush1.bf16.msra.mxu0 %v5923
  %6161 = vmatprep.subr.bf16.mxu0 0
  %6162 = vmatpush1.bf16.msra.mxu0 0
  %6163 = vmatprep.subr.bf16.mxu0 0
  %6164 = vmatpush1.bf16.msra.mxu0 0
  %6165 = vmatprep.subr.bf16.mxu0 0
  %6166 = vmatpush1.bf16.msra.mxu0 0
  %6167 = vmatprep.subr.bf16.mxu0 0
  %6168 = vmatpush1.bf16.msra.mxu0 0
  %6169 = vmatprep.subr.bf16.mxu0 0
  %6170 = vmatpush1.bf16.msra.mxu0 0
  %6171 = vmatprep.subr.bf16.mxu0 0
  %6172 = vmatpush1.bf16.msra.mxu0 0
  %6173 = vmatprep.subr.bf16.mxu0 0
  %6174 = vmatpush1.bf16.msra.mxu0 0
  %6175 = vmatprep.subr.bf16.mxu0 0
  %6176 = vmatpush1.bf16.msra.mxu0 0
  %6177 = vmatprep.subr.bf16.mxu0 0
  %6178 = vmatpush1.bf16.msra.mxu0 0
  %6179 = vmatprep.subr.bf16.mxu0 0
  %6180 = vmatpush1.bf16.msra.mxu0 0
  %6181 = vmatprep.subr.bf16.mxu0 0
  %6182 = vmatpush1.bf16.msra.mxu0 0
  %6183 = vmatprep.subr.bf16.mxu0 0
  %6184 = vmatpush1.bf16.msra.mxu0 0
  %6185 = vmatprep.subr.bf16.mxu0 0
  %6186 = vmatpush1.bf16.msra.mxu0 0
  %6187 = vmatprep.mubr.bf16.mxu0 0
  %6188 = vmatmul.mubr.bf16.gmra.mrb[0].mxu0 %v5890
  %v6189 = vpop.f32.mrb[0].mxu0
  %v6190 = vadd.f32 %v5652, %v6189
  %v6191 = vpop.f32.mrb[0].mxu0
  %v6192 = vadd.f32 %v5656, %v6191
  %v6193 = vpop.f32.mrb[0].mxu0
  %v6194 = vadd.f32 %v5652, %v6193
  %v6195 = vpop.f32.mrb[0].mxu0
  %v6196 = vadd.f32 %v5656, %v6195
  %6197 = vdwg.mxu0
  %6198 = vmatprep.subr.bf16.mxu0 %v5822
  %6199 = vmatpush1.bf16.msra.mxu0 %v5821
  %6200 = vmatprep.subr.bf16.mxu0 %v5838
  %6201 = vmatpush1.bf16.msra.mxu0 %v5837
  %6202 = vmatprep.subr.bf16.mxu0 %v5932
  %6203 = vmatpush1.bf16.msra.mxu0 %v5929
  %6204 = vmatprep.subr.bf16.mxu0 0
  %6205 = vmatpush1.bf16.msra.mxu0 0
  %6206 = vmatprep.subr.bf16.mxu0 0
  %6207 = vmatpush1.bf16.msra.mxu0 0
  %6208 = vmatprep.subr.bf16.mxu0 0
  %6209 = vmatpush1.bf16.msra.mxu0 0
  %6210 = vmatprep.subr.bf16.mxu0 0
  %6211 = vmatpush1.bf16.msra.mxu0 0
  %6212 = vmatprep.subr.bf16.mxu0 0
  %6213 = vmatpush1.bf16.msra.mxu0 0
  %6214 = vmatprep.subr.bf16.mxu0 0
  %6215 = vmatpush1.bf16.msra.mxu0 0
  %6216 = vmatprep.subr.bf16.mxu0 0
  %6217 = vmatpush1.bf16.msra.mxu0 0
  %6218 = vmatprep.subr.bf16.mxu0 0
  %6219 = vmatpush1.bf16.msra.mxu0 0
  %6220 = vmatprep.subr.bf16.mxu0 0
  %6221 = vmatpush1.bf16.msra.mxu0 0
  %6222 = vmatprep.subr.bf16.mxu0 0
  %6223 = vmatpush1.bf16.msra.mxu0 0
  %6224 = vmatprep.subr.bf16.mxu0 0
  %6225 = vmatpush1.bf16.msra.mxu0 0
  %6226 = vmatprep.subr.bf16.mxu0 0
  %6227 = vmatpush1.bf16.msra.mxu0 0
  %6228 = vmatprep.subr.bf16.mxu0 0
  %6229 = vmatpush1.bf16.msra.mxu0 0
  %6230 = vmatprep.mubr.bf16.mxu0 0
  %6231 = vmatmul.mubr.bf16.gmra.mrb[0].mxu0 %v5890
  %v6232 = vpop.f32.mrb[0].mxu0
  %v6233 = vadd.f32 %v5660, %v6232
  %v6234 = vpop.f32.mrb[0].mxu0
  %v6235 = vadd.f32 %v5664, %v6234
  %v6236 = vpop.f32.mrb[0].mxu0
  %v6237 = vadd.f32 %v5660, %v6236
  %v6238 = vpop.f32.mrb[0].mxu0
  %v6239 = vadd.f32 %v5664, %v6238
  %6240 = vdwg.mxu0
  %6241 = vmatprep.subr.bf16.mxu0 %v5824
  %6242 = vmatpush1.bf16.msra.mxu0 %v5823
  %6243 = vmatprep.subr.bf16.mxu0 %v5840
  %6244 = vmatpush1.bf16.msra.mxu0 %v5839
  %6245 = vmatprep.subr.bf16.mxu0 %v5938
  %6246 = vmatpush1.bf16.msra.mxu0 %v5935
  %6247 = vmatprep.subr.bf16.mxu0 0
  %6248 = vmatpush1.bf16.msra.mxu0 0
  %6249 = vmatprep.subr.bf16.mxu0 0
  %6250 = vmatpush1.bf16.msra.mxu0 0
  %6251 = vmatprep.subr.bf16.mxu0 0
  %6252 = vmatpush1.bf16.msra.mxu0 0
  %6253 = vmatprep.subr.bf16.mxu0 0
  %6254 = vmatpush1.bf16.msra.mxu0 0
  %6255 = vmatprep.subr.bf16.mxu0 0
  %6256 = vmatpush1.bf16.msra.mxu0 0
  %6257 = vmatprep.subr.bf16.mxu0 0
  %6258 = vmatpush1.bf16.msra.mxu0 0
  %6259 = vmatprep.subr.bf16.mxu0 0
  %6260 = vmatpush1.bf16.msra.mxu0 0
  %6261 = vmatprep.subr.bf16.mxu0 0
  %6262 = vmatpush1.bf16.msra.mxu0 0
  %6263 = vmatprep.subr.bf16.mxu0 0
  %6264 = vmatpush1.bf16.msra.mxu0 0
  %6265 = vmatprep.subr.bf16.mxu0 0
  %6266 = vmatpush1.bf16.msra.mxu0 0
  %6267 = vmatprep.subr.bf16.mxu0 0
  %6268 = vmatpush1.bf16.msra.mxu0 0
  %6269 = vmatprep.subr.bf16.mxu0 0
  %6270 = vmatpush1.bf16.msra.mxu0 0
  %6271 = vmatprep.subr.bf16.mxu0 0
  %6272 = vmatpush1.bf16.msra.mxu0 0
  %6273 = vmatprep.mubr.bf16.mxu0 0
  %6274 = vmatmul.mubr.bf16.gmra.mrb[0].mxu0 %v5890
  %v6275 = vpop.f32.mrb[0].mxu0
  %v6276 = vadd.f32 %v5668, %v6275
  %v6277 = vpop.f32.mrb[0].mxu0
  %v6278 = vadd.f32 %v5672, %v6277
  %v6279 = vpop.f32.mrb[0].mxu0
  %v6280 = vadd.f32 %v5668, %v6279
  %v6281 = vpop.f32.mrb[0].mxu0
  %v6282 = vadd.f32 %v5672, %v6281
  %6283 = vdwg.mxu0
  %v6284 = vmax.f32 %v5975, 0.0
  %v6285 = vmax.f32 %v5977, 0.0
  %v6286 = vmax.f32 %v6018, 0.0
  %v6287 = vmax.f32 %v6020, 0.0
  %v6288 = vmax.f32 %v6061, 0.0
  %v6289 = vmax.f32 %v6063, 0.0
  %v6290 = vmax.f32 %v6104, 0.0
  %v6291 = vmax.f32 %v6106, 0.0
  %v6292 = vmax.f32 %v6147, 0.0
  %v6293 = vmax.f32 %v6149, 0.0
  %v6294 = vmax.f32 %v6190, 0.0
  %v6295 = vmax.f32 %v6192, 0.0
  %v6296 = vmax.f32 %v6233, 0.0
  %v6297 = vmax.f32 %v6235, 0.0
  %v6298 = vmax.f32 %v6276, 0.0
  %v6299 = vmax.f32 %v6278, 0.0
  %v6300 = vmax.f32 %v5979, 0.0
  %v6301 = vmax.f32 %v5981, 0.0
  %v6302 = vmax.f32 %v6022, 0.0
  %v6303 = vmax.f32 %v6024, 0.0
  %v6304 = vmax.f32 %v6065, 0.0
  %v6305 = vmax.f32 %v6067, 0.0
  %v6306 = vmax.f32 %v6108, 0.0
  %v6307 = vmax.f32 %v6110, 0.0
  %v6308 = vmax.f32 %v6151, 0.0
  %v6309 = vmax.f32 %v6153, 0.0
  %v6310 = vmax.f32 %v6194, 0.0
  %v6311 = vmax.f32 %v6196, 0.0
  %v6312 = vmax.f32 %v6237, 0.0
  %v6313 = vmax.f32 %v6239, 0.0
  %v6314 = vmax.f32 %v6280, 0.0
  %v6315 = vmax.f32 %v6282, 0.0
  %v6316 = vpack.c.bf16 %v6300, %v6284
  %v6317 = vpack.c.bf16 %v6301, %v6285
  %v6318 = vpack.c.bf16 %v6302, %v6286
  %v6319 = vpack.c.bf16 %v6303, %v6287
  %v6320 = vpack.c.bf16 %v6304, %v6288
  %v6321 = vpack.c.bf16 %v6305, %v6289
  %v6322 = vpack.c.bf16 %v6306, %v6290
  %v6323 = vpack.c.bf16 %v6307, %v6291
  %v6324 = vpack.c.bf16 %v6308, %v6292
  %v6325 = vpack.c.bf16 %v6309, %v6293
  %v6326 = vpack.c.bf16 %v6310, %v6294
  %v6327 = vpack.c.bf16 %v6311, %v6295
  %v6328 = vpack.c.bf16 %v6312, %v6296
  %v6329 = vpack.c.bf16 %v6313, %v6297
  %v6330 = vpack.c.bf16 %v6314, %v6298
  %v6331 = vpack.c.bf16 %v6315, %v6299
  %s6332 = scalar_lea.vmem %s13, 1024
  %v6333 = vld [vmem:[%s6332] sm:$0xf]
  %v6334 = vld [vmem:[%s6332 + $0x4] sm:$0xf]
  %v6335 = vld [vmem:[%s6332 + $0x8] sm:$0xf]
  %v6336 = vld [vmem:[%s6332 + $0xc] sm:$0xf]
  %v6337 = vld [vmem:[%s6332 + $0x10] sm:$0xf]
  %v6338 = vld [vmem:[%s6332 + $0x14] sm:$0xf]
  %v6339 = vld [vmem:[%s6332 + $0x18] sm:$0xf]
  %v6340 = vld [vmem:[%s6332 + $0x1c] sm:$0xf]
  %v6341 = vld [vmem:[%s6332 + $0x20] sm:$0xf]
  %v6342 = vld [vmem:[%s6332 + $0x24] sm:$0xf]
  %v6343 = vld [vmem:[%s6332 + $0x28] sm:$0xf]
  %v6344 = vld [vmem:[%s6332 + $0x2c] sm:$0xf]
  %v6345 = vld [vmem:[%s6332 + $0x30] sm:$0xf]
  %v6346 = vld [vmem:[%s6332 + $0x34] sm:$0xf]
  %v6347 = vld [vmem:[%s6332 + $0x38] sm:$0xf]
  %v6348 = vld [vmem:[%s6332 + $0x3c] sm:$0xf]
  %v6349 = vld [vmem:[%s6332 + $0x40] sm:$0xf]
  %v6350 = vld [vmem:[%s6332 + $0x44] sm:$0xf]
  %v6351 = vld [vmem:[%s6332 + $0x48] sm:$0xf]
  %v6352 = vld [vmem:[%s6332 + $0x4c] sm:$0xf]
  %v6353 = vld [vmem:[%s6332 + $0x50] sm:$0xf]
  %v6354 = vld [vmem:[%s6332 + $0x54] sm:$0xf]
  %v6355 = vld [vmem:[%s6332 + $0x58] sm:$0xf]
  %v6356 = vld [vmem:[%s6332 + $0x5c] sm:$0xf]
  %v6357 = vld [vmem:[%s6332 + $0x60] sm:$0xf]
  %v6358 = vld [vmem:[%s6332 + $0x64] sm:$0xf]
  %v6359 = vld [vmem:[%s6332 + $0x68] sm:$0xf]
  %v6360 = vld [vmem:[%s6332 + $0x6c] sm:$0xf]
  %v6361 = vld [vmem:[%s6332 + $0x70] sm:$0xf]
  %v6362 = vld [vmem:[%s6332 + $0x74] sm:$0xf]
  %v6363 = vld [vmem:[%s6332 + $0x78] sm:$0xf]
  %v6364 = vld [vmem:[%s6332 + $0x7c] sm:$0xf]
  %v6365 = vld [vmem:[%s6332 + $0x80] sm:$0xf]
  %v6366 = vld [vmem:[%s6332 + $0x84] sm:$0xf]
  %v6367 = vld [vmem:[%s6332 + $0x88] sm:$0xf]
  %v6368 = vld [vmem:[%s6332 + $0x8c] sm:$0xf]
  %v6369 = vld [vmem:[%s6332 + $0x90] sm:$0xf]
  %v6370 = vld [vmem:[%s6332 + $0x94] sm:$0xf]
  %v6371 = vld [vmem:[%s6332 + $0x98] sm:$0xf]
  %v6372 = vld [vmem:[%s6332 + $0x9c] sm:$0xf]
  %v6373 = vld [vmem:[%s6332 + $0xa0] sm:$0xf]
  %v6374 = vld [vmem:[%s6332 + $0xa4] sm:$0xf]
  %v6375 = vld [vmem:[%s6332 + $0xa8] sm:$0xf]
  %v6376 = vld [vmem:[%s6332 + $0xac] sm:$0xf]
  %v6377 = vld [vmem:[%s6332 + $0xb0] sm:$0xf]
  %v6378 = vld [vmem:[%s6332 + $0xb4] sm:$0xf]
  %v6379 = vld [vmem:[%s6332 + $0xb8] sm:$0xf]
  %v6380 = vld [vmem:[%s6332 + $0xbc] sm:$0xf]
  %v6381 = vld [vmem:[%s6332 + $0xc0] sm:$0xf]
  %v6382 = vld [vmem:[%s6332 + $0xc4] sm:$0xf]
  %v6383 = vld [vmem:[%s6332 + $0xc8] sm:$0xf]
  %v6384 = vld [vmem:[%s6332 + $0xcc] sm:$0xf]
  %v6385 = vld [vmem:[%s6332 + $0xd0] sm:$0xf]
  %v6386 = vld [vmem:[%s6332 + $0xd4] sm:$0xf]
  %v6387 = vld [vmem:[%s6332 + $0xd8] sm:$0xf]
  %v6388 = vld [vmem:[%s6332 + $0xdc] sm:$0xf]
  %v6389 = vld [vmem:[%s6332 + $0xe0] sm:$0xf]
  %v6390 = vld [vmem:[%s6332 + $0xe4] sm:$0xf]
  %v6391 = vld [vmem:[%s6332 + $0xe8] sm:$0xf]
  %v6392 = vld [vmem:[%s6332 + $0xec] sm:$0xf]
  %v6393 = vld [vmem:[%s6332 + $0xf0] sm:$0xf]
  %v6394 = vld [vmem:[%s6332 + $0xf4] sm:$0xf]
  %v6395 = vld [vmem:[%s6332 + $0xf8] sm:$0xf]
  %v6396 = vld [vmem:[%s6332 + $0xfc] sm:$0xf]
  %v6397 = vld [vmem:[%s6332 + $0x100] sm:$0xf]
  %v6398 = vld [vmem:[%s6332 + $0x104] sm:$0xf]
  %v6399 = vld [vmem:[%s6332 + $0x108] sm:$0xf]
  %v6400 = vld [vmem:[%s6332 + $0x10c] sm:$0xf]
  %v6401 = vld [vmem:[%s6332 + $0x110] sm:$0xf]
  %v6402 = vld [vmem:[%s6332 + $0x114] sm:$0xf]
  %v6403 = vld [vmem:[%s6332 + $0x118] sm:$0xf]
  %v6404 = vld [vmem:[%s6332 + $0x11c] sm:$0xf]
  %v6405 = vld [vmem:[%s6332 + $0x120] sm:$0xf]
  %v6406 = vld [vmem:[%s6332 + $0x124] sm:$0xf]
  %v6407 = vld [vmem:[%s6332 + $0x128] sm:$0xf]
  %v6408 = vld [vmem:[%s6332 + $0x12c] sm:$0xf]
  %v6409 = vld [vmem:[%s6332 + $0x130] sm:$0xf]
  %v6410 = vld [vmem:[%s6332 + $0x134] sm:$0xf]
  %v6411 = vld [vmem:[%s6332 + $0x138] sm:$0xf]
  %v6412 = vld [vmem:[%s6332 + $0x13c] sm:$0xf]
  %v6413 = vld [vmem:[%s6332 + $0x140] sm:$0xf]
  %v6414 = vld [vmem:[%s6332 + $0x144] sm:$0xf]
  %v6415 = vld [vmem:[%s6332 + $0x148] sm:$0xf]
  %v6416 = vld [vmem:[%s6332 + $0x14c] sm:$0xf]
  %v6417 = vld [vmem:[%s6332 + $0x150] sm:$0xf]
  %v6418 = vld [vmem:[%s6332 + $0x154] sm:$0xf]
  %v6419 = vld [vmem:[%s6332 + $0x158] sm:$0xf]
  %v6420 = vld [vmem:[%s6332 + $0x15c] sm:$0xf]
  %v6421 = vld [vmem:[%s6332 + $0x160] sm:$0xf]
  %v6422 = vld [vmem:[%s6332 + $0x164] sm:$0xf]
  %v6423 = vld [vmem:[%s6332 + $0x168] sm:$0xf]
  %v6424 = vld [vmem:[%s6332 + $0x16c] sm:$0xf]
  %v6425 = vld [vmem:[%s6332 + $0x170] sm:$0xf]
  %v6426 = vld [vmem:[%s6332 + $0x174] sm:$0xf]
  %v6427 = vld [vmem:[%s6332 + $0x178] sm:$0xf]
  %v6428 = vld [vmem:[%s6332 + $0x17c] sm:$0xf]
  %v6429 = vld [vmem:[%s6332 + $0x180] sm:$0xf]
  %v6430 = vld [vmem:[%s6332 + $0x184] sm:$0xf]
  %v6431 = vld [vmem:[%s6332 + $0x188] sm:$0xf]
  %v6432 = vld [vmem:[%s6332 + $0x18c] sm:$0xf]
  %v6433 = vld [vmem:[%s6332 + $0x190] sm:$0xf]
  %v6434 = vld [vmem:[%s6332 + $0x194] sm:$0xf]
  %v6435 = vld [vmem:[%s6332 + $0x198] sm:$0xf]
  %v6436 = vld [vmem:[%s6332 + $0x19c] sm:$0xf]
  %v6437 = vld [vmem:[%s6332 + $0x1a0] sm:$0xf]
  %v6438 = vld [vmem:[%s6332 + $0x1a4] sm:$0xf]
  %v6439 = vld [vmem:[%s6332 + $0x1a8] sm:$0xf]
  %v6440 = vld [vmem:[%s6332 + $0x1ac] sm:$0xf]
  %v6441 = vld [vmem:[%s6332 + $0x1b0] sm:$0xf]
  %v6442 = vld [vmem:[%s6332 + $0x1b4] sm:$0xf]
  %v6443 = vld [vmem:[%s6332 + $0x1b8] sm:$0xf]
  %v6444 = vld [vmem:[%s6332 + $0x1bc] sm:$0xf]
  %v6445 = vld [vmem:[%s6332 + $0x1c0] sm:$0xf]
  %v6446 = vld [vmem:[%s6332 + $0x1c4] sm:$0xf]
  %v6447 = vld [vmem:[%s6332 + $0x1c8] sm:$0xf]
  %v6448 = vld [vmem:[%s6332 + $0x1cc] sm:$0xf]
  %v6449 = vld [vmem:[%s6332 + $0x1d0] sm:$0xf]
  %v6450 = vld [vmem:[%s6332 + $0x1d4] sm:$0xf]
  %v6451 = vld [vmem:[%s6332 + $0x1d8] sm:$0xf]
  %v6452 = vld [vmem:[%s6332 + $0x1dc] sm:$0xf]
  %v6453 = vld [vmem:[%s6332 + $0x1e0] sm:$0xf]
  %v6454 = vld [vmem:[%s6332 + $0x1e4] sm:$0xf]
  %v6455 = vld [vmem:[%s6332 + $0x1e8] sm:$0xf]
  %v6456 = vld [vmem:[%s6332 + $0x1ec] sm:$0xf]
  %v6457 = vld [vmem:[%s6332 + $0x1f0] sm:$0xf]
  %v6458 = vld [vmem:[%s6332 + $0x1f4] sm:$0xf]
  %v6459 = vld [vmem:[%s6332 + $0x1f8] sm:$0xf]
  %v6460 = vld [vmem:[%s6332 + $0x1fc] sm:$0xf]
  %v6461 = vld [vmem:[%s6332 + $0x200] sm:$0xf]
  %v6462 = vld [vmem:[%s6332 + $0x204] sm:$0xf]
  %v6463 = vld [vmem:[%s6332 + $0x208] sm:$0xf]
  %v6464 = vld [vmem:[%s6332 + $0x20c] sm:$0xf]
  %v6465 = vld [vmem:[%s6332 + $0x210] sm:$0xf]
  %v6466 = vld [vmem:[%s6332 + $0x214] sm:$0xf]
  %v6467 = vld [vmem:[%s6332 + $0x218] sm:$0xf]
  %v6468 = vld [vmem:[%s6332 + $0x21c] sm:$0xf]
  %v6469 = vld [vmem:[%s6332 + $0x220] sm:$0xf]
  %v6470 = vld [vmem:[%s6332 + $0x224] sm:$0xf]
  %v6471 = vld [vmem:[%s6332 + $0x228] sm:$0xf]
  %v6472 = vld [vmem:[%s6332 + $0x22c] sm:$0xf]
  %v6473 = vld [vmem:[%s6332 + $0x230] sm:$0xf]
  %v6474 = vld [vmem:[%s6332 + $0x234] sm:$0xf]
  %v6475 = vld [vmem:[%s6332 + $0x238] sm:$0xf]
  %v6476 = vld [vmem:[%s6332 + $0x23c] sm:$0xf]
  %v6477 = vld [vmem:[%s6332 + $0x240] sm:$0xf]
  %v6478 = vld [vmem:[%s6332 + $0x244] sm:$0xf]
  %v6479 = vld [vmem:[%s6332 + $0x248] sm:$0xf]
  %v6480 = vld [vmem:[%s6332 + $0x24c] sm:$0xf]
  %v6481 = vld [vmem:[%s6332 + $0x250] sm:$0xf]
  %v6482 = vld [vmem:[%s6332 + $0x254] sm:$0xf]
  %v6483 = vld [vmem:[%s6332 + $0x258] sm:$0xf]
  %v6484 = vld [vmem:[%s6332 + $0x25c] sm:$0xf]
  %v6485 = vld [vmem:[%s6332 + $0x260] sm:$0xf]
  %v6486 = vld [vmem:[%s6332 + $0x264] sm:$0xf]
  %v6487 = vld [vmem:[%s6332 + $0x268] sm:$0xf]
  %v6488 = vld [vmem:[%s6332 + $0x26c] sm:$0xf]
  %v6489 = vld [vmem:[%s6332 + $0x270] sm:$0xf]
  %v6490 = vld [vmem:[%s6332 + $0x274] sm:$0xf]
  %v6491 = vld [vmem:[%s6332 + $0x278] sm:$0xf]
  %v6492 = vld [vmem:[%s6332 + $0x27c] sm:$0xf]
  %v6493 = vld [vmem:[%s6332 + $0x280] sm:$0xf]
  %v6494 = vld [vmem:[%s6332 + $0x284] sm:$0xf]
  %v6495 = vld [vmem:[%s6332 + $0x288] sm:$0xf]
  %v6496 = vld [vmem:[%s6332 + $0x28c] sm:$0xf]
  %v6497 = vld [vmem:[%s6332 + $0x290] sm:$0xf]
  %v6498 = vld [vmem:[%s6332 + $0x294] sm:$0xf]
  %v6499 = vld [vmem:[%s6332 + $0x298] sm:$0xf]
  %v6500 = vld [vmem:[%s6332 + $0x29c] sm:$0xf]
  %v6501 = vld [vmem:[%s6332 + $0x2a0] sm:$0xf]
  %v6502 = vld [vmem:[%s6332 + $0x2a4] sm:$0xf]
  %v6503 = vld [vmem:[%s6332 + $0x2a8] sm:$0xf]
  %v6504 = vld [vmem:[%s6332 + $0x2ac] sm:$0xf]
  %v6505 = vld [vmem:[%s6332 + $0x2b0] sm:$0xf]
  %v6506 = vld [vmem:[%s6332 + $0x2b4] sm:$0xf]
  %v6507 = vld [vmem:[%s6332 + $0x2b8] sm:$0xf]
  %v6508 = vld [vmem:[%s6332 + $0x2bc] sm:$0xf]
  %v6509 = vld [vmem:[%s6332 + $0x2c0] sm:$0xf]
  %v6510 = vld [vmem:[%s6332 + $0x2c4] sm:$0xf]
  %v6511 = vld [vmem:[%s6332 + $0x2c8] sm:$0xf]
  %v6512 = vld [vmem:[%s6332 + $0x2cc] sm:$0xf]
  %v6513 = vld [vmem:[%s6332 + $0x2d0] sm:$0xf]
  %v6514 = vld [vmem:[%s6332 + $0x2d4] sm:$0xf]
  %v6515 = vld [vmem:[%s6332 + $0x2d8] sm:$0xf]
  %v6516 = vld [vmem:[%s6332 + $0x2dc] sm:$0xf]
  %v6517 = vld [vmem:[%s6332 + $0x2e0] sm:$0xf]
  %v6518 = vld [vmem:[%s6332 + $0x2e4] sm:$0xf]
  %v6519 = vld [vmem:[%s6332 + $0x2e8] sm:$0xf]
  %v6520 = vld [vmem:[%s6332 + $0x2ec] sm:$0xf]
  %v6521 = vld [vmem:[%s6332 + $0x2f0] sm:$0xf]
  %v6522 = vld [vmem:[%s6332 + $0x2f4] sm:$0xf]
  %v6523 = vld [vmem:[%s6332 + $0x2f8] sm:$0xf]
  %v6524 = vld [vmem:[%s6332 + $0x2fc] sm:$0xf]
  %v6525 = vld [vmem:[%s6332 + $0x300] sm:$0xf]
  %v6526 = vld [vmem:[%s6332 + $0x304] sm:$0xf]
  %v6527 = vld [vmem:[%s6332 + $0x308] sm:$0xf]
  %v6528 = vld [vmem:[%s6332 + $0x30c] sm:$0xf]
  %v6529 = vld [vmem:[%s6332 + $0x310] sm:$0xf]
  %v6530 = vld [vmem:[%s6332 + $0x314] sm:$0xf]
  %v6531 = vld [vmem:[%s6332 + $0x318] sm:$0xf]
  %v6532 = vld [vmem:[%s6332 + $0x31c] sm:$0xf]
  %v6533 = vld [vmem:[%s6332 + $0x320] sm:$0xf]
  %v6534 = vld [vmem:[%s6332 + $0x324] sm:$0xf]
  %v6535 = vld [vmem:[%s6332 + $0x328] sm:$0xf]
  %v6536 = vld [vmem:[%s6332 + $0x32c] sm:$0xf]
  %v6537 = vld [vmem:[%s6332 + $0x330] sm:$0xf]
  %v6538 = vld [vmem:[%s6332 + $0x334] sm:$0xf]
  %v6539 = vld [vmem:[%s6332 + $0x338] sm:$0xf]
  %v6540 = vld [vmem:[%s6332 + $0x33c] sm:$0xf]
  %v6541 = vld [vmem:[%s6332 + $0x340] sm:$0xf]
  %v6542 = vld [vmem:[%s6332 + $0x344] sm:$0xf]
  %v6543 = vld [vmem:[%s6332 + $0x348] sm:$0xf]
  %v6544 = vld [vmem:[%s6332 + $0x34c] sm:$0xf]
  %v6545 = vld [vmem:[%s6332 + $0x350] sm:$0xf]
  %v6546 = vld [vmem:[%s6332 + $0x354] sm:$0xf]
  %v6547 = vld [vmem:[%s6332 + $0x358] sm:$0xf]
  %v6548 = vld [vmem:[%s6332 + $0x35c] sm:$0xf]
  %v6549 = vld [vmem:[%s6332 + $0x360] sm:$0xf]
  %v6550 = vld [vmem:[%s6332 + $0x364] sm:$0xf]
  %v6551 = vld [vmem:[%s6332 + $0x368] sm:$0xf]
  %v6552 = vld [vmem:[%s6332 + $0x36c] sm:$0xf]
  %v6553 = vld [vmem:[%s6332 + $0x370] sm:$0xf]
  %v6554 = vld [vmem:[%s6332 + $0x374] sm:$0xf]
  %v6555 = vld [vmem:[%s6332 + $0x378] sm:$0xf]
  %v6556 = vld [vmem:[%s6332 + $0x37c] sm:$0xf]
  %v6557 = vld [vmem:[%s6332 + $0x380] sm:$0xf]
  %v6558 = vld [vmem:[%s6332 + $0x384] sm:$0xf]
  %v6559 = vld [vmem:[%s6332 + $0x388] sm:$0xf]
  %v6560 = vld [vmem:[%s6332 + $0x38c] sm:$0xf]
  %v6561 = vld [vmem:[%s6332 + $0x390] sm:$0xf]
  %v6562 = vld [vmem:[%s6332 + $0x394] sm:$0xf]
  %v6563 = vld [vmem:[%s6332 + $0x398] sm:$0xf]
  %v6564 = vld [vmem:[%s6332 + $0x39c] sm:$0xf]
  %v6565 = vld [vmem:[%s6332 + $0x3a0] sm:$0xf]
  %v6566 = vld [vmem:[%s6332 + $0x3a4] sm:$0xf]
  %v6567 = vld [vmem:[%s6332 + $0x3a8] sm:$0xf]
  %v6568 = vld [vmem:[%s6332 + $0x3ac] sm:$0xf]
  %v6569 = vld [vmem:[%s6332 + $0x3b0] sm:$0xf]
  %v6570 = vld [vmem:[%s6332 + $0x3b4] sm:$0xf]
  %v6571 = vld [vmem:[%s6332 + $0x3b8] sm:$0xf]
  %v6572 = vld [vmem:[%s6332 + $0x3bc] sm:$0xf]
  %v6573 = vld [vmem:[%s6332 + $0x3c0] sm:$0xf]
  %v6574 = vld [vmem:[%s6332 + $0x3c4] sm:$0xf]
  %v6575 = vld [vmem:[%s6332 + $0x3c8] sm:$0xf]
  %v6576 = vld [vmem:[%s6332 + $0x3cc] sm:$0xf]
  %v6577 = vld [vmem:[%s6332 + $0x3d0] sm:$0xf]
  %v6578 = vld [vmem:[%s6332 + $0x3d4] sm:$0xf]
  %v6579 = vld [vmem:[%s6332 + $0x3d8] sm:$0xf]
  %v6580 = vld [vmem:[%s6332 + $0x3dc] sm:$0xf]
  %v6581 = vld [vmem:[%s6332 + $0x3e0] sm:$0xf]
  %v6582 = vld [vmem:[%s6332 + $0x3e4] sm:$0xf]
  %v6583 = vld [vmem:[%s6332 + $0x3e8] sm:$0xf]
  %v6584 = vld [vmem:[%s6332 + $0x3ec] sm:$0xf]
  %v6585 = vld [vmem:[%s6332 + $0x3f0] sm:$0xf]
  %v6586 = vld [vmem:[%s6332 + $0x3f4] sm:$0xf]
  %v6587 = vld [vmem:[%s6332 + $0x3f8] sm:$0xf]
  %v6588 = vld [vmem:[%s6332 + $0x3fc] sm:$0xf]
  %s6589 = scalar_lea.vmem %s14, 1
  %v6590 = vld [vmem:[%s6589] sm:$0x1]
  %v6592 = vlaneseq
  %v6593 = vshrl.u32 %v6592, 7
  %v6594 = vsub.s32 0, %v6593
  %v6595 = vrot.slane %v6590, %v6594
  %v6853 = vunpack.c.l.b16 %v6333
  %v6854 = vunpack.c.l.b16 %v6334
  %v6855 = vunpack.c.l.b16 %v6335
  %v6856 = vunpack.c.l.b16 %v6336
  %v6857 = vunpack.c.l.b16 %v6337
  %v6858 = vunpack.c.l.b16 %v6338
  %v6859 = vunpack.c.l.b16 %v6339
  %v6860 = vunpack.c.l.b16 %v6340
  %v6861 = vunpack.c.l.b16 %v6341
  %v6862 = vunpack.c.l.b16 %v6342
  %v6863 = vunpack.c.l.b16 %v6343
  %v6864 = vunpack.c.l.b16 %v6344
  %v6865 = vunpack.c.l.b16 %v6345
  %v6866 = vunpack.c.l.b16 %v6346
  %v6867 = vunpack.c.l.b16 %v6347
  %v6868 = vunpack.c.l.b16 %v6348
  %v6869 = vunpack.c.l.b16 %v6349
  %v6870 = vunpack.c.l.b16 %v6350
  %v6871 = vunpack.c.l.b16 %v6351
  %v6872 = vunpack.c.l.b16 %v6352
  %v6873 = vunpack.c.l.b16 %v6353
  %v6874 = vunpack.c.l.b16 %v6354
  %v6875 = vunpack.c.l.b16 %v6355
  %v6876 = vunpack.c.l.b16 %v6356
  %v6877 = vunpack.c.l.b16 %v6357
  %v6878 = vunpack.c.l.b16 %v6358
  %v6879 = vunpack.c.l.b16 %v6359
  %v6880 = vunpack.c.l.b16 %v6360
  %v6881 = vunpack.c.l.b16 %v6361
  %v6882 = vunpack.c.l.b16 %v6362
  %v6883 = vunpack.c.l.b16 %v6363
  %v6884 = vunpack.c.l.b16 %v6364
  %v6885 = vunpack.c.l.b16 %v6365
  %v6886 = vunpack.c.l.b16 %v6366
  %v6887 = vunpack.c.l.b16 %v6367
  %v6888 = vunpack.c.l.b16 %v6368
  %v6889 = vunpack.c.l.b16 %v6369
  %v6890 = vunpack.c.l.b16 %v6370
  %v6891 = vunpack.c.l.b16 %v6371
  %v6892 = vunpack.c.l.b16 %v6372
  %v6893 = vunpack.c.l.b16 %v6373
  %v6894 = vunpack.c.l.b16 %v6374
  %v6895 = vunpack.c.l.b16 %v6375
  %v6896 = vunpack.c.l.b16 %v6376
  %v6897 = vunpack.c.l.b16 %v6377
  %v6898 = vunpack.c.l.b16 %v6378
  %v6899 = vunpack.c.l.b16 %v6379
  %v6900 = vunpack.c.l.b16 %v6380
  %v6901 = vunpack.c.l.b16 %v6381
  %v6902 = vunpack.c.l.b16 %v6382
  %v6903 = vunpack.c.l.b16 %v6383
  %v6904 = vunpack.c.l.b16 %v6384
  %v6905 = vunpack.c.l.b16 %v6385
  %v6906 = vunpack.c.l.b16 %v6386
  %v6907 = vunpack.c.l.b16 %v6387
  %v6908 = vunpack.c.l.b16 %v6388
  %v6909 = vunpack.c.l.b16 %v6389
  %v6910 = vunpack.c.l.b16 %v6390
  %v6911 = vunpack.c.l.b16 %v6391
  %v6912 = vunpack.c.l.b16 %v6392
  %v6913 = vunpack.c.l.b16 %v6393
  %v6914 = vunpack.c.l.b16 %v6394
  %v6915 = vunpack.c.l.b16 %v6395
  %v6916 = vunpack.c.l.b16 %v6396
  %v6917 = vunpack.c.l.b16 %v6397
  %v6918 = vunpack.c.l.b16 %v6398
  %v6919 = vunpack.c.l.b16 %v6399
  %v6920 = vunpack.c.l.b16 %v6400
  %v6921 = vunpack.c.l.b16 %v6401
  %v6922 = vunpack.c.l.b16 %v6402
  %v6923 = vunpack.c.l.b16 %v6403
  %v6924 = vunpack.c.l.b16 %v6404
  %v6925 = vunpack.c.l.b16 %v6405
  %v6926 = vunpack.c.l.b16 %v6406
  %v6927 = vunpack.c.l.b16 %v6407
  %v6928 = vunpack.c.l.b16 %v6408
  %v6929 = vunpack.c.l.b16 %v6409
  %v6930 = vunpack.c.l.b16 %v6410
  %v6931 = vunpack.c.l.b16 %v6411
  %v6932 = vunpack.c.l.b16 %v6412
  %v6933 = vunpack.c.l.b16 %v6413
  %v6934 = vunpack.c.l.b16 %v6414
  %v6935 = vunpack.c.l.b16 %v6415
  %v6936 = vunpack.c.l.b16 %v6416
  %v6937 = vunpack.c.l.b16 %v6417
  %v6938 = vunpack.c.l.b16 %v6418
  %v6939 = vunpack.c.l.b16 %v6419
  %v6940 = vunpack.c.l.b16 %v6420
  %v6941 = vunpack.c.l.b16 %v6421
  %v6942 = vunpack.c.l.b16 %v6422
  %v6943 = vunpack.c.l.b16 %v6423
  %v6944 = vunpack.c.l.b16 %v6424
  %v6945 = vunpack.c.l.b16 %v6425
  %v6946 = vunpack.c.l.b16 %v6426
  %v6947 = vunpack.c.l.b16 %v6427
  %v6948 = vunpack.c.l.b16 %v6428
  %v6949 = vunpack.c.l.b16 %v6429
  %v6950 = vunpack.c.l.b16 %v6430
  %v6951 = vunpack.c.l.b16 %v6431
  %v6952 = vunpack.c.l.b16 %v6432
  %v6953 = vunpack.c.l.b16 %v6433
  %v6954 = vunpack.c.l.b16 %v6434
  %v6955 = vunpack.c.l.b16 %v6435
  %v6956 = vunpack.c.l.b16 %v6436
  %v6957 = vunpack.c.l.b16 %v6437
  %v6958 = vunpack.c.l.b16 %v6438
  %v6959 = vunpack.c.l.b16 %v6439
  %v6960 = vunpack.c.l.b16 %v6440
  %v6961 = vunpack.c.l.b16 %v6441
  %v6962 = vunpack.c.l.b16 %v6442
  %v6963 = vunpack.c.l.b16 %v6443
  %v6964 = vunpack.c.l.b16 %v6444
  %v6965 = vunpack.c.l.b16 %v6445
  %v6966 = vunpack.c.l.b16 %v6446
  %v6967 = vunpack.c.l.b16 %v6447
  %v6968 = vunpack.c.l.b16 %v6448
  %v6969 = vunpack.c.l.b16 %v6449
  %v6970 = vunpack.c.l.b16 %v6450
  %v6971 = vunpack.c.l.b16 %v6451
  %v6972 = vunpack.c.l.b16 %v6452
  %v6973 = vunpack.c.l.b16 %v6453
  %v6974 = vunpack.c.l.b16 %v6454
  %v6975 = vunpack.c.l.b16 %v6455
  %v6976 = vunpack.c.l.b16 %v6456
  %v6977 = vunpack.c.l.b16 %v6457
  %v6978 = vunpack.c.l.b16 %v6458
  %v6979 = vunpack.c.l.b16 %v6459
  %v6980 = vunpack.c.l.b16 %v6460
  %v6981 = vunpack.c.l.b16 %v6461
  %v6982 = vunpack.c.l.b16 %v6462
  %v6983 = vunpack.c.l.b16 %v6463
  %v6984 = vunpack.c.l.b16 %v6464
  %v6985 = vunpack.c.l.b16 %v6465
  %v6986 = vunpack.c.l.b16 %v6466
  %v6987 = vunpack.c.l.b16 %v6467
  %v6988 = vunpack.c.l.b16 %v6468
  %v6989 = vunpack.c.l.b16 %v6469
  %v6990 = vunpack.c.l.b16 %v6470
  %v6991 = vunpack.c.l.b16 %v6471
  %v6992 = vunpack.c.l.b16 %v6472
  %v6993 = vunpack.c.l.b16 %v6473
  %v6994 = vunpack.c.l.b16 %v6474
  %v6995 = vunpack.c.l.b16 %v6475
  %v6996 = vunpack.c.l.b16 %v6476
  %v6997 = vunpack.c.l.b16 %v6477
  %v6998 = vunpack.c.l.b16 %v6478
  %v6999 = vunpack.c.l.b16 %v6479
  %v7000 = vunpack.c.l.b16 %v6480
  %v7001 = vunpack.c.l.b16 %v6481
  %v7002 = vunpack.c.l.b16 %v6482
  %v7003 = vunpack.c.l.b16 %v6483
  %v7004 = vunpack.c.l.b16 %v6484
  %v7005 = vunpack.c.l.b16 %v6485
  %v7006 = vunpack.c.l.b16 %v6486
  %v7007 = vunpack.c.l.b16 %v6487
  %v7008 = vunpack.c.l.b16 %v6488
  %v7009 = vunpack.c.l.b16 %v6489
  %v7010 = vunpack.c.l.b16 %v6490
  %v7011 = vunpack.c.l.b16 %v6491
  %v7012 = vunpack.c.l.b16 %v6492
  %v7013 = vunpack.c.l.b16 %v6493
  %v7014 = vunpack.c.l.b16 %v6494
  %v7015 = vunpack.c.l.b16 %v6495
  %v7016 = vunpack.c.l.b16 %v6496
  %v7017 = vunpack.c.l.b16 %v6497
  %v7018 = vunpack.c.l.b16 %v6498
  %v7019 = vunpack.c.l.b16 %v6499
  %v7020 = vunpack.c.l.b16 %v6500
  %v7021 = vunpack.c.l.b16 %v6501
  %v7022 = vunpack.c.l.b16 %v6502
  %v7023 = vunpack.c.l.b16 %v6503
  %v7024 = vunpack.c.l.b16 %v6504
  %v7025 = vunpack.c.l.b16 %v6505
  %v7026 = vunpack.c.l.b16 %v6506
  %v7027 = vunpack.c.l.b16 %v6507
  %v7028 = vunpack.c.l.b16 %v6508
  %v7029 = vunpack.c.l.b16 %v6509
  %v7030 = vunpack.c.l.b16 %v6510
  %v7031 = vunpack.c.l.b16 %v6511
  %v7032 = vunpack.c.l.b16 %v6512
  %v7033 = vunpack.c.l.b16 %v6513
  %v7034 = vunpack.c.l.b16 %v6514
  %v7035 = vunpack.c.l.b16 %v6515
  %v7036 = vunpack.c.l.b16 %v6516
  %v7037 = vunpack.c.l.b16 %v6517
  %v7038 = vunpack.c.l.b16 %v6518
  %v7039 = vunpack.c.l.b16 %v6519
  %v7040 = vunpack.c.l.b16 %v6520
  %v7041 = vunpack.c.l.b16 %v6521
  %v7042 = vunpack.c.l.b16 %v6522
  %v7043 = vunpack.c.l.b16 %v6523
  %v7044 = vunpack.c.l.b16 %v6524
  %v7045 = vunpack.c.l.b16 %v6525
  %v7046 = vunpack.c.l.b16 %v6526
  %v7047 = vunpack.c.l.b16 %v6527
  %v7048 = vunpack.c.l.b16 %v6528
  %v7049 = vunpack.c.l.b16 %v6529
  %v7050 = vunpack.c.l.b16 %v6530
  %v7051 = vunpack.c.l.b16 %v6531
  %v7052 = vunpack.c.l.b16 %v6532
  %v7053 = vunpack.c.l.b16 %v6533
  %v7054 = vunpack.c.l.b16 %v6534
  %v7055 = vunpack.c.l.b16 %v6535
  %v7056 = vunpack.c.l.b16 %v6536
  %v7057 = vunpack.c.l.b16 %v6537
  %v7058 = vunpack.c.l.b16 %v6538
  %v7059 = vunpack.c.l.b16 %v6539
  %v7060 = vunpack.c.l.b16 %v6540
  %v7061 = vunpack.c.l.b16 %v6541
  %v7062 = vunpack.c.l.b16 %v6542
  %v7063 = vunpack.c.l.b16 %v6543
  %v7064 = vunpack.c.l.b16 %v6544
  %v7065 = vunpack.c.l.b16 %v6545
  %v7066 = vunpack.c.l.b16 %v6546
  %v7067 = vunpack.c.l.b16 %v6547
  %v7068 = vunpack.c.l.b16 %v6548
  %v7069 = vunpack.c.l.b16 %v6549
  %v7070 = vunpack.c.l.b16 %v6550
  %v7071 = vunpack.c.l.b16 %v6551
  %v7072 = vunpack.c.l.b16 %v6552
  %v7073 = vunpack.c.l.b16 %v6553
  %v7074 = vunpack.c.l.b16 %v6554
  %v7075 = vunpack.c.l.b16 %v6555
  %v7076 = vunpack.c.l.b16 %v6556
  %v7077 = vunpack.c.l.b16 %v6557
  %v7078 = vunpack.c.l.b16 %v6558
  %v7079 = vunpack.c.l.b16 %v6559
  %v7080 = vunpack.c.l.b16 %v6560
  %v7081 = vunpack.c.l.b16 %v6561
  %v7082 = vunpack.c.l.b16 %v6562
  %v7083 = vunpack.c.l.b16 %v6563
  %v7084 = vunpack.c.l.b16 %v6564
  %v7085 = vunpack.c.l.b16 %v6565
  %v7086 = vunpack.c.l.b16 %v6566
  %v7087 = vunpack.c.l.b16 %v6567
  %v7088 = vunpack.c.l.b16 %v6568
  %v7089 = vunpack.c.l.b16 %v6569
  %v7090 = vunpack.c.l.b16 %v6570
  %v7091 = vunpack.c.l.b16 %v6571
  %v7092 = vunpack.c.l.b16 %v6572
  %v7093 = vunpack.c.l.b16 %v6573
  %v7094 = vunpack.c.l.b16 %v6574
  %v7095 = vunpack.c.l.b16 %v6575
  %v7096 = vunpack.c.l.b16 %v6576
  %v7097 = vunpack.c.l.b16 %v6577
  %v7098 = vunpack.c.l.b16 %v6578
  %v7099 = vunpack.c.l.b16 %v6579
  %v7100 = vunpack.c.l.b16 %v6580
  %v7101 = vunpack.c.l.b16 %v6581
  %v7102 = vunpack.c.l.b16 %v6582
  %v7103 = vunpack.c.l.b16 %v6583
  %v7104 = vunpack.c.l.b16 %v6584
  %v7105 = vunpack.c.l.b16 %v6585
  %v7106 = vunpack.c.l.b16 %v6586
  %v7107 = vunpack.c.l.b16 %v6587
  %v7108 = vunpack.c.l.b16 %v6588
  %v7109 = vpack.c.b16 %v6854, %v6853
  %v7110 = vpack.c.b16 %v6856, %v6855
  %v7111 = vpack.c.b16 %v6858, %v6857
  %v7112 = vpack.c.b16 %v6860, %v6859
  %v7113 = vpack.c.b16 %v6862, %v6861
  %v7114 = vpack.c.b16 %v6864, %v6863
  %v7115 = vpack.c.b16 %v6866, %v6865
  %v7116 = vpack.c.b16 %v6868, %v6867
  %v7117 = vpack.c.b16 %v6870, %v6869
  %v7118 = vpack.c.b16 %v6872, %v6871
  %v7119 = vpack.c.b16 %v6874, %v6873
  %v7120 = vpack.c.b16 %v6876, %v6875
  %v7121 = vpack.c.b16 %v6878, %v6877
  %v7122 = vpack.c.b16 %v6880, %v6879
  %v7123 = vpack.c.b16 %v6882, %v6881
  %v7124 = vpack.c.b16 %v6884, %v6883
  %v7125 = vpack.c.b16 %v6886, %v6885
  %v7126 = vpack.c.b16 %v6888, %v6887
  %v7127 = vpack.c.b16 %v6890, %v6889
  %v7128 = vpack.c.b16 %v6892, %v6891
  %v7129 = vpack.c.b16 %v6894, %v6893
  %v7130 = vpack.c.b16 %v6896, %v6895
  %v7131 = vpack.c.b16 %v6898, %v6897
  %v7132 = vpack.c.b16 %v6900, %v6899
  %v7133 = vpack.c.b16 %v6902, %v6901
  %v7134 = vpack.c.b16 %v6904, %v6903
  %v7135 = vpack.c.b16 %v6906, %v6905
  %v7136 = vpack.c.b16 %v6908, %v6907
  %v7137 = vpack.c.b16 %v6910, %v6909
  %v7138 = vpack.c.b16 %v6912, %v6911
  %v7139 = vpack.c.b16 %v6914, %v6913
  %v7140 = vpack.c.b16 %v6916, %v6915
  %v7141 = vpack.c.b16 %v6918, %v6917
  %v7142 = vpack.c.b16 %v6920, %v6919
  %v7143 = vpack.c.b16 %v6922, %v6921
  %v7144 = vpack.c.b16 %v6924, %v6923
  %v7145 = vpack.c.b16 %v6926, %v6925
  %v7146 = vpack.c.b16 %v6928, %v6927
  %v7147 = vpack.c.b16 %v6930, %v6929
  %v7148 = vpack.c.b16 %v6932, %v6931
  %v7149 = vpack.c.b16 %v6934, %v6933
  %v7150 = vpack.c.b16 %v6936, %v6935
  %v7151 = vpack.c.b16 %v6938, %v6937
  %v7152 = vpack.c.b16 %v6940, %v6939
  %v7153 = vpack.c.b16 %v6942, %v6941
  %v7154 = vpack.c.b16 %v6944, %v6943
  %v7155 = vpack.c.b16 %v6946, %v6945
  %v7156 = vpack.c.b16 %v6948, %v6947
  %v7157 = vpack.c.b16 %v6950, %v6949
  %v7158 = vpack.c.b16 %v6952, %v6951
  %v7159 = vpack.c.b16 %v6954, %v6953
  %v7160 = vpack.c.b16 %v6956, %v6955
  %v7161 = vpack.c.b16 %v6958, %v6957
  %v7162 = vpack.c.b16 %v6960, %v6959
  %v7163 = vpack.c.b16 %v6962, %v6961
  %v7164 = vpack.c.b16 %v6964, %v6963
  %v7165 = vpack.c.b16 %v6966, %v6965
  %v7166 = vpack.c.b16 %v6968, %v6967
  %v7167 = vpack.c.b16 %v6970, %v6969
  %v7168 = vpack.c.b16 %v6972, %v6971
  %v7169 = vpack.c.b16 %v6974, %v6973
  %v7170 = vpack.c.b16 %v6976, %v6975
  %v7171 = vpack.c.b16 %v6978, %v6977
  %v7172 = vpack.c.b16 %v6980, %v6979
  %v7173 = vpack.c.b16 %v6982, %v6981
  %v7174 = vpack.c.b16 %v6984, %v6983
  %v7175 = vpack.c.b16 %v6986, %v6985
  %v7176 = vpack.c.b16 %v6988, %v6987
  %v7177 = vpack.c.b16 %v6990, %v6989
  %v7178 = vpack.c.b16 %v6992, %v6991
  %v7179 = vpack.c.b16 %v6994, %v6993
  %v7180 = vpack.c.b16 %v6996, %v6995
  %v7181 = vpack.c.b16 %v6998, %v6997
  %v7182 = vpack.c.b16 %v7000, %v6999
  %v7183 = vpack.c.b16 %v7002, %v7001
  %v7184 = vpack.c.b16 %v7004, %v7003
  %v7185 = vpack.c.b16 %v7006, %v7005
  %v7186 = vpack.c.b16 %v7008, %v7007
  %v7187 = vpack.c.b16 %v7010, %v7009
  %v7188 = vpack.c.b16 %v7012, %v7011
  %v7189 = vpack.c.b16 %v7014, %v7013
  %v7190 = vpack.c.b16 %v7016, %v7015
  %v7191 = vpack.c.b16 %v7018, %v7017
  %v7192 = vpack.c.b16 %v7020, %v7019
  %v7193 = vpack.c.b16 %v7022, %v7021
  %v7194 = vpack.c.b16 %v7024, %v7023
  %v7195 = vpack.c.b16 %v7026, %v7025
  %v7196 = vpack.c.b16 %v7028, %v7027
  %v7197 = vpack.c.b16 %v7030, %v7029
  %v7198 = vpack.c.b16 %v7032, %v7031
  %v7199 = vpack.c.b16 %v7034, %v7033
  %v7200 = vpack.c.b16 %v7036, %v7035
  %v7201 = vpack.c.b16 %v7038, %v7037
  %v7202 = vpack.c.b16 %v7040, %v7039
  %v7203 = vpack.c.b16 %v7042, %v7041
  %v7204 = vpack.c.b16 %v7044, %v7043
  %v7205 = vpack.c.b16 %v7046, %v7045
  %v7206 = vpack.c.b16 %v7048, %v7047
  %v7207 = vpack.c.b16 %v7050, %v7049
  %v7208 = vpack.c.b16 %v7052, %v7051
  %v7209 = vpack.c.b16 %v7054, %v7053
  %v7210 = vpack.c.b16 %v7056, %v7055
  %v7211 = vpack.c.b16 %v7058, %v7057
  %v7212 = vpack.c.b16 %v7060, %v7059
  %v7213 = vpack.c.b16 %v7062, %v7061
  %v7214 = vpack.c.b16 %v7064, %v7063
  %v7215 = vpack.c.b16 %v7066, %v7065
  %v7216 = vpack.c.b16 %v7068, %v7067
  %v7217 = vpack.c.b16 %v7070, %v7069
  %v7218 = vpack.c.b16 %v7072, %v7071
  %v7219 = vpack.c.b16 %v7074, %v7073
  %v7220 = vpack.c.b16 %v7076, %v7075
  %v7221 = vpack.c.b16 %v7078, %v7077
  %v7222 = vpack.c.b16 %v7080, %v7079
  %v7223 = vpack.c.b16 %v7082, %v7081
  %v7224 = vpack.c.b16 %v7084, %v7083
  %v7225 = vpack.c.b16 %v7086, %v7085
  %v7226 = vpack.c.b16 %v7088, %v7087
  %v7227 = vpack.c.b16 %v7090, %v7089
  %v7228 = vpack.c.b16 %v7092, %v7091
  %v7229 = vpack.c.b16 %v7094, %v7093
  %v7230 = vpack.c.b16 %v7096, %v7095
  %v7231 = vpack.c.b16 %v7098, %v7097
  %v7232 = vpack.c.b16 %v7100, %v7099
  %v7233 = vpack.c.b16 %v7102, %v7101
  %v7234 = vpack.c.b16 %v7104, %v7103
  %v7235 = vpack.c.b16 %v7106, %v7105
  %v7236 = vpack.c.b16 %v7108, %v7107
  %7365 = vmatprep.subr.bf16.mxu0 0
  %7366 = vmatpush1.bf16.msra.mxu0 %v7109
  %7367 = vmatprep.subr.bf16.mxu0 0
  %7368 = vmatpush1.bf16.msra.mxu0 %v7110
  %7369 = vmatprep.subr.bf16.mxu0 0
  %7370 = vmatpush1.bf16.msra.mxu0 %v7111
  %7371 = vmatprep.subr.bf16.mxu0 0
  %7372 = vmatpush1.bf16.msra.mxu0 %v7112
  %7373 = vmatprep.subr.bf16.mxu0 0
  %7374 = vmatpush1.bf16.msra.mxu0 %v7113
  %7375 = vmatprep.subr.bf16.mxu0 0
  %7376 = vmatpush1.bf16.msra.mxu0 %v7114
  %7377 = vmatprep.subr.bf16.mxu0 0
  %7378 = vmatpush1.bf16.msra.mxu0 %v7115
  %7379 = vmatprep.subr.bf16.mxu0 0
  %7380 = vmatpush1.bf16.msra.mxu0 %v7116
  %7381 = vmatprep.subr.bf16.mxu0 0
  %7382 = vmatpush1.bf16.msra.mxu0 %v7117
  %7383 = vmatprep.subr.bf16.mxu0 0
  %7384 = vmatpush1.bf16.msra.mxu0 %v7118
  %7385 = vmatprep.subr.bf16.mxu0 0
  %7386 = vmatpush1.bf16.msra.mxu0 %v7119
  %7387 = vmatprep.subr.bf16.mxu0 0
  %7388 = vmatpush1.bf16.msra.mxu0 %v7120
  %7389 = vmatprep.subr.bf16.mxu0 0
  %7390 = vmatpush1.bf16.msra.mxu0 %v7121
  %7391 = vmatprep.subr.bf16.mxu0 0
  %7392 = vmatpush1.bf16.msra.mxu0 %v7122
  %7393 = vmatprep.subr.bf16.mxu0 0
  %7394 = vmatpush1.bf16.msra.mxu0 %v7123
  %7395 = vmatprep.subr.bf16.mxu0 0
  %7396 = vmatpush1.bf16.msra.mxu0 %v7124
  %7397 = vmatprep.mubr.bf16.mxu0 %v6317
  %7398 = vmatmul.mubr.bf16.gmra.mrb[0].mxu0 %v6316
  %v7399 = vpop.f32.mrb[0].mxu0
  %v7400 = vadd.f32 %v6595, %v7399
  %v7401 = vpop.f32.mrb[0].mxu0
  %v7402 = vpop.f32.mrb[0].mxu0
  %v7403 = vadd.f32 %v6595, %v7402
  %v7404 = vpop.f32.mrb[0].mxu0
  %7405 = vdwg.mxu0
  %7406 = vmatprep.subr.bf16.mxu0 0
  %7407 = vmatpush1.bf16.msra.mxu0 %v7125
  %7408 = vmatprep.subr.bf16.mxu0 0
  %7409 = vmatpush1.bf16.msra.mxu0 %v7126
  %7410 = vmatprep.subr.bf16.mxu0 0
  %7411 = vmatpush1.bf16.msra.mxu0 %v7127
  %7412 = vmatprep.subr.bf16.mxu0 0
  %7413 = vmatpush1.bf16.msra.mxu0 %v7128
  %7414 = vmatprep.subr.bf16.mxu0 0
  %7415 = vmatpush1.bf16.msra.mxu0 %v7129
  %7416 = vmatprep.subr.bf16.mxu0 0
  %7417 = vmatpush1.bf16.msra.mxu0 %v7130
  %7418 = vmatprep.subr.bf16.mxu0 0
  %7419 = vmatpush1.bf16.msra.mxu0 %v7131
  %7420 = vmatprep.subr.bf16.mxu0 0
  %7421 = vmatpush1.bf16.msra.mxu0 %v7132
  %7422 = vmatprep.subr.bf16.mxu0 0
  %7423 = vmatpush1.bf16.msra.mxu0 %v7133
  %7424 = vmatprep.subr.bf16.mxu0 0
  %7425 = vmatpush1.bf16.msra.mxu0 %v7134
  %7426 = vmatprep.subr.bf16.mxu0 0
  %7427 = vmatpush1.bf16.msra.mxu0 %v7135
  %7428 = vmatprep.subr.bf16.mxu0 0
  %7429 = vmatpush1.bf16.msra.mxu0 %v7136
  %7430 = vmatprep.subr.bf16.mxu0 0
  %7431 = vmatpush1.bf16.msra.mxu0 %v7137
  %7432 = vmatprep.subr.bf16.mxu0 0
  %7433 = vmatpush1.bf16.msra.mxu0 %v7138
  %7434 = vmatprep.subr.bf16.mxu0 0
  %7435 = vmatpush1.bf16.msra.mxu0 %v7139
  %7436 = vmatprep.subr.bf16.mxu0 0
  %7437 = vmatpush1.bf16.msra.mxu0 %v7140
  %7438 = vmatprep.mubr.bf16.mxu0 %v6319
  %7439 = vmatmul.mubr.bf16.gmra.mrb[0].mxu0 %v6318
  %v7440 = vpop.f32.mrb[0].mxu0
  %v7441 = vadd.f32 %v7400, %v7440
  %v7442 = vpop.f32.mrb[0].mxu0
  %v7443 = vpop.f32.mrb[0].mxu0
  %v7444 = vadd.f32 %v7403, %v7443
  %v7445 = vpop.f32.mrb[0].mxu0
  %7446 = vdwg.mxu0
  %7447 = vmatprep.subr.bf16.mxu0 0
  %7448 = vmatpush1.bf16.msra.mxu0 %v7141
  %7449 = vmatprep.subr.bf16.mxu0 0
  %7450 = vmatpush1.bf16.msra.mxu0 %v7142
  %7451 = vmatprep.subr.bf16.mxu0 0
  %7452 = vmatpush1.bf16.msra.mxu0 %v7143
  %7453 = vmatprep.subr.bf16.mxu0 0
  %7454 = vmatpush1.bf16.msra.mxu0 %v7144
  %7455 = vmatprep.subr.bf16.mxu0 0
  %7456 = vmatpush1.bf16.msra.mxu0 %v7145
  %7457 = vmatprep.subr.bf16.mxu0 0
  %7458 = vmatpush1.bf16.msra.mxu0 %v7146
  %7459 = vmatprep.subr.bf16.mxu0 0
  %7460 = vmatpush1.bf16.msra.mxu0 %v7147
  %7461 = vmatprep.subr.bf16.mxu0 0
  %7462 = vmatpush1.bf16.msra.mxu0 %v7148
  %7463 = vmatprep.subr.bf16.mxu0 0
  %7464 = vmatpush1.bf16.msra.mxu0 %v7149
  %7465 = vmatprep.subr.bf16.mxu0 0
  %7466 = vmatpush1.bf16.msra.mxu0 %v7150
  %7467 = vmatprep.subr.bf16.mxu0 0
  %7468 = vmatpush1.bf16.msra.mxu0 %v7151
  %7469 = vmatprep.subr.bf16.mxu0 0
  %7470 = vmatpush1.bf16.msra.mxu0 %v7152
  %7471 = vmatprep.subr.bf16.mxu0 0
  %7472 = vmatpush1.bf16.msra.mxu0 %v7153
  %7473 = vmatprep.subr.bf16.mxu0 0
  %7474 = vmatpush1.bf16.msra.mxu0 %v7154
  %7475 = vmatprep.subr.bf16.mxu0 0
  %7476 = vmatpush1.bf16.msra.mxu0 %v7155
  %7477 = vmatprep.subr.bf16.mxu0 0
  %7478 = vmatpush1.bf16.msra.mxu0 %v7156
  %7479 = vmatprep.mubr.bf16.mxu0 %v6321
  %7480 = vmatmul.mubr.bf16.gmra.mrb[0].mxu0 %v6320
  %v7481 = vpop.f32.mrb[0].mxu0
  %v7482 = vadd.f32 %v7441, %v7481
  %v7483 = vpop.f32.mrb[0].mxu0
  %v7484 = vpop.f32.mrb[0].mxu0
  %v7485 = vadd.f32 %v7444, %v7484
  %v7486 = vpop.f32.mrb[0].mxu0
  %7487 = vdwg.mxu0
  %7488 = vmatprep.subr.bf16.mxu0 0
  %7489 = vmatpush1.bf16.msra.mxu0 %v7157
  %7490 = vmatprep.subr.bf16.mxu0 0
  %7491 = vmatpush1.bf16.msra.mxu0 %v7158
  %7492 = vmatprep.subr.bf16.mxu0 0
  %7493 = vmatpush1.bf16.msra.mxu0 %v7159
  %7494 = vmatprep.subr.bf16.mxu0 0
  %7495 = vmatpush1.bf16.msra.mxu0 %v7160
  %7496 = vmatprep.subr.bf16.mxu0 0
  %7497 = vmatpush1.bf16.msra.mxu0 %v7161
  %7498 = vmatprep.subr.bf16.mxu0 0
  %7499 = vmatpush1.bf16.msra.mxu0 %v7162
  %7500 = vmatprep.subr.bf16.mxu0 0
  %7501 = vmatpush1.bf16.msra.mxu0 %v7163
  %7502 = vmatprep.subr.bf16.mxu0 0
  %7503 = vmatpush1.bf16.msra.mxu0 %v7164
  %7504 = vmatprep.subr.bf16.mxu0 0
  %7505 = vmatpush1.bf16.msra.mxu0 %v7165
  %7506 = vmatprep.subr.bf16.mxu0 0
  %7507 = vmatpush1.bf16.msra.mxu0 %v7166
  %7508 = vmatprep.subr.bf16.mxu0 0
  %7509 = vmatpush1.bf16.msra.mxu0 %v7167
  %7510 = vmatprep.subr.bf16.mxu0 0
  %7511 = vmatpush1.bf16.msra.mxu0 %v7168
  %7512 = vmatprep.subr.bf16.mxu0 0
  %7513 = vmatpush1.bf16.msra.mxu0 %v7169
  %7514 = vmatprep.subr.bf16.mxu0 0
  %7515 = vmatpush1.bf16.msra.mxu0 %v7170
  %7516 = vmatprep.subr.bf16.mxu0 0
  %7517 = vmatpush1.bf16.msra.mxu0 %v7171
  %7518 = vmatprep.subr.bf16.mxu0 0
  %7519 = vmatpush1.bf16.msra.mxu0 %v7172
  %7520 = vmatprep.mubr.bf16.mxu0 %v6323
  %7521 = vmatmul.mubr.bf16.gmra.mrb[0].mxu0 %v6322
  %v7522 = vpop.f32.mrb[0].mxu0
  %v7523 = vadd.f32 %v7482, %v7522
  %v7524 = vpop.f32.mrb[0].mxu0
  %v7525 = vpop.f32.mrb[0].mxu0
  %v7526 = vadd.f32 %v7485, %v7525
  %v7527 = vpop.f32.mrb[0].mxu0
  %7528 = vdwg.mxu0
  %7529 = vmatprep.subr.bf16.mxu0 0
  %7530 = vmatpush1.bf16.msra.mxu0 %v7173
  %7531 = vmatprep.subr.bf16.mxu0 0
  %7532 = vmatpush1.bf16.msra.mxu0 %v7174
  %7533 = vmatprep.subr.bf16.mxu0 0
  %7534 = vmatpush1.bf16.msra.mxu0 %v7175
  %7535 = vmatprep.subr.bf16.mxu0 0
  %7536 = vmatpush1.bf16.msra.mxu0 %v7176
  %7537 = vmatprep.subr.bf16.mxu0 0
  %7538 = vmatpush1.bf16.msra.mxu0 %v7177
  %7539 = vmatprep.subr.bf16.mxu0 0
  %7540 = vmatpush1.bf16.msra.mxu0 %v7178
  %7541 = vmatprep.subr.bf16.mxu0 0
  %7542 = vmatpush1.bf16.msra.mxu0 %v7179
  %7543 = vmatprep.subr.bf16.mxu0 0
  %7544 = vmatpush1.bf16.msra.mxu0 %v7180
  %7545 = vmatprep.subr.bf16.mxu0 0
  %7546 = vmatpush1.bf16.msra.mxu0 %v7181
  %7547 = vmatprep.subr.bf16.mxu0 0
  %7548 = vmatpush1.bf16.msra.mxu0 %v7182
  %7549 = vmatprep.subr.bf16.mxu0 0
  %7550 = vmatpush1.bf16.msra.mxu0 %v7183
  %7551 = vmatprep.subr.bf16.mxu0 0
  %7552 = vmatpush1.bf16.msra.mxu0 %v7184
  %7553 = vmatprep.subr.bf16.mxu0 0
  %7554 = vmatpush1.bf16.msra.mxu0 %v7185
  %7555 = vmatprep.subr.bf16.mxu0 0
  %7556 = vmatpush1.bf16.msra.mxu0 %v7186
  %7557 = vmatprep.subr.bf16.mxu0 0
  %7558 = vmatpush1.bf16.msra.mxu0 %v7187
  %7559 = vmatprep.subr.bf16.mxu0 0
  %7560 = vmatpush1.bf16.msra.mxu0 %v7188
  %7561 = vmatprep.mubr.bf16.mxu0 %v6325
  %7562 = vmatmul.mubr.bf16.gmra.mrb[0].mxu0 %v6324
  %v7563 = vpop.f32.mrb[0].mxu0
  %v7564 = vadd.f32 %v7523, %v7563
  %v7565 = vpop.f32.mrb[0].mxu0
  %v7566 = vpop.f32.mrb[0].mxu0
  %v7567 = vadd.f32 %v7526, %v7566
  %v7568 = vpop.f32.mrb[0].mxu0
  %7569 = vdwg.mxu0
  %7570 = vmatprep.subr.bf16.mxu0 0
  %7571 = vmatpush1.bf16.msra.mxu0 %v7189
  %7572 = vmatprep.subr.bf16.mxu0 0
  %7573 = vmatpush1.bf16.msra.mxu0 %v7190
  %7574 = vmatprep.subr.bf16.mxu0 0
  %7575 = vmatpush1.bf16.msra.mxu0 %v7191
  %7576 = vmatprep.subr.bf16.mxu0 0
  %7577 = vmatpush1.bf16.msra.mxu0 %v7192
  %7578 = vmatprep.subr.bf16.mxu0 0
  %7579 = vmatpush1.bf16.msra.mxu0 %v7193
  %7580 = vmatprep.subr.bf16.mxu0 0
  %7581 = vmatpush1.bf16.msra.mxu0 %v7194
  %7582 = vmatprep.subr.bf16.mxu0 0
  %7583 = vmatpush1.bf16.msra.mxu0 %v7195
  %7584 = vmatprep.subr.bf16.mxu0 0
  %7585 = vmatpush1.bf16.msra.mxu0 %v7196
  %7586 = vmatprep.subr.bf16.mxu0 0
  %7587 = vmatpush1.bf16.msra.mxu0 %v7197
  %7588 = vmatprep.subr.bf16.mxu0 0
  %7589 = vmatpush1.bf16.msra.mxu0 %v7198
  %7590 = vmatprep.subr.bf16.mxu0 0
  %7591 = vmatpush1.bf16.msra.mxu0 %v7199
  %7592 = vmatprep.subr.bf16.mxu0 0
  %7593 = vmatpush1.bf16.msra.mxu0 %v7200
  %7594 = vmatprep.subr.bf16.mxu0 0
  %7595 = vmatpush1.bf16.msra.mxu0 %v7201
  %7596 = vmatprep.subr.bf16.mxu0 0
  %7597 = vmatpush1.bf16.msra.mxu0 %v7202
  %7598 = vmatprep.subr.bf16.mxu0 0
  %7599 = vmatpush1.bf16.msra.mxu0 %v7203
  %7600 = vmatprep.subr.bf16.mxu0 0
  %7601 = vmatpush1.bf16.msra.mxu0 %v7204
  %7602 = vmatprep.mubr.bf16.mxu0 %v6327
  %7603 = vmatmul.mubr.bf16.gmra.mrb[0].mxu0 %v6326
  %v7604 = vpop.f32.mrb[0].mxu0
  %v7605 = vadd.f32 %v7564, %v7604
  %v7606 = vpop.f32.mrb[0].mxu0
  %v7607 = vpop.f32.mrb[0].mxu0
  %v7608 = vadd.f32 %v7567, %v7607
  %v7609 = vpop.f32.mrb[0].mxu0
  %7610 = vdwg.mxu0
  %7611 = vmatprep.subr.bf16.mxu0 0
  %7612 = vmatpush1.bf16.msra.mxu0 %v7205
  %7613 = vmatprep.subr.bf16.mxu0 0
  %7614 = vmatpush1.bf16.msra.mxu0 %v7206
  %7615 = vmatprep.subr.bf16.mxu0 0
  %7616 = vmatpush1.bf16.msra.mxu0 %v7207
  %7617 = vmatprep.subr.bf16.mxu0 0
  %7618 = vmatpush1.bf16.msra.mxu0 %v7208
  %7619 = vmatprep.subr.bf16.mxu0 0
  %7620 = vmatpush1.bf16.msra.mxu0 %v7209
  %7621 = vmatprep.subr.bf16.mxu0 0
  %7622 = vmatpush1.bf16.msra.mxu0 %v7210
  %7623 = vmatprep.subr.bf16.mxu0 0
  %7624 = vmatpush1.bf16.msra.mxu0 %v7211
  %7625 = vmatprep.subr.bf16.mxu0 0
  %7626 = vmatpush1.bf16.msra.mxu0 %v7212
  %7627 = vmatprep.subr.bf16.mxu0 0
  %7628 = vmatpush1.bf16.msra.mxu0 %v7213
  %7629 = vmatprep.subr.bf16.mxu0 0
  %7630 = vmatpush1.bf16.msra.mxu0 %v7214
  %7631 = vmatprep.subr.bf16.mxu0 0
  %7632 = vmatpush1.bf16.msra.mxu0 %v7215
  %7633 = vmatprep.subr.bf16.mxu0 0
  %7634 = vmatpush1.bf16.msra.mxu0 %v7216
  %7635 = vmatprep.subr.bf16.mxu0 0
  %7636 = vmatpush1.bf16.msra.mxu0 %v7217
  %7637 = vmatprep.subr.bf16.mxu0 0
  %7638 = vmatpush1.bf16.msra.mxu0 %v7218
  %7639 = vmatprep.subr.bf16.mxu0 0
  %7640 = vmatpush1.bf16.msra.mxu0 %v7219
  %7641 = vmatprep.subr.bf16.mxu0 0
  %7642 = vmatpush1.bf16.msra.mxu0 %v7220
  %7643 = vmatprep.mubr.bf16.mxu0 %v6329
  %7644 = vmatmul.mubr.bf16.gmra.mrb[0].mxu0 %v6328
  %v7645 = vpop.f32.mrb[0].mxu0
  %v7646 = vadd.f32 %v7605, %v7645
  %v7647 = vpop.f32.mrb[0].mxu0
  %v7648 = vpop.f32.mrb[0].mxu0
  %v7649 = vadd.f32 %v7608, %v7648
  %v7650 = vpop.f32.mrb[0].mxu0
  %7651 = vdwg.mxu0
  %7652 = vmatprep.subr.bf16.mxu0 0
  %7653 = vmatpush1.bf16.msra.mxu0 %v7221
  %7654 = vmatprep.subr.bf16.mxu0 0
  %7655 = vmatpush1.bf16.msra.mxu0 %v7222
  %7656 = vmatprep.subr.bf16.mxu0 0
  %7657 = vmatpush1.bf16.msra.mxu0 %v7223
  %7658 = vmatprep.subr.bf16.mxu0 0
  %7659 = vmatpush1.bf16.msra.mxu0 %v7224
  %7660 = vmatprep.subr.bf16.mxu0 0
  %7661 = vmatpush1.bf16.msra.mxu0 %v7225
  %7662 = vmatprep.subr.bf16.mxu0 0
  %7663 = vmatpush1.bf16.msra.mxu0 %v7226
  %7664 = vmatprep.subr.bf16.mxu0 0
  %7665 = vmatpush1.bf16.msra.mxu0 %v7227
  %7666 = vmatprep.subr.bf16.mxu0 0
  %7667 = vmatpush1.bf16.msra.mxu0 %v7228
  %7668 = vmatprep.subr.bf16.mxu0 0
  %7669 = vmatpush1.bf16.msra.mxu0 %v7229
  %7670 = vmatprep.subr.bf16.mxu0 0
  %7671 = vmatpush1.bf16.msra.mxu0 %v7230
  %7672 = vmatprep.subr.bf16.mxu0 0
  %7673 = vmatpush1.bf16.msra.mxu0 %v7231
  %7674 = vmatprep.subr.bf16.mxu0 0
  %7675 = vmatpush1.bf16.msra.mxu0 %v7232
  %7676 = vmatprep.subr.bf16.mxu0 0
  %7677 = vmatpush1.bf16.msra.mxu0 %v7233
  %7678 = vmatprep.subr.bf16.mxu0 0
  %7679 = vmatpush1.bf16.msra.mxu0 %v7234
  %7680 = vmatprep.subr.bf16.mxu0 0
  %7681 = vmatpush1.bf16.msra.mxu0 %v7235
  %7682 = vmatprep.subr.bf16.mxu0 0
  %7683 = vmatpush1.bf16.msra.mxu0 %v7236
  %7684 = vmatprep.mubr.bf16.mxu0 %v6331
  %7685 = vmatmul.mubr.bf16.gmra.mrb[0].mxu0 %v6330
  %v7686 = vpop.f32.mrb[0].mxu0
  %v7687 = vadd.f32 %v7646, %v7686
  %v7688 = vpop.f32.mrb[0].mxu0
  %v7689 = vpop.f32.mrb[0].mxu0
  %v7690 = vadd.f32 %v7649, %v7689
  %v7691 = vpop.f32.mrb[0].mxu0
  %7692 = vdwg.mxu0
  %v7693 = vadd.f32 %v5560, %v7687
  %v7694 = vadd.f32 %v5561, %v7690
  %s7695 = scalar_lea.vmem %s15, 1
  %v7696 = vld [vmem:[%s7695] sm:$0x1]
  %s7697 = scalar_lea.vmem %s16, 1
  %v7698 = vld [vmem:[%s7697] sm:$0x1]
  %v7699 = vsel %vm289, %v7693, 0.0
  %7700 = vadd.xlane.f32.xlu0 %v7699
  %v7701 = vpop.xlane.xlu0 %7700
  %v7702 = vsel %vm289, %v7694, 0.0
  %7703 = vadd.xlane.f32.xlu0 %v7702
  %v7704 = vpop.xlane.xlu0 %7703
  %v7705 = vmul.f32 %v7701, %v1738
  %v7706 = vmul.f32 %v7704, %v1738
  %v7707 = vsub.f32 %v7693, %v7705
  %v7708 = vsub.f32 %v7694, %v7706
  %v7709 = vmul.f32 %v7707, %v7707
  %v7710 = vmul.f32 %v7708, %v7708
  %v7711 = vsel %vm289, %v7709, 0.0
  %7712 = vadd.xlane.f32.xlu0 %v7711
  %v7713 = vpop.xlane.xlu0 %7712
  %v7714 = vsel %vm289, %v7710, 0.0
  %7715 = vadd.xlane.f32.xlu0 %v7714
  %v7716 = vpop.xlane.xlu0 %7715
  %v7717 = vmul.f32 %v7713, %v1738
  %v7718 = vmul.f32 %v7716, %v1738
  %v7719 = vadd.f32 %v7717, 1e-05
  %v7720 = vadd.f32 %v7718, 1e-05
  %v7721 = vrsqrt.pop %v7719
  %v7722 = vrsqrt.pop %v7720
  %v7723 = vmul.f32 %v7707, %v7721
  %v7724 = vmul.f32 %v7708, %v7722
  %v7726 = vlaneseq
  %v7727 = vshrl.u32 %v7726, 7
  %v7728 = vsub.s32 0, %v7727
  %v7729 = vrot.slane %v7696, %v7728
  %v7731 = vmul.f32 %v7723, %v7729
  %v7732 = vmul.f32 %v7724, %v7729
  %v7734 = vlaneseq
  %v7735 = vshrl.u32 %v7734, 7
  %v7736 = vsub.s32 0, %v7735
  %v7737 = vrot.slane %v7698, %v7736
  %v7739 = vadd.f32 %v7731, %v7737
  %v7740 = vadd.f32 %v7732, %v7737
  %s7741 = scalar_lea.vmem %s5, 960
  %v7742 = vld [vmem:[%s7741] sm:$0xff]
  %v7743 = vld [vmem:[%s7741 + $0x8] sm:$0xff]
  %v7744 = vld [vmem:[%s7741 + $0x10] sm:$0xff]
  %v7745 = vld [vmem:[%s7741 + $0x18] sm:$0xff]
  %v7746 = vld [vmem:[%s7741 + $0x20] sm:$0xff]
  %v7747 = vld [vmem:[%s7741 + $0x28] sm:$0xff]
  %v7748 = vld [vmem:[%s7741 + $0x30] sm:$0xff]
  %v7749 = vld [vmem:[%s7741 + $0x38] sm:$0xff]
  %v7750 = vld [vmem:[%s7741 + $0x40] sm:$0xff]
  %v7751 = vld [vmem:[%s7741 + $0x48] sm:$0xff]
  %v7752 = vld [vmem:[%s7741 + $0x50] sm:$0xff]
  %v7753 = vld [vmem:[%s7741 + $0x58] sm:$0xff]
  %v7754 = vld [vmem:[%s7741 + $0x60] sm:$0xff]
  %v7755 = vld [vmem:[%s7741 + $0x68] sm:$0xff]
  %v7756 = vld [vmem:[%s7741 + $0x70] sm:$0xff]
  %v7757 = vld [vmem:[%s7741 + $0x78] sm:$0xff]
  %v7758 = vld [vmem:[%s7741 + $0x80] sm:$0xff]
  %v7759 = vld [vmem:[%s7741 + $0x88] sm:$0xff]
  %v7760 = vld [vmem:[%s7741 + $0x90] sm:$0xff]
  %v7761 = vld [vmem:[%s7741 + $0x98] sm:$0xff]
  %v7762 = vld [vmem:[%s7741 + $0xa0] sm:$0xff]
  %v7763 = vld [vmem:[%s7741 + $0xa8] sm:$0xff]
  %v7764 = vld [vmem:[%s7741 + $0xb0] sm:$0xff]
  %v7765 = vld [vmem:[%s7741 + $0xb8] sm:$0xff]
  %v7766 = vld [vmem:[%s7741 + $0xc0] sm:$0xff]
  %v7767 = vld [vmem:[%s7741 + $0xc8] sm:$0xff]
  %v7768 = vld [vmem:[%s7741 + $0xd0] sm:$0xff]
  %v7769 = vld [vmem:[%s7741 + $0xd8] sm:$0xff]
  %v7770 = vld [vmem:[%s7741 + $0xe0] sm:$0xff]
  %v7771 = vld [vmem:[%s7741 + $0xe8] sm:$0xff]
  %v7772 = vld [vmem:[%s7741 + $0xf0] sm:$0xff]
  %v7773 = vld [vmem:[%s7741 + $0xf8] sm:$0xff]
  %v7774 = vld [vmem:[%s7741 + $0x100] sm:$0xff]
  %v7775 = vld [vmem:[%s7741 + $0x108] sm:$0xff]
  %v7776 = vld [vmem:[%s7741 + $0x110] sm:$0xff]
  %v7777 = vld [vmem:[%s7741 + $0x118] sm:$0xff]
  %v7778 = vld [vmem:[%s7741 + $0x120] sm:$0xff]
  %v7779 = vld [vmem:[%s7741 + $0x128] sm:$0xff]
  %v7780 = vld [vmem:[%s7741 + $0x130] sm:$0xff]
  %v7781 = vld [vmem:[%s7741 + $0x138] sm:$0xff]
  %v7782 = vld [vmem:[%s7741 + $0x140] sm:$0xff]
  %v7783 = vld [vmem:[%s7741 + $0x148] sm:$0xff]
  %v7784 = vld [vmem:[%s7741 + $0x150] sm:$0xff]
  %v7785 = vld [vmem:[%s7741 + $0x158] sm:$0xff]
  %v7786 = vld [vmem:[%s7741 + $0x160] sm:$0xff]
  %v7787 = vld [vmem:[%s7741 + $0x168] sm:$0xff]
  %v7788 = vld [vmem:[%s7741 + $0x170] sm:$0xff]
  %v7789 = vld [vmem:[%s7741 + $0x178] sm:$0xff]
  %v7790 = vld [vmem:[%s7741 + $0x180] sm:$0xf]
  %v7791 = vld [vmem:[%s7741 + $0x188] sm:$0xf]
  %v7792 = vld [vmem:[%s7741 + $0x190] sm:$0xf]
  %v7793 = vld [vmem:[%s7741 + $0x198] sm:$0xf]
  %v7794 = vld [vmem:[%s7741 + $0x1a0] sm:$0xf]
  %v7795 = vld [vmem:[%s7741 + $0x1a8] sm:$0xf]
  %v7796 = vld [vmem:[%s7741 + $0x1b0] sm:$0xf]
  %v7797 = vld [vmem:[%s7741 + $0x1b8] sm:$0xf]
  %v7798 = vld [vmem:[%s7741 + $0x1c0] sm:$0xf]
  %v7799 = vld [vmem:[%s7741 + $0x1c8] sm:$0xf]
  %v7800 = vld [vmem:[%s7741 + $0x1d0] sm:$0xf]
  %v7801 = vld [vmem:[%s7741 + $0x1d8] sm:$0xf]
  %s7802 = scalar_lea.vmem %s6, 24
  %v7803 = vld [vmem:[%s7802] sm:$0xff]
  %v7804 = vld [vmem:[%s7802 + $0x8] sm:$0xf]
  %v7807 = vlaneseq
  %v7808 = vshrl.u32 %v7807, 7
  %v7809 = vsub.s32 0, %v7808
  %v7810 = vrot.slane %v7803, %v7809
  %v7811 = vlaneseq
  %v7812 = vshrl.u32 %v7811, 7
  %v7813 = vsub.s32 1, %v7812
  %v7814 = vrot.slane %v7803, %v7813
  %v7815 = vlaneseq
  %v7816 = vshrl.u32 %v7815, 7
  %v7817 = vsub.s32 2, %v7816
  %v7818 = vrot.slane %v7803, %v7817
  %v7819 = vlaneseq
  %v7820 = vshrl.u32 %v7819, 7
  %v7821 = vsub.s32 3, %v7820
  %v7822 = vrot.slane %v7803, %v7821
  %v7823 = vlaneseq
  %v7824 = vshrl.u32 %v7823, 7
  %v7825 = vsub.s32 4, %v7824
  %v7826 = vrot.slane %v7803, %v7825
  %v7827 = vlaneseq
  %v7828 = vshrl.u32 %v7827, 7
  %v7829 = vsub.s32 5, %v7828
  %v7830 = vrot.slane %v7803, %v7829
  %v7831 = vlaneseq
  %v7832 = vshrl.u32 %v7831, 7
  %v7833 = vsub.s32 6, %v7832
  %v7834 = vrot.slane %v7803, %v7833
  %v7835 = vlaneseq
  %v7836 = vshrl.u32 %v7835, 7
  %v7837 = vsub.s32 7, %v7836
  %v7838 = vrot.slane %v7803, %v7837
  %v7839 = vlaneseq
  %v7840 = vshrl.u32 %v7839, 7
  %v7841 = vsub.s32 0, %v7840
  %v7842 = vrot.slane %v7804, %v7841
  %v7843 = vlaneseq
  %v7844 = vshrl.u32 %v7843, 7
  %v7845 = vsub.s32 1, %v7844
  %v7846 = vrot.slane %v7804, %v7845
  %v7847 = vlaneseq
  %v7848 = vshrl.u32 %v7847, 7
  %v7849 = vsub.s32 2, %v7848
  %v7850 = vrot.slane %v7804, %v7849
  %v7851 = vlaneseq
  %v7852 = vshrl.u32 %v7851, 7
  %v7853 = vsub.s32 3, %v7852
  %v7854 = vrot.slane %v7804, %v7853
  %v7868 = vsel %vm289, %v7739, 0
  %v7871 = vsel %vm289, %v7740, 0
  %v7874 = vsel %vm82, %v7790, 0
  %v7877 = vsel %vm82, %v7791, 0
  %v7880 = vsel %vm82, %v7792, 0
  %v7883 = vsel %vm82, %v7793, 0
  %v7886 = vsel %vm82, %v7794, 0
  %v7889 = vsel %vm82, %v7795, 0
  %v7892 = vsel %vm82, %v7796, 0
  %v7895 = vsel %vm82, %v7797, 0
  %v7898 = vsel %vm82, %v7798, 0
  %v7901 = vsel %vm82, %v7799, 0
  %v7904 = vsel %vm82, %v7800, 0
  %v7907 = vsel %vm82, %v7801, 0
  %7909 = vmatprep.subr.mxu0 %v7743
  %7910 = vmatpush1.msra.mxu0 %v7742
  %7911 = vmatprep.subr.mxu0 %v7755
  %7912 = vmatpush1.msra.mxu0 %v7754
  %7913 = vmatprep.subr.mxu0 %v7767
  %7914 = vmatpush1.msra.mxu0 %v7766
  %7915 = vmatprep.subr.mxu0 %v7779
  %7916 = vmatpush1.msra.mxu0 %v7778
  %7917 = vmatprep.subr.mxu0 %v7877
  %7918 = vmatpush1.msra.mxu0 %v7874
  %7919 = vmatprep.subr.mxu0 0.0
  %7920 = vmatpush1.msra.mxu0 0.0
  %7921 = vmatprep.subr.mxu0 0.0
  %7922 = vmatpush1.msra.mxu0 0.0
  %7923 = vmatprep.subr.mxu0 0.0
  %7924 = vmatpush1.msra.mxu0 0.0
  %7925 = vmatprep.subr.mxu0 0.0
  %7926 = vmatpush1.msra.mxu0 0.0
  %7927 = vmatprep.subr.mxu0 0.0
  %7928 = vmatpush1.msra.mxu0 0.0
  %7929 = vmatprep.subr.mxu0 0.0
  %7930 = vmatpush1.msra.mxu0 0.0
  %7931 = vmatprep.subr.mxu0 0.0
  %7932 = vmatpush1.msra.mxu0 0.0
  %7933 = vmatprep.subr.mxu0 0.0
  %7934 = vmatpush1.msra.mxu0 0.0
  %7935 = vmatprep.subr.mxu0 0.0
  %7936 = vmatpush1.msra.mxu0 0.0
  %7937 = vmatprep.subr.mxu0 0.0
  %7938 = vmatpush1.msra.mxu0 0.0
  %7939 = vmatprep.subr.mxu0 0.0
  %7940 = vmatpush1.msra.mxu0 0.0
  %7941 = vmatprep.subr.mxu0 0.0
  %7942 = vmatpush1.msra.mxu0 0.0
  %7943 = vmatprep.subr.mxu0 0.0
  %7944 = vmatpush1.msra.mxu0 0.0
  %7945 = vmatprep.subr.mxu0 0.0
  %7946 = vmatpush1.msra.mxu0 0.0
  %7947 = vmatprep.subr.mxu0 0.0
  %7948 = vmatpush1.msra.mxu0 0.0
  %7949 = vmatprep.subr.mxu0 0.0
  %7950 = vmatpush1.msra.mxu0 0.0
  %7951 = vmatprep.subr.mxu0 0.0
  %7952 = vmatpush1.msra.mxu0 0.0
  %7953 = vmatprep.subr.mxu0 0.0
  %7954 = vmatpush1.msra.mxu0 0.0
  %7955 = vmatprep.subr.mxu0 0.0
  %7956 = vmatpush1.msra.mxu0 0.0
  %7957 = vmatprep.subr.mxu0 0.0
  %7958 = vmatpush1.msra.mxu0 0.0
  %7959 = vmatprep.subr.mxu0 0.0
  %7960 = vmatpush1.msra.mxu0 0.0
  %7961 = vmatprep.subr.mxu0 0.0
  %7962 = vmatpush1.msra.mxu0 0.0
  %7963 = vmatprep.subr.mxu0 0.0
  %7964 = vmatpush1.msra.mxu0 0.0
  %7965 = vmatprep.subr.mxu0 0.0
  %7966 = vmatpush1.msra.mxu0 0.0
  %7967 = vmatprep.subr.mxu0 0.0
  %7968 = vmatpush1.msra.mxu0 0.0
  %7969 = vmatprep.subr.mxu0 0.0
  %7970 = vmatpush1.msra.mxu0 0.0
  %7971 = vmatprep.subr.mxu0 0.0
  %7972 = vmatpush1.msra.mxu0 0.0
  %7973 = vmatprep.mubr.f32.mxu0 0.0
  %7974 = vmatmul.mubr.f32.gmra.mrb[0].mxu0 %v7868
  %v7975 = vpop.f32.mrb[0].mxu0
  %v7976 = vadd.f32 %v7810, %v7975
  %v7977 = vpop.f32.mrb[0].mxu0
  %v7978 = vadd.f32 %v7814, %v7977
  %7979 = vmatprep.mubr.f32.mxu0 0.0
  %7980 = vmatmul.mubr.f32.gmra.mrb[0].mxu0 %v7871
  %v7981 = vpop.f32.mrb[0].mxu0
  %v7982 = vadd.f32 %v7810, %v7981
  %v7983 = vpop.f32.mrb[0].mxu0
  %v7984 = vadd.f32 %v7814, %v7983
  %7985 = vdwg.mxu0
  %7986 = vmatprep.subr.mxu0 %v7745
  %7987 = vmatpush1.msra.mxu0 %v7744
  %7988 = vmatprep.subr.mxu0 %v7757
  %7989 = vmatpush1.msra.mxu0 %v7756
  %7990 = vmatprep.subr.mxu0 %v7769
  %7991 = vmatpush1.msra.mxu0 %v7768
  %7992 = vmatprep.subr.mxu0 %v7781
  %7993 = vmatpush1.msra.mxu0 %v7780
  %7994 = vmatprep.subr.mxu0 %v7883
  %7995 = vmatpush1.msra.mxu0 %v7880
  %7996 = vmatprep.subr.mxu0 0.0
  %7997 = vmatpush1.msra.mxu0 0.0
  %7998 = vmatprep.subr.mxu0 0.0
  %7999 = vmatpush1.msra.mxu0 0.0
  %8000 = vmatprep.subr.mxu0 0.0
  %8001 = vmatpush1.msra.mxu0 0.0
  %8002 = vmatprep.subr.mxu0 0.0
  %8003 = vmatpush1.msra.mxu0 0.0
  %8004 = vmatprep.subr.mxu0 0.0
  %8005 = vmatpush1.msra.mxu0 0.0
  %8006 = vmatprep.subr.mxu0 0.0
  %8007 = vmatpush1.msra.mxu0 0.0
  %8008 = vmatprep.subr.mxu0 0.0
  %8009 = vmatpush1.msra.mxu0 0.0
  %8010 = vmatprep.subr.mxu0 0.0
  %8011 = vmatpush1.msra.mxu0 0.0
  %8012 = vmatprep.subr.mxu0 0.0
  %8013 = vmatpush1.msra.mxu0 0.0
  %8014 = vmatprep.subr.mxu0 0.0
  %8015 = vmatpush1.msra.mxu0 0.0
  %8016 = vmatprep.subr.mxu0 0.0
  %8017 = vmatpush1.msra.mxu0 0.0
  %8018 = vmatprep.subr.mxu0 0.0
  %8019 = vmatpush1.msra.mxu0 0.0
  %8020 = vmatprep.subr.mxu0 0.0
  %8021 = vmatpush1.msra.mxu0 0.0
  %8022 = vmatprep.subr.mxu0 0.0
  %8023 = vmatpush1.msra.mxu0 0.0
  %8024 = vmatprep.subr.mxu0 0.0
  %8025 = vmatpush1.msra.mxu0 0.0
  %8026 = vmatprep.subr.mxu0 0.0
  %8027 = vmatpush1.msra.mxu0 0.0
  %8028 = vmatprep.subr.mxu0 0.0
  %8029 = vmatpush1.msra.mxu0 0.0
  %8030 = vmatprep.subr.mxu0 0.0
  %8031 = vmatpush1.msra.mxu0 0.0
  %8032 = vmatprep.subr.mxu0 0.0
  %8033 = vmatpush1.msra.mxu0 0.0
  %8034 = vmatprep.subr.mxu0 0.0
  %8035 = vmatpush1.msra.mxu0 0.0
  %8036 = vmatprep.subr.mxu0 0.0
  %8037 = vmatpush1.msra.mxu0 0.0
  %8038 = vmatprep.subr.mxu0 0.0
  %8039 = vmatpush1.msra.mxu0 0.0
  %8040 = vmatprep.subr.mxu0 0.0
  %8041 = vmatpush1.msra.mxu0 0.0
  %8042 = vmatprep.subr.mxu0 0.0
  %8043 = vmatpush1.msra.mxu0 0.0
  %8044 = vmatprep.subr.mxu0 0.0
  %8045 = vmatpush1.msra.mxu0 0.0
  %8046 = vmatprep.subr.mxu0 0.0
  %8047 = vmatpush1.msra.mxu0 0.0
  %8048 = vmatprep.subr.mxu0 0.0
  %8049 = vmatpush1.msra.mxu0 0.0
  %8050 = vmatprep.mubr.f32.mxu0 0.0
  %8051 = vmatmul.mubr.f32.gmra.mrb[0].mxu0 %v7868
  %v8052 = vpop.f32.mrb[0].mxu0
  %v8053 = vadd.f32 %v7818, %v8052
  %v8054 = vpop.f32.mrb[0].mxu0
  %v8055 = vadd.f32 %v7822, %v8054
  %8056 = vmatprep.mubr.f32.mxu0 0.0
  %8057 = vmatmul.mubr.f32.gmra.mrb[0].mxu0 %v7871
  %v8058 = vpop.f32.mrb[0].mxu0
  %v8059 = vadd.f32 %v7818, %v8058
  %v8060 = vpop.f32.mrb[0].mxu0
  %v8061 = vadd.f32 %v7822, %v8060
  %8062 = vdwg.mxu0
  %8063 = vmatprep.subr.mxu0 %v7747
  %8064 = vmatpush1.msra.mxu0 %v7746
  %8065 = vmatprep.subr.mxu0 %v7759
  %8066 = vmatpush1.msra.mxu0 %v7758
  %8067 = vmatprep.subr.mxu0 %v7771
  %8068 = vmatpush1.msra.mxu0 %v7770
  %8069 = vmatprep.subr.mxu0 %v7783
  %8070 = vmatpush1.msra.mxu0 %v7782
  %8071 = vmatprep.subr.mxu0 %v7889
  %8072 = vmatpush1.msra.mxu0 %v7886
  %8073 = vmatprep.subr.mxu0 0.0
  %8074 = vmatpush1.msra.mxu0 0.0
  %8075 = vmatprep.subr.mxu0 0.0
  %8076 = vmatpush1.msra.mxu0 0.0
  %8077 = vmatprep.subr.mxu0 0.0
  %8078 = vmatpush1.msra.mxu0 0.0
  %8079 = vmatprep.subr.mxu0 0.0
  %8080 = vmatpush1.msra.mxu0 0.0
  %8081 = vmatprep.subr.mxu0 0.0
  %8082 = vmatpush1.msra.mxu0 0.0
  %8083 = vmatprep.subr.mxu0 0.0
  %8084 = vmatpush1.msra.mxu0 0.0
  %8085 = vmatprep.subr.mxu0 0.0
  %8086 = vmatpush1.msra.mxu0 0.0
  %8087 = vmatprep.subr.mxu0 0.0
  %8088 = vmatpush1.msra.mxu0 0.0
  %8089 = vmatprep.subr.mxu0 0.0
  %8090 = vmatpush1.msra.mxu0 0.0
  %8091 = vmatprep.subr.mxu0 0.0
  %8092 = vmatpush1.msra.mxu0 0.0
  %8093 = vmatprep.subr.mxu0 0.0
  %8094 = vmatpush1.msra.mxu0 0.0
  %8095 = vmatprep.subr.mxu0 0.0
  %8096 = vmatpush1.msra.mxu0 0.0
  %8097 = vmatprep.subr.mxu0 0.0
  %8098 = vmatpush1.msra.mxu0 0.0
  %8099 = vmatprep.subr.mxu0 0.0
  %8100 = vmatpush1.msra.mxu0 0.0
  %8101 = vmatprep.subr.mxu0 0.0
  %8102 = vmatpush1.msra.mxu0 0.0
  %8103 = vmatprep.subr.mxu0 0.0
  %8104 = vmatpush1.msra.mxu0 0.0
  %8105 = vmatprep.subr.mxu0 0.0
  %8106 = vmatpush1.msra.mxu0 0.0
  %8107 = vmatprep.subr.mxu0 0.0
  %8108 = vmatpush1.msra.mxu0 0.0
  %8109 = vmatprep.subr.mxu0 0.0
  %8110 = vmatpush1.msra.mxu0 0.0
  %8111 = vmatprep.subr.mxu0 0.0
  %8112 = vmatpush1.msra.mxu0 0.0
  %8113 = vmatprep.subr.mxu0 0.0
  %8114 = vmatpush1.msra.mxu0 0.0
  %8115 = vmatprep.subr.mxu0 0.0
  %8116 = vmatpush1.msra.mxu0 0.0
  %8117 = vmatprep.subr.mxu0 0.0
  %8118 = vmatpush1.msra.mxu0 0.0
  %8119 = vmatprep.subr.mxu0 0.0
  %8120 = vmatpush1.msra.mxu0 0.0
  %8121 = vmatprep.subr.mxu0 0.0
  %8122 = vmatpush1.msra.mxu0 0.0
  %8123 = vmatprep.subr.mxu0 0.0
  %8124 = vmatpush1.msra.mxu0 0.0
  %8125 = vmatprep.subr.mxu0 0.0
  %8126 = vmatpush1.msra.mxu0 0.0
  %8127 = vmatprep.mubr.f32.mxu0 0.0
  %8128 = vmatmul.mubr.f32.gmra.mrb[0].mxu0 %v7868
  %v8129 = vpop.f32.mrb[0].mxu0
  %v8130 = vadd.f32 %v7826, %v8129
  %v8131 = vpop.f32.mrb[0].mxu0
  %v8132 = vadd.f32 %v7830, %v8131
  %8133 = vmatprep.mubr.f32.mxu0 0.0
  %8134 = vmatmul.mubr.f32.gmra.mrb[0].mxu0 %v7871
  %v8135 = vpop.f32.mrb[0].mxu0
  %v8136 = vadd.f32 %v7826, %v8135
  %v8137 = vpop.f32.mrb[0].mxu0
  %v8138 = vadd.f32 %v7830, %v8137
  %8139 = vdwg.mxu0
  %8140 = vmatprep.subr.mxu0 %v7749
  %8141 = vmatpush1.msra.mxu0 %v7748
  %8142 = vmatprep.subr.mxu0 %v7761
  %8143 = vmatpush1.msra.mxu0 %v7760
  %8144 = vmatprep.subr.mxu0 %v7773
  %8145 = vmatpush1.msra.mxu0 %v7772
  %8146 = vmatprep.subr.mxu0 %v7785
  %8147 = vmatpush1.msra.mxu0 %v7784
  %8148 = vmatprep.subr.mxu0 %v7895
  %8149 = vmatpush1.msra.mxu0 %v7892
  %8150 = vmatprep.subr.mxu0 0.0
  %8151 = vmatpush1.msra.mxu0 0.0
  %8152 = vmatprep.subr.mxu0 0.0
  %8153 = vmatpush1.msra.mxu0 0.0
  %8154 = vmatprep.subr.mxu0 0.0
  %8155 = vmatpush1.msra.mxu0 0.0
  %8156 = vmatprep.subr.mxu0 0.0
  %8157 = vmatpush1.msra.mxu0 0.0
  %8158 = vmatprep.subr.mxu0 0.0
  %8159 = vmatpush1.msra.mxu0 0.0
  %8160 = vmatprep.subr.mxu0 0.0
  %8161 = vmatpush1.msra.mxu0 0.0
  %8162 = vmatprep.subr.mxu0 0.0
  %8163 = vmatpush1.msra.mxu0 0.0
  %8164 = vmatprep.subr.mxu0 0.0
  %8165 = vmatpush1.msra.mxu0 0.0
  %8166 = vmatprep.subr.mxu0 0.0
  %8167 = vmatpush1.msra.mxu0 0.0
  %8168 = vmatprep.subr.mxu0 0.0
  %8169 = vmatpush1.msra.mxu0 0.0
  %8170 = vmatprep.subr.mxu0 0.0
  %8171 = vmatpush1.msra.mxu0 0.0
  %8172 = vmatprep.subr.mxu0 0.0
  %8173 = vmatpush1.msra.mxu0 0.0
  %8174 = vmatprep.subr.mxu0 0.0
  %8175 = vmatpush1.msra.mxu0 0.0
  %8176 = vmatprep.subr.mxu0 0.0
  %8177 = vmatpush1.msra.mxu0 0.0
  %8178 = vmatprep.subr.mxu0 0.0
  %8179 = vmatpush1.msra.mxu0 0.0
  %8180 = vmatprep.subr.mxu0 0.0
  %8181 = vmatpush1.msra.mxu0 0.0
  %8182 = vmatprep.subr.mxu0 0.0
  %8183 = vmatpush1.msra.mxu0 0.0
  %8184 = vmatprep.subr.mxu0 0.0
  %8185 = vmatpush1.msra.mxu0 0.0
  %8186 = vmatprep.subr.mxu0 0.0
  %8187 = vmatpush1.msra.mxu0 0.0
  %8188 = vmatprep.subr.mxu0 0.0
  %8189 = vmatpush1.msra.mxu0 0.0
  %8190 = vmatprep.subr.mxu0 0.0
  %8191 = vmatpush1.msra.mxu0 0.0
  %8192 = vmatprep.subr.mxu0 0.0
  %8193 = vmatpush1.msra.mxu0 0.0
  %8194 = vmatprep.subr.mxu0 0.0
  %8195 = vmatpush1.msra.mxu0 0.0
  %8196 = vmatprep.subr.mxu0 0.0
  %8197 = vmatpush1.msra.mxu0 0.0
  %8198 = vmatprep.subr.mxu0 0.0
  %8199 = vmatpush1.msra.mxu0 0.0
  %8200 = vmatprep.subr.mxu0 0.0
  %8201 = vmatpush1.msra.mxu0 0.0
  %8202 = vmatprep.subr.mxu0 0.0
  %8203 = vmatpush1.msra.mxu0 0.0
  %8204 = vmatprep.mubr.f32.mxu0 0.0
  %8205 = vmatmul.mubr.f32.gmra.mrb[0].mxu0 %v7868
  %v8206 = vpop.f32.mrb[0].mxu0
  %v8207 = vadd.f32 %v7834, %v8206
  %v8208 = vpop.f32.mrb[0].mxu0
  %v8209 = vadd.f32 %v7838, %v8208
  %8210 = vmatprep.mubr.f32.mxu0 0.0
  %8211 = vmatmul.mubr.f32.gmra.mrb[0].mxu0 %v7871
  %v8212 = vpop.f32.mrb[0].mxu0
  %v8213 = vadd.f32 %v7834, %v8212
  %v8214 = vpop.f32.mrb[0].mxu0
  %v8215 = vadd.f32 %v7838, %v8214
  %8216 = vdwg.mxu0
  %8217 = vmatprep.subr.mxu0 %v7751
  %8218 = vmatpush1.msra.mxu0 %v7750
  %8219 = vmatprep.subr.mxu0 %v7763
  %8220 = vmatpush1.msra.mxu0 %v7762
  %8221 = vmatprep.subr.mxu0 %v7775
  %8222 = vmatpush1.msra.mxu0 %v7774
  %8223 = vmatprep.subr.mxu0 %v7787
  %8224 = vmatpush1.msra.mxu0 %v7786
  %8225 = vmatprep.subr.mxu0 %v7901
  %8226 = vmatpush1.msra.mxu0 %v7898
  %8227 = vmatprep.subr.mxu0 0.0
  %8228 = vmatpush1.msra.mxu0 0.0
  %8229 = vmatprep.subr.mxu0 0.0
  %8230 = vmatpush1.msra.mxu0 0.0
  %8231 = vmatprep.subr.mxu0 0.0
  %8232 = vmatpush1.msra.mxu0 0.0
  %8233 = vmatprep.subr.mxu0 0.0
  %8234 = vmatpush1.msra.mxu0 0.0
  %8235 = vmatprep.subr.mxu0 0.0
  %8236 = vmatpush1.msra.mxu0 0.0
  %8237 = vmatprep.subr.mxu0 0.0
  %8238 = vmatpush1.msra.mxu0 0.0
  %8239 = vmatprep.subr.mxu0 0.0
  %8240 = vmatpush1.msra.mxu0 0.0
  %8241 = vmatprep.subr.mxu0 0.0
  %8242 = vmatpush1.msra.mxu0 0.0
  %8243 = vmatprep.subr.mxu0 0.0
  %8244 = vmatpush1.msra.mxu0 0.0
  %8245 = vmatprep.subr.mxu0 0.0
  %8246 = vmatpush1.msra.mxu0 0.0
  %8247 = vmatprep.subr.mxu0 0.0
  %8248 = vmatpush1.msra.mxu0 0.0
  %8249 = vmatprep.subr.mxu0 0.0
  %8250 = vmatpush1.msra.mxu0 0.0
  %8251 = vmatprep.subr.mxu0 0.0
  %8252 = vmatpush1.msra.mxu0 0.0
  %8253 = vmatprep.subr.mxu0 0.0
  %8254 = vmatpush1.msra.mxu0 0.0
  %8255 = vmatprep.subr.mxu0 0.0
  %8256 = vmatpush1.msra.mxu0 0.0
  %8257 = vmatprep.subr.mxu0 0.0
  %8258 = vmatpush1.msra.mxu0 0.0
  %8259 = vmatprep.subr.mxu0 0.0
  %8260 = vmatpush1.msra.mxu0 0.0
  %8261 = vmatprep.subr.mxu0 0.0
  %8262 = vmatpush1.msra.mxu0 0.0
  %8263 = vmatprep.subr.mxu0 0.0
  %8264 = vmatpush1.msra.mxu0 0.0
  %8265 = vmatprep.subr.mxu0 0.0
  %8266 = vmatpush1.msra.mxu0 0.0
  %8267 = vmatprep.subr.mxu0 0.0
  %8268 = vmatpush1.msra.mxu0 0.0
  %8269 = vmatprep.subr.mxu0 0.0
  %8270 = vmatpush1.msra.mxu0 0.0
  %8271 = vmatprep.subr.mxu0 0.0
  %8272 = vmatpush1.msra.mxu0 0.0
  %8273 = vmatprep.subr.mxu0 0.0
  %8274 = vmatpush1.msra.mxu0 0.0
  %8275 = vmatprep.subr.mxu0 0.0
  %8276 = vmatpush1.msra.mxu0 0.0
  %8277 = vmatprep.subr.mxu0 0.0
  %8278 = vmatpush1.msra.mxu0 0.0
  %8279 = vmatprep.subr.mxu0 0.0
  %8280 = vmatpush1.msra.mxu0 0.0
  %8281 = vmatprep.mubr.f32.mxu0 0.0
  %8282 = vmatmul.mubr.f32.gmra.mrb[0].mxu0 %v7868
  %v8283 = vpop.f32.mrb[0].mxu0
  %v8284 = vadd.f32 %v7842, %v8283
  %v8285 = vpop.f32.mrb[0].mxu0
  %v8286 = vadd.f32 %v7846, %v8285
  %8287 = vmatprep.mubr.f32.mxu0 0.0
  %8288 = vmatmul.mubr.f32.gmra.mrb[0].mxu0 %v7871
  %v8289 = vpop.f32.mrb[0].mxu0
  %v8290 = vadd.f32 %v7842, %v8289
  %v8291 = vpop.f32.mrb[0].mxu0
  %v8292 = vadd.f32 %v7846, %v8291
  %8293 = vdwg.mxu0
  %8294 = vmatprep.subr.mxu0 %v7753
  %8295 = vmatpush1.msra.mxu0 %v7752
  %8296 = vmatprep.subr.mxu0 %v7765
  %8297 = vmatpush1.msra.mxu0 %v7764
  %8298 = vmatprep.subr.mxu0 %v7777
  %8299 = vmatpush1.msra.mxu0 %v7776
  %8300 = vmatprep.subr.mxu0 %v7789
  %8301 = vmatpush1.msra.mxu0 %v7788
  %8302 = vmatprep.subr.mxu0 %v7907
  %8303 = vmatpush1.msra.mxu0 %v7904
  %8304 = vmatprep.subr.mxu0 0.0
  %8305 = vmatpush1.msra.mxu0 0.0
  %8306 = vmatprep.subr.mxu0 0.0
  %8307 = vmatpush1.msra.mxu0 0.0
  %8308 = vmatprep.subr.mxu0 0.0
  %8309 = vmatpush1.msra.mxu0 0.0
  %8310 = vmatprep.subr.mxu0 0.0
  %8311 = vmatpush1.msra.mxu0 0.0
  %8312 = vmatprep.subr.mxu0 0.0
  %8313 = vmatpush1.msra.mxu0 0.0
  %8314 = vmatprep.subr.mxu0 0.0
  %8315 = vmatpush1.msra.mxu0 0.0
  %8316 = vmatprep.subr.mxu0 0.0
  %8317 = vmatpush1.msra.mxu0 0.0
  %8318 = vmatprep.subr.mxu0 0.0
  %8319 = vmatpush1.msra.mxu0 0.0
  %8320 = vmatprep.subr.mxu0 0.0
  %8321 = vmatpush1.msra.mxu0 0.0
  %8322 = vmatprep.subr.mxu0 0.0
  %8323 = vmatpush1.msra.mxu0 0.0
  %8324 = vmatprep.subr.mxu0 0.0
  %8325 = vmatpush1.msra.mxu0 0.0
  %8326 = vmatprep.subr.mxu0 0.0
  %8327 = vmatpush1.msra.mxu0 0.0
  %8328 = vmatprep.subr.mxu0 0.0
  %8329 = vmatpush1.msra.mxu0 0.0
  %8330 = vmatprep.subr.mxu0 0.0
  %8331 = vmatpush1.msra.mxu0 0.0
  %8332 = vmatprep.subr.mxu0 0.0
  %8333 = vmatpush1.msra.mxu0 0.0
  %8334 = vmatprep.subr.mxu0 0.0
  %8335 = vmatpush1.msra.mxu0 0.0
  %8336 = vmatprep.subr.mxu0 0.0
  %8337 = vmatpush1.msra.mxu0 0.0
  %8338 = vmatprep.subr.mxu0 0.0
  %8339 = vmatpush1.msra.mxu0 0.0
  %8340 = vmatprep.subr.mxu0 0.0
  %8341 = vmatpush1.msra.mxu0 0.0
  %8342 = vmatprep.subr.mxu0 0.0
  %8343 = vmatpush1.msra.mxu0 0.0
  %8344 = vmatprep.subr.mxu0 0.0
  %8345 = vmatpush1.msra.mxu0 0.0
  %8346 = vmatprep.subr.mxu0 0.0
  %8347 = vmatpush1.msra.mxu0 0.0
  %8348 = vmatprep.subr.mxu0 0.0
  %8349 = vmatpush1.msra.mxu0 0.0
  %8350 = vmatprep.subr.mxu0 0.0
  %8351 = vmatpush1.msra.mxu0 0.0
  %8352 = vmatprep.subr.mxu0 0.0
  %8353 = vmatpush1.msra.mxu0 0.0
  %8354 = vmatprep.subr.mxu0 0.0
  %8355 = vmatpush1.msra.mxu0 0.0
  %8356 = vmatprep.subr.mxu0 0.0
  %8357 = vmatpush1.msra.mxu0 0.0
  %8358 = vmatprep.mubr.f32.mxu0 0.0
  %8359 = vmatmul.mubr.f32.gmra.mrb[0].mxu0 %v7868
  %v8360 = vpop.f32.mrb[0].mxu0
  %v8361 = vadd.f32 %v7850, %v8360
  %v8362 = vpop.f32.mrb[0].mxu0
  %v8363 = vadd.f32 %v7854, %v8362
  %8364 = vmatprep.mubr.f32.mxu0 0.0
  %8365 = vmatmul.mubr.f32.gmra.mrb[0].mxu0 %v7871
  %v8366 = vpop.f32.mrb[0].mxu0
  %v8367 = vadd.f32 %v7850, %v8366
  %v8368 = vpop.f32.mrb[0].mxu0
  %v8369 = vadd.f32 %v7854, %v8368
  %8370 = vdwg.mxu0
  %8371 = vmatprep.subr.mxu0 0.0
  %8372 = vmatpush1.xpose.msra.mxu0 %v8130
  %8373 = vmatprep.subr.mxu0 0.0
  %8374 = vmatpush1.xpose.msra.mxu0 %v8136
  %8375 = vmatprep.subr.mxu0 0.0
  %8376 = vmatpush1.xpose.msra.mxu0 0.0
  %8377 = vmatprep.subr.mxu0 0.0
  %8378 = vmatpush1.xpose.msra.mxu0 0.0
  %8379 = vmatprep.subr.mxu0 0.0
  %8380 = vmatpush1.xpose.msra.mxu0 0.0
  %8381 = vmatprep.subr.mxu0 0.0
  %8382 = vmatpush1.xpose.msra.mxu0 0.0
  %8383 = vmatprep.subr.mxu0 0.0
  %8384 = vmatpush1.xpose.msra.mxu0 0.0
  %8385 = vmatprep.subr.mxu0 0.0
  %8386 = vmatpush1.xpose.msra.mxu0 0.0
  %8387 = vmatprep.subr.mxu0 0.0
  %8388 = vmatpush1.xpose.msra.mxu0 0.0
  %8389 = vmatprep.subr.mxu0 0.0
  %8390 = vmatpush1.xpose.msra.mxu0 0.0
  %8391 = vmatprep.subr.mxu0 0.0
  %8392 = vmatpush1.xpose.msra.mxu0 0.0
  %8393 = vmatprep.subr.mxu0 0.0
  %8394 = vmatpush1.xpose.msra.mxu0 0.0
  %8395 = vmatprep.subr.mxu0 0.0
  %8396 = vmatpush1.xpose.msra.mxu0 0.0
  %8397 = vmatprep.subr.mxu0 0.0
  %8398 = vmatpush1.xpose.msra.mxu0 0.0
  %8399 = vmatprep.subr.mxu0 0.0
  %8400 = vmatpush1.xpose.msra.mxu0 0.0
  %8401 = vmatprep.subr.mxu0 0.0
  %8402 = vmatpush1.xpose.msra.mxu0 0.0
  %8403 = vmatprep.subr.mxu0 0.0
  %8404 = vmatpush1.xpose.msra.mxu0 0.0
  %8405 = vmatprep.subr.mxu0 0.0
  %8406 = vmatpush1.xpose.msra.mxu0 0.0
  %8407 = vmatprep.subr.mxu0 0.0
  %8408 = vmatpush1.xpose.msra.mxu0 0.0
  %8409 = vmatprep.subr.mxu0 0.0
  %8410 = vmatpush1.xpose.msra.mxu0 0.0
  %8411 = vmatprep.subr.mxu0 0.0
  %8412 = vmatpush1.xpose.msra.mxu0 0.0
  %8413 = vmatprep.subr.mxu0 0.0
  %8414 = vmatpush1.xpose.msra.mxu0 0.0
  %8415 = vmatprep.subr.mxu0 0.0
  %8416 = vmatpush1.xpose.msra.mxu0 0.0
  %8417 = vmatprep.subr.mxu0 0.0
  %8418 = vmatpush1.xpose.msra.mxu0 0.0
  %8419 = vmatprep.subr.mxu0 0.0
  %8420 = vmatpush1.xpose.msra.mxu0 0.0
  %8421 = vmatprep.subr.mxu0 0.0
  %8422 = vmatpush1.xpose.msra.mxu0 0.0
  %8423 = vmatprep.subr.mxu0 0.0
  %8424 = vmatpush1.xpose.msra.mxu0 0.0
  %8425 = vmatprep.subr.mxu0 0.0
  %8426 = vmatpush1.xpose.msra.mxu0 0.0
  %8427 = vmatprep.subr.mxu0 0.0
  %8428 = vmatpush1.xpose.msra.mxu0 0.0
  %8429 = vmatprep.subr.mxu0 0.0
  %8430 = vmatpush1.xpose.msra.mxu0 0.0
  %8431 = vmatprep.subr.mxu0 0.0
  %8432 = vmatpush1.xpose.msra.mxu0 0.0
  %8433 = vmatprep.subr.mxu0 0.0
  %8434 = vmatpush1.xpose.msra.mxu0 0.0
  %8435 = vmatprep.mubr.f32.mxu0 0.0
  %8436 = vmatmul.mubr.f32.gmra.mrb[0].mxu0 %v7976
  %v8437 = vpop.f32.mrb[0].mxu0
  %v8438 = vadd.f32 %v63, %v8437
  %v8439 = vpop.f32.mrb[0].mxu0
  %8440 = vmatprep.mubr.f32.mxu0 0.0
  %8441 = vmatmul.mubr.f32.gmra.mrb[0].mxu0 %v7982
  %v8442 = vpop.f32.mrb[0].mxu0
  %v8443 = vadd.f32 %v64, %v8442
  %v8444 = vpop.f32.mrb[0].mxu0
  %8445 = vdwg.mxu0
  %v8446 = vsel %vm869, %v8438, -inf
  %8447 = vmax.xlane.f32.xlu0 %v8446
  %v8448 = vpop.xlane.xlu0 %8447
  %v8449 = vsel %vm869, %v8443, -inf
  %8450 = vmax.xlane.f32.xlu0 %v8449
  %v8451 = vpop.xlane.xlu0 %8450
  %v8452 = vsub.f32 %v8438, %v8448
  %v8453 = vsub.f32 %v8443, %v8451
  %v8454 = vmul.f32 %v8452, 1.442695
  %v8455 = vpow.pop %v8454
  %v8456 = vmul.f32 %v8453, 1.442695
  %v8457 = vpow.pop %v8456
  %v8458 = vsel %vm869, %v8455, 0.0
  %8459 = vadd.xlane.f32.xlu0 %v8458
  %v8460 = vpop.xlane.xlu0 %8459
  %v8461 = vsel %vm869, %v8457, 0.0
  %8462 = vadd.xlane.f32.xlu0 %v8461
  %v8463 = vpop.xlane.xlu0 %8462
  %v8464 = vrcp.pop %v8460
  %v8465 = vrcp.pop %v8463
  %v8466 = vmul.f32 %v8455, %v8464
  %v8467 = vmul.f32 %v8457, %v8465
  %v8469 = vsel %vm869, %v8466, 0
  %v8472 = vsel %vm869, %v8467, 0
  %8474 = vmatprep.subr.mxu0 0.0
  %8475 = vmatpush1.msra.mxu0 %v8284
  %8476 = vmatprep.subr.mxu0 0.0
  %8477 = vmatpush1.msra.mxu0 %v8290
  %8478 = vmatprep.subr.mxu0 0.0
  %8479 = vmatpush1.msra.mxu0 0.0
  %8480 = vmatprep.subr.mxu0 0.0
  %8481 = vmatpush1.msra.mxu0 0.0
  %8482 = vmatprep.subr.mxu0 0.0
  %8483 = vmatpush1.msra.mxu0 0.0
  %8484 = vmatprep.subr.mxu0 0.0
  %8485 = vmatpush1.msra.mxu0 0.0
  %8486 = vmatprep.subr.mxu0 0.0
  %8487 = vmatpush1.msra.mxu0 0.0
  %8488 = vmatprep.subr.mxu0 0.0
  %8489 = vmatpush1.msra.mxu0 0.0
  %8490 = vmatprep.subr.mxu0 0.0
  %8491 = vmatpush1.msra.mxu0 0.0
  %8492 = vmatprep.subr.mxu0 0.0
  %8493 = vmatpush1.msra.mxu0 0.0
  %8494 = vmatprep.subr.mxu0 0.0
  %8495 = vmatpush1.msra.mxu0 0.0
  %8496 = vmatprep.subr.mxu0 0.0
  %8497 = vmatpush1.msra.mxu0 0.0
  %8498 = vmatprep.subr.mxu0 0.0
  %8499 = vmatpush1.msra.mxu0 0.0
  %8500 = vmatprep.subr.mxu0 0.0
  %8501 = vmatpush1.msra.mxu0 0.0
  %8502 = vmatprep.subr.mxu0 0.0
  %8503 = vmatpush1.msra.mxu0 0.0
  %8504 = vmatprep.subr.mxu0 0.0
  %8505 = vmatpush1.msra.mxu0 0.0
  %8506 = vmatprep.subr.mxu0 0.0
  %8507 = vmatpush1.msra.mxu0 0.0
  %8508 = vmatprep.subr.mxu0 0.0
  %8509 = vmatpush1.msra.mxu0 0.0
  %8510 = vmatprep.subr.mxu0 0.0
  %8511 = vmatpush1.msra.mxu0 0.0
  %8512 = vmatprep.subr.mxu0 0.0
  %8513 = vmatpush1.msra.mxu0 0.0
  %8514 = vmatprep.subr.mxu0 0.0
  %8515 = vmatpush1.msra.mxu0 0.0
  %8516 = vmatprep.subr.mxu0 0.0
  %8517 = vmatpush1.msra.mxu0 0.0
  %8518 = vmatprep.subr.mxu0 0.0
  %8519 = vmatpush1.msra.mxu0 0.0
  %8520 = vmatprep.subr.mxu0 0.0
  %8521 = vmatpush1.msra.mxu0 0.0
  %8522 = vmatprep.subr.mxu0 0.0
  %8523 = vmatpush1.msra.mxu0 0.0
  %8524 = vmatprep.subr.mxu0 0.0
  %8525 = vmatpush1.msra.mxu0 0.0
  %8526 = vmatprep.subr.mxu0 0.0
  %8527 = vmatpush1.msra.mxu0 0.0
  %8528 = vmatprep.subr.mxu0 0.0
  %8529 = vmatpush1.msra.mxu0 0.0
  %8530 = vmatprep.subr.mxu0 0.0
  %8531 = vmatpush1.msra.mxu0 0.0
  %8532 = vmatprep.subr.mxu0 0.0
  %8533 = vmatpush1.msra.mxu0 0.0
  %8534 = vmatprep.subr.mxu0 0.0
  %8535 = vmatpush1.msra.mxu0 0.0
  %8536 = vmatprep.subr.mxu0 0.0
  %8537 = vmatpush1.msra.mxu0 0.0
  %8538 = vmatprep.mubr.f32.mxu0 0.0
  %8539 = vmatmul.mubr.f32.gmra.mrb[0].mxu0 %v8469
  %v8540 = vpop.f32.mrb[0].mxu0
  %v8541 = vadd.f32 0.0, %v8540
  %v8542 = vpop.f32.mrb[0].mxu0
  %8543 = vmatprep.mubr.f32.mxu0 0.0
  %8544 = vmatmul.mubr.f32.gmra.mrb[0].mxu0 %v8472
  %v8545 = vpop.f32.mrb[0].mxu0
  %v8546 = vadd.f32 0.0, %v8545
  %v8547 = vpop.f32.mrb[0].mxu0
  %8548 = vdwg.mxu0
  %8549 = vmatprep.subr.mxu0 0.0
  %8550 = vmatpush1.xpose.msra.mxu0 %v8132
  %8551 = vmatprep.subr.mxu0 0.0
  %8552 = vmatpush1.xpose.msra.mxu0 %v8138
  %8553 = vmatprep.subr.mxu0 0.0
  %8554 = vmatpush1.xpose.msra.mxu0 0.0
  %8555 = vmatprep.subr.mxu0 0.0
  %8556 = vmatpush1.xpose.msra.mxu0 0.0
  %8557 = vmatprep.subr.mxu0 0.0
  %8558 = vmatpush1.xpose.msra.mxu0 0.0
  %8559 = vmatprep.subr.mxu0 0.0
  %8560 = vmatpush1.xpose.msra.mxu0 0.0
  %8561 = vmatprep.subr.mxu0 0.0
  %8562 = vmatpush1.xpose.msra.mxu0 0.0
  %8563 = vmatprep.subr.mxu0 0.0
  %8564 = vmatpush1.xpose.msra.mxu0 0.0
  %8565 = vmatprep.subr.mxu0 0.0
  %8566 = vmatpush1.xpose.msra.mxu0 0.0
  %8567 = vmatprep.subr.mxu0 0.0
  %8568 = vmatpush1.xpose.msra.mxu0 0.0
  %8569 = vmatprep.subr.mxu0 0.0
  %8570 = vmatpush1.xpose.msra.mxu0 0.0
  %8571 = vmatprep.subr.mxu0 0.0
  %8572 = vmatpush1.xpose.msra.mxu0 0.0
  %8573 = vmatprep.subr.mxu0 0.0
  %8574 = vmatpush1.xpose.msra.mxu0 0.0
  %8575 = vmatprep.subr.mxu0 0.0
  %8576 = vmatpush1.xpose.msra.mxu0 0.0
  %8577 = vmatprep.subr.mxu0 0.0
  %8578 = vmatpush1.xpose.msra.mxu0 0.0
  %8579 = vmatprep.subr.mxu0 0.0
  %8580 = vmatpush1.xpose.msra.mxu0 0.0
  %8581 = vmatprep.subr.mxu0 0.0
  %8582 = vmatpush1.xpose.msra.mxu0 0.0
  %8583 = vmatprep.subr.mxu0 0.0
  %8584 = vmatpush1.xpose.msra.mxu0 0.0
  %8585 = vmatprep.subr.mxu0 0.0
  %8586 = vmatpush1.xpose.msra.mxu0 0.0
  %8587 = vmatprep.subr.mxu0 0.0
  %8588 = vmatpush1.xpose.msra.mxu0 0.0
  %8589 = vmatprep.subr.mxu0 0.0
  %8590 = vmatpush1.xpose.msra.mxu0 0.0
  %8591 = vmatprep.subr.mxu0 0.0
  %8592 = vmatpush1.xpose.msra.mxu0 0.0
  %8593 = vmatprep.subr.mxu0 0.0
  %8594 = vmatpush1.xpose.msra.mxu0 0.0
  %8595 = vmatprep.subr.mxu0 0.0
  %8596 = vmatpush1.xpose.msra.mxu0 0.0
  %8597 = vmatprep.subr.mxu0 0.0
  %8598 = vmatpush1.xpose.msra.mxu0 0.0
  %8599 = vmatprep.subr.mxu0 0.0
  %8600 = vmatpush1.xpose.msra.mxu0 0.0
  %8601 = vmatprep.subr.mxu0 0.0
  %8602 = vmatpush1.xpose.msra.mxu0 0.0
  %8603 = vmatprep.subr.mxu0 0.0
  %8604 = vmatpush1.xpose.msra.mxu0 0.0
  %8605 = vmatprep.subr.mxu0 0.0
  %8606 = vmatpush1.xpose.msra.mxu0 0.0
  %8607 = vmatprep.subr.mxu0 0.0
  %8608 = vmatpush1.xpose.msra.mxu0 0.0
  %8609 = vmatprep.subr.mxu0 0.0
  %8610 = vmatpush1.xpose.msra.mxu0 0.0
  %8611 = vmatprep.subr.mxu0 0.0
  %8612 = vmatpush1.xpose.msra.mxu0 0.0
  %8613 = vmatprep.mubr.f32.mxu0 0.0
  %8614 = vmatmul.mubr.f32.gmra.mrb[0].mxu0 %v7978
  %v8615 = vpop.f32.mrb[0].mxu0
  %v8616 = vadd.f32 %v63, %v8615
  %v8617 = vpop.f32.mrb[0].mxu0
  %8618 = vmatprep.mubr.f32.mxu0 0.0
  %8619 = vmatmul.mubr.f32.gmra.mrb[0].mxu0 %v7984
  %v8620 = vpop.f32.mrb[0].mxu0
  %v8621 = vadd.f32 %v64, %v8620
  %v8622 = vpop.f32.mrb[0].mxu0
  %8623 = vdwg.mxu0
  %v8624 = vsel %vm869, %v8616, -inf
  %8625 = vmax.xlane.f32.xlu0 %v8624
  %v8626 = vpop.xlane.xlu0 %8625
  %v8627 = vsel %vm869, %v8621, -inf
  %8628 = vmax.xlane.f32.xlu0 %v8627
  %v8629 = vpop.xlane.xlu0 %8628
  %v8630 = vsub.f32 %v8616, %v8626
  %v8631 = vsub.f32 %v8621, %v8629
  %v8632 = vmul.f32 %v8630, 1.442695
  %v8633 = vpow.pop %v8632
  %v8634 = vmul.f32 %v8631, 1.442695
  %v8635 = vpow.pop %v8634
  %v8636 = vsel %vm869, %v8633, 0.0
  %8637 = vadd.xlane.f32.xlu0 %v8636
  %v8638 = vpop.xlane.xlu0 %8637
  %v8639 = vsel %vm869, %v8635, 0.0
  %8640 = vadd.xlane.f32.xlu0 %v8639
  %v8641 = vpop.xlane.xlu0 %8640
  %v8642 = vrcp.pop %v8638
  %v8643 = vrcp.pop %v8641
  %v8644 = vmul.f32 %v8633, %v8642
  %v8645 = vmul.f32 %v8635, %v8643
  %v8647 = vsel %vm869, %v8644, 0
  %v8650 = vsel %vm869, %v8645, 0
  %8652 = vmatprep.subr.mxu0 0.0
  %8653 = vmatpush1.msra.mxu0 %v8286
  %8654 = vmatprep.subr.mxu0 0.0
  %8655 = vmatpush1.msra.mxu0 %v8292
  %8656 = vmatprep.subr.mxu0 0.0
  %8657 = vmatpush1.msra.mxu0 0.0
  %8658 = vmatprep.subr.mxu0 0.0
  %8659 = vmatpush1.msra.mxu0 0.0
  %8660 = vmatprep.subr.mxu0 0.0
  %8661 = vmatpush1.msra.mxu0 0.0
  %8662 = vmatprep.subr.mxu0 0.0
  %8663 = vmatpush1.msra.mxu0 0.0
  %8664 = vmatprep.subr.mxu0 0.0
  %8665 = vmatpush1.msra.mxu0 0.0
  %8666 = vmatprep.subr.mxu0 0.0
  %8667 = vmatpush1.msra.mxu0 0.0
  %8668 = vmatprep.subr.mxu0 0.0
  %8669 = vmatpush1.msra.mxu0 0.0
  %8670 = vmatprep.subr.mxu0 0.0
  %8671 = vmatpush1.msra.mxu0 0.0
  %8672 = vmatprep.subr.mxu0 0.0
  %8673 = vmatpush1.msra.mxu0 0.0
  %8674 = vmatprep.subr.mxu0 0.0
  %8675 = vmatpush1.msra.mxu0 0.0
  %8676 = vmatprep.subr.mxu0 0.0
  %8677 = vmatpush1.msra.mxu0 0.0
  %8678 = vmatprep.subr.mxu0 0.0
  %8679 = vmatpush1.msra.mxu0 0.0
  %8680 = vmatprep.subr.mxu0 0.0
  %8681 = vmatpush1.msra.mxu0 0.0
  %8682 = vmatprep.subr.mxu0 0.0
  %8683 = vmatpush1.msra.mxu0 0.0
  %8684 = vmatprep.subr.mxu0 0.0
  %8685 = vmatpush1.msra.mxu0 0.0
  %8686 = vmatprep.subr.mxu0 0.0
  %8687 = vmatpush1.msra.mxu0 0.0
  %8688 = vmatprep.subr.mxu0 0.0
  %8689 = vmatpush1.msra.mxu0 0.0
  %8690 = vmatprep.subr.mxu0 0.0
  %8691 = vmatpush1.msra.mxu0 0.0
  %8692 = vmatprep.subr.mxu0 0.0
  %8693 = vmatpush1.msra.mxu0 0.0
  %8694 = vmatprep.subr.mxu0 0.0
  %8695 = vmatpush1.msra.mxu0 0.0
  %8696 = vmatprep.subr.mxu0 0.0
  %8697 = vmatpush1.msra.mxu0 0.0
  %8698 = vmatprep.subr.mxu0 0.0
  %8699 = vmatpush1.msra.mxu0 0.0
  %8700 = vmatprep.subr.mxu0 0.0
  %8701 = vmatpush1.msra.mxu0 0.0
  %8702 = vmatprep.subr.mxu0 0.0
  %8703 = vmatpush1.msra.mxu0 0.0
  %8704 = vmatprep.subr.mxu0 0.0
  %8705 = vmatpush1.msra.mxu0 0.0
  %8706 = vmatprep.subr.mxu0 0.0
  %8707 = vmatpush1.msra.mxu0 0.0
  %8708 = vmatprep.subr.mxu0 0.0
  %8709 = vmatpush1.msra.mxu0 0.0
  %8710 = vmatprep.subr.mxu0 0.0
  %8711 = vmatpush1.msra.mxu0 0.0
  %8712 = vmatprep.subr.mxu0 0.0
  %8713 = vmatpush1.msra.mxu0 0.0
  %8714 = vmatprep.subr.mxu0 0.0
  %8715 = vmatpush1.msra.mxu0 0.0
  %8716 = vmatprep.mubr.f32.mxu0 0.0
  %8717 = vmatmul.mubr.f32.gmra.mrb[0].mxu0 %v8647
  %v8718 = vpop.f32.mrb[0].mxu0
  %v8719 = vadd.f32 0.0, %v8718
  %v8720 = vpop.f32.mrb[0].mxu0
  %8721 = vmatprep.mubr.f32.mxu0 0.0
  %8722 = vmatmul.mubr.f32.gmra.mrb[0].mxu0 %v8650
  %v8723 = vpop.f32.mrb[0].mxu0
  %v8724 = vadd.f32 0.0, %v8723
  %v8725 = vpop.f32.mrb[0].mxu0
  %8726 = vdwg.mxu0
  %8727 = vmatprep.subr.mxu0 0.0
  %8728 = vmatpush1.xpose.msra.mxu0 %v8207
  %8729 = vmatprep.subr.mxu0 0.0
  %8730 = vmatpush1.xpose.msra.mxu0 %v8213
  %8731 = vmatprep.subr.mxu0 0.0
  %8732 = vmatpush1.xpose.msra.mxu0 0.0
  %8733 = vmatprep.subr.mxu0 0.0
  %8734 = vmatpush1.xpose.msra.mxu0 0.0
  %8735 = vmatprep.subr.mxu0 0.0
  %8736 = vmatpush1.xpose.msra.mxu0 0.0
  %8737 = vmatprep.subr.mxu0 0.0
  %8738 = vmatpush1.xpose.msra.mxu0 0.0
  %8739 = vmatprep.subr.mxu0 0.0
  %8740 = vmatpush1.xpose.msra.mxu0 0.0
  %8741 = vmatprep.subr.mxu0 0.0
  %8742 = vmatpush1.xpose.msra.mxu0 0.0
  %8743 = vmatprep.subr.mxu0 0.0
  %8744 = vmatpush1.xpose.msra.mxu0 0.0
  %8745 = vmatprep.subr.mxu0 0.0
  %8746 = vmatpush1.xpose.msra.mxu0 0.0
  %8747 = vmatprep.subr.mxu0 0.0
  %8748 = vmatpush1.xpose.msra.mxu0 0.0
  %8749 = vmatprep.subr.mxu0 0.0
  %8750 = vmatpush1.xpose.msra.mxu0 0.0
  %8751 = vmatprep.subr.mxu0 0.0
  %8752 = vmatpush1.xpose.msra.mxu0 0.0
  %8753 = vmatprep.subr.mxu0 0.0
  %8754 = vmatpush1.xpose.msra.mxu0 0.0
  %8755 = vmatprep.subr.mxu0 0.0
  %8756 = vmatpush1.xpose.msra.mxu0 0.0
  %8757 = vmatprep.subr.mxu0 0.0
  %8758 = vmatpush1.xpose.msra.mxu0 0.0
  %8759 = vmatprep.subr.mxu0 0.0
  %8760 = vmatpush1.xpose.msra.mxu0 0.0
  %8761 = vmatprep.subr.mxu0 0.0
  %8762 = vmatpush1.xpose.msra.mxu0 0.0
  %8763 = vmatprep.subr.mxu0 0.0
  %8764 = vmatpush1.xpose.msra.mxu0 0.0
  %8765 = vmatprep.subr.mxu0 0.0
  %8766 = vmatpush1.xpose.msra.mxu0 0.0
  %8767 = vmatprep.subr.mxu0 0.0
  %8768 = vmatpush1.xpose.msra.mxu0 0.0
  %8769 = vmatprep.subr.mxu0 0.0
  %8770 = vmatpush1.xpose.msra.mxu0 0.0
  %8771 = vmatprep.subr.mxu0 0.0
  %8772 = vmatpush1.xpose.msra.mxu0 0.0
  %8773 = vmatprep.subr.mxu0 0.0
  %8774 = vmatpush1.xpose.msra.mxu0 0.0
  %8775 = vmatprep.subr.mxu0 0.0
  %8776 = vmatpush1.xpose.msra.mxu0 0.0
  %8777 = vmatprep.subr.mxu0 0.0
  %8778 = vmatpush1.xpose.msra.mxu0 0.0
  %8779 = vmatprep.subr.mxu0 0.0
  %8780 = vmatpush1.xpose.msra.mxu0 0.0
  %8781 = vmatprep.subr.mxu0 0.0
  %8782 = vmatpush1.xpose.msra.mxu0 0.0
  %8783 = vmatprep.subr.mxu0 0.0
  %8784 = vmatpush1.xpose.msra.mxu0 0.0
  %8785 = vmatprep.subr.mxu0 0.0
  %8786 = vmatpush1.xpose.msra.mxu0 0.0
  %8787 = vmatprep.subr.mxu0 0.0
  %8788 = vmatpush1.xpose.msra.mxu0 0.0
  %8789 = vmatprep.subr.mxu0 0.0
  %8790 = vmatpush1.xpose.msra.mxu0 0.0
  %8791 = vmatprep.mubr.f32.mxu0 0.0
  %8792 = vmatmul.mubr.f32.gmra.mrb[0].mxu0 %v8053
  %v8793 = vpop.f32.mrb[0].mxu0
  %v8794 = vadd.f32 %v63, %v8793
  %v8795 = vpop.f32.mrb[0].mxu0
  %8796 = vmatprep.mubr.f32.mxu0 0.0
  %8797 = vmatmul.mubr.f32.gmra.mrb[0].mxu0 %v8059
  %v8798 = vpop.f32.mrb[0].mxu0
  %v8799 = vadd.f32 %v64, %v8798
  %v8800 = vpop.f32.mrb[0].mxu0
  %8801 = vdwg.mxu0
  %v8802 = vsel %vm869, %v8794, -inf
  %8803 = vmax.xlane.f32.xlu0 %v8802
  %v8804 = vpop.xlane.xlu0 %8803
  %v8805 = vsel %vm869, %v8799, -inf
  %8806 = vmax.xlane.f32.xlu0 %v8805
  %v8807 = vpop.xlane.xlu0 %8806
  %v8808 = vsub.f32 %v8794, %v8804
  %v8809 = vsub.f32 %v8799, %v8807
  %v8810 = vmul.f32 %v8808, 1.442695
  %v8811 = vpow.pop %v8810
  %v8812 = vmul.f32 %v8809, 1.442695
  %v8813 = vpow.pop %v8812
  %v8814 = vsel %vm869, %v8811, 0.0
  %8815 = vadd.xlane.f32.xlu0 %v8814
  %v8816 = vpop.xlane.xlu0 %8815
  %v8817 = vsel %vm869, %v8813, 0.0
  %8818 = vadd.xlane.f32.xlu0 %v8817
  %v8819 = vpop.xlane.xlu0 %8818
  %v8820 = vrcp.pop %v8816
  %v8821 = vrcp.pop %v8819
  %v8822 = vmul.f32 %v8811, %v8820
  %v8823 = vmul.f32 %v8813, %v8821
  %v8825 = vsel %vm869, %v8822, 0
  %v8828 = vsel %vm869, %v8823, 0
  %8830 = vmatprep.subr.mxu0 0.0
  %8831 = vmatpush1.msra.mxu0 %v8361
  %8832 = vmatprep.subr.mxu0 0.0
  %8833 = vmatpush1.msra.mxu0 %v8367
  %8834 = vmatprep.subr.mxu0 0.0
  %8835 = vmatpush1.msra.mxu0 0.0
  %8836 = vmatprep.subr.mxu0 0.0
  %8837 = vmatpush1.msra.mxu0 0.0
  %8838 = vmatprep.subr.mxu0 0.0
  %8839 = vmatpush1.msra.mxu0 0.0
  %8840 = vmatprep.subr.mxu0 0.0
  %8841 = vmatpush1.msra.mxu0 0.0
  %8842 = vmatprep.subr.mxu0 0.0
  %8843 = vmatpush1.msra.mxu0 0.0
  %8844 = vmatprep.subr.mxu0 0.0
  %8845 = vmatpush1.msra.mxu0 0.0
  %8846 = vmatprep.subr.mxu0 0.0
  %8847 = vmatpush1.msra.mxu0 0.0
  %8848 = vmatprep.subr.mxu0 0.0
  %8849 = vmatpush1.msra.mxu0 0.0
  %8850 = vmatprep.subr.mxu0 0.0
  %8851 = vmatpush1.msra.mxu0 0.0
  %8852 = vmatprep.subr.mxu0 0.0
  %8853 = vmatpush1.msra.mxu0 0.0
  %8854 = vmatprep.subr.mxu0 0.0
  %8855 = vmatpush1.msra.mxu0 0.0
  %8856 = vmatprep.subr.mxu0 0.0
  %8857 = vmatpush1.msra.mxu0 0.0
  %8858 = vmatprep.subr.mxu0 0.0
  %8859 = vmatpush1.msra.mxu0 0.0
  %8860 = vmatprep.subr.mxu0 0.0
  %8861 = vmatpush1.msra.mxu0 0.0
  %8862 = vmatprep.subr.mxu0 0.0
  %8863 = vmatpush1.msra.mxu0 0.0
  %8864 = vmatprep.subr.mxu0 0.0
  %8865 = vmatpush1.msra.mxu0 0.0
  %8866 = vmatprep.subr.mxu0 0.0
  %8867 = vmatpush1.msra.mxu0 0.0
  %8868 = vmatprep.subr.mxu0 0.0
  %8869 = vmatpush1.msra.mxu0 0.0
  %8870 = vmatprep.subr.mxu0 0.0
  %8871 = vmatpush1.msra.mxu0 0.0
  %8872 = vmatprep.subr.mxu0 0.0
  %8873 = vmatpush1.msra.mxu0 0.0
  %8874 = vmatprep.subr.mxu0 0.0
  %8875 = vmatpush1.msra.mxu0 0.0
  %8876 = vmatprep.subr.mxu0 0.0
  %8877 = vmatpush1.msra.mxu0 0.0
  %8878 = vmatprep.subr.mxu0 0.0
  %8879 = vmatpush1.msra.mxu0 0.0
  %8880 = vmatprep.subr.mxu0 0.0
  %8881 = vmatpush1.msra.mxu0 0.0
  %8882 = vmatprep.subr.mxu0 0.0
  %8883 = vmatpush1.msra.mxu0 0.0
  %8884 = vmatprep.subr.mxu0 0.0
  %8885 = vmatpush1.msra.mxu0 0.0
  %8886 = vmatprep.subr.mxu0 0.0
  %8887 = vmatpush1.msra.mxu0 0.0
  %8888 = vmatprep.subr.mxu0 0.0
  %8889 = vmatpush1.msra.mxu0 0.0
  %8890 = vmatprep.subr.mxu0 0.0
  %8891 = vmatpush1.msra.mxu0 0.0
  %8892 = vmatprep.subr.mxu0 0.0
  %8893 = vmatpush1.msra.mxu0 0.0
  %8894 = vmatprep.mubr.f32.mxu0 0.0
  %8895 = vmatmul.mubr.f32.gmra.mrb[0].mxu0 %v8825
  %v8896 = vpop.f32.mrb[0].mxu0
  %v8897 = vadd.f32 0.0, %v8896
  %v8898 = vpop.f32.mrb[0].mxu0
  %8899 = vmatprep.mubr.f32.mxu0 0.0
  %8900 = vmatmul.mubr.f32.gmra.mrb[0].mxu0 %v8828
  %v8901 = vpop.f32.mrb[0].mxu0
  %v8902 = vadd.f32 0.0, %v8901
  %v8903 = vpop.f32.mrb[0].mxu0
  %8904 = vdwg.mxu0
  %8905 = vmatprep.subr.mxu0 0.0
  %8906 = vmatpush1.xpose.msra.mxu0 %v8209
  %8907 = vmatprep.subr.mxu0 0.0
  %8908 = vmatpush1.xpose.msra.mxu0 %v8215
  %8909 = vmatprep.subr.mxu0 0.0
  %8910 = vmatpush1.xpose.msra.mxu0 0.0
  %8911 = vmatprep.subr.mxu0 0.0
  %8912 = vmatpush1.xpose.msra.mxu0 0.0
  %8913 = vmatprep.subr.mxu0 0.0
  %8914 = vmatpush1.xpose.msra.mxu0 0.0
  %8915 = vmatprep.subr.mxu0 0.0
  %8916 = vmatpush1.xpose.msra.mxu0 0.0
  %8917 = vmatprep.subr.mxu0 0.0
  %8918 = vmatpush1.xpose.msra.mxu0 0.0
  %8919 = vmatprep.subr.mxu0 0.0
  %8920 = vmatpush1.xpose.msra.mxu0 0.0
  %8921 = vmatprep.subr.mxu0 0.0
  %8922 = vmatpush1.xpose.msra.mxu0 0.0
  %8923 = vmatprep.subr.mxu0 0.0
  %8924 = vmatpush1.xpose.msra.mxu0 0.0
  %8925 = vmatprep.subr.mxu0 0.0
  %8926 = vmatpush1.xpose.msra.mxu0 0.0
  %8927 = vmatprep.subr.mxu0 0.0
  %8928 = vmatpush1.xpose.msra.mxu0 0.0
  %8929 = vmatprep.subr.mxu0 0.0
  %8930 = vmatpush1.xpose.msra.mxu0 0.0
  %8931 = vmatprep.subr.mxu0 0.0
  %8932 = vmatpush1.xpose.msra.mxu0 0.0
  %8933 = vmatprep.subr.mxu0 0.0
  %8934 = vmatpush1.xpose.msra.mxu0 0.0
  %8935 = vmatprep.subr.mxu0 0.0
  %8936 = vmatpush1.xpose.msra.mxu0 0.0
  %8937 = vmatprep.subr.mxu0 0.0
  %8938 = vmatpush1.xpose.msra.mxu0 0.0
  %8939 = vmatprep.subr.mxu0 0.0
  %8940 = vmatpush1.xpose.msra.mxu0 0.0
  %8941 = vmatprep.subr.mxu0 0.0
  %8942 = vmatpush1.xpose.msra.mxu0 0.0
  %8943 = vmatprep.subr.mxu0 0.0
  %8944 = vmatpush1.xpose.msra.mxu0 0.0
  %8945 = vmatprep.subr.mxu0 0.0
  %8946 = vmatpush1.xpose.msra.mxu0 0.0
  %8947 = vmatprep.subr.mxu0 0.0
  %8948 = vmatpush1.xpose.msra.mxu0 0.0
  %8949 = vmatprep.subr.mxu0 0.0
  %8950 = vmatpush1.xpose.msra.mxu0 0.0
  %8951 = vmatprep.subr.mxu0 0.0
  %8952 = vmatpush1.xpose.msra.mxu0 0.0
  %8953 = vmatprep.subr.mxu0 0.0
  %8954 = vmatpush1.xpose.msra.mxu0 0.0
  %8955 = vmatprep.subr.mxu0 0.0
  %8956 = vmatpush1.xpose.msra.mxu0 0.0
  %8957 = vmatprep.subr.mxu0 0.0
  %8958 = vmatpush1.xpose.msra.mxu0 0.0
  %8959 = vmatprep.subr.mxu0 0.0
  %8960 = vmatpush1.xpose.msra.mxu0 0.0
  %8961 = vmatprep.subr.mxu0 0.0
  %8962 = vmatpush1.xpose.msra.mxu0 0.0
  %8963 = vmatprep.subr.mxu0 0.0
  %8964 = vmatpush1.xpose.msra.mxu0 0.0
  %8965 = vmatprep.subr.mxu0 0.0
  %8966 = vmatpush1.xpose.msra.mxu0 0.0
  %8967 = vmatprep.subr.mxu0 0.0
  %8968 = vmatpush1.xpose.msra.mxu0 0.0
  %8969 = vmatprep.mubr.f32.mxu0 0.0
  %8970 = vmatmul.mubr.f32.gmra.mrb[0].mxu0 %v8055
  %v8971 = vpop.f32.mrb[0].mxu0
  %v8972 = vadd.f32 %v63, %v8971
  %v8973 = vpop.f32.mrb[0].mxu0
  %8974 = vmatprep.mubr.f32.mxu0 0.0
  %8975 = vmatmul.mubr.f32.gmra.mrb[0].mxu0 %v8061
  %v8976 = vpop.f32.mrb[0].mxu0
  %v8977 = vadd.f32 %v64, %v8976
  %v8978 = vpop.f32.mrb[0].mxu0
  %8979 = vdwg.mxu0
  %v8980 = vsel %vm869, %v8972, -inf
  %8981 = vmax.xlane.f32.xlu0 %v8980
  %v8982 = vpop.xlane.xlu0 %8981
  %v8983 = vsel %vm869, %v8977, -inf
  %8984 = vmax.xlane.f32.xlu0 %v8983
  %v8985 = vpop.xlane.xlu0 %8984
  %v8986 = vsub.f32 %v8972, %v8982
  %v8987 = vsub.f32 %v8977, %v8985
  %v8988 = vmul.f32 %v8986, 1.442695
  %v8989 = vpow.pop %v8988
  %v8990 = vmul.f32 %v8987, 1.442695
  %v8991 = vpow.pop %v8990
  %v8992 = vsel %vm869, %v8989, 0.0
  %8993 = vadd.xlane.f32.xlu0 %v8992
  %v8994 = vpop.xlane.xlu0 %8993
  %v8995 = vsel %vm869, %v8991, 0.0
  %8996 = vadd.xlane.f32.xlu0 %v8995
  %v8997 = vpop.xlane.xlu0 %8996
  %v8998 = vrcp.pop %v8994
  %v8999 = vrcp.pop %v8997
  %v9000 = vmul.f32 %v8989, %v8998
  %v9001 = vmul.f32 %v8991, %v8999
  %v9003 = vsel %vm869, %v9000, 0
  %v9006 = vsel %vm869, %v9001, 0
  %9008 = vmatprep.subr.mxu0 0.0
  %9009 = vmatpush1.msra.mxu0 %v8363
  %9010 = vmatprep.subr.mxu0 0.0
  %9011 = vmatpush1.msra.mxu0 %v8369
  %9012 = vmatprep.subr.mxu0 0.0
  %9013 = vmatpush1.msra.mxu0 0.0
  %9014 = vmatprep.subr.mxu0 0.0
  %9015 = vmatpush1.msra.mxu0 0.0
  %9016 = vmatprep.subr.mxu0 0.0
  %9017 = vmatpush1.msra.mxu0 0.0
  %9018 = vmatprep.subr.mxu0 0.0
  %9019 = vmatpush1.msra.mxu0 0.0
  %9020 = vmatprep.subr.mxu0 0.0
  %9021 = vmatpush1.msra.mxu0 0.0
  %9022 = vmatprep.subr.mxu0 0.0
  %9023 = vmatpush1.msra.mxu0 0.0
  %9024 = vmatprep.subr.mxu0 0.0
  %9025 = vmatpush1.msra.mxu0 0.0
  %9026 = vmatprep.subr.mxu0 0.0
  %9027 = vmatpush1.msra.mxu0 0.0
  %9028 = vmatprep.subr.mxu0 0.0
  %9029 = vmatpush1.msra.mxu0 0.0
  %9030 = vmatprep.subr.mxu0 0.0
  %9031 = vmatpush1.msra.mxu0 0.0
  %9032 = vmatprep.subr.mxu0 0.0
  %9033 = vmatpush1.msra.mxu0 0.0
  %9034 = vmatprep.subr.mxu0 0.0
  %9035 = vmatpush1.msra.mxu0 0.0
  %9036 = vmatprep.subr.mxu0 0.0
  %9037 = vmatpush1.msra.mxu0 0.0
  %9038 = vmatprep.subr.mxu0 0.0
  %9039 = vmatpush1.msra.mxu0 0.0
  %9040 = vmatprep.subr.mxu0 0.0
  %9041 = vmatpush1.msra.mxu0 0.0
  %9042 = vmatprep.subr.mxu0 0.0
  %9043 = vmatpush1.msra.mxu0 0.0
  %9044 = vmatprep.subr.mxu0 0.0
  %9045 = vmatpush1.msra.mxu0 0.0
  %9046 = vmatprep.subr.mxu0 0.0
  %9047 = vmatpush1.msra.mxu0 0.0
  %9048 = vmatprep.subr.mxu0 0.0
  %9049 = vmatpush1.msra.mxu0 0.0
  %9050 = vmatprep.subr.mxu0 0.0
  %9051 = vmatpush1.msra.mxu0 0.0
  %9052 = vmatprep.subr.mxu0 0.0
  %9053 = vmatpush1.msra.mxu0 0.0
  %9054 = vmatprep.subr.mxu0 0.0
  %9055 = vmatpush1.msra.mxu0 0.0
  %9056 = vmatprep.subr.mxu0 0.0
  %9057 = vmatpush1.msra.mxu0 0.0
  %9058 = vmatprep.subr.mxu0 0.0
  %9059 = vmatpush1.msra.mxu0 0.0
  %9060 = vmatprep.subr.mxu0 0.0
  %9061 = vmatpush1.msra.mxu0 0.0
  %9062 = vmatprep.subr.mxu0 0.0
  %9063 = vmatpush1.msra.mxu0 0.0
  %9064 = vmatprep.subr.mxu0 0.0
  %9065 = vmatpush1.msra.mxu0 0.0
  %9066 = vmatprep.subr.mxu0 0.0
  %9067 = vmatpush1.msra.mxu0 0.0
  %9068 = vmatprep.subr.mxu0 0.0
  %9069 = vmatpush1.msra.mxu0 0.0
  %9070 = vmatprep.subr.mxu0 0.0
  %9071 = vmatpush1.msra.mxu0 0.0
  %9072 = vmatprep.mubr.f32.mxu0 0.0
  %9073 = vmatmul.mubr.f32.gmra.mrb[0].mxu0 %v9003
  %v9074 = vpop.f32.mrb[0].mxu0
  %v9075 = vadd.f32 0.0, %v9074
  %v9076 = vpop.f32.mrb[0].mxu0
  %9077 = vmatprep.mubr.f32.mxu0 0.0
  %9078 = vmatmul.mubr.f32.gmra.mrb[0].mxu0 %v9006
  %v9079 = vpop.f32.mrb[0].mxu0
  %v9080 = vadd.f32 0.0, %v9079
  %v9081 = vpop.f32.mrb[0].mxu0
  %9082 = vdwg.mxu0
  %s9083 = scalar_lea.vmem %s7, 1024
  %v9084 = vld [vmem:[%s9083] sm:$0xff]
  %v9085 = vld [vmem:[%s9083 + $0x8] sm:$0xff]
  %v9086 = vld [vmem:[%s9083 + $0x10] sm:$0xff]
  %v9087 = vld [vmem:[%s9083 + $0x18] sm:$0xff]
  %v9088 = vld [vmem:[%s9083 + $0x20] sm:$0xff]
  %v9089 = vld [vmem:[%s9083 + $0x28] sm:$0xff]
  %v9090 = vld [vmem:[%s9083 + $0x30] sm:$0xff]
  %v9091 = vld [vmem:[%s9083 + $0x38] sm:$0xff]
  %v9092 = vld [vmem:[%s9083 + $0x40] sm:$0xff]
  %v9093 = vld [vmem:[%s9083 + $0x48] sm:$0xff]
  %v9094 = vld [vmem:[%s9083 + $0x50] sm:$0xff]
  %v9095 = vld [vmem:[%s9083 + $0x58] sm:$0xff]
  %v9096 = vld [vmem:[%s9083 + $0x60] sm:$0xff]
  %v9097 = vld [vmem:[%s9083 + $0x68] sm:$0xff]
  %v9098 = vld [vmem:[%s9083 + $0x70] sm:$0xff]
  %v9099 = vld [vmem:[%s9083 + $0x78] sm:$0xff]
  %v9100 = vld [vmem:[%s9083 + $0x80] sm:$0xff]
  %v9101 = vld [vmem:[%s9083 + $0x88] sm:$0xff]
  %v9102 = vld [vmem:[%s9083 + $0x90] sm:$0xff]
  %v9103 = vld [vmem:[%s9083 + $0x98] sm:$0xff]
  %v9104 = vld [vmem:[%s9083 + $0xa0] sm:$0xff]
  %v9105 = vld [vmem:[%s9083 + $0xa8] sm:$0xff]
  %v9106 = vld [vmem:[%s9083 + $0xb0] sm:$0xff]
  %v9107 = vld [vmem:[%s9083 + $0xb8] sm:$0xff]
  %v9108 = vld [vmem:[%s9083 + $0xc0] sm:$0xff]
  %v9109 = vld [vmem:[%s9083 + $0xc8] sm:$0xff]
  %v9110 = vld [vmem:[%s9083 + $0xd0] sm:$0xff]
  %v9111 = vld [vmem:[%s9083 + $0xd8] sm:$0xff]
  %v9112 = vld [vmem:[%s9083 + $0xe0] sm:$0xff]
  %v9113 = vld [vmem:[%s9083 + $0xe8] sm:$0xff]
  %v9114 = vld [vmem:[%s9083 + $0xf0] sm:$0xff]
  %v9115 = vld [vmem:[%s9083 + $0xf8] sm:$0xff]
  %v9116 = vld [vmem:[%s9083 + $0x100] sm:$0xff]
  %v9117 = vld [vmem:[%s9083 + $0x108] sm:$0xff]
  %v9118 = vld [vmem:[%s9083 + $0x110] sm:$0xff]
  %v9119 = vld [vmem:[%s9083 + $0x118] sm:$0xff]
  %v9120 = vld [vmem:[%s9083 + $0x120] sm:$0xff]
  %v9121 = vld [vmem:[%s9083 + $0x128] sm:$0xff]
  %v9122 = vld [vmem:[%s9083 + $0x130] sm:$0xff]
  %v9123 = vld [vmem:[%s9083 + $0x138] sm:$0xff]
  %v9124 = vld [vmem:[%s9083 + $0x140] sm:$0xff]
  %v9125 = vld [vmem:[%s9083 + $0x148] sm:$0xff]
  %v9126 = vld [vmem:[%s9083 + $0x150] sm:$0xff]
  %v9127 = vld [vmem:[%s9083 + $0x158] sm:$0xff]
  %v9128 = vld [vmem:[%s9083 + $0x160] sm:$0xff]
  %v9129 = vld [vmem:[%s9083 + $0x168] sm:$0xff]
  %v9130 = vld [vmem:[%s9083 + $0x170] sm:$0xff]
  %v9131 = vld [vmem:[%s9083 + $0x178] sm:$0xff]
  %v9132 = vld [vmem:[%s9083 + $0x180] sm:$0xff]
  %v9133 = vld [vmem:[%s9083 + $0x188] sm:$0xff]
  %v9134 = vld [vmem:[%s9083 + $0x190] sm:$0xff]
  %v9135 = vld [vmem:[%s9083 + $0x198] sm:$0xff]
  %v9136 = vld [vmem:[%s9083 + $0x1a0] sm:$0xff]
  %v9137 = vld [vmem:[%s9083 + $0x1a8] sm:$0xff]
  %v9138 = vld [vmem:[%s9083 + $0x1b0] sm:$0xff]
  %v9139 = vld [vmem:[%s9083 + $0x1b8] sm:$0xff]
  %v9140 = vld [vmem:[%s9083 + $0x1c0] sm:$0xff]
  %v9141 = vld [vmem:[%s9083 + $0x1c8] sm:$0xff]
  %v9142 = vld [vmem:[%s9083 + $0x1d0] sm:$0xff]
  %v9143 = vld [vmem:[%s9083 + $0x1d8] sm:$0xff]
  %v9144 = vld [vmem:[%s9083 + $0x1e0] sm:$0xff]
  %v9145 = vld [vmem:[%s9083 + $0x1e8] sm:$0xff]
  %v9146 = vld [vmem:[%s9083 + $0x1f0] sm:$0xff]
  %v9147 = vld [vmem:[%s9083 + $0x1f8] sm:$0xff]
  %s9148 = scalar_lea.vmem %s8, 2
  %v9149 = vld [vmem:[%s9148] sm:$0x1]
  %v9151 = vlaneseq
  %v9152 = vshrl.u32 %v9151, 7
  %v9153 = vsub.s32 0, %v9152
  %v9154 = vrot.slane %v9149, %v9153
  %9156 = vmatprep.subr.mxu0 0.0
  %9157 = vmatpush1.msra.mxu0 %v9084
  %9158 = vmatprep.subr.mxu0 0.0
  %9159 = vmatpush1.msra.mxu0 %v9085
  %9160 = vmatprep.subr.mxu0 0.0
  %9161 = vmatpush1.msra.mxu0 %v9086
  %9162 = vmatprep.subr.mxu0 0.0
  %9163 = vmatpush1.msra.mxu0 %v9087
  %9164 = vmatprep.subr.mxu0 0.0
  %9165 = vmatpush1.msra.mxu0 %v9088
  %9166 = vmatprep.subr.mxu0 0.0
  %9167 = vmatpush1.msra.mxu0 %v9089
  %9168 = vmatprep.subr.mxu0 0.0
  %9169 = vmatpush1.msra.mxu0 %v9090
  %9170 = vmatprep.subr.mxu0 0.0
  %9171 = vmatpush1.msra.mxu0 %v9091
  %9172 = vmatprep.subr.mxu0 0.0
  %9173 = vmatpush1.msra.mxu0 %v9092
  %9174 = vmatprep.subr.mxu0 0.0
  %9175 = vmatpush1.msra.mxu0 %v9093
  %9176 = vmatprep.subr.mxu0 0.0
  %9177 = vmatpush1.msra.mxu0 %v9094
  %9178 = vmatprep.subr.mxu0 0.0
  %9179 = vmatpush1.msra.mxu0 %v9095
  %9180 = vmatprep.subr.mxu0 0.0
  %9181 = vmatpush1.msra.mxu0 %v9096
  %9182 = vmatprep.subr.mxu0 0.0
  %9183 = vmatpush1.msra.mxu0 %v9097
  %9184 = vmatprep.subr.mxu0 0.0
  %9185 = vmatpush1.msra.mxu0 %v9098
  %9186 = vmatprep.subr.mxu0 0.0
  %9187 = vmatpush1.msra.mxu0 %v9099
  %9188 = vmatprep.subr.mxu0 0.0
  %9189 = vmatpush1.msra.mxu0 %v9100
  %9190 = vmatprep.subr.mxu0 0.0
  %9191 = vmatpush1.msra.mxu0 %v9101
  %9192 = vmatprep.subr.mxu0 0.0
  %9193 = vmatpush1.msra.mxu0 %v9102
  %9194 = vmatprep.subr.mxu0 0.0
  %9195 = vmatpush1.msra.mxu0 %v9103
  %9196 = vmatprep.subr.mxu0 0.0
  %9197 = vmatpush1.msra.mxu0 %v9104
  %9198 = vmatprep.subr.mxu0 0.0
  %9199 = vmatpush1.msra.mxu0 %v9105
  %9200 = vmatprep.subr.mxu0 0.0
  %9201 = vmatpush1.msra.mxu0 %v9106
  %9202 = vmatprep.subr.mxu0 0.0
  %9203 = vmatpush1.msra.mxu0 %v9107
  %9204 = vmatprep.subr.mxu0 0.0
  %9205 = vmatpush1.msra.mxu0 %v9108
  %9206 = vmatprep.subr.mxu0 0.0
  %9207 = vmatpush1.msra.mxu0 %v9109
  %9208 = vmatprep.subr.mxu0 0.0
  %9209 = vmatpush1.msra.mxu0 %v9110
  %9210 = vmatprep.subr.mxu0 0.0
  %9211 = vmatpush1.msra.mxu0 %v9111
  %9212 = vmatprep.subr.mxu0 0.0
  %9213 = vmatpush1.msra.mxu0 %v9112
  %9214 = vmatprep.subr.mxu0 0.0
  %9215 = vmatpush1.msra.mxu0 %v9113
  %9216 = vmatprep.subr.mxu0 0.0
  %9217 = vmatpush1.msra.mxu0 %v9114
  %9218 = vmatprep.subr.mxu0 0.0
  %9219 = vmatpush1.msra.mxu0 %v9115
  %9220 = vmatprep.mubr.f32.mxu0 %v8719
  %9221 = vmatmul.mubr.f32.gmra.mrb[0].mxu0 %v8541
  %v9222 = vpop.f32.mrb[0].mxu0
  %v9223 = vadd.f32 %v9154, %v9222
  %v9224 = vpop.f32.mrb[0].mxu0
  %9225 = vmatprep.mubr.f32.mxu0 %v8724
  %9226 = vmatmul.mubr.f32.gmra.mrb[0].mxu0 %v8546
  %v9227 = vpop.f32.mrb[0].mxu0
  %v9228 = vadd.f32 %v9154, %v9227
  %v9229 = vpop.f32.mrb[0].mxu0
  %9230 = vdwg.mxu0
  %9231 = vmatprep.subr.mxu0 0.0
  %9232 = vmatpush1.msra.mxu0 %v9116
  %9233 = vmatprep.subr.mxu0 0.0
  %9234 = vmatpush1.msra.mxu0 %v9117
  %9235 = vmatprep.subr.mxu0 0.0
  %9236 = vmatpush1.msra.mxu0 %v9118
  %9237 = vmatprep.subr.mxu0 0.0
  %9238 = vmatpush1.msra.mxu0 %v9119
  %9239 = vmatprep.subr.mxu0 0.0
  %9240 = vmatpush1.msra.mxu0 %v9120
  %9241 = vmatprep.subr.mxu0 0.0
  %9242 = vmatpush1.msra.mxu0 %v9121
  %9243 = vmatprep.subr.mxu0 0.0
  %9244 = vmatpush1.msra.mxu0 %v9122
  %9245 = vmatprep.subr.mxu0 0.0
  %9246 = vmatpush1.msra.mxu0 %v9123
  %9247 = vmatprep.subr.mxu0 0.0
  %9248 = vmatpush1.msra.mxu0 %v9124
  %9249 = vmatprep.subr.mxu0 0.0
  %9250 = vmatpush1.msra.mxu0 %v9125
  %9251 = vmatprep.subr.mxu0 0.0
  %9252 = vmatpush1.msra.mxu0 %v9126
  %9253 = vmatprep.subr.mxu0 0.0
  %9254 = vmatpush1.msra.mxu0 %v9127
  %9255 = vmatprep.subr.mxu0 0.0
  %9256 = vmatpush1.msra.mxu0 %v9128
  %9257 = vmatprep.subr.mxu0 0.0
  %9258 = vmatpush1.msra.mxu0 %v9129
  %9259 = vmatprep.subr.mxu0 0.0
  %9260 = vmatpush1.msra.mxu0 %v9130
  %9261 = vmatprep.subr.mxu0 0.0
  %9262 = vmatpush1.msra.mxu0 %v9131
  %9263 = vmatprep.subr.mxu0 0.0
  %9264 = vmatpush1.msra.mxu0 %v9132
  %9265 = vmatprep.subr.mxu0 0.0
  %9266 = vmatpush1.msra.mxu0 %v9133
  %9267 = vmatprep.subr.mxu0 0.0
  %9268 = vmatpush1.msra.mxu0 %v9134
  %9269 = vmatprep.subr.mxu0 0.0
  %9270 = vmatpush1.msra.mxu0 %v9135
  %9271 = vmatprep.subr.mxu0 0.0
  %9272 = vmatpush1.msra.mxu0 %v9136
  %9273 = vmatprep.subr.mxu0 0.0
  %9274 = vmatpush1.msra.mxu0 %v9137
  %9275 = vmatprep.subr.mxu0 0.0
  %9276 = vmatpush1.msra.mxu0 %v9138
  %9277 = vmatprep.subr.mxu0 0.0
  %9278 = vmatpush1.msra.mxu0 %v9139
  %9279 = vmatprep.subr.mxu0 0.0
  %9280 = vmatpush1.msra.mxu0 %v9140
  %9281 = vmatprep.subr.mxu0 0.0
  %9282 = vmatpush1.msra.mxu0 %v9141
  %9283 = vmatprep.subr.mxu0 0.0
  %9284 = vmatpush1.msra.mxu0 %v9142
  %9285 = vmatprep.subr.mxu0 0.0
  %9286 = vmatpush1.msra.mxu0 %v9143
  %9287 = vmatprep.subr.mxu0 0.0
  %9288 = vmatpush1.msra.mxu0 %v9144
  %9289 = vmatprep.subr.mxu0 0.0
  %9290 = vmatpush1.msra.mxu0 %v9145
  %9291 = vmatprep.subr.mxu0 0.0
  %9292 = vmatpush1.msra.mxu0 %v9146
  %9293 = vmatprep.subr.mxu0 0.0
  %9294 = vmatpush1.msra.mxu0 %v9147
  %9295 = vmatprep.mubr.f32.mxu0 %v9075
  %9296 = vmatmul.mubr.f32.gmra.mrb[0].mxu0 %v8897
  %v9297 = vpop.f32.mrb[0].mxu0
  %v9298 = vadd.f32 %v9223, %v9297
  %v9299 = vpop.f32.mrb[0].mxu0
  %9300 = vmatprep.mubr.f32.mxu0 %v9080
  %9301 = vmatmul.mubr.f32.gmra.mrb[0].mxu0 %v8902
  %v9302 = vpop.f32.mrb[0].mxu0
  %v9303 = vadd.f32 %v9228, %v9302
  %v9304 = vpop.f32.mrb[0].mxu0
  %9305 = vdwg.mxu0
  %v9306 = vadd.f32 %v7739, %v9298
  %v9307 = vadd.f32 %v7740, %v9303
  %s9308 = scalar_lea.vmem %s9, 2
  %v9309 = vld [vmem:[%s9308] sm:$0x1]
  %s9310 = scalar_lea.vmem %s10, 2
  %v9311 = vld [vmem:[%s9310] sm:$0x1]
  %v9312 = vsel %vm289, %v9306, 0.0
  %9313 = vadd.xlane.f32.xlu0 %v9312
  %v9314 = vpop.xlane.xlu0 %9313
  %v9315 = vsel %vm289, %v9307, 0.0
  %9316 = vadd.xlane.f32.xlu0 %v9315
  %v9317 = vpop.xlane.xlu0 %9316
  %v9318 = vmul.f32 %v9314, %v1738
  %v9319 = vmul.f32 %v9317, %v1738
  %v9320 = vsub.f32 %v9306, %v9318
  %v9321 = vsub.f32 %v9307, %v9319
  %v9322 = vmul.f32 %v9320, %v9320
  %v9323 = vmul.f32 %v9321, %v9321
  %v9324 = vsel %vm289, %v9322, 0.0
  %9325 = vadd.xlane.f32.xlu0 %v9324
  %v9326 = vpop.xlane.xlu0 %9325
  %v9327 = vsel %vm289, %v9323, 0.0
  %9328 = vadd.xlane.f32.xlu0 %v9327
  %v9329 = vpop.xlane.xlu0 %9328
  %v9330 = vmul.f32 %v9326, %v1738
  %v9331 = vmul.f32 %v9329, %v1738
  %v9332 = vadd.f32 %v9330, 1e-05
  %v9333 = vadd.f32 %v9331, 1e-05
  %v9334 = vrsqrt.pop %v9332
  %v9335 = vrsqrt.pop %v9333
  %v9336 = vmul.f32 %v9320, %v9334
  %v9337 = vmul.f32 %v9321, %v9335
  %v9339 = vlaneseq
  %v9340 = vshrl.u32 %v9339, 7
  %v9341 = vsub.s32 0, %v9340
  %v9342 = vrot.slane %v9309, %v9341
  %v9344 = vmul.f32 %v9336, %v9342
  %v9345 = vmul.f32 %v9337, %v9342
  %v9347 = vlaneseq
  %v9348 = vshrl.u32 %v9347, 7
  %v9349 = vsub.s32 0, %v9348
  %v9350 = vrot.slane %v9311, %v9349
  %v9352 = vadd.f32 %v9344, %v9350
  %v9353 = vadd.f32 %v9345, %v9350
  %v9354 = vpack.c.bf16 %v9353, %v9352
  %s9355 = scalar_lea.vmem %s11, 640
  %v9356 = vld [vmem:[%s9355] sm:$0xff]
  %v9357 = vld [vmem:[%s9355 + $0x8] sm:$0xff]
  %v9358 = vld [vmem:[%s9355 + $0x10] sm:$0xff]
  %v9359 = vld [vmem:[%s9355 + $0x18] sm:$0xff]
  %v9360 = vld [vmem:[%s9355 + $0x20] sm:$0xff]
  %v9361 = vld [vmem:[%s9355 + $0x28] sm:$0xff]
  %v9362 = vld [vmem:[%s9355 + $0x30] sm:$0xff]
  %v9363 = vld [vmem:[%s9355 + $0x38] sm:$0xff]
  %v9364 = vld [vmem:[%s9355 + $0x40] sm:$0xff]
  %v9365 = vld [vmem:[%s9355 + $0x48] sm:$0xff]
  %v9366 = vld [vmem:[%s9355 + $0x50] sm:$0xff]
  %v9367 = vld [vmem:[%s9355 + $0x58] sm:$0xff]
  %v9368 = vld [vmem:[%s9355 + $0x60] sm:$0xff]
  %v9369 = vld [vmem:[%s9355 + $0x68] sm:$0xff]
  %v9370 = vld [vmem:[%s9355 + $0x70] sm:$0xff]
  %v9371 = vld [vmem:[%s9355 + $0x78] sm:$0xff]
  %v9372 = vld [vmem:[%s9355 + $0x80] sm:$0xff]
  %v9373 = vld [vmem:[%s9355 + $0x88] sm:$0xff]
  %v9374 = vld [vmem:[%s9355 + $0x90] sm:$0xff]
  %v9375 = vld [vmem:[%s9355 + $0x98] sm:$0xff]
  %v9376 = vld [vmem:[%s9355 + $0xa0] sm:$0xff]
  %v9377 = vld [vmem:[%s9355 + $0xa8] sm:$0xff]
  %v9378 = vld [vmem:[%s9355 + $0xb0] sm:$0xff]
  %v9379 = vld [vmem:[%s9355 + $0xb8] sm:$0xff]
  %v9380 = vld [vmem:[%s9355 + $0xc0] sm:$0xff]
  %v9381 = vld [vmem:[%s9355 + $0xc8] sm:$0xff]
  %v9382 = vld [vmem:[%s9355 + $0xd0] sm:$0xff]
  %v9383 = vld [vmem:[%s9355 + $0xd8] sm:$0xff]
  %v9384 = vld [vmem:[%s9355 + $0xe0] sm:$0xff]
  %v9385 = vld [vmem:[%s9355 + $0xe8] sm:$0xff]
  %v9386 = vld [vmem:[%s9355 + $0xf0] sm:$0xff]
  %v9387 = vld [vmem:[%s9355 + $0xf8] sm:$0xff]
  %v9388 = vld [vmem:[%s9355 + $0x100] sm:$0x33]
  %v9389 = vld [vmem:[%s9355 + $0x108] sm:$0x33]
  %v9390 = vld [vmem:[%s9355 + $0x110] sm:$0x33]
  %v9391 = vld [vmem:[%s9355 + $0x118] sm:$0x33]
  %v9392 = vld [vmem:[%s9355 + $0x120] sm:$0x33]
  %v9393 = vld [vmem:[%s9355 + $0x128] sm:$0x33]
  %v9394 = vld [vmem:[%s9355 + $0x130] sm:$0x33]
  %v9395 = vld [vmem:[%s9355 + $0x138] sm:$0x33]
  %s9396 = scalar_lea.vmem %s12, 32
  %v9397 = vld [vmem:[%s9396] sm:$0xff]
  %v9398 = vld [vmem:[%s9396 + $0x8] sm:$0xff]
  %v9401 = vlaneseq
  %v9402 = vshrl.u32 %v9401, 7
  %v9403 = vsub.s32 0, %v9402
  %v9404 = vrot.slane %v9397, %v9403
  %v9405 = vlaneseq
  %v9406 = vshrl.u32 %v9405, 7
  %v9407 = vsub.s32 1, %v9406
  %v9408 = vrot.slane %v9397, %v9407
  %v9409 = vlaneseq
  %v9410 = vshrl.u32 %v9409, 7
  %v9411 = vsub.s32 2, %v9410
  %v9412 = vrot.slane %v9397, %v9411
  %v9413 = vlaneseq
  %v9414 = vshrl.u32 %v9413, 7
  %v9415 = vsub.s32 3, %v9414
  %v9416 = vrot.slane %v9397, %v9415
  %v9417 = vlaneseq
  %v9418 = vshrl.u32 %v9417, 7
  %v9419 = vsub.s32 4, %v9418
  %v9420 = vrot.slane %v9397, %v9419
  %v9421 = vlaneseq
  %v9422 = vshrl.u32 %v9421, 7
  %v9423 = vsub.s32 5, %v9422
  %v9424 = vrot.slane %v9397, %v9423
  %v9425 = vlaneseq
  %v9426 = vshrl.u32 %v9425, 7
  %v9427 = vsub.s32 6, %v9426
  %v9428 = vrot.slane %v9397, %v9427
  %v9429 = vlaneseq
  %v9430 = vshrl.u32 %v9429, 7
  %v9431 = vsub.s32 7, %v9430
  %v9432 = vrot.slane %v9397, %v9431
  %v9433 = vlaneseq
  %v9434 = vshrl.u32 %v9433, 7
  %v9435 = vsub.s32 0, %v9434
  %v9436 = vrot.slane %v9398, %v9435
  %v9437 = vlaneseq
  %v9438 = vshrl.u32 %v9437, 7
  %v9439 = vsub.s32 1, %v9438
  %v9440 = vrot.slane %v9398, %v9439
  %v9441 = vlaneseq
  %v9442 = vshrl.u32 %v9441, 7
  %v9443 = vsub.s32 2, %v9442
  %v9444 = vrot.slane %v9398, %v9443
  %v9445 = vlaneseq
  %v9446 = vshrl.u32 %v9445, 7
  %v9447 = vsub.s32 3, %v9446
  %v9448 = vrot.slane %v9398, %v9447
  %v9449 = vlaneseq
  %v9450 = vshrl.u32 %v9449, 7
  %v9451 = vsub.s32 4, %v9450
  %v9452 = vrot.slane %v9398, %v9451
  %v9453 = vlaneseq
  %v9454 = vshrl.u32 %v9453, 7
  %v9455 = vsub.s32 5, %v9454
  %v9456 = vrot.slane %v9398, %v9455
  %v9457 = vlaneseq
  %v9458 = vshrl.u32 %v9457, 7
  %v9459 = vsub.s32 6, %v9458
  %v9460 = vrot.slane %v9398, %v9459
  %v9461 = vlaneseq
  %v9462 = vshrl.u32 %v9461, 7
  %v9463 = vsub.s32 7, %v9462
  %v9464 = vrot.slane %v9398, %v9463
  %v9521 = vunpack.c.l.b16 %v9356
  %v9522 = vunpack.c.h.b16 %v9356
  %v9523 = vunpack.c.l.b16 %v9357
  %v9524 = vunpack.c.h.b16 %v9357
  %v9525 = vunpack.c.l.b16 %v9358
  %v9526 = vunpack.c.h.b16 %v9358
  %v9527 = vunpack.c.l.b16 %v9359
  %v9528 = vunpack.c.h.b16 %v9359
  %v9529 = vunpack.c.l.b16 %v9360
  %v9530 = vunpack.c.h.b16 %v9360
  %v9531 = vunpack.c.l.b16 %v9361
  %v9532 = vunpack.c.h.b16 %v9361
  %v9533 = vunpack.c.l.b16 %v9362
  %v9534 = vunpack.c.h.b16 %v9362
  %v9535 = vunpack.c.l.b16 %v9363
  %v9536 = vunpack.c.h.b16 %v9363
  %v9537 = vunpack.c.l.b16 %v9364
  %v9538 = vunpack.c.h.b16 %v9364
  %v9539 = vunpack.c.l.b16 %v9365
  %v9540 = vunpack.c.h.b16 %v9365
  %v9541 = vunpack.c.l.b16 %v9366
  %v9542 = vunpack.c.h.b16 %v9366
  %v9543 = vunpack.c.l.b16 %v9367
  %v9544 = vunpack.c.h.b16 %v9367
  %v9545 = vunpack.c.l.b16 %v9368
  %v9546 = vunpack.c.h.b16 %v9368
  %v9547 = vunpack.c.l.b16 %v9369
  %v9548 = vunpack.c.h.b16 %v9369
  %v9549 = vunpack.c.l.b16 %v9370
  %v9550 = vunpack.c.h.b16 %v9370
  %v9551 = vunpack.c.l.b16 %v9371
  %v9552 = vunpack.c.h.b16 %v9371
  %v9553 = vunpack.c.l.b16 %v9372
  %v9554 = vunpack.c.h.b16 %v9372
  %v9555 = vunpack.c.l.b16 %v9373
  %v9556 = vunpack.c.h.b16 %v9373
  %v9557 = vunpack.c.l.b16 %v9374
  %v9558 = vunpack.c.h.b16 %v9374
  %v9559 = vunpack.c.l.b16 %v9375
  %v9560 = vunpack.c.h.b16 %v9375
  %v9561 = vunpack.c.l.b16 %v9376
  %v9562 = vunpack.c.h.b16 %v9376
  %v9563 = vunpack.c.l.b16 %v9377
  %v9564 = vunpack.c.h.b16 %v9377
  %v9565 = vunpack.c.l.b16 %v9378
  %v9566 = vunpack.c.h.b16 %v9378
  %v9567 = vunpack.c.l.b16 %v9379
  %v9568 = vunpack.c.h.b16 %v9379
  %v9569 = vunpack.c.l.b16 %v9380
  %v9570 = vunpack.c.h.b16 %v9380
  %v9571 = vunpack.c.l.b16 %v9381
  %v9572 = vunpack.c.h.b16 %v9381
  %v9573 = vunpack.c.l.b16 %v9382
  %v9574 = vunpack.c.h.b16 %v9382
  %v9575 = vunpack.c.l.b16 %v9383
  %v9576 = vunpack.c.h.b16 %v9383
  %v9577 = vunpack.c.l.b16 %v9384
  %v9578 = vunpack.c.h.b16 %v9384
  %v9579 = vunpack.c.l.b16 %v9385
  %v9580 = vunpack.c.h.b16 %v9385
  %v9581 = vunpack.c.l.b16 %v9386
  %v9582 = vunpack.c.h.b16 %v9386
  %v9583 = vunpack.c.l.b16 %v9387
  %v9584 = vunpack.c.h.b16 %v9387
  %v9585 = vunpack.c.l.b16 %v9388
  %v9586 = vunpack.c.h.b16 %v9388
  %v9587 = vunpack.c.l.b16 %v9389
  %v9588 = vunpack.c.h.b16 %v9389
  %v9589 = vunpack.c.l.b16 %v9390
  %v9590 = vunpack.c.h.b16 %v9390
  %v9591 = vunpack.c.l.b16 %v9391
  %v9592 = vunpack.c.h.b16 %v9391
  %v9593 = vunpack.c.l.b16 %v9392
  %v9594 = vunpack.c.h.b16 %v9392
  %v9595 = vunpack.c.l.b16 %v9393
  %v9596 = vunpack.c.h.b16 %v9393
  %v9597 = vunpack.c.l.b16 %v9394
  %v9598 = vunpack.c.h.b16 %v9394
  %v9599 = vunpack.c.l.b16 %v9395
  %v9600 = vunpack.c.h.b16 %v9395
  %v9601 = vpack.c.b16 %v9537, %v9521
  %v9602 = vpack.c.b16 %v9538, %v9522
  %v9603 = vpack.c.b16 %v9539, %v9523
  %v9604 = vpack.c.b16 %v9540, %v9524
  %v9605 = vpack.c.b16 %v9541, %v9525
  %v9606 = vpack.c.b16 %v9542, %v9526
  %v9607 = vpack.c.b16 %v9543, %v9527
  %v9608 = vpack.c.b16 %v9544, %v9528
  %v9609 = vpack.c.b16 %v9545, %v9529
  %v9610 = vpack.c.b16 %v9546, %v9530
  %v9611 = vpack.c.b16 %v9547, %v9531
  %v9612 = vpack.c.b16 %v9548, %v9532
  %v9613 = vpack.c.b16 %v9549, %v9533
  %v9614 = vpack.c.b16 %v9550, %v9534
  %v9615 = vpack.c.b16 %v9551, %v9535
  %v9616 = vpack.c.b16 %v9552, %v9536
  %v9617 = vpack.c.b16 %v9569, %v9553
  %v9618 = vpack.c.b16 %v9570, %v9554
  %v9619 = vpack.c.b16 %v9571, %v9555
  %v9620 = vpack.c.b16 %v9572, %v9556
  %v9621 = vpack.c.b16 %v9573, %v9557
  %v9622 = vpack.c.b16 %v9574, %v9558
  %v9623 = vpack.c.b16 %v9575, %v9559
  %v9624 = vpack.c.b16 %v9576, %v9560
  %v9625 = vpack.c.b16 %v9577, %v9561
  %v9626 = vpack.c.b16 %v9578, %v9562
  %v9627 = vpack.c.b16 %v9579, %v9563
  %v9628 = vpack.c.b16 %v9580, %v9564
  %v9629 = vpack.c.b16 %v9581, %v9565
  %v9630 = vpack.c.b16 %v9582, %v9566
  %v9631 = vpack.c.b16 %v9583, %v9567
  %v9632 = vpack.c.b16 %v9584, %v9568
  %v9633 = vpack.c.b16 %v9585, %v9585
  %v9634 = vpack.c.b16 %v9586, %v9586
  %v9635 = vpack.c.b16 %v9587, %v9587
  %v9636 = vpack.c.b16 %v9588, %v9588
  %v9637 = vpack.c.b16 %v9589, %v9589
  %v9638 = vpack.c.b16 %v9590, %v9590
  %v9639 = vpack.c.b16 %v9591, %v9591
  %v9640 = vpack.c.b16 %v9592, %v9592
  %v9641 = vpack.c.b16 %v9593, %v9593
  %v9642 = vpack.c.b16 %v9594, %v9594
  %v9643 = vpack.c.b16 %v9595, %v9595
  %v9644 = vpack.c.b16 %v9596, %v9596
  %v9645 = vpack.c.b16 %v9597, %v9597
  %v9646 = vpack.c.b16 %v9598, %v9598
  %v9647 = vpack.c.b16 %v9599, %v9599
  %v9648 = vpack.c.b16 %v9600, %v9600
  %v9682 = vsel %vm289, %v9354, 0
  %v9685 = vsel %vm2103, %v9633, 0
  %v9688 = vsel %vm2103, %v9634, 0
  %v9691 = vsel %vm2103, %v9635, 0
  %v9694 = vsel %vm2103, %v9636, 0
  %v9697 = vsel %vm2103, %v9637, 0
  %v9700 = vsel %vm2103, %v9638, 0
  %v9703 = vsel %vm2103, %v9639, 0
  %v9706 = vsel %vm2103, %v9640, 0
  %v9709 = vsel %vm2103, %v9641, 0
  %v9712 = vsel %vm2103, %v9642, 0
  %v9715 = vsel %vm2103, %v9643, 0
  %v9718 = vsel %vm2103, %v9644, 0
  %v9721 = vsel %vm2103, %v9645, 0
  %v9724 = vsel %vm2103, %v9646, 0
  %v9727 = vsel %vm2103, %v9647, 0
  %v9730 = vsel %vm2103, %v9648, 0
  %9732 = vmatprep.subr.bf16.mxu0 %v9602
  %9733 = vmatpush1.bf16.msra.mxu0 %v9601
  %9734 = vmatprep.subr.bf16.mxu0 %v9618
  %9735 = vmatpush1.bf16.msra.mxu0 %v9617
  %9736 = vmatprep.subr.bf16.mxu0 %v9688
  %9737 = vmatpush1.bf16.msra.mxu0 %v9685
  %9738 = vmatprep.subr.bf16.mxu0 0
  %9739 = vmatpush1.bf16.msra.mxu0 0
  %9740 = vmatprep.subr.bf16.mxu0 0
  %9741 = vmatpush1.bf16.msra.mxu0 0
  %9742 = vmatprep.subr.bf16.mxu0 0
  %9743 = vmatpush1.bf16.msra.mxu0 0
  %9744 = vmatprep.subr.bf16.mxu0 0
  %9745 = vmatpush1.bf16.msra.mxu0 0
  %9746 = vmatprep.subr.bf16.mxu0 0
  %9747 = vmatpush1.bf16.msra.mxu0 0
  %9748 = vmatprep.subr.bf16.mxu0 0
  %9749 = vmatpush1.bf16.msra.mxu0 0
  %9750 = vmatprep.subr.bf16.mxu0 0
  %9751 = vmatpush1.bf16.msra.mxu0 0
  %9752 = vmatprep.subr.bf16.mxu0 0
  %9753 = vmatpush1.bf16.msra.mxu0 0
  %9754 = vmatprep.subr.bf16.mxu0 0
  %9755 = vmatpush1.bf16.msra.mxu0 0
  %9756 = vmatprep.subr.bf16.mxu0 0
  %9757 = vmatpush1.bf16.msra.mxu0 0
  %9758 = vmatprep.subr.bf16.mxu0 0
  %9759 = vmatpush1.bf16.msra.mxu0 0
  %9760 = vmatprep.subr.bf16.mxu0 0
  %9761 = vmatpush1.bf16.msra.mxu0 0
  %9762 = vmatprep.subr.bf16.mxu0 0
  %9763 = vmatpush1.bf16.msra.mxu0 0
  %9764 = vmatprep.mubr.bf16.mxu0 0
  %9765 = vmatmul.mubr.bf16.gmra.mrb[0].mxu0 %v9682
  %v9766 = vpop.f32.mrb[0].mxu0
  %v9767 = vadd.f32 %v9404, %v9766
  %v9768 = vpop.f32.mrb[0].mxu0
  %v9769 = vadd.f32 %v9408, %v9768
  %v9770 = vpop.f32.mrb[0].mxu0
  %v9771 = vadd.f32 %v9404, %v9770
  %v9772 = vpop.f32.mrb[0].mxu0
  %v9773 = vadd.f32 %v9408, %v9772
  %9774 = vdwg.mxu0
  %9775 = vmatprep.subr.bf16.mxu0 %v9604
  %9776 = vmatpush1.bf16.msra.mxu0 %v9603
  %9777 = vmatprep.subr.bf16.mxu0 %v9620
  %9778 = vmatpush1.bf16.msra.mxu0 %v9619
  %9779 = vmatprep.subr.bf16.mxu0 %v9694
  %9780 = vmatpush1.bf16.msra.mxu0 %v9691
  %9781 = vmatprep.subr.bf16.mxu0 0
  %9782 = vmatpush1.bf16.msra.mxu0 0
  %9783 = vmatprep.subr.bf16.mxu0 0
  %9784 = vmatpush1.bf16.msra.mxu0 0
  %9785 = vmatprep.subr.bf16.mxu0 0
  %9786 = vmatpush1.bf16.msra.mxu0 0
  %9787 = vmatprep.subr.bf16.mxu0 0
  %9788 = vmatpush1.bf16.msra.mxu0 0
  %9789 = vmatprep.subr.bf16.mxu0 0
  %9790 = vmatpush1.bf16.msra.mxu0 0
  %9791 = vmatprep.subr.bf16.mxu0 0
  %9792 = vmatpush1.bf16.msra.mxu0 0
  %9793 = vmatprep.subr.bf16.mxu0 0
  %9794 = vmatpush1.bf16.msra.mxu0 0
  %9795 = vmatprep.subr.bf16.mxu0 0
  %9796 = vmatpush1.bf16.msra.mxu0 0
  %9797 = vmatprep.subr.bf16.mxu0 0
  %9798 = vmatpush1.bf16.msra.mxu0 0
  %9799 = vmatprep.subr.bf16.mxu0 0
  %9800 = vmatpush1.bf16.msra.mxu0 0
  %9801 = vmatprep.subr.bf16.mxu0 0
  %9802 = vmatpush1.bf16.msra.mxu0 0
  %9803 = vmatprep.subr.bf16.mxu0 0
  %9804 = vmatpush1.bf16.msra.mxu0 0
  %9805 = vmatprep.subr.bf16.mxu0 0
  %9806 = vmatpush1.bf16.msra.mxu0 0
  %9807 = vmatprep.mubr.bf16.mxu0 0
  %9808 = vmatmul.mubr.bf16.gmra.mrb[0].mxu0 %v9682
  %v9809 = vpop.f32.mrb[0].mxu0
  %v9810 = vadd.f32 %v9412, %v9809
  %v9811 = vpop.f32.mrb[0].mxu0
  %v9812 = vadd.f32 %v9416, %v9811
  %v9813 = vpop.f32.mrb[0].mxu0
  %v9814 = vadd.f32 %v9412, %v9813
  %v9815 = vpop.f32.mrb[0].mxu0
  %v9816 = vadd.f32 %v9416, %v9815
  %9817 = vdwg.mxu0
  %9818 = vmatprep.subr.bf16.mxu0 %v9606
  %9819 = vmatpush1.bf16.msra.mxu0 %v9605
  %9820 = vmatprep.subr.bf16.mxu0 %v9622
  %9821 = vmatpush1.bf16.msra.mxu0 %v9621
  %9822 = vmatprep.subr.bf16.mxu0 %v9700
  %9823 = vmatpush1.bf16.msra.mxu0 %v9697
  %9824 = vmatprep.subr.bf16.mxu0 0
  %9825 = vmatpush1.bf16.msra.mxu0 0
  %9826 = vmatprep.subr.bf16.mxu0 0
  %9827 = vmatpush1.bf16.msra.mxu0 0
  %9828 = vmatprep.subr.bf16.mxu0 0
  %9829 = vmatpush1.bf16.msra.mxu0 0
  %9830 = vmatprep.subr.bf16.mxu0 0
  %9831 = vmatpush1.bf16.msra.mxu0 0
  %9832 = vmatprep.subr.bf16.mxu0 0
  %9833 = vmatpush1.bf16.msra.mxu0 0
  %9834 = vmatprep.subr.bf16.mxu0 0
  %9835 = vmatpush1.bf16.msra.mxu0 0
  %9836 = vmatprep.subr.bf16.mxu0 0
  %9837 = vmatpush1.bf16.msra.mxu0 0
  %9838 = vmatprep.subr.bf16.mxu0 0
  %9839 = vmatpush1.bf16.msra.mxu0 0
  %9840 = vmatprep.subr.bf16.mxu0 0
  %9841 = vmatpush1.bf16.msra.mxu0 0
  %9842 = vmatprep.subr.bf16.mxu0 0
  %9843 = vmatpush1.bf16.msra.mxu0 0
  %9844 = vmatprep.subr.bf16.mxu0 0
  %9845 = vmatpush1.bf16.msra.mxu0 0
  %9846 = vmatprep.subr.bf16.mxu0 0
  %9847 = vmatpush1.bf16.msra.mxu0 0
  %9848 = vmatprep.subr.bf16.mxu0 0
  %9849 = vmatpush1.bf16.msra.mxu0 0
  %9850 = vmatprep.mubr.bf16.mxu0 0
  %9851 = vmatmul.mubr.bf16.gmra.mrb[0].mxu0 %v9682
  %v9852 = vpop.f32.mrb[0].mxu0
  %v9853 = vadd.f32 %v9420, %v9852
  %v9854 = vpop.f32.mrb[0].mxu0
  %v9855 = vadd.f32 %v9424, %v9854
  %v9856 = vpop.f32.mrb[0].mxu0
  %v9857 = vadd.f32 %v9420, %v9856
  %v9858 = vpop.f32.mrb[0].mxu0
  %v9859 = vadd.f32 %v9424, %v9858
  %9860 = vdwg.mxu0
  %9861 = vmatprep.subr.bf16.mxu0 %v9608
  %9862 = vmatpush1.bf16.msra.mxu0 %v9607
  %9863 = vmatprep.subr.bf16.mxu0 %v9624
  %9864 = vmatpush1.bf16.msra.mxu0 %v9623
  %9865 = vmatprep.subr.bf16.mxu0 %v9706
  %9866 = vmatpush1.bf16.msra.mxu0 %v9703
  %9867 = vmatprep.subr.bf16.mxu0 0
  %9868 = vmatpush1.bf16.msra.mxu0 0
  %9869 = vmatprep.subr.bf16.mxu0 0
  %9870 = vmatpush1.bf16.msra.mxu0 0
  %9871 = vmatprep.subr.bf16.mxu0 0
  %9872 = vmatpush1.bf16.msra.mxu0 0
  %9873 = vmatprep.subr.bf16.mxu0 0
  %9874 = vmatpush1.bf16.msra.mxu0 0
  %9875 = vmatprep.subr.bf16.mxu0 0
  %9876 = vmatpush1.bf16.msra.mxu0 0
  %9877 = vmatprep.subr.bf16.mxu0 0
  %9878 = vmatpush1.bf16.msra.mxu0 0
  %9879 = vmatprep.subr.bf16.mxu0 0
  %9880 = vmatpush1.bf16.msra.mxu0 0
  %9881 = vmatprep.subr.bf16.mxu0 0
  %9882 = vmatpush1.bf16.msra.mxu0 0
  %9883 = vmatprep.subr.bf16.mxu0 0
  %9884 = vmatpush1.bf16.msra.mxu0 0
  %9885 = vmatprep.subr.bf16.mxu0 0
  %9886 = vmatpush1.bf16.msra.mxu0 0
  %9887 = vmatprep.subr.bf16.mxu0 0
  %9888 = vmatpush1.bf16.msra.mxu0 0
  %9889 = vmatprep.subr.bf16.mxu0 0
  %9890 = vmatpush1.bf16.msra.mxu0 0
  %9891 = vmatprep.subr.bf16.mxu0 0
  %9892 = vmatpush1.bf16.msra.mxu0 0
  %9893 = vmatprep.mubr.bf16.mxu0 0
  %9894 = vmatmul.mubr.bf16.gmra.mrb[0].mxu0 %v9682
  %v9895 = vpop.f32.mrb[0].mxu0
  %v9896 = vadd.f32 %v9428, %v9895
  %v9897 = vpop.f32.mrb[0].mxu0
  %v9898 = vadd.f32 %v9432, %v9897
  %v9899 = vpop.f32.mrb[0].mxu0
  %v9900 = vadd.f32 %v9428, %v9899
  %v9901 = vpop.f32.mrb[0].mxu0
  %v9902 = vadd.f32 %v9432, %v9901
  %9903 = vdwg.mxu0
  %9904 = vmatprep.subr.bf16.mxu0 %v9610
  %9905 = vmatpush1.bf16.msra.mxu0 %v9609
  %9906 = vmatprep.subr.bf16.mxu0 %v9626
  %9907 = vmatpush1.bf16.msra.mxu0 %v9625
  %9908 = vmatprep.subr.bf16.mxu0 %v9712
  %9909 = vmatpush1.bf16.msra.mxu0 %v9709
  %9910 = vmatprep.subr.bf16.mxu0 0
  %9911 = vmatpush1.bf16.msra.mxu0 0
  %9912 = vmatprep.subr.bf16.mxu0 0
  %9913 = vmatpush1.bf16.msra.mxu0 0
  %9914 = vmatprep.subr.bf16.mxu0 0
  %9915 = vmatpush1.bf16.msra.mxu0 0
  %9916 = vmatprep.subr.bf16.mxu0 0
  %9917 = vmatpush1.bf16.msra.mxu0 0
  %9918 = vmatprep.subr.bf16.mxu0 0
  %9919 = vmatpush1.bf16.msra.mxu0 0
  %9920 = vmatprep.subr.bf16.mxu0 0
  %9921 = vmatpush1.bf16.msra.mxu0 0
  %9922 = vmatprep.subr.bf16.mxu0 0
  %9923 = vmatpush1.bf16.msra.mxu0 0
  %9924 = vmatprep.subr.bf16.mxu0 0
  %9925 = vmatpush1.bf16.msra.mxu0 0
  %9926 = vmatprep.subr.bf16.mxu0 0
  %9927 = vmatpush1.bf16.msra.mxu0 0
  %9928 = vmatprep.subr.bf16.mxu0 0
  %9929 = vmatpush1.bf16.msra.mxu0 0
  %9930 = vmatprep.subr.bf16.mxu0 0
  %9931 = vmatpush1.bf16.msra.mxu0 0
  %9932 = vmatprep.subr.bf16.mxu0 0
  %9933 = vmatpush1.bf16.msra.mxu0 0
  %9934 = vmatprep.subr.bf16.mxu0 0
  %9935 = vmatpush1.bf16.msra.mxu0 0
  %9936 = vmatprep.mubr.bf16.mxu0 0
  %9937 = vmatmul.mubr.bf16.gmra.mrb[0].mxu0 %v9682
  %v9938 = vpop.f32.mrb[0].mxu0
  %v9939 = vadd.f32 %v9436, %v9938
  %v9940 = vpop.f32.mrb[0].mxu0
  %v9941 = vadd.f32 %v9440, %v9940
  %v9942 = vpop.f32.mrb[0].mxu0
  %v9943 = vadd.f32 %v9436, %v9942
  %v9944 = vpop.f32.mrb[0].mxu0
  %v9945 = vadd.f32 %v9440, %v9944
  %9946 = vdwg.mxu0
  %9947 = vmatprep.subr.bf16.mxu0 %v9612
  %9948 = vmatpush1.bf16.msra.mxu0 %v9611
  %9949 = vmatprep.subr.bf16.mxu0 %v9628
  %9950 = vmatpush1.bf16.msra.mxu0 %v9627
  %9951 = vmatprep.subr.bf16.mxu0 %v9718
  %9952 = vmatpush1.bf16.msra.mxu0 %v9715
  %9953 = vmatprep.subr.bf16.mxu0 0
  %9954 = vmatpush1.bf16.msra.mxu0 0
  %9955 = vmatprep.subr.bf16.mxu0 0
  %9956 = vmatpush1.bf16.msra.mxu0 0
  %9957 = vmatprep.subr.bf16.mxu0 0
  %9958 = vmatpush1.bf16.msra.mxu0 0
  %9959 = vmatprep.subr.bf16.mxu0 0
  %9960 = vmatpush1.bf16.msra.mxu0 0
  %9961 = vmatprep.subr.bf16.mxu0 0
  %9962 = vmatpush1.bf16.msra.mxu0 0
  %9963 = vmatprep.subr.bf16.mxu0 0
  %9964 = vmatpush1.bf16.msra.mxu0 0
  %9965 = vmatprep.subr.bf16.mxu0 0
  %9966 = vmatpush1.bf16.msra.mxu0 0
  %9967 = vmatprep.subr.bf16.mxu0 0
  %9968 = vmatpush1.bf16.msra.mxu0 0
  %9969 = vmatprep.subr.bf16.mxu0 0
  %9970 = vmatpush1.bf16.msra.mxu0 0
  %9971 = vmatprep.subr.bf16.mxu0 0
  %9972 = vmatpush1.bf16.msra.mxu0 0
  %9973 = vmatprep.subr.bf16.mxu0 0
  %9974 = vmatpush1.bf16.msra.mxu0 0
  %9975 = vmatprep.subr.bf16.mxu0 0
  %9976 = vmatpush1.bf16.msra.mxu0 0
  %9977 = vmatprep.subr.bf16.mxu0 0
  %9978 = vmatpush1.bf16.msra.mxu0 0
  %9979 = vmatprep.mubr.bf16.mxu0 0
  %9980 = vmatmul.mubr.bf16.gmra.mrb[0].mxu0 %v9682
  %v9981 = vpop.f32.mrb[0].mxu0
  %v9982 = vadd.f32 %v9444, %v9981
  %v9983 = vpop.f32.mrb[0].mxu0
  %v9984 = vadd.f32 %v9448, %v9983
  %v9985 = vpop.f32.mrb[0].mxu0
  %v9986 = vadd.f32 %v9444, %v9985
  %v9987 = vpop.f32.mrb[0].mxu0
  %v9988 = vadd.f32 %v9448, %v9987
  %9989 = vdwg.mxu0
  %9990 = vmatprep.subr.bf16.mxu0 %v9614
  %9991 = vmatpush1.bf16.msra.mxu0 %v9613
  %9992 = vmatprep.subr.bf16.mxu0 %v9630
  %9993 = vmatpush1.bf16.msra.mxu0 %v9629
  %9994 = vmatprep.subr.bf16.mxu0 %v9724
  %9995 = vmatpush1.bf16.msra.mxu0 %v9721
  %9996 = vmatprep.subr.bf16.mxu0 0
  %9997 = vmatpush1.bf16.msra.mxu0 0
  %9998 = vmatprep.subr.bf16.mxu0 0
  %9999 = vmatpush1.bf16.msra.mxu0 0
  %10000 = vmatprep.subr.bf16.mxu0 0
  %10001 = vmatpush1.bf16.msra.mxu0 0
  %10002 = vmatprep.subr.bf16.mxu0 0
  %10003 = vmatpush1.bf16.msra.mxu0 0
  %10004 = vmatprep.subr.bf16.mxu0 0
  %10005 = vmatpush1.bf16.msra.mxu0 0
  %10006 = vmatprep.subr.bf16.mxu0 0
  %10007 = vmatpush1.bf16.msra.mxu0 0
  %10008 = vmatprep.subr.bf16.mxu0 0
  %10009 = vmatpush1.bf16.msra.mxu0 0
  %10010 = vmatprep.subr.bf16.mxu0 0
  %10011 = vmatpush1.bf16.msra.mxu0 0
  %10012 = vmatprep.subr.bf16.mxu0 0
  %10013 = vmatpush1.bf16.msra.mxu0 0
  %10014 = vmatprep.subr.bf16.mxu0 0
  %10015 = vmatpush1.bf16.msra.mxu0 0
  %10016 = vmatprep.subr.bf16.mxu0 0
  %10017 = vmatpush1.bf16.msra.mxu0 0
  %10018 = vmatprep.subr.bf16.mxu0 0
  %10019 = vmatpush1.bf16.msra.mxu0 0
  %10020 = vmatprep.subr.bf16.mxu0 0
  %10021 = vmatpush1.bf16.msra.mxu0 0
  %10022 = vmatprep.mubr.bf16.mxu0 0
  %10023 = vmatmul.mubr.bf16.gmra.mrb[0].mxu0 %v9682
  %v10024 = vpop.f32.mrb[0].mxu0
  %v10025 = vadd.f32 %v9452, %v10024
  %v10026 = vpop.f32.mrb[0].mxu0
  %v10027 = vadd.f32 %v9456, %v10026
  %v10028 = vpop.f32.mrb[0].mxu0
  %v10029 = vadd.f32 %v9452, %v10028
  %v10030 = vpop.f32.mrb[0].mxu0
  %v10031 = vadd.f32 %v9456, %v10030
  %10032 = vdwg.mxu0
  %10033 = vmatprep.subr.bf16.mxu0 %v9616
  %10034 = vmatpush1.bf16.msra.mxu0 %v9615
  %10035 = vmatprep.subr.bf16.mxu0 %v9632
  %10036 = vmatpush1.bf16.msra.mxu0 %v9631
  %10037 = vmatprep.subr.bf16.mxu0 %v9730
  %10038 = vmatpush1.bf16.msra.mxu0 %v9727
  %10039 = vmatprep.subr.bf16.mxu0 0
  %10040 = vmatpush1.bf16.msra.mxu0 0
  %10041 = vmatprep.subr.bf16.mxu0 0
  %10042 = vmatpush1.bf16.msra.mxu0 0
  %10043 = vmatprep.subr.bf16.mxu0 0
  %10044 = vmatpush1.bf16.msra.mxu0 0
  %10045 = vmatprep.subr.bf16.mxu0 0
  %10046 = vmatpush1.bf16.msra.mxu0 0
  %10047 = vmatprep.subr.bf16.mxu0 0
  %10048 = vmatpush1.bf16.msra.mxu0 0
  %10049 = vmatprep.subr.bf16.mxu0 0
  %10050 = vmatpush1.bf16.msra.mxu0 0
  %10051 = vmatprep.subr.bf16.mxu0 0
  %10052 = vmatpush1.bf16.msra.mxu0 0
  %10053 = vmatprep.subr.bf16.mxu0 0
  %10054 = vmatpush1.bf16.msra.mxu0 0
  %10055 = vmatprep.subr.bf16.mxu0 0
  %10056 = vmatpush1.bf16.msra.mxu0 0
  %10057 = vmatprep.subr.bf16.mxu0 0
  %10058 = vmatpush1.bf16.msra.mxu0 0
  %10059 = vmatprep.subr.bf16.mxu0 0
  %10060 = vmatpush1.bf16.msra.mxu0 0
  %10061 = vmatprep.subr.bf16.mxu0 0
  %10062 = vmatpush1.bf16.msra.mxu0 0
  %10063 = vmatprep.subr.bf16.mxu0 0
  %10064 = vmatpush1.bf16.msra.mxu0 0
  %10065 = vmatprep.mubr.bf16.mxu0 0
  %10066 = vmatmul.mubr.bf16.gmra.mrb[0].mxu0 %v9682
  %v10067 = vpop.f32.mrb[0].mxu0
  %v10068 = vadd.f32 %v9460, %v10067
  %v10069 = vpop.f32.mrb[0].mxu0
  %v10070 = vadd.f32 %v9464, %v10069
  %v10071 = vpop.f32.mrb[0].mxu0
  %v10072 = vadd.f32 %v9460, %v10071
  %v10073 = vpop.f32.mrb[0].mxu0
  %v10074 = vadd.f32 %v9464, %v10073
  %10075 = vdwg.mxu0
  %v10076 = vmax.f32 %v9767, 0.0
  %v10077 = vmax.f32 %v9769, 0.0
  %v10078 = vmax.f32 %v9810, 0.0
  %v10079 = vmax.f32 %v9812, 0.0
  %v10080 = vmax.f32 %v9853, 0.0
  %v10081 = vmax.f32 %v9855, 0.0
  %v10082 = vmax.f32 %v9896, 0.0
  %v10083 = vmax.f32 %v9898, 0.0
  %v10084 = vmax.f32 %v9939, 0.0
  %v10085 = vmax.f32 %v9941, 0.0
  %v10086 = vmax.f32 %v9982, 0.0
  %v10087 = vmax.f32 %v9984, 0.0
  %v10088 = vmax.f32 %v10025, 0.0
  %v10089 = vmax.f32 %v10027, 0.0
  %v10090 = vmax.f32 %v10068, 0.0
  %v10091 = vmax.f32 %v10070, 0.0
  %v10092 = vmax.f32 %v9771, 0.0
  %v10093 = vmax.f32 %v9773, 0.0
  %v10094 = vmax.f32 %v9814, 0.0
  %v10095 = vmax.f32 %v9816, 0.0
  %v10096 = vmax.f32 %v9857, 0.0
  %v10097 = vmax.f32 %v9859, 0.0
  %v10098 = vmax.f32 %v9900, 0.0
  %v10099 = vmax.f32 %v9902, 0.0
  %v10100 = vmax.f32 %v9943, 0.0
  %v10101 = vmax.f32 %v9945, 0.0
  %v10102 = vmax.f32 %v9986, 0.0
  %v10103 = vmax.f32 %v9988, 0.0
  %v10104 = vmax.f32 %v10029, 0.0
  %v10105 = vmax.f32 %v10031, 0.0
  %v10106 = vmax.f32 %v10072, 0.0
  %v10107 = vmax.f32 %v10074, 0.0
  %v10108 = vpack.c.bf16 %v10092, %v10076
  %v10109 = vpack.c.bf16 %v10093, %v10077
  %v10110 = vpack.c.bf16 %v10094, %v10078
  %v10111 = vpack.c.bf16 %v10095, %v10079
  %v10112 = vpack.c.bf16 %v10096, %v10080
  %v10113 = vpack.c.bf16 %v10097, %v10081
  %v10114 = vpack.c.bf16 %v10098, %v10082
  %v10115 = vpack.c.bf16 %v10099, %v10083
  %v10116 = vpack.c.bf16 %v10100, %v10084
  %v10117 = vpack.c.bf16 %v10101, %v10085
  %v10118 = vpack.c.bf16 %v10102, %v10086
  %v10119 = vpack.c.bf16 %v10103, %v10087
  %v10120 = vpack.c.bf16 %v10104, %v10088
  %v10121 = vpack.c.bf16 %v10105, %v10089
  %v10122 = vpack.c.bf16 %v10106, %v10090
  %v10123 = vpack.c.bf16 %v10107, %v10091
  %s10124 = scalar_lea.vmem %s13, 2048
  %v10125 = vld [vmem:[%s10124] sm:$0xf]
  %v10126 = vld [vmem:[%s10124 + $0x4] sm:$0xf]
  %v10127 = vld [vmem:[%s10124 + $0x8] sm:$0xf]
  %v10128 = vld [vmem:[%s10124 + $0xc] sm:$0xf]
  %v10129 = vld [vmem:[%s10124 + $0x10] sm:$0xf]
  %v10130 = vld [vmem:[%s10124 + $0x14] sm:$0xf]
  %v10131 = vld [vmem:[%s10124 + $0x18] sm:$0xf]
  %v10132 = vld [vmem:[%s10124 + $0x1c] sm:$0xf]
  %v10133 = vld [vmem:[%s10124 + $0x20] sm:$0xf]
  %v10134 = vld [vmem:[%s10124 + $0x24] sm:$0xf]
  %v10135 = vld [vmem:[%s10124 + $0x28] sm:$0xf]
  %v10136 = vld [vmem:[%s10124 + $0x2c] sm:$0xf]
  %v10137 = vld [vmem:[%s10124 + $0x30] sm:$0xf]
  %v10138 = vld [vmem:[%s10124 + $0x34] sm:$0xf]
  %v10139 = vld [vmem:[%s10124 + $0x38] sm:$0xf]
  %v10140 = vld [vmem:[%s10124 + $0x3c] sm:$0xf]
  %v10141 = vld [vmem:[%s10124 + $0x40] sm:$0xf]
  %v10142 = vld [vmem:[%s10124 + $0x44] sm:$0xf]
  %v10143 = vld [vmem:[%s10124 + $0x48] sm:$0xf]
  %v10144 = vld [vmem:[%s10124 + $0x4c] sm:$0xf]
  %v10145 = vld [vmem:[%s10124 + $0x50] sm:$0xf]
  %v10146 = vld [vmem:[%s10124 + $0x54] sm:$0xf]
  %v10147 = vld [vmem:[%s10124 + $0x58] sm:$0xf]
  %v10148 = vld [vmem:[%s10124 + $0x5c] sm:$0xf]
  %v10149 = vld [vmem:[%s10124 + $0x60] sm:$0xf]
  %v10150 = vld [vmem:[%s10124 + $0x64] sm:$0xf]
  %v10151 = vld [vmem:[%s10124 + $0x68] sm:$0xf]
  %v10152 = vld [vmem:[%s10124 + $0x6c] sm:$0xf]
  %v10153 = vld [vmem:[%s10124 + $0x70] sm:$0xf]
  %v10154 = vld [vmem:[%s10124 + $0x74] sm:$0xf]
  %v10155 = vld [vmem:[%s10124 + $0x78] sm:$0xf]
  %v10156 = vld [vmem:[%s10124 + $0x7c] sm:$0xf]
  %v10157 = vld [vmem:[%s10124 + $0x80] sm:$0xf]
  %v10158 = vld [vmem:[%s10124 + $0x84] sm:$0xf]
  %v10159 = vld [vmem:[%s10124 + $0x88] sm:$0xf]
  %v10160 = vld [vmem:[%s10124 + $0x8c] sm:$0xf]
  %v10161 = vld [vmem:[%s10124 + $0x90] sm:$0xf]
  %v10162 = vld [vmem:[%s10124 + $0x94] sm:$0xf]
  %v10163 = vld [vmem:[%s10124 + $0x98] sm:$0xf]
  %v10164 = vld [vmem:[%s10124 + $0x9c] sm:$0xf]
  %v10165 = vld [vmem:[%s10124 + $0xa0] sm:$0xf]
  %v10166 = vld [vmem:[%s10124 + $0xa4] sm:$0xf]
  %v10167 = vld [vmem:[%s10124 + $0xa8] sm:$0xf]
  %v10168 = vld [vmem:[%s10124 + $0xac] sm:$0xf]
  %v10169 = vld [vmem:[%s10124 + $0xb0] sm:$0xf]
  %v10170 = vld [vmem:[%s10124 + $0xb4] sm:$0xf]
  %v10171 = vld [vmem:[%s10124 + $0xb8] sm:$0xf]
  %v10172 = vld [vmem:[%s10124 + $0xbc] sm:$0xf]
  %v10173 = vld [vmem:[%s10124 + $0xc0] sm:$0xf]
  %v10174 = vld [vmem:[%s10124 + $0xc4] sm:$0xf]
  %v10175 = vld [vmem:[%s10124 + $0xc8] sm:$0xf]
  %v10176 = vld [vmem:[%s10124 + $0xcc] sm:$0xf]
  %v10177 = vld [vmem:[%s10124 + $0xd0] sm:$0xf]
  %v10178 = vld [vmem:[%s10124 + $0xd4] sm:$0xf]
  %v10179 = vld [vmem:[%s10124 + $0xd8] sm:$0xf]
  %v10180 = vld [vmem:[%s10124 + $0xdc] sm:$0xf]
  %v10181 = vld [vmem:[%s10124 + $0xe0] sm:$0xf]
  %v10182 = vld [vmem:[%s10124 + $0xe4] sm:$0xf]
  %v10183 = vld [vmem:[%s10124 + $0xe8] sm:$0xf]
  %v10184 = vld [vmem:[%s10124 + $0xec] sm:$0xf]
  %v10185 = vld [vmem:[%s10124 + $0xf0] sm:$0xf]
  %v10186 = vld [vmem:[%s10124 + $0xf4] sm:$0xf]
  %v10187 = vld [vmem:[%s10124 + $0xf8] sm:$0xf]
  %v10188 = vld [vmem:[%s10124 + $0xfc] sm:$0xf]
  %v10189 = vld [vmem:[%s10124 + $0x100] sm:$0xf]
  %v10190 = vld [vmem:[%s10124 + $0x104] sm:$0xf]
  %v10191 = vld [vmem:[%s10124 + $0x108] sm:$0xf]
  %v10192 = vld [vmem:[%s10124 + $0x10c] sm:$0xf]
  %v10193 = vld [vmem:[%s10124 + $0x110] sm:$0xf]
  %v10194 = vld [vmem:[%s10124 + $0x114] sm:$0xf]
  %v10195 = vld [vmem:[%s10124 + $0x118] sm:$0xf]
  %v10196 = vld [vmem:[%s10124 + $0x11c] sm:$0xf]
  %v10197 = vld [vmem:[%s10124 + $0x120] sm:$0xf]
  %v10198 = vld [vmem:[%s10124 + $0x124] sm:$0xf]
  %v10199 = vld [vmem:[%s10124 + $0x128] sm:$0xf]
  %v10200 = vld [vmem:[%s10124 + $0x12c] sm:$0xf]
  %v10201 = vld [vmem:[%s10124 + $0x130] sm:$0xf]
  %v10202 = vld [vmem:[%s10124 + $0x134] sm:$0xf]
  %v10203 = vld [vmem:[%s10124 + $0x138] sm:$0xf]
  %v10204 = vld [vmem:[%s10124 + $0x13c] sm:$0xf]
  %v10205 = vld [vmem:[%s10124 + $0x140] sm:$0xf]
  %v10206 = vld [vmem:[%s10124 + $0x144] sm:$0xf]
  %v10207 = vld [vmem:[%s10124 + $0x148] sm:$0xf]
  %v10208 = vld [vmem:[%s10124 + $0x14c] sm:$0xf]
  %v10209 = vld [vmem:[%s10124 + $0x150] sm:$0xf]
  %v10210 = vld [vmem:[%s10124 + $0x154] sm:$0xf]
  %v10211 = vld [vmem:[%s10124 + $0x158] sm:$0xf]
  %v10212 = vld [vmem:[%s10124 + $0x15c] sm:$0xf]
  %v10213 = vld [vmem:[%s10124 + $0x160] sm:$0xf]
  %v10214 = vld [vmem:[%s10124 + $0x164] sm:$0xf]
  %v10215 = vld [vmem:[%s10124 + $0x168] sm:$0xf]
  %v10216 = vld [vmem:[%s10124 + $0x16c] sm:$0xf]
  %v10217 = vld [vmem:[%s10124 + $0x170] sm:$0xf]
  %v10218 = vld [vmem:[%s10124 + $0x174] sm:$0xf]
  %v10219 = vld [vmem:[%s10124 + $0x178] sm:$0xf]
  %v10220 = vld [vmem:[%s10124 + $0x17c] sm:$0xf]
  %v10221 = vld [vmem:[%s10124 + $0x180] sm:$0xf]
  %v10222 = vld [vmem:[%s10124 + $0x184] sm:$0xf]
  %v10223 = vld [vmem:[%s10124 + $0x188] sm:$0xf]
  %v10224 = vld [vmem:[%s10124 + $0x18c] sm:$0xf]
  %v10225 = vld [vmem:[%s10124 + $0x190] sm:$0xf]
  %v10226 = vld [vmem:[%s10124 + $0x194] sm:$0xf]
  %v10227 = vld [vmem:[%s10124 + $0x198] sm:$0xf]
  %v10228 = vld [vmem:[%s10124 + $0x19c] sm:$0xf]
  %v10229 = vld [vmem:[%s10124 + $0x1a0] sm:$0xf]
  %v10230 = vld [vmem:[%s10124 + $0x1a4] sm:$0xf]
  %v10231 = vld [vmem:[%s10124 + $0x1a8] sm:$0xf]
  %v10232 = vld [vmem:[%s10124 + $0x1ac] sm:$0xf]
  %v10233 = vld [vmem:[%s10124 + $0x1b0] sm:$0xf]
  %v10234 = vld [vmem:[%s10124 + $0x1b4] sm:$0xf]
  %v10235 = vld [vmem:[%s10124 + $0x1b8] sm:$0xf]
  %v10236 = vld [vmem:[%s10124 + $0x1bc] sm:$0xf]
  %v10237 = vld [vmem:[%s10124 + $0x1c0] sm:$0xf]
  %v10238 = vld [vmem:[%s10124 + $0x1c4] sm:$0xf]
  %v10239 = vld [vmem:[%s10124 + $0x1c8] sm:$0xf]
  %v10240 = vld [vmem:[%s10124 + $0x1cc] sm:$0xf]
  %v10241 = vld [vmem:[%s10124 + $0x1d0] sm:$0xf]
  %v10242 = vld [vmem:[%s10124 + $0x1d4] sm:$0xf]
  %v10243 = vld [vmem:[%s10124 + $0x1d8] sm:$0xf]
  %v10244 = vld [vmem:[%s10124 + $0x1dc] sm:$0xf]
  %v10245 = vld [vmem:[%s10124 + $0x1e0] sm:$0xf]
  %v10246 = vld [vmem:[%s10124 + $0x1e4] sm:$0xf]
  %v10247 = vld [vmem:[%s10124 + $0x1e8] sm:$0xf]
  %v10248 = vld [vmem:[%s10124 + $0x1ec] sm:$0xf]
  %v10249 = vld [vmem:[%s10124 + $0x1f0] sm:$0xf]
  %v10250 = vld [vmem:[%s10124 + $0x1f4] sm:$0xf]
  %v10251 = vld [vmem:[%s10124 + $0x1f8] sm:$0xf]
  %v10252 = vld [vmem:[%s10124 + $0x1fc] sm:$0xf]
  %v10253 = vld [vmem:[%s10124 + $0x200] sm:$0xf]
  %v10254 = vld [vmem:[%s10124 + $0x204] sm:$0xf]
  %v10255 = vld [vmem:[%s10124 + $0x208] sm:$0xf]
  %v10256 = vld [vmem:[%s10124 + $0x20c] sm:$0xf]
  %v10257 = vld [vmem:[%s10124 + $0x210] sm:$0xf]
  %v10258 = vld [vmem:[%s10124 + $0x214] sm:$0xf]
  %v10259 = vld [vmem:[%s10124 + $0x218] sm:$0xf]
  %v10260 = vld [vmem:[%s10124 + $0x21c] sm:$0xf]
  %v10261 = vld [vmem:[%s10124 + $0x220] sm:$0xf]
  %v10262 = vld [vmem:[%s10124 + $0x224] sm:$0xf]
  %v10263 = vld [vmem:[%s10124 + $0x228] sm:$0xf]
  %v10264 = vld [vmem:[%s10124 + $0x22c] sm:$0xf]
  %v10265 = vld [vmem:[%s10124 + $0x230] sm:$0xf]
  %v10266 = vld [vmem:[%s10124 + $0x234] sm:$0xf]
  %v10267 = vld [vmem:[%s10124 + $0x238] sm:$0xf]
  %v10268 = vld [vmem:[%s10124 + $0x23c] sm:$0xf]
  %v10269 = vld [vmem:[%s10124 + $0x240] sm:$0xf]
  %v10270 = vld [vmem:[%s10124 + $0x244] sm:$0xf]
  %v10271 = vld [vmem:[%s10124 + $0x248] sm:$0xf]
  %v10272 = vld [vmem:[%s10124 + $0x24c] sm:$0xf]
  %v10273 = vld [vmem:[%s10124 + $0x250] sm:$0xf]
  %v10274 = vld [vmem:[%s10124 + $0x254] sm:$0xf]
  %v10275 = vld [vmem:[%s10124 + $0x258] sm:$0xf]
  %v10276 = vld [vmem:[%s10124 + $0x25c] sm:$0xf]
  %v10277 = vld [vmem:[%s10124 + $0x260] sm:$0xf]
  %v10278 = vld [vmem:[%s10124 + $0x264] sm:$0xf]
  %v10279 = vld [vmem:[%s10124 + $0x268] sm:$0xf]
  %v10280 = vld [vmem:[%s10124 + $0x26c] sm:$0xf]
  %v10281 = vld [vmem:[%s10124 + $0x270] sm:$0xf]
  %v10282 = vld [vmem:[%s10124 + $0x274] sm:$0xf]
  %v10283 = vld [vmem:[%s10124 + $0x278] sm:$0xf]
  %v10284 = vld [vmem:[%s10124 + $0x27c] sm:$0xf]
  %v10285 = vld [vmem:[%s10124 + $0x280] sm:$0xf]
  %v10286 = vld [vmem:[%s10124 + $0x284] sm:$0xf]
  %v10287 = vld [vmem:[%s10124 + $0x288] sm:$0xf]
  %v10288 = vld [vmem:[%s10124 + $0x28c] sm:$0xf]
  %v10289 = vld [vmem:[%s10124 + $0x290] sm:$0xf]
  %v10290 = vld [vmem:[%s10124 + $0x294] sm:$0xf]
  %v10291 = vld [vmem:[%s10124 + $0x298] sm:$0xf]
  %v10292 = vld [vmem:[%s10124 + $0x29c] sm:$0xf]
  %v10293 = vld [vmem:[%s10124 + $0x2a0] sm:$0xf]
  %v10294 = vld [vmem:[%s10124 + $0x2a4] sm:$0xf]
  %v10295 = vld [vmem:[%s10124 + $0x2a8] sm:$0xf]
  %v10296 = vld [vmem:[%s10124 + $0x2ac] sm:$0xf]
  %v10297 = vld [vmem:[%s10124 + $0x2b0] sm:$0xf]
  %v10298 = vld [vmem:[%s10124 + $0x2b4] sm:$0xf]
  %v10299 = vld [vmem:[%s10124 + $0x2b8] sm:$0xf]
  %v10300 = vld [vmem:[%s10124 + $0x2bc] sm:$0xf]
  %v10301 = vld [vmem:[%s10124 + $0x2c0] sm:$0xf]
  %v10302 = vld [vmem:[%s10124 + $0x2c4] sm:$0xf]
  %v10303 = vld [vmem:[%s10124 + $0x2c8] sm:$0xf]
  %v10304 = vld [vmem:[%s10124 + $0x2cc] sm:$0xf]
  %v10305 = vld [vmem:[%s10124 + $0x2d0] sm:$0xf]
  %v10306 = vld [vmem:[%s10124 + $0x2d4] sm:$0xf]
  %v10307 = vld [vmem:[%s10124 + $0x2d8] sm:$0xf]
  %v10308 = vld [vmem:[%s10124 + $0x2dc] sm:$0xf]
  %v10309 = vld [vmem:[%s10124 + $0x2e0] sm:$0xf]
  %v10310 = vld [vmem:[%s10124 + $0x2e4] sm:$0xf]
  %v10311 = vld [vmem:[%s10124 + $0x2e8] sm:$0xf]
  %v10312 = vld [vmem:[%s10124 + $0x2ec] sm:$0xf]
  %v10313 = vld [vmem:[%s10124 + $0x2f0] sm:$0xf]
  %v10314 = vld [vmem:[%s10124 + $0x2f4] sm:$0xf]
  %v10315 = vld [vmem:[%s10124 + $0x2f8] sm:$0xf]
  %v10316 = vld [vmem:[%s10124 + $0x2fc] sm:$0xf]
  %v10317 = vld [vmem:[%s10124 + $0x300] sm:$0xf]
  %v10318 = vld [vmem:[%s10124 + $0x304] sm:$0xf]
  %v10319 = vld [vmem:[%s10124 + $0x308] sm:$0xf]
  %v10320 = vld [vmem:[%s10124 + $0x30c] sm:$0xf]
  %v10321 = vld [vmem:[%s10124 + $0x310] sm:$0xf]
  %v10322 = vld [vmem:[%s10124 + $0x314] sm:$0xf]
  %v10323 = vld [vmem:[%s10124 + $0x318] sm:$0xf]
  %v10324 = vld [vmem:[%s10124 + $0x31c] sm:$0xf]
  %v10325 = vld [vmem:[%s10124 + $0x320] sm:$0xf]
  %v10326 = vld [vmem:[%s10124 + $0x324] sm:$0xf]
  %v10327 = vld [vmem:[%s10124 + $0x328] sm:$0xf]
  %v10328 = vld [vmem:[%s10124 + $0x32c] sm:$0xf]
  %v10329 = vld [vmem:[%s10124 + $0x330] sm:$0xf]
  %v10330 = vld [vmem:[%s10124 + $0x334] sm:$0xf]
  %v10331 = vld [vmem:[%s10124 + $0x338] sm:$0xf]
  %v10332 = vld [vmem:[%s10124 + $0x33c] sm:$0xf]
  %v10333 = vld [vmem:[%s10124 + $0x340] sm:$0xf]
  %v10334 = vld [vmem:[%s10124 + $0x344] sm:$0xf]
  %v10335 = vld [vmem:[%s10124 + $0x348] sm:$0xf]
  %v10336 = vld [vmem:[%s10124 + $0x34c] sm:$0xf]
  %v10337 = vld [vmem:[%s10124 + $0x350] sm:$0xf]
  %v10338 = vld [vmem:[%s10124 + $0x354] sm:$0xf]
  %v10339 = vld [vmem:[%s10124 + $0x358] sm:$0xf]
  %v10340 = vld [vmem:[%s10124 + $0x35c] sm:$0xf]
  %v10341 = vld [vmem:[%s10124 + $0x360] sm:$0xf]
  %v10342 = vld [vmem:[%s10124 + $0x364] sm:$0xf]
  %v10343 = vld [vmem:[%s10124 + $0x368] sm:$0xf]
  %v10344 = vld [vmem:[%s10124 + $0x36c] sm:$0xf]
  %v10345 = vld [vmem:[%s10124 + $0x370] sm:$0xf]
  %v10346 = vld [vmem:[%s10124 + $0x374] sm:$0xf]
  %v10347 = vld [vmem:[%s10124 + $0x378] sm:$0xf]
  %v10348 = vld [vmem:[%s10124 + $0x37c] sm:$0xf]
  %v10349 = vld [vmem:[%s10124 + $0x380] sm:$0xf]
  %v10350 = vld [vmem:[%s10124 + $0x384] sm:$0xf]
  %v10351 = vld [vmem:[%s10124 + $0x388] sm:$0xf]
  %v10352 = vld [vmem:[%s10124 + $0x38c] sm:$0xf]
  %v10353 = vld [vmem:[%s10124 + $0x390] sm:$0xf]
  %v10354 = vld [vmem:[%s10124 + $0x394] sm:$0xf]
  %v10355 = vld [vmem:[%s10124 + $0x398] sm:$0xf]
  %v10356 = vld [vmem:[%s10124 + $0x39c] sm:$0xf]
  %v10357 = vld [vmem:[%s10124 + $0x3a0] sm:$0xf]
  %v10358 = vld [vmem:[%s10124 + $0x3a4] sm:$0xf]
  %v10359 = vld [vmem:[%s10124 + $0x3a8] sm:$0xf]
  %v10360 = vld [vmem:[%s10124 + $0x3ac] sm:$0xf]
  %v10361 = vld [vmem:[%s10124 + $0x3b0] sm:$0xf]
  %v10362 = vld [vmem:[%s10124 + $0x3b4] sm:$0xf]
  %v10363 = vld [vmem:[%s10124 + $0x3b8] sm:$0xf]
  %v10364 = vld [vmem:[%s10124 + $0x3bc] sm:$0xf]
  %v10365 = vld [vmem:[%s10124 + $0x3c0] sm:$0xf]
  %v10366 = vld [vmem:[%s10124 + $0x3c4] sm:$0xf]
  %v10367 = vld [vmem:[%s10124 + $0x3c8] sm:$0xf]
  %v10368 = vld [vmem:[%s10124 + $0x3cc] sm:$0xf]
  %v10369 = vld [vmem:[%s10124 + $0x3d0] sm:$0xf]
  %v10370 = vld [vmem:[%s10124 + $0x3d4] sm:$0xf]
  %v10371 = vld [vmem:[%s10124 + $0x3d8] sm:$0xf]
  %v10372 = vld [vmem:[%s10124 + $0x3dc] sm:$0xf]
  %v10373 = vld [vmem:[%s10124 + $0x3e0] sm:$0xf]
  %v10374 = vld [vmem:[%s10124 + $0x3e4] sm:$0xf]
  %v10375 = vld [vmem:[%s10124 + $0x3e8] sm:$0xf]
  %v10376 = vld [vmem:[%s10124 + $0x3ec] sm:$0xf]
  %v10377 = vld [vmem:[%s10124 + $0x3f0] sm:$0xf]
  %v10378 = vld [vmem:[%s10124 + $0x3f4] sm:$0xf]
  %v10379 = vld [vmem:[%s10124 + $0x3f8] sm:$0xf]
  %v10380 = vld [vmem:[%s10124 + $0x3fc] sm:$0xf]
  %s10381 = scalar_lea.vmem %s14, 2
  %v10382 = vld [vmem:[%s10381] sm:$0x1]
  %v10384 = vlaneseq
  %v10385 = vshrl.u32 %v10384, 7
  %v10386 = vsub.s32 0, %v10385
  %v10387 = vrot.slane %v10382, %v10386
  %v10645 = vunpack.c.l.b16 %v10125
  %v10646 = vunpack.c.l.b16 %v10126
  %v10647 = vunpack.c.l.b16 %v10127
  %v10648 = vunpack.c.l.b16 %v10128
  %v10649 = vunpack.c.l.b16 %v10129
  %v10650 = vunpack.c.l.b16 %v10130
  %v10651 = vunpack.c.l.b16 %v10131
  %v10652 = vunpack.c.l.b16 %v10132
  %v10653 = vunpack.c.l.b16 %v10133
  %v10654 = vunpack.c.l.b16 %v10134
  %v10655 = vunpack.c.l.b16 %v10135
  %v10656 = vunpack.c.l.b16 %v10136
  %v10657 = vunpack.c.l.b16 %v10137
  %v10658 = vunpack.c.l.b16 %v10138
  %v10659 = vunpack.c.l.b16 %v10139
  %v10660 = vunpack.c.l.b16 %v10140
  %v10661 = vunpack.c.l.b16 %v10141
  %v10662 = vunpack.c.l.b16 %v10142
  %v10663 = vunpack.c.l.b16 %v10143
  %v10664 = vunpack.c.l.b16 %v10144
  %v10665 = vunpack.c.l.b16 %v10145
  %v10666 = vunpack.c.l.b16 %v10146
  %v10667 = vunpack.c.l.b16 %v10147
  %v10668 = vunpack.c.l.b16 %v10148
  %v10669 = vunpack.c.l.b16 %v10149
  %v10670 = vunpack.c.l.b16 %v10150
  %v10671 = vunpack.c.l.b16 %v10151
  %v10672 = vunpack.c.l.b16 %v10152
  %v10673 = vunpack.c.l.b16 %v10153
  %v10674 = vunpack.c.l.b16 %v10154
  %v10675 = vunpack.c.l.b16 %v10155
  %v10676 = vunpack.c.l.b16 %v10156
  %v10677 = vunpack.c.l.b16 %v10157
  %v10678 = vunpack.c.l.b16 %v10158
  %v10679 = vunpack.c.l.b16 %v10159
  %v10680 = vunpack.c.l.b16 %v10160
  %v10681 = vunpack.c.l.b16 %v10161
  %v10682 = vunpack.c.l.b16 %v10162
  %v10683 = vunpack.c.l.b16 %v10163
  %v10684 = vunpack.c.l.b16 %v10164
  %v10685 = vunpack.c.l.b16 %v10165
  %v10686 = vunpack.c.l.b16 %v10166
  %v10687 = vunpack.c.l.b16 %v10167
  %v10688 = vunpack.c.l.b16 %v10168
  %v10689 = vunpack.c.l.b16 %v10169
  %v10690 = vunpack.c.l.b16 %v10170
  %v10691 = vunpack.c.l.b16 %v10171
  %v10692 = vunpack.c.l.b16 %v10172
  %v10693 = vunpack.c.l.b16 %v10173
  %v10694 = vunpack.c.l.b16 %v10174
  %v10695 = vunpack.c.l.b16 %v10175
  %v10696 = vunpack.c.l.b16 %v10176
  %v10697 = vunpack.c.l.b16 %v10177
  %v10698 = vunpack.c.l.b16 %v10178
  %v10699 = vunpack.c.l.b16 %v10179
  %v10700 = vunpack.c.l.b16 %v10180
  %v10701 = vunpack.c.l.b16 %v10181
  %v10702 = vunpack.c.l.b16 %v10182
  %v10703 = vunpack.c.l.b16 %v10183
  %v10704 = vunpack.c.l.b16 %v10184
  %v10705 = vunpack.c.l.b16 %v10185
  %v10706 = vunpack.c.l.b16 %v10186
  %v10707 = vunpack.c.l.b16 %v10187
  %v10708 = vunpack.c.l.b16 %v10188
  %v10709 = vunpack.c.l.b16 %v10189
  %v10710 = vunpack.c.l.b16 %v10190
  %v10711 = vunpack.c.l.b16 %v10191
  %v10712 = vunpack.c.l.b16 %v10192
  %v10713 = vunpack.c.l.b16 %v10193
  %v10714 = vunpack.c.l.b16 %v10194
  %v10715 = vunpack.c.l.b16 %v10195
  %v10716 = vunpack.c.l.b16 %v10196
  %v10717 = vunpack.c.l.b16 %v10197
  %v10718 = vunpack.c.l.b16 %v10198
  %v10719 = vunpack.c.l.b16 %v10199
  %v10720 = vunpack.c.l.b16 %v10200
  %v10721 = vunpack.c.l.b16 %v10201
  %v10722 = vunpack.c.l.b16 %v10202
  %v10723 = vunpack.c.l.b16 %v10203
  %v10724 = vunpack.c.l.b16 %v10204
  %v10725 = vunpack.c.l.b16 %v10205
  %v10726 = vunpack.c.l.b16 %v10206
  %v10727 = vunpack.c.l.b16 %v10207
  %v10728 = vunpack.c.l.b16 %v10208
  %v10729 = vunpack.c.l.b16 %v10209
  %v10730 = vunpack.c.l.b16 %v10210
  %v10731 = vunpack.c.l.b16 %v10211
  %v10732 = vunpack.c.l.b16 %v10212
  %v10733 = vunpack.c.l.b16 %v10213
  %v10734 = vunpack.c.l.b16 %v10214
  %v10735 = vunpack.c.l.b16 %v10215
  %v10736 = vunpack.c.l.b16 %v10216
  %v10737 = vunpack.c.l.b16 %v10217
  %v10738 = vunpack.c.l.b16 %v10218
  %v10739 = vunpack.c.l.b16 %v10219
  %v10740 = vunpack.c.l.b16 %v10220
  %v10741 = vunpack.c.l.b16 %v10221
  %v10742 = vunpack.c.l.b16 %v10222
  %v10743 = vunpack.c.l.b16 %v10223
  %v10744 = vunpack.c.l.b16 %v10224
  %v10745 = vunpack.c.l.b16 %v10225
  %v10746 = vunpack.c.l.b16 %v10226
  %v10747 = vunpack.c.l.b16 %v10227
  %v10748 = vunpack.c.l.b16 %v10228
  %v10749 = vunpack.c.l.b16 %v10229
  %v10750 = vunpack.c.l.b16 %v10230
  %v10751 = vunpack.c.l.b16 %v10231
  %v10752 = vunpack.c.l.b16 %v10232
  %v10753 = vunpack.c.l.b16 %v10233
  %v10754 = vunpack.c.l.b16 %v10234
  %v10755 = vunpack.c.l.b16 %v10235
  %v10756 = vunpack.c.l.b16 %v10236
  %v10757 = vunpack.c.l.b16 %v10237
  %v10758 = vunpack.c.l.b16 %v10238
  %v10759 = vunpack.c.l.b16 %v10239
  %v10760 = vunpack.c.l.b16 %v10240
  %v10761 = vunpack.c.l.b16 %v10241
  %v10762 = vunpack.c.l.b16 %v10242
  %v10763 = vunpack.c.l.b16 %v10243
  %v10764 = vunpack.c.l.b16 %v10244
  %v10765 = vunpack.c.l.b16 %v10245
  %v10766 = vunpack.c.l.b16 %v10246
  %v10767 = vunpack.c.l.b16 %v10247
  %v10768 = vunpack.c.l.b16 %v10248
  %v10769 = vunpack.c.l.b16 %v10249
  %v10770 = vunpack.c.l.b16 %v10250
  %v10771 = vunpack.c.l.b16 %v10251
  %v10772 = vunpack.c.l.b16 %v10252
  %v10773 = vunpack.c.l.b16 %v10253
  %v10774 = vunpack.c.l.b16 %v10254
  %v10775 = vunpack.c.l.b16 %v10255
  %v10776 = vunpack.c.l.b16 %v10256
  %v10777 = vunpack.c.l.b16 %v10257
  %v10778 = vunpack.c.l.b16 %v10258
  %v10779 = vunpack.c.l.b16 %v10259
  %v10780 = vunpack.c.l.b16 %v10260
  %v10781 = vunpack.c.l.b16 %v10261
  %v10782 = vunpack.c.l.b16 %v10262
  %v10783 = vunpack.c.l.b16 %v10263
  %v10784 = vunpack.c.l.b16 %v10264
  %v10785 = vunpack.c.l.b16 %v10265
  %v10786 = vunpack.c.l.b16 %v10266
  %v10787 = vunpack.c.l.b16 %v10267
  %v10788 = vunpack.c.l.b16 %v10268
  %v10789 = vunpack.c.l.b16 %v10269
  %v10790 = vunpack.c.l.b16 %v10270
  %v10791 = vunpack.c.l.b16 %v10271
  %v10792 = vunpack.c.l.b16 %v10272
  %v10793 = vunpack.c.l.b16 %v10273
  %v10794 = vunpack.c.l.b16 %v10274
  %v10795 = vunpack.c.l.b16 %v10275
  %v10796 = vunpack.c.l.b16 %v10276
  %v10797 = vunpack.c.l.b16 %v10277
  %v10798 = vunpack.c.l.b16 %v10278
  %v10799 = vunpack.c.l.b16 %v10279
  %v10800 = vunpack.c.l.b16 %v10280
  %v10801 = vunpack.c.l.b16 %v10281
  %v10802 = vunpack.c.l.b16 %v10282
  %v10803 = vunpack.c.l.b16 %v10283
  %v10804 = vunpack.c.l.b16 %v10284
  %v10805 = vunpack.c.l.b16 %v10285
  %v10806 = vunpack.c.l.b16 %v10286
  %v10807 = vunpack.c.l.b16 %v10287
  %v10808 = vunpack.c.l.b16 %v10288
  %v10809 = vunpack.c.l.b16 %v10289
  %v10810 = vunpack.c.l.b16 %v10290
  %v10811 = vunpack.c.l.b16 %v10291
  %v10812 = vunpack.c.l.b16 %v10292
  %v10813 = vunpack.c.l.b16 %v10293
  %v10814 = vunpack.c.l.b16 %v10294
  %v10815 = vunpack.c.l.b16 %v10295
  %v10816 = vunpack.c.l.b16 %v10296
  %v10817 = vunpack.c.l.b16 %v10297
  %v10818 = vunpack.c.l.b16 %v10298
  %v10819 = vunpack.c.l.b16 %v10299
  %v10820 = vunpack.c.l.b16 %v10300
  %v10821 = vunpack.c.l.b16 %v10301
  %v10822 = vunpack.c.l.b16 %v10302
  %v10823 = vunpack.c.l.b16 %v10303
  %v10824 = vunpack.c.l.b16 %v10304
  %v10825 = vunpack.c.l.b16 %v10305
  %v10826 = vunpack.c.l.b16 %v10306
  %v10827 = vunpack.c.l.b16 %v10307
  %v10828 = vunpack.c.l.b16 %v10308
  %v10829 = vunpack.c.l.b16 %v10309
  %v10830 = vunpack.c.l.b16 %v10310
  %v10831 = vunpack.c.l.b16 %v10311
  %v10832 = vunpack.c.l.b16 %v10312
  %v10833 = vunpack.c.l.b16 %v10313
  %v10834 = vunpack.c.l.b16 %v10314
  %v10835 = vunpack.c.l.b16 %v10315
  %v10836 = vunpack.c.l.b16 %v10316
  %v10837 = vunpack.c.l.b16 %v10317
  %v10838 = vunpack.c.l.b16 %v10318
  %v10839 = vunpack.c.l.b16 %v10319
  %v10840 = vunpack.c.l.b16 %v10320
  %v10841 = vunpack.c.l.b16 %v10321
  %v10842 = vunpack.c.l.b16 %v10322
  %v10843 = vunpack.c.l.b16 %v10323
  %v10844 = vunpack.c.l.b16 %v10324
  %v10845 = vunpack.c.l.b16 %v10325
  %v10846 = vunpack.c.l.b16 %v10326
  %v10847 = vunpack.c.l.b16 %v10327
  %v10848 = vunpack.c.l.b16 %v10328
  %v10849 = vunpack.c.l.b16 %v10329
  %v10850 = vunpack.c.l.b16 %v10330
  %v10851 = vunpack.c.l.b16 %v10331
  %v10852 = vunpack.c.l.b16 %v10332
  %v10853 = vunpack.c.l.b16 %v10333
  %v10854 = vunpack.c.l.b16 %v10334
  %v10855 = vunpack.c.l.b16 %v10335
  %v10856 = vunpack.c.l.b16 %v10336
  %v10857 = vunpack.c.l.b16 %v10337
  %v10858 = vunpack.c.l.b16 %v10338
  %v10859 = vunpack.c.l.b16 %v10339
  %v10860 = vunpack.c.l.b16 %v10340
  %v10861 = vunpack.c.l.b16 %v10341
  %v10862 = vunpack.c.l.b16 %v10342
  %v10863 = vunpack.c.l.b16 %v10343
  %v10864 = vunpack.c.l.b16 %v10344
  %v10865 = vunpack.c.l.b16 %v10345
  %v10866 = vunpack.c.l.b16 %v10346
  %v10867 = vunpack.c.l.b16 %v10347
  %v10868 = vunpack.c.l.b16 %v10348
  %v10869 = vunpack.c.l.b16 %v10349
  %v10870 = vunpack.c.l.b16 %v10350
  %v10871 = vunpack.c.l.b16 %v10351
  %v10872 = vunpack.c.l.b16 %v10352
  %v10873 = vunpack.c.l.b16 %v10353
  %v10874 = vunpack.c.l.b16 %v10354
  %v10875 = vunpack.c.l.b16 %v10355
  %v10876 = vunpack.c.l.b16 %v10356
  %v10877 = vunpack.c.l.b16 %v10357
  %v10878 = vunpack.c.l.b16 %v10358
  %v10879 = vunpack.c.l.b16 %v10359
  %v10880 = vunpack.c.l.b16 %v10360
  %v10881 = vunpack.c.l.b16 %v10361
  %v10882 = vunpack.c.l.b16 %v10362
  %v10883 = vunpack.c.l.b16 %v10363
  %v10884 = vunpack.c.l.b16 %v10364
  %v10885 = vunpack.c.l.b16 %v10365
  %v10886 = vunpack.c.l.b16 %v10366
  %v10887 = vunpack.c.l.b16 %v10367
  %v10888 = vunpack.c.l.b16 %v10368
  %v10889 = vunpack.c.l.b16 %v10369
  %v10890 = vunpack.c.l.b16 %v10370
  %v10891 = vunpack.c.l.b16 %v10371
  %v10892 = vunpack.c.l.b16 %v10372
  %v10893 = vunpack.c.l.b16 %v10373
  %v10894 = vunpack.c.l.b16 %v10374
  %v10895 = vunpack.c.l.b16 %v10375
  %v10896 = vunpack.c.l.b16 %v10376
  %v10897 = vunpack.c.l.b16 %v10377
  %v10898 = vunpack.c.l.b16 %v10378
  %v10899 = vunpack.c.l.b16 %v10379
  %v10900 = vunpack.c.l.b16 %v10380
  %v10901 = vpack.c.b16 %v10646, %v10645
  %v10902 = vpack.c.b16 %v10648, %v10647
  %v10903 = vpack.c.b16 %v10650, %v10649
  %v10904 = vpack.c.b16 %v10652, %v10651
  %v10905 = vpack.c.b16 %v10654, %v10653
  %v10906 = vpack.c.b16 %v10656, %v10655
  %v10907 = vpack.c.b16 %v10658, %v10657
  %v10908 = vpack.c.b16 %v10660, %v10659
  %v10909 = vpack.c.b16 %v10662, %v10661
  %v10910 = vpack.c.b16 %v10664, %v10663
  %v10911 = vpack.c.b16 %v10666, %v10665
  %v10912 = vpack.c.b16 %v10668, %v10667
  %v10913 = vpack.c.b16 %v10670, %v10669
  %v10914 = vpack.c.b16 %v10672, %v10671
  %v10915 = vpack.c.b16 %v10674, %v10673
  %v10916 = vpack.c.b16 %v10676, %v10675
  %v10917 = vpack.c.b16 %v10678, %v10677
  %v10918 = vpack.c.b16 %v10680, %v10679
  %v10919 = vpack.c.b16 %v10682, %v10681
  %v10920 = vpack.c.b16 %v10684, %v10683
  %v10921 = vpack.c.b16 %v10686, %v10685
  %v10922 = vpack.c.b16 %v10688, %v10687
  %v10923 = vpack.c.b16 %v10690, %v10689
  %v10924 = vpack.c.b16 %v10692, %v10691
  %v10925 = vpack.c.b16 %v10694, %v10693
  %v10926 = vpack.c.b16 %v10696, %v10695
  %v10927 = vpack.c.b16 %v10698, %v10697
  %v10928 = vpack.c.b16 %v10700, %v10699
  %v10929 = vpack.c.b16 %v10702, %v10701
  %v10930 = vpack.c.b16 %v10704, %v10703
  %v10931 = vpack.c.b16 %v10706, %v10705
  %v10932 = vpack.c.b16 %v10708, %v10707
  %v10933 = vpack.c.b16 %v10710, %v10709
  %v10934 = vpack.c.b16 %v10712, %v10711
  %v10935 = vpack.c.b16 %v10714, %v10713
  %v10936 = vpack.c.b16 %v10716, %v10715
  %v10937 = vpack.c.b16 %v10718, %v10717
  %v10938 = vpack.c.b16 %v10720, %v10719
  %v10939 = vpack.c.b16 %v10722, %v10721
  %v10940 = vpack.c.b16 %v10724, %v10723
  %v10941 = vpack.c.b16 %v10726, %v10725
  %v10942 = vpack.c.b16 %v10728, %v10727
  %v10943 = vpack.c.b16 %v10730, %v10729
  %v10944 = vpack.c.b16 %v10732, %v10731
  %v10945 = vpack.c.b16 %v10734, %v10733
  %v10946 = vpack.c.b16 %v10736, %v10735
  %v10947 = vpack.c.b16 %v10738, %v10737
  %v10948 = vpack.c.b16 %v10740, %v10739
  %v10949 = vpack.c.b16 %v10742, %v10741
  %v10950 = vpack.c.b16 %v10744, %v10743
  %v10951 = vpack.c.b16 %v10746, %v10745
  %v10952 = vpack.c.b16 %v10748, %v10747
  %v10953 = vpack.c.b16 %v10750, %v10749
  %v10954 = vpack.c.b16 %v10752, %v10751
  %v10955 = vpack.c.b16 %v10754, %v10753
  %v10956 = vpack.c.b16 %v10756, %v10755
  %v10957 = vpack.c.b16 %v10758, %v10757
  %v10958 = vpack.c.b16 %v10760, %v10759
  %v10959 = vpack.c.b16 %v10762, %v10761
  %v10960 = vpack.c.b16 %v10764, %v10763
  %v10961 = vpack.c.b16 %v10766, %v10765
  %v10962 = vpack.c.b16 %v10768, %v10767
  %v10963 = vpack.c.b16 %v10770, %v10769
  %v10964 = vpack.c.b16 %v10772, %v10771
  %v10965 = vpack.c.b16 %v10774, %v10773
  %v10966 = vpack.c.b16 %v10776, %v10775
  %v10967 = vpack.c.b16 %v10778, %v10777
  %v10968 = vpack.c.b16 %v10780, %v10779
  %v10969 = vpack.c.b16 %v10782, %v10781
  %v10970 = vpack.c.b16 %v10784, %v10783
  %v10971 = vpack.c.b16 %v10786, %v10785
  %v10972 = vpack.c.b16 %v10788, %v10787
  %v10973 = vpack.c.b16 %v10790, %v10789
  %v10974 = vpack.c.b16 %v10792, %v10791
  %v10975 = vpack.c.b16 %v10794, %v10793
  %v10976 = vpack.c.b16 %v10796, %v10795
  %v10977 = vpack.c.b16 %v10798, %v10797
  %v10978 = vpack.c.b16 %v10800, %v10799
  %v10979 = vpack.c.b16 %v10802, %v10801
  %v10980 = vpack.c.b16 %v10804, %v10803
  %v10981 = vpack.c.b16 %v10806, %v10805
  %v10982 = vpack.c.b16 %v10808, %v10807
  %v10983 = vpack.c.b16 %v10810, %v10809
  %v10984 = vpack.c.b16 %v10812, %v10811
  %v10985 = vpack.c.b16 %v10814, %v10813
  %v10986 = vpack.c.b16 %v10816, %v10815
  %v10987 = vpack.c.b16 %v10818, %v10817
  %v10988 = vpack.c.b16 %v10820, %v10819
  %v10989 = vpack.c.b16 %v10822, %v10821
  %v10990 = vpack.c.b16 %v10824, %v10823
  %v10991 = vpack.c.b16 %v10826, %v10825
  %v10992 = vpack.c.b16 %v10828, %v10827
  %v10993 = vpack.c.b16 %v10830, %v10829
  %v10994 = vpack.c.b16 %v10832, %v10831
  %v10995 = vpack.c.b16 %v10834, %v10833
  %v10996 = vpack.c.b16 %v10836, %v10835
  %v10997 = vpack.c.b16 %v10838, %v10837
  %v10998 = vpack.c.b16 %v10840, %v10839
  %v10999 = vpack.c.b16 %v10842, %v10841
  %v11000 = vpack.c.b16 %v10844, %v10843
  %v11001 = vpack.c.b16 %v10846, %v10845
  %v11002 = vpack.c.b16 %v10848, %v10847
  %v11003 = vpack.c.b16 %v10850, %v10849
  %v11004 = vpack.c.b16 %v10852, %v10851
  %v11005 = vpack.c.b16 %v10854, %v10853
  %v11006 = vpack.c.b16 %v10856, %v10855
  %v11007 = vpack.c.b16 %v10858, %v10857
  %v11008 = vpack.c.b16 %v10860, %v10859
  %v11009 = vpack.c.b16 %v10862, %v10861
  %v11010 = vpack.c.b16 %v10864, %v10863
  %v11011 = vpack.c.b16 %v10866, %v10865
  %v11012 = vpack.c.b16 %v10868, %v10867
  %v11013 = vpack.c.b16 %v10870, %v10869
  %v11014 = vpack.c.b16 %v10872, %v10871
  %v11015 = vpack.c.b16 %v10874, %v10873
  %v11016 = vpack.c.b16 %v10876, %v10875
  %v11017 = vpack.c.b16 %v10878, %v10877
  %v11018 = vpack.c.b16 %v10880, %v10879
  %v11019 = vpack.c.b16 %v10882, %v10881
  %v11020 = vpack.c.b16 %v10884, %v10883
  %v11021 = vpack.c.b16 %v10886, %v10885
  %v11022 = vpack.c.b16 %v10888, %v10887
  %v11023 = vpack.c.b16 %v10890, %v10889
  %v11024 = vpack.c.b16 %v10892, %v10891
  %v11025 = vpack.c.b16 %v10894, %v10893
  %v11026 = vpack.c.b16 %v10896, %v10895
  %v11027 = vpack.c.b16 %v10898, %v10897
  %v11028 = vpack.c.b16 %v10900, %v10899
  %11157 = vmatprep.subr.bf16.mxu0 0
  %11158 = vmatpush1.bf16.msra.mxu0 %v10901
  %11159 = vmatprep.subr.bf16.mxu0 0
  %11160 = vmatpush1.bf16.msra.mxu0 %v10902
  %11161 = vmatprep.subr.bf16.mxu0 0
  %11162 = vmatpush1.bf16.msra.mxu0 %v10903
  %11163 = vmatprep.subr.bf16.mxu0 0
  %11164 = vmatpush1.bf16.msra.mxu0 %v10904
  %11165 = vmatprep.subr.bf16.mxu0 0
  %11166 = vmatpush1.bf16.msra.mxu0 %v10905
  %11167 = vmatprep.subr.bf16.mxu0 0
  %11168 = vmatpush1.bf16.msra.mxu0 %v10906
  %11169 = vmatprep.subr.bf16.mxu0 0
  %11170 = vmatpush1.bf16.msra.mxu0 %v10907
  %11171 = vmatprep.subr.bf16.mxu0 0
  %11172 = vmatpush1.bf16.msra.mxu0 %v10908
  %11173 = vmatprep.subr.bf16.mxu0 0
  %11174 = vmatpush1.bf16.msra.mxu0 %v10909
  %11175 = vmatprep.subr.bf16.mxu0 0
  %11176 = vmatpush1.bf16.msra.mxu0 %v10910
  %11177 = vmatprep.subr.bf16.mxu0 0
  %11178 = vmatpush1.bf16.msra.mxu0 %v10911
  %11179 = vmatprep.subr.bf16.mxu0 0
  %11180 = vmatpush1.bf16.msra.mxu0 %v10912
  %11181 = vmatprep.subr.bf16.mxu0 0
  %11182 = vmatpush1.bf16.msra.mxu0 %v10913
  %11183 = vmatprep.subr.bf16.mxu0 0
  %11184 = vmatpush1.bf16.msra.mxu0 %v10914
  %11185 = vmatprep.subr.bf16.mxu0 0
  %11186 = vmatpush1.bf16.msra.mxu0 %v10915
  %11187 = vmatprep.subr.bf16.mxu0 0
  %11188 = vmatpush1.bf16.msra.mxu0 %v10916
  %11189 = vmatprep.mubr.bf16.mxu0 %v10109
  %11190 = vmatmul.mubr.bf16.gmra.mrb[0].mxu0 %v10108
  %v11191 = vpop.f32.mrb[0].mxu0
  %v11192 = vadd.f32 %v10387, %v11191
  %v11193 = vpop.f32.mrb[0].mxu0
  %v11194 = vpop.f32.mrb[0].mxu0
  %v11195 = vadd.f32 %v10387, %v11194
  %v11196 = vpop.f32.mrb[0].mxu0
  %11197 = vdwg.mxu0
  %11198 = vmatprep.subr.bf16.mxu0 0
  %11199 = vmatpush1.bf16.msra.mxu0 %v10917
  %11200 = vmatprep.subr.bf16.mxu0 0
  %11201 = vmatpush1.bf16.msra.mxu0 %v10918
  %11202 = vmatprep.subr.bf16.mxu0 0
  %11203 = vmatpush1.bf16.msra.mxu0 %v10919
  %11204 = vmatprep.subr.bf16.mxu0 0
  %11205 = vmatpush1.bf16.msra.mxu0 %v10920
  %11206 = vmatprep.subr.bf16.mxu0 0
  %11207 = vmatpush1.bf16.msra.mxu0 %v10921
  %11208 = vmatprep.subr.bf16.mxu0 0
  %11209 = vmatpush1.bf16.msra.mxu0 %v10922
  %11210 = vmatprep.subr.bf16.mxu0 0
  %11211 = vmatpush1.bf16.msra.mxu0 %v10923
  %11212 = vmatprep.subr.bf16.mxu0 0
  %11213 = vmatpush1.bf16.msra.mxu0 %v10924
  %11214 = vmatprep.subr.bf16.mxu0 0
  %11215 = vmatpush1.bf16.msra.mxu0 %v10925
  %11216 = vmatprep.subr.bf16.mxu0 0
  %11217 = vmatpush1.bf16.msra.mxu0 %v10926
  %11218 = vmatprep.subr.bf16.mxu0 0
  %11219 = vmatpush1.bf16.msra.mxu0 %v10927
  %11220 = vmatprep.subr.bf16.mxu0 0
  %11221 = vmatpush1.bf16.msra.mxu0 %v10928
  %11222 = vmatprep.subr.bf16.mxu0 0
  %11223 = vmatpush1.bf16.msra.mxu0 %v10929
  %11224 = vmatprep.subr.bf16.mxu0 0
  %11225 = vmatpush1.bf16.msra.mxu0 %v10930
  %11226 = vmatprep.subr.bf16.mxu0 0
  %11227 = vmatpush1.bf16.msra.mxu0 %v10931
  %11228 = vmatprep.subr.bf16.mxu0 0
  %11229 = vmatpush1.bf16.msra.mxu0 %v10932
  %11230 = vmatprep.mubr.bf16.mxu0 %v10111
  %11231 = vmatmul.mubr.bf16.gmra.mrb[0].mxu0 %v10110
  %v11232 = vpop.f32.mrb[0].mxu0
  %v11233 = vadd.f32 %v11192, %v11232
  %v11234 = vpop.f32.mrb[0].mxu0
  %v11235 = vpop.f32.mrb[0].mxu0
  %v11236 = vadd.f32 %v11195, %v11235
  %v11237 = vpop.f32.mrb[0].mxu0
  %11238 = vdwg.mxu0
  %11239 = vmatprep.subr.bf16.mxu0 0
  %11240 = vmatpush1.bf16.msra.mxu0 %v10933
  %11241 = vmatprep.subr.bf16.mxu0 0
  %11242 = vmatpush1.bf16.msra.mxu0 %v10934
  %11243 = vmatprep.subr.bf16.mxu0 0
  %11244 = vmatpush1.bf16.msra.mxu0 %v10935
  %11245 = vmatprep.subr.bf16.mxu0 0
  %11246 = vmatpush1.bf16.msra.mxu0 %v10936
  %11247 = vmatprep.subr.bf16.mxu0 0
  %11248 = vmatpush1.bf16.msra.mxu0 %v10937
  %11249 = vmatprep.subr.bf16.mxu0 0
  %11250 = vmatpush1.bf16.msra.mxu0 %v10938
  %11251 = vmatprep.subr.bf16.mxu0 0
  %11252 = vmatpush1.bf16.msra.mxu0 %v10939
  %11253 = vmatprep.subr.bf16.mxu0 0
  %11254 = vmatpush1.bf16.msra.mxu0 %v10940
  %11255 = vmatprep.subr.bf16.mxu0 0
  %11256 = vmatpush1.bf16.msra.mxu0 %v10941
  %11257 = vmatprep.subr.bf16.mxu0 0
  %11258 = vmatpush1.bf16.msra.mxu0 %v10942
  %11259 = vmatprep.subr.bf16.mxu0 0
  %11260 = vmatpush1.bf16.msra.mxu0 %v10943
  %11261 = vmatprep.subr.bf16.mxu0 0
  %11262 = vmatpush1.bf16.msra.mxu0 %v10944
  %11263 = vmatprep.subr.bf16.mxu0 0
  %11264 = vmatpush1.bf16.msra.mxu0 %v10945
  %11265 = vmatprep.subr.bf16.mxu0 0
  %11266 = vmatpush1.bf16.msra.mxu0 %v10946
  %11267 = vmatprep.subr.bf16.mxu0 0
  %11268 = vmatpush1.bf16.msra.mxu0 %v10947
  %11269 = vmatprep.subr.bf16.mxu0 0
  %11270 = vmatpush1.bf16.msra.mxu0 %v10948
  %11271 = vmatprep.mubr.bf16.mxu0 %v10113
  %11272 = vmatmul.mubr.bf16.gmra.mrb[0].mxu0 %v10112
  %v11273 = vpop.f32.mrb[0].mxu0
  %v11274 = vadd.f32 %v11233, %v11273
  %v11275 = vpop.f32.mrb[0].mxu0
  %v11276 = vpop.f32.mrb[0].mxu0
  %v11277 = vadd.f32 %v11236, %v11276
  %v11278 = vpop.f32.mrb[0].mxu0
  %11279 = vdwg.mxu0
  %11280 = vmatprep.subr.bf16.mxu0 0
  %11281 = vmatpush1.bf16.msra.mxu0 %v10949
  %11282 = vmatprep.subr.bf16.mxu0 0
  %11283 = vmatpush1.bf16.msra.mxu0 %v10950
  %11284 = vmatprep.subr.bf16.mxu0 0
  %11285 = vmatpush1.bf16.msra.mxu0 %v10951
  %11286 = vmatprep.subr.bf16.mxu0 0
  %11287 = vmatpush1.bf16.msra.mxu0 %v10952
  %11288 = vmatprep.subr.bf16.mxu0 0
  %11289 = vmatpush1.bf16.msra.mxu0 %v10953
  %11290 = vmatprep.subr.bf16.mxu0 0
  %11291 = vmatpush1.bf16.msra.mxu0 %v10954
  %11292 = vmatprep.subr.bf16.mxu0 0
  %11293 = vmatpush1.bf16.msra.mxu0 %v10955
  %11294 = vmatprep.subr.bf16.mxu0 0
  %11295 = vmatpush1.bf16.msra.mxu0 %v10956
  %11296 = vmatprep.subr.bf16.mxu0 0
  %11297 = vmatpush1.bf16.msra.mxu0 %v10957
  %11298 = vmatprep.subr.bf16.mxu0 0
  %11299 = vmatpush1.bf16.msra.mxu0 %v10958
  %11300 = vmatprep.subr.bf16.mxu0 0
  %11301 = vmatpush1.bf16.msra.mxu0 %v10959
  %11302 = vmatprep.subr.bf16.mxu0 0
  %11303 = vmatpush1.bf16.msra.mxu0 %v10960
  %11304 = vmatprep.subr.bf16.mxu0 0
  %11305 = vmatpush1.bf16.msra.mxu0 %v10961
  %11306 = vmatprep.subr.bf16.mxu0 0
  %11307 = vmatpush1.bf16.msra.mxu0 %v10962
  %11308 = vmatprep.subr.bf16.mxu0 0
  %11309 = vmatpush1.bf16.msra.mxu0 %v10963
  %11310 = vmatprep.subr.bf16.mxu0 0
  %11311 = vmatpush1.bf16.msra.mxu0 %v10964
  %11312 = vmatprep.mubr.bf16.mxu0 %v10115
  %11313 = vmatmul.mubr.bf16.gmra.mrb[0].mxu0 %v10114
  %v11314 = vpop.f32.mrb[0].mxu0
  %v11315 = vadd.f32 %v11274, %v11314
  %v11316 = vpop.f32.mrb[0].mxu0
  %v11317 = vpop.f32.mrb[0].mxu0
  %v11318 = vadd.f32 %v11277, %v11317
  %v11319 = vpop.f32.mrb[0].mxu0
  %11320 = vdwg.mxu0
  %11321 = vmatprep.subr.bf16.mxu0 0
  %11322 = vmatpush1.bf16.msra.mxu0 %v10965
  %11323 = vmatprep.subr.bf16.mxu0 0
  %11324 = vmatpush1.bf16.msra.mxu0 %v10966
  %11325 = vmatprep.subr.bf16.mxu0 0
  %11326 = vmatpush1.bf16.msra.mxu0 %v10967
  %11327 = vmatprep.subr.bf16.mxu0 0
  %11328 = vmatpush1.bf16.msra.mxu0 %v10968
  %11329 = vmatprep.subr.bf16.mxu0 0
  %11330 = vmatpush1.bf16.msra.mxu0 %v10969
  %11331 = vmatprep.subr.bf16.mxu0 0
  %11332 = vmatpush1.bf16.msra.mxu0 %v10970
  %11333 = vmatprep.subr.bf16.mxu0 0
  %11334 = vmatpush1.bf16.msra.mxu0 %v10971
  %11335 = vmatprep.subr.bf16.mxu0 0
  %11336 = vmatpush1.bf16.msra.mxu0 %v10972
  %11337 = vmatprep.subr.bf16.mxu0 0
  %11338 = vmatpush1.bf16.msra.mxu0 %v10973
  %11339 = vmatprep.subr.bf16.mxu0 0
  %11340 = vmatpush1.bf16.msra.mxu0 %v10974
  %11341 = vmatprep.subr.bf16.mxu0 0
  %11342 = vmatpush1.bf16.msra.mxu0 %v10975
  %11343 = vmatprep.subr.bf16.mxu0 0
  %11344 = vmatpush1.bf16.msra.mxu0 %v10976
  %11345 = vmatprep.subr.bf16.mxu0 0
  %11346 = vmatpush1.bf16.msra.mxu0 %v10977
  %11347 = vmatprep.subr.bf16.mxu0 0
  %11348 = vmatpush1.bf16.msra.mxu0 %v10978
  %11349 = vmatprep.subr.bf16.mxu0 0
  %11350 = vmatpush1.bf16.msra.mxu0 %v10979
  %11351 = vmatprep.subr.bf16.mxu0 0
  %11352 = vmatpush1.bf16.msra.mxu0 %v10980
  %11353 = vmatprep.mubr.bf16.mxu0 %v10117
  %11354 = vmatmul.mubr.bf16.gmra.mrb[0].mxu0 %v10116
  %v11355 = vpop.f32.mrb[0].mxu0
  %v11356 = vadd.f32 %v11315, %v11355
  %v11357 = vpop.f32.mrb[0].mxu0
  %v11358 = vpop.f32.mrb[0].mxu0
  %v11359 = vadd.f32 %v11318, %v11358
  %v11360 = vpop.f32.mrb[0].mxu0
  %11361 = vdwg.mxu0
  %11362 = vmatprep.subr.bf16.mxu0 0
  %11363 = vmatpush1.bf16.msra.mxu0 %v10981
  %11364 = vmatprep.subr.bf16.mxu0 0
  %11365 = vmatpush1.bf16.msra.mxu0 %v10982
  %11366 = vmatprep.subr.bf16.mxu0 0
  %11367 = vmatpush1.bf16.msra.mxu0 %v10983
  %11368 = vmatprep.subr.bf16.mxu0 0
  %11369 = vmatpush1.bf16.msra.mxu0 %v10984
  %11370 = vmatprep.subr.bf16.mxu0 0
  %11371 = vmatpush1.bf16.msra.mxu0 %v10985
  %11372 = vmatprep.subr.bf16.mxu0 0
  %11373 = vmatpush1.bf16.msra.mxu0 %v10986
  %11374 = vmatprep.subr.bf16.mxu0 0
  %11375 = vmatpush1.bf16.msra.mxu0 %v10987
  %11376 = vmatprep.subr.bf16.mxu0 0
  %11377 = vmatpush1.bf16.msra.mxu0 %v10988
  %11378 = vmatprep.subr.bf16.mxu0 0
  %11379 = vmatpush1.bf16.msra.mxu0 %v10989
  %11380 = vmatprep.subr.bf16.mxu0 0
  %11381 = vmatpush1.bf16.msra.mxu0 %v10990
  %11382 = vmatprep.subr.bf16.mxu0 0
  %11383 = vmatpush1.bf16.msra.mxu0 %v10991
  %11384 = vmatprep.subr.bf16.mxu0 0
  %11385 = vmatpush1.bf16.msra.mxu0 %v10992
  %11386 = vmatprep.subr.bf16.mxu0 0
  %11387 = vmatpush1.bf16.msra.mxu0 %v10993
  %11388 = vmatprep.subr.bf16.mxu0 0
  %11389 = vmatpush1.bf16.msra.mxu0 %v10994
  %11390 = vmatprep.subr.bf16.mxu0 0
  %11391 = vmatpush1.bf16.msra.mxu0 %v10995
  %11392 = vmatprep.subr.bf16.mxu0 0
  %11393 = vmatpush1.bf16.msra.mxu0 %v10996
  %11394 = vmatprep.mubr.bf16.mxu0 %v10119
  %11395 = vmatmul.mubr.bf16.gmra.mrb[0].mxu0 %v10118
  %v11396 = vpop.f32.mrb[0].mxu0
  %v11397 = vadd.f32 %v11356, %v11396
  %v11398 = vpop.f32.mrb[0].mxu0
  %v11399 = vpop.f32.mrb[0].mxu0
  %v11400 = vadd.f32 %v11359, %v11399
  %v11401 = vpop.f32.mrb[0].mxu0
  %11402 = vdwg.mxu0
  %11403 = vmatprep.subr.bf16.mxu0 0
  %11404 = vmatpush1.bf16.msra.mxu0 %v10997
  %11405 = vmatprep.subr.bf16.mxu0 0
  %11406 = vmatpush1.bf16.msra.mxu0 %v10998
  %11407 = vmatprep.subr.bf16.mxu0 0
  %11408 = vmatpush1.bf16.msra.mxu0 %v10999
  %11409 = vmatprep.subr.bf16.mxu0 0
  %11410 = vmatpush1.bf16.msra.mxu0 %v11000
  %11411 = vmatprep.subr.bf16.mxu0 0
  %11412 = vmatpush1.bf16.msra.mxu0 %v11001
  %11413 = vmatprep.subr.bf16.mxu0 0
  %11414 = vmatpush1.bf16.msra.mxu0 %v11002
  %11415 = vmatprep.subr.bf16.mxu0 0
  %11416 = vmatpush1.bf16.msra.mxu0 %v11003
  %11417 = vmatprep.subr.bf16.mxu0 0
  %11418 = vmatpush1.bf16.msra.mxu0 %v11004
  %11419 = vmatprep.subr.bf16.mxu0 0
  %11420 = vmatpush1.bf16.msra.mxu0 %v11005
  %11421 = vmatprep.subr.bf16.mxu0 0
  %11422 = vmatpush1.bf16.msra.mxu0 %v11006
  %11423 = vmatprep.subr.bf16.mxu0 0
  %11424 = vmatpush1.bf16.msra.mxu0 %v11007
  %11425 = vmatprep.subr.bf16.mxu0 0
  %11426 = vmatpush1.bf16.msra.mxu0 %v11008
  %11427 = vmatprep.subr.bf16.mxu0 0
  %11428 = vmatpush1.bf16.msra.mxu0 %v11009
  %11429 = vmatprep.subr.bf16.mxu0 0
  %11430 = vmatpush1.bf16.msra.mxu0 %v11010
  %11431 = vmatprep.subr.bf16.mxu0 0
  %11432 = vmatpush1.bf16.msra.mxu0 %v11011
  %11433 = vmatprep.subr.bf16.mxu0 0
  %11434 = vmatpush1.bf16.msra.mxu0 %v11012
  %11435 = vmatprep.mubr.bf16.mxu0 %v10121
  %11436 = vmatmul.mubr.bf16.gmra.mrb[0].mxu0 %v10120
  %v11437 = vpop.f32.mrb[0].mxu0
  %v11438 = vadd.f32 %v11397, %v11437
  %v11439 = vpop.f32.mrb[0].mxu0
  %v11440 = vpop.f32.mrb[0].mxu0
  %v11441 = vadd.f32 %v11400, %v11440
  %v11442 = vpop.f32.mrb[0].mxu0
  %11443 = vdwg.mxu0
  %11444 = vmatprep.subr.bf16.mxu0 0
  %11445 = vmatpush1.bf16.msra.mxu0 %v11013
  %11446 = vmatprep.subr.bf16.mxu0 0
  %11447 = vmatpush1.bf16.msra.mxu0 %v11014
  %11448 = vmatprep.subr.bf16.mxu0 0
  %11449 = vmatpush1.bf16.msra.mxu0 %v11015
  %11450 = vmatprep.subr.bf16.mxu0 0
  %11451 = vmatpush1.bf16.msra.mxu0 %v11016
  %11452 = vmatprep.subr.bf16.mxu0 0
  %11453 = vmatpush1.bf16.msra.mxu0 %v11017
  %11454 = vmatprep.subr.bf16.mxu0 0
  %11455 = vmatpush1.bf16.msra.mxu0 %v11018
  %11456 = vmatprep.subr.bf16.mxu0 0
  %11457 = vmatpush1.bf16.msra.mxu0 %v11019
  %11458 = vmatprep.subr.bf16.mxu0 0
  %11459 = vmatpush1.bf16.msra.mxu0 %v11020
  %11460 = vmatprep.subr.bf16.mxu0 0
  %11461 = vmatpush1.bf16.msra.mxu0 %v11021
  %11462 = vmatprep.subr.bf16.mxu0 0
  %11463 = vmatpush1.bf16.msra.mxu0 %v11022
  %11464 = vmatprep.subr.bf16.mxu0 0
  %11465 = vmatpush1.bf16.msra.mxu0 %v11023
  %11466 = vmatprep.subr.bf16.mxu0 0
  %11467 = vmatpush1.bf16.msra.mxu0 %v11024
  %11468 = vmatprep.subr.bf16.mxu0 0
  %11469 = vmatpush1.bf16.msra.mxu0 %v11025
  %11470 = vmatprep.subr.bf16.mxu0 0
  %11471 = vmatpush1.bf16.msra.mxu0 %v11026
  %11472 = vmatprep.subr.bf16.mxu0 0
  %11473 = vmatpush1.bf16.msra.mxu0 %v11027
  %11474 = vmatprep.subr.bf16.mxu0 0
  %11475 = vmatpush1.bf16.msra.mxu0 %v11028
  %11476 = vmatprep.mubr.bf16.mxu0 %v10123
  %11477 = vmatmul.mubr.bf16.gmra.mrb[0].mxu0 %v10122
  %v11478 = vpop.f32.mrb[0].mxu0
  %v11479 = vadd.f32 %v11438, %v11478
  %v11480 = vpop.f32.mrb[0].mxu0
  %v11481 = vpop.f32.mrb[0].mxu0
  %v11482 = vadd.f32 %v11441, %v11481
  %v11483 = vpop.f32.mrb[0].mxu0
  %11484 = vdwg.mxu0
  %v11485 = vadd.f32 %v9352, %v11479
  %v11486 = vadd.f32 %v9353, %v11482
  %s11487 = scalar_lea.vmem %s15, 2
  %v11488 = vld [vmem:[%s11487] sm:$0x1]
  %s11489 = scalar_lea.vmem %s16, 2
  %v11490 = vld [vmem:[%s11489] sm:$0x1]
  %v11491 = vsel %vm289, %v11485, 0.0
  %11492 = vadd.xlane.f32.xlu0 %v11491
  %v11493 = vpop.xlane.xlu0 %11492
  %v11494 = vsel %vm289, %v11486, 0.0
  %11495 = vadd.xlane.f32.xlu0 %v11494
  %v11496 = vpop.xlane.xlu0 %11495
  %v11497 = vmul.f32 %v11493, %v1738
  %v11498 = vmul.f32 %v11496, %v1738
  %v11499 = vsub.f32 %v11485, %v11497
  %v11500 = vsub.f32 %v11486, %v11498
  %v11501 = vmul.f32 %v11499, %v11499
  %v11502 = vmul.f32 %v11500, %v11500
  %v11503 = vsel %vm289, %v11501, 0.0
  %11504 = vadd.xlane.f32.xlu0 %v11503
  %v11505 = vpop.xlane.xlu0 %11504
  %v11506 = vsel %vm289, %v11502, 0.0
  %11507 = vadd.xlane.f32.xlu0 %v11506
  %v11508 = vpop.xlane.xlu0 %11507
  %v11509 = vmul.f32 %v11505, %v1738
  %v11510 = vmul.f32 %v11508, %v1738
  %v11511 = vadd.f32 %v11509, 1e-05
  %v11512 = vadd.f32 %v11510, 1e-05
  %v11513 = vrsqrt.pop %v11511
  %v11514 = vrsqrt.pop %v11512
  %v11515 = vmul.f32 %v11499, %v11513
  %v11516 = vmul.f32 %v11500, %v11514
  %v11518 = vlaneseq
  %v11519 = vshrl.u32 %v11518, 7
  %v11520 = vsub.s32 0, %v11519
  %v11521 = vrot.slane %v11488, %v11520
  %v11523 = vmul.f32 %v11515, %v11521
  %v11524 = vmul.f32 %v11516, %v11521
  %v11526 = vlaneseq
  %v11527 = vshrl.u32 %v11526, 7
  %v11528 = vsub.s32 0, %v11527
  %v11529 = vrot.slane %v11490, %v11528
  %v11531 = vadd.f32 %v11523, %v11529
  %v11532 = vadd.f32 %v11524, %v11529
  %v11533 = vld [vmem:[%s17] sm:$0xff]
  %v11534 = vld [vmem:[%s17 + $0x8] sm:$0xff]
  %v11535 = vld [vmem:[%s17 + $0x10] sm:$0xff]
  %v11536 = vld [vmem:[%s17 + $0x18] sm:$0xff]
  %v11537 = vld [vmem:[%s17 + $0x20] sm:$0xf]
  %v11538 = vld [vmem:[%s18] sm:$0x1]
  %v11540 = vlaneseq
  %v11541 = vshrl.u32 %v11540, 7
  %v11542 = vsub.s32 0, %v11541
  %v11543 = vrot.slane %v11538, %v11542
  %v11546 = vsel %vm289, %v11531, 0
  %v11549 = vsel %vm289, %v11532, 0
  %v11552 = vsel %vm82, %v11537, 0
  %11554 = vmatprep.subr.mxu0 0.0
  %11555 = vmatpush1.msra.mxu0 %v11533
  %11556 = vmatprep.subr.mxu0 0.0
  %11557 = vmatpush1.msra.mxu0 %v11534
  %11558 = vmatprep.subr.mxu0 0.0
  %11559 = vmatpush1.msra.mxu0 %v11535
  %11560 = vmatprep.subr.mxu0 0.0
  %11561 = vmatpush1.msra.mxu0 %v11536
  %11562 = vmatprep.subr.mxu0 0.0
  %11563 = vmatpush1.msra.mxu0 %v11552
  %11564 = vmatprep.subr.mxu0 0.0
  %11565 = vmatpush1.msra.mxu0 0.0
  %11566 = vmatprep.subr.mxu0 0.0
  %11567 = vmatpush1.msra.mxu0 0.0
  %11568 = vmatprep.subr.mxu0 0.0
  %11569 = vmatpush1.msra.mxu0 0.0
  %11570 = vmatprep.subr.mxu0 0.0
  %11571 = vmatpush1.msra.mxu0 0.0
  %11572 = vmatprep.subr.mxu0 0.0
  %11573 = vmatpush1.msra.mxu0 0.0
  %11574 = vmatprep.subr.mxu0 0.0
  %11575 = vmatpush1.msra.mxu0 0.0
  %11576 = vmatprep.subr.mxu0 0.0
  %11577 = vmatpush1.msra.mxu0 0.0
  %11578 = vmatprep.subr.mxu0 0.0
  %11579 = vmatpush1.msra.mxu0 0.0
  %11580 = vmatprep.subr.mxu0 0.0
  %11581 = vmatpush1.msra.mxu0 0.0
  %11582 = vmatprep.subr.mxu0 0.0
  %11583 = vmatpush1.msra.mxu0 0.0
  %11584 = vmatprep.subr.mxu0 0.0
  %11585 = vmatpush1.msra.mxu0 0.0
  %11586 = vmatprep.subr.mxu0 0.0
  %11587 = vmatpush1.msra.mxu0 0.0
  %11588 = vmatprep.subr.mxu0 0.0
  %11589 = vmatpush1.msra.mxu0 0.0
  %11590 = vmatprep.subr.mxu0 0.0
  %11591 = vmatpush1.msra.mxu0 0.0
  %11592 = vmatprep.subr.mxu0 0.0
  %11593 = vmatpush1.msra.mxu0 0.0
  %11594 = vmatprep.subr.mxu0 0.0
  %11595 = vmatpush1.msra.mxu0 0.0
  %11596 = vmatprep.subr.mxu0 0.0
  %11597 = vmatpush1.msra.mxu0 0.0
  %11598 = vmatprep.subr.mxu0 0.0
  %11599 = vmatpush1.msra.mxu0 0.0
  %11600 = vmatprep.subr.mxu0 0.0
  %11601 = vmatpush1.msra.mxu0 0.0
  %11602 = vmatprep.subr.mxu0 0.0
  %11603 = vmatpush1.msra.mxu0 0.0
  %11604 = vmatprep.subr.mxu0 0.0
  %11605 = vmatpush1.msra.mxu0 0.0
  %11606 = vmatprep.subr.mxu0 0.0
  %11607 = vmatpush1.msra.mxu0 0.0
  %11608 = vmatprep.subr.mxu0 0.0
  %11609 = vmatpush1.msra.mxu0 0.0
  %11610 = vmatprep.subr.mxu0 0.0
  %11611 = vmatpush1.msra.mxu0 0.0
  %11612 = vmatprep.subr.mxu0 0.0
  %11613 = vmatpush1.msra.mxu0 0.0
  %11614 = vmatprep.subr.mxu0 0.0
  %11615 = vmatpush1.msra.mxu0 0.0
  %11616 = vmatprep.subr.mxu0 0.0
  %11617 = vmatpush1.msra.mxu0 0.0
  %11618 = vmatprep.mubr.f32.mxu0 0.0
  %11619 = vmatmul.mubr.f32.gmra.mrb[0].mxu0 %v11546
  %v11620 = vpop.f32.mrb[0].mxu0
  %v11621 = vadd.f32 %v11543, %v11620
  %v11622 = vpop.f32.mrb[0].mxu0
  %11623 = vmatprep.mubr.f32.mxu0 0.0
  %11624 = vmatmul.mubr.f32.gmra.mrb[0].mxu0 %v11549
  %v11625 = vpop.f32.mrb[0].mxu0
  %v11626 = vadd.f32 %v11543, %v11625
  %v11627 = vpop.f32.mrb[0].mxu0
  %11628 = vdwg.mxu0
  %11629 = vst.msk [vmem:[%s19] sm:$0xff] %vm75, %v11621
  %11630 = vst.msk [vmem:[%s19 + $0x8] sm:$0xff] %vm75, %v11626
  // Predicated region
  $region78: #{transam_forward.1} parent=0 // pred_check
    _
  $region79: #{transam_forward.1} parent=0 // pred_check_branch
    %11632 = sbr.rel (0) target = $region81
  $region80: #{transam_forward.1} parent=0 // pred_region
    _
  $region81: #{transam_forward.1} parent=0 // pred_fallthru
    _
  // Predicated region
  $region82: #{transam_forward.1} parent=0 // pred_check
    _
  $region83: #{transam_forward.1} parent=0 // pred_check_branch
    %11634 = sbr.rel (0) target = $region85
  $region84: #{transam_forward.1} parent=0 // pred_region
    _
  $region85: #{transam_forward.1} parent=0 // pred_fallthru
    _

</llo_original>
